<compile_context>
chip_gen: v6e
topology: v6e:2x2x1
jax: 0.10.0
libtpu: 0.0.40
codegen_flags: <defaults>
</compile_context>

<pallas_src>
import numpy as np
import jax
import jax.numpy as jnp
from jax.experimental import pallas as pl
from jax.experimental.pallas import tpu as pltpu


VMEM_LIMIT_BYTES = 32 * 1024 * 1024   # explicit scoped-VMEM budget (safe on v5e/v6e/v7x)
DEFAULT_TILE_M = 1024                 # multiple of 8; blocks stay << 1 MiB even at K=180
TAIL_TILE_B = 8                       # images per tail grid step (rows per tile = 8*49 = 392)


def _compiler_params():
    return pltpu.CompilerParams(
        dimension_semantics=("parallel",),
        vmem_limit_bytes=VMEM_LIMIT_BYTES,
    )


def _row_tiling(m, tile_m):
    """Pick a row tile: single full block for small M, else tile_m with a cdiv grid."""
    if m <= tile_m:
        return m, 1
    return tile_m, pl.cdiv(m, tile_m)


# ----------------------------------------------------------------------------
# Pallas kernels
# ----------------------------------------------------------------------------
def _matmul_bias_relu_kernel(x_ref, w_ref, b_ref, o_ref):
    # x: (tile_m, K) bf16, w: (K, N) bf16, b: (1, N) f32 -> o = relu(x @ w + b) stored bf16
    y = jnp.dot(x_ref[...], w_ref[...], preferred_element_type=jnp.float32)
    o_ref[...] = jnp.maximum(y + b_ref[...], 0.0).astype(o_ref.dtype)


def _maxpool_conv1x1_relu_kernel(a_ref, b_ref, c_ref, d_ref, w_ref, bias_ref, o_ref):
    # 2x2/stride-2 max pool (4 shifted slabs) fused with the following 1x1 conv + BN + ReLU.
    a = a_ref[...].astype(jnp.float32)
    b = b_ref[...].astype(jnp.float32)
    c = c_ref[...].astype(jnp.float32)
    d = d_ref[...].astype(jnp.float32)
    m = jnp.maximum(jnp.maximum(a, b), jnp.maximum(c, d))          # f32 epilogue math (v5e-safe)
    y = jnp.dot(m.astype(w_ref.dtype), w_ref[...], preferred_element_type=jnp.float32)
    o_ref[...] = jnp.maximum(y + bias_ref[...], 0.0).astype(o_ref.dtype)


def _tail_kernel(p6_ref, ex_ref, w6_ref, b6_ref, w7_ref, b7_ref, pool_ref,
                 wf1f_ref, wf1e_ref, bf1_ref, wf2_ref, bf2_ref, wf3_ref, bf3_ref,
                 o_ref):
    # Per batch-tile of TB images:
    #   conv6|conv13 (3x3, im2col rows) -> conv7|conv14 (1x1) -> AvgPool2d(7) via pooling matmul
    #   -> concat([feat, u/5, o, -o]) -> fc1|fc4 -> relu -> fc2|fc5 -> relu -> fc3|fc6.
    h = jnp.dot(p6_ref[...], w6_ref[...], preferred_element_type=jnp.float32) + b6_ref[...]
    h = jnp.maximum(h, 0.0)                                          # (TB*49, 40)
    h = jnp.dot(h.astype(w7_ref.dtype), w7_ref[...],
                preferred_element_type=jnp.float32) + b7_ref[...]
    h = jnp.maximum(h, 0.0)                                          # (TB*49, 20)
    # AvgPool2d(7): 0/1 block pooling matrix (TB, TB*49) -> sum over 49 positions, scale by 1/49.
    spatial = pool_ref.shape[1] // pool_ref.shape[0]
    feat = jnp.dot(pool_ref[...], h.astype(pool_ref.dtype),
                   preferred_element_type=jnp.float32) * (1.0 / float(spatial))   # (TB, 20)
    z = (jnp.dot(feat, wf1f_ref[...], preferred_element_type=jnp.float32)
         + jnp.dot(ex_ref[...], wf1e_ref[...], preferred_element_type=jnp.float32)
         + bf1_ref[...])                                             # fc on [feat, u/5, o, -o]
    z = jnp.maximum(z, 0.0)                                          # (TB, 100)
    z = jnp.dot(z, wf2_ref[...], preferred_element_type=jnp.float32) + bf2_ref[...]
    z = jnp.maximum(z, 0.0)                                          # (TB, 20)
    o_ref[...] = jnp.dot(z, wf3_ref[...], preferred_element_type=jnp.float32) + bf3_ref[...]


# ----------------------------------------------------------------------------
# Pallas wrappers
# ----------------------------------------------------------------------------
def matmul_bias_relu(x2d, w2d, bias, out_dtype=jnp.bfloat16, tile_m=DEFAULT_TILE_M):
    M, K = x2d.shape
    N = w2d.shape[1]
    tile, steps = _row_tiling(M, tile_m)
    return pl.pallas_call(
        _matmul_bias_relu_kernel,
        out_shape=jax.ShapeDtypeStruct((M, N), out_dtype),
        grid=(steps,),
        in_specs=[
            pl.BlockSpec((tile, K), lambda i: (i, 0)),
            pl.BlockSpec((K, N), lambda i: (0, 0)),
            pl.BlockSpec((1, N), lambda i: (0, 0)),
        ],
        out_specs=pl.BlockSpec((tile, N), lambda i: (i, 0)),
        compiler_params=_compiler_params(),
    )(x2d.astype(jnp.bfloat16), w2d.astype(jnp.bfloat16),
      bias.reshape(1, N).astype(jnp.float32))


def maxpool2x2_conv1x1_relu(x, w2d, bias, out_dtype=jnp.bfloat16, tile_m=DEFAULT_TILE_M):
    """F.max_pool2d(x, 2) fused with the following 1x1 conv+BN+ReLU. x: (B, H, W, C) NHWC."""
    B, H, W, C = x.shape
    Ho, Wo = H // 2, W // 2
    M = B * Ho * Wo
    N = w2d.shape[1]
    slabs = [x[:, dy:2 * Ho:2, dx:2 * Wo:2, :].reshape(M, C)
             for dy in (0, 1) for dx in (0, 1)]
    tile, steps = _row_tiling(M, tile_m)
    row_spec = pl.BlockSpec((tile, C), lambda i: (i, 0))
    y = pl.pallas_call(
        _maxpool_conv1x1_relu_kernel,
        out_shape=jax.ShapeDtypeStruct((M, N), out_dtype),
        grid=(steps,),
        in_specs=[row_spec, row_spec, row_spec, row_spec,
                  pl.BlockSpec((C, N), lambda i: (0, 0)),
                  pl.BlockSpec((1, N), lambda i: (0, 0))],
        out_specs=pl.BlockSpec((tile, N), lambda i: (i, 0)),
        compiler_params=_compiler_params(),
    )(*slabs, w2d.astype(jnp.bfloat16), bias.reshape(1, N).astype(jnp.float32))
    return y.reshape(B, Ho, Wo, N)


def tail_fused(p6_rows, extras, spatial, w6, b6, w7, b7,
               wf1_feat, wf1_ext, bf1, wf2, bf2, wf3, bf3, tile_b=TAIL_TILE_B):
    """Fused conv6/7 (both heads) + avgpool + concat + 3-layer MLP heads.

    Gridded over batch TILES of `tile_b` images; avg-pool is a 0/1 pooling matmul so there are
    no in-kernel reshapes and each grid step feeds the MXU (tile_b*49)-row matmuls.
    """
    B, ne = extras.shape
    Kp = p6_rows.shape[1]
    n6 = w6.shape[1]
    n7 = w7.shape[1]
    h1 = wf1_feat.shape[1]
    h2 = wf2.shape[1]
    no = wf3.shape[1]

    steps = pl.cdiv(B, tile_b)
    Bp = steps * tile_b
    if Bp != B:                                   # zero-pad batch; padded rows are discarded
        p6_rows = jnp.pad(p6_rows, ((0, (Bp - B) * spatial), (0, 0)))
        extras = jnp.pad(extras, ((0, Bp - B), (0, 0)))

    # Block pooling matrix: row i sums the `spatial` im2col rows of image i within the tile.
    pool = jnp.asarray(np.kron(np.eye(tile_b), np.ones((1, spatial))), jnp.bfloat16)

    def const(shape):
        return pl.BlockSpec(shape, lambda i: (0,) * len(shape))

    out = pl.pallas_call(
        _tail_kernel,
        out_shape=jax.ShapeDtypeStruct((Bp, no), jnp.float32),
        grid=(steps,),
        in_specs=[
            pl.BlockSpec((tile_b * spatial, Kp), lambda i: (i, 0)),   # conv6 patches per tile
            pl.BlockSpec((tile_b, ne), lambda i: (i, 0)),             # [u/5, o, -o] per tile
            const((Kp, n6)), const((1, n6)),                          # conv6|conv13 (folded BN)
            const((n6, n7)), const((1, n7)),                          # conv7|conv14 (1x1)
            const((tile_b, tile_b * spatial)),                        # avg-pool matrix
            const((n7, h1)), const((ne, h1)), const((1, h1)),         # fc1|fc4 (feat / extras)
            const((h1, h2)), const((1, h2)),                          # fc2|fc5
            const((h2, no)), const((1, no)),                          # fc3|fc6
        ],
        out_specs=pl.BlockSpec((tile_b, no), lambda i: (i, 0)),
        compiler_params=_compiler_params(),
    )(p6_rows.astype(jnp.bfloat16), extras.astype(jnp.float32),
      w6.astype(jnp.bfloat16), b6.reshape(1, n6).astype(jnp.float32),
      w7.astype(jnp.bfloat16), b7.reshape(1, n7).astype(jnp.float32),
      pool,
      wf1_feat.astype(jnp.float32), wf1_ext.astype(jnp.float32), bf1.astype(jnp.float32),
      wf2.astype(jnp.float32), bf2.astype(jnp.float32),
      wf3.astype(jnp.float32), bf3.astype(jnp.float32))
    return out[:B]


# ----------------------------------------------------------------------------
# JAX glue: im2col, BN folding, twin-branch weight merging
# ----------------------------------------------------------------------------
def _im2col(x, k):
    """x: (B, H, W, C) NHWC -> patches (B*Ho*Wo, k*k*C) with (dy, dx, cin) channel order."""
    B, H, W, C = x.shape
    Ho, Wo = H - k + 1, W - k + 1
    cols = [x[:, dy:dy + Ho, dx:dx + Wo, :] for dy in range(k) for dx in range(k)]
    return jnp.concatenate(cols, axis=-1).reshape(B * Ho * Wo, k * k * C), Ho, Wo


def fold_bn(w, b, gamma, beta, mean, var, eps=1e-5):
    """Eval-mode BatchNorm folded into the preceding conv (per output channel)."""
    scale = gamma / jnp.sqrt(var + eps)
    w_f = w * scale[:, None, None, None]
    b_f = (b - mean) * scale + beta
    return w_f, b_f


def _fold(cp):
    return fold_bn(cp["w"], cp["b"], cp["gamma"], cp["beta"], cp["mean"], cp["var"])


def merge_conv_pair(cp_a, cp_b, shared_input=False):
    """Stack two twin-branch convs into one block-diagonal conv => one pallas_call for both heads."""
    wa, ba = _fold(cp_a)
    wb, bb = _fold(cp_b)
    co_a, ci_a, k, _ = wa.shape
    co_b, ci_b, _, _ = wb.shape
    if shared_input:                      # first layer: both branches read the same image
        w = jnp.concatenate([wa, wb], axis=0)                      # (co_a+co_b, ci, k, k)
    else:                                 # deeper layers: block-diagonal in (Cout, Cin)
        w = jnp.zeros((co_a + co_b, ci_a + ci_b, k, k), jnp.float32)
        w = w.at[:co_a, :ci_a].set(wa).at[co_a:, ci_a:].set(wb)
    b = jnp.concatenate([ba, bb])
    # (Cout, Cin, kh, kw) -> (kh*kw*Cin, Cout), matching the im2col patch ordering
    w2d = jnp.transpose(w, (2, 3, 1, 0)).reshape(k * k * w.shape[1], w.shape[0])
    return w2d, b


def merge_fc_heads(fc1, fc2, fc3, fc4, fc5, fc6):
    """Stack the two FC heads. Merged feature = [feat1(10), feat2(10)]; extras = [u/5, o, -o]."""
    w1a, w1b = fc1["w"].T, fc4["w"].T          # (13, 50) each
    d1 = w1a.shape[1]
    nf = w1a.shape[0] - 3                       # feature width per branch (10)
    wf1_feat = jnp.zeros((2 * nf, 2 * d1), jnp.float32)
    wf1_feat = wf1_feat.at[:nf, :d1].set(w1a[:nf]).at[nf:, d1:].set(w1b[:nf])
    wf1_ext = jnp.concatenate([w1a[nf:], w1b[nf:]], axis=1)        # (3, 100)
    bf1 = jnp.concatenate([fc1["b"], fc4["b"]]).reshape(1, 2 * d1)

    w2a, w2b = fc2["w"].T, fc5["w"].T          # (50, 10) each
    d2 = w2a.shape[1]
    wf2 = jnp.zeros((2 * d1, 2 * d2), jnp.float32)
    wf2 = wf2.at[:d1, :d2].set(w2a).at[d1:, d2:].set(w2b)
    bf2 = jnp.concatenate([fc2["b"], fc5["b"]]).reshape(1, 2 * d2)

    w3a, w3b = fc3["w"].T, fc6["w"].T          # (10, 1) each
    wf3 = jnp.zeros((2 * d2, 2), jnp.float32)
    wf3 = wf3.at[:d2, 0:1].set(w3a).at[d2:, 1:2].set(w3b)
    bf3 = jnp.concatenate([fc3["b"], fc6["b"]]).reshape(1, 2)
    return wf1_feat, wf1_ext, bf1, wf2, bf2, wf3, bf3


def conv_bn_relu_fused(x, w2d, bias, k, tile_m=DEFAULT_TILE_M):
    """3x3 (or 1x1) conv + folded BN + ReLU for BOTH branches via one gridded Pallas matmul."""
    B = x.shape[0]
    patches, Ho, Wo = _im2col(x, k)
    y = matmul_bias_relu(patches, w2d, bias, out_dtype=jnp.bfloat16, tile_m=tile_m)
    return y.reshape(B, Ho, Wo, w2d.shape[1])


BRANCH_PAIRS = [("conv1", "conv8"), ("conv2", "conv9"), ("conv3", "conv10"),
                ("conv4", "conv11"), ("conv5", "conv12"), ("conv6", "conv13"),
                ("conv7", "conv14")]


def prepare_critic_params(params):
    """One-time (outside-jit) BN folding + twin-branch weight merging."""
    merged = {}
    for li, (a, b) in enumerate(BRANCH_PAIRS, start=1):
        w2d, bias = merge_conv_pair(params[a], params[b], shared_input=(li == 1))
        merged[f"w{li}"] = w2d
        merged[f"b{li}"] = bias
    (merged["wf1f"], merged["wf1e"], merged["bf1"],
     merged["wf2"], merged["bf2"], merged["wf3"], merged["bf3"]) = merge_fc_heads(
        params["fc1"], params["fc2"], params["fc3"],
        params["fc4"], params["fc5"], params["fc6"])
    return merged


@jax.jit
def critic_forward(merged, x, u, o, d):
    # d is accepted but unused (matches the PyTorch forward signature)
    del d
    x_img = x.reshape(-1, 28, 28, 1).astype(jnp.bfloat16)   # NHWC (C=1, equiv. to NCHW)
    B = x_img.shape[0]

    h = conv_bn_relu_fused(x_img, merged["w1"], merged["b1"], k=3)   # (B,26,26,20) conv1|conv8
    h = conv_bn_relu_fused(h, merged["w2"], merged["b2"], k=3)       # (B,24,24,20) conv2|conv9
    h = conv_bn_relu_fused(h, merged["w3"], merged["b3"], k=3)       # (B,22,22,40) conv3|conv10
    # dropout(0.25): identity in eval mode
    h = maxpool2x2_conv1x1_relu(h, merged["w4"], merged["b4"])       # (B,11,11,20) pool+conv4|11
    h = conv_bn_relu_fused(h, merged["w5"], merged["b5"], k=3)       # (B,9,9,20)   conv5|conv12
    # dropout(0.25): identity in eval mode
    p6, Ho, Wo = _im2col(h, 3)                                       # (B*49, 180) conv6 patches
    extras = jnp.concatenate([u / 5.0, o, -o], axis=1)               # (B, 3) = [u/5, o, -o]
    q = tail_fused(p6, extras, Ho * Wo,
                   merged["w6"], merged["b6"], merged["w7"], merged["b7"],
                   merged["wf1f"], merged["wf1e"], merged["bf1"],
                   merged["wf2"], merged["bf2"], merged["wf3"], merged["bf3"])  # (B, 2)
    return q[:, 0:1], q[:, 1:2]


# ----------------------------------------------------------------------------
# Deterministic parameter initialization (synthetic; shapes from the module)
# ----------------------------------------------------------------------------
def init_params(key):
    params = {}
    keys = iter(jax.random.split(key, 256))

    def conv(name, cin, cout, k):
        params[name] = {
            "w": 0.1 * jax.random.normal(next(keys), (cout, cin, k, k), jnp.float32),
            "b": 0.1 * jax.random.normal(next(keys), (cout,), jnp.float32),
            "gamma": 1.0 + 0.1 * jax.random.normal(next(keys), (cout,), jnp.float32),
            "beta": 0.1 * jax.random.normal(next(keys), (cout,), jnp.float32),
            "mean": 0.1 * jax.random.normal(next(keys), (cout,), jnp.float32),
            "var": 1.0 + 0.1 * jnp.abs(jax.random.normal(next(keys), (cout,), jnp.float32)),
        }

    def linear(name, din, dout):
        params[name] = {
            "w": 0.1 * jax.random.normal(next(keys), (dout, din), jnp.float32),
            "b": 0.1 * jax.random.normal(next(keys), (dout,), jnp.float32),
        }

    conv("conv1", 1, 10, 3);  conv("conv2", 10, 10, 3); conv("conv3", 10, 20, 3)
    conv("conv4", 20, 10, 1); conv("conv5", 10, 10, 3); conv("conv6", 10, 20, 3)
    conv("conv7", 20, 10, 1)
    linear("fc1", 13, 50); linear("fc2", 50, 10); linear("fc3", 10, 1)
    conv("conv8", 1, 10, 3);  conv("conv9", 10, 10, 3); conv("conv10", 10, 20, 3)
    conv("conv11", 20, 10, 1); conv("conv12", 10, 10, 3); conv("conv13", 10, 20, 3)
    conv("conv14", 20, 10, 1)
    linear("fc4", 13, 50); linear("fc5", 50, 10); linear("fc6", 10, 1)
    return params


if __name__ == "__main__":
    key = jax.random.PRNGKey(0)
    kp, kx, ku, ko, kd = jax.random.split(key, 5)
    params = init_params(kp)
    merged = jax.block_until_ready(prepare_critic_params(params))   # one-time BN fold + merge

    B = 2
    x = jax.random.normal(kx, (B, 784), jnp.float32)   # state: flattened 28x28 image
    u = jax.random.normal(ku, (B, 1), jnp.float32)     # action (action_dim = 1)
    o = jax.random.normal(ko, (B, 1), jnp.float32)
    d = jax.random.normal(kd, (B, 1), jnp.float32)     # unused in forward, kept for parity

    q1, q2 = critic_forward(merged, x, u, o, d)
    jax.block_until_ready((q1, q2))
    assert q1.shape == (B, 1) and q2.shape == (B, 1)
    assert bool(jnp.isfinite(q1).all()) and bool(jnp.isfinite(q2).all())
    print("KERNEL_OK")
</pallas_src>

<mosaic_0001>
module attributes {stable_mosaic.version = 11 : i64} {
  func.func @_matmul_bias_relu_kernel(%arg0: i32, %arg1: memref<1024x9xbf16, #tpu.memory_space<vmem>>, %arg2: memref<9x20xbf16, #tpu.memory_space<vmem>>, %arg3: memref<1x20xf32, #tpu.memory_space<vmem>>, %arg4: memref<1024x20xbf16, #tpu.memory_space<vmem>>) attributes {dimension_semantics = [#tpu.dimension_semantics<parallel>], iteration_bounds = array<i64: 2>, scalar_prefetch = 0 : i64, scratch_operands = 0 : i64, tpu.core_type = #tpu.core_type<tc>, window_params = [{transform_indices = @transform_0, window_bounds = array<i64: 1024, 9>}, {pipeline_mode = #tpu.pipeline_mode<synchronous>, transform_indices = @transform_1, window_bounds = array<i64: 9, 20>}, {pipeline_mode = #tpu.pipeline_mode<synchronous>, transform_indices = @transform_2, window_bounds = array<i64: 1, 20>}, {transform_indices = @transform_3, window_bounds = array<i64: 1024, 20>}]} {
    %c0 = arith.constant 0 : index
    %c0_0 = arith.constant 0 : index
    %0 = vector.load %arg1[%c0, %c0_0] : memref<1024x9xbf16, #tpu.memory_space<vmem>>, vector<1024x9xbf16>
    %c0_1 = arith.constant 0 : index
    %c0_2 = arith.constant 0 : index
    %1 = vector.load %arg2[%c0_1, %c0_2] : memref<9x20xbf16, #tpu.memory_space<vmem>>, vector<9x20xbf16>
    %cst = arith.constant dense<0.000000e+00> : vector<1024x20xf32>
    %2 = tpu.matmul %0, %1, %cst {dimension_numbers = #tpu.dot_dimension_numbers<[1], [0], [0], [1], [0, 0, 1, 1], [], []>} : vector<1024x9xbf16>, vector<9x20xbf16>, vector<1024x20xf32> -> vector<1024x20xf32>
    %c0_3 = arith.constant 0 : index
    %c0_4 = arith.constant 0 : index
    %3 = vector.load %arg3[%c0_3, %c0_4] : memref<1x20xf32, #tpu.memory_space<vmem>>, vector<1x20xf32>
    %4 = vector.broadcast %3 : vector<1x20xf32> to vector<1024x20xf32>
    %5 = arith.addf %2, %4 : vector<1024x20xf32>
    %cst_5 = arith.constant 0.000000e+00 : f32
    %6 = vector.broadcast %cst_5 : f32 to vector<1024x20xf32>
    %7 = arith.maximumf %5, %6 : vector<1024x20xf32>
    %8 = arith.truncf %7 : vector<1024x20xf32> to vector<1024x20xbf16>
    %c0_6 = arith.constant 0 : index
    %c0_7 = arith.constant 0 : index
    %9 = vector.load %arg4[%c0_6, %c0_7] : memref<1024x20xbf16, #tpu.memory_space<vmem>>, vector<1024x20xbf16>
    tpu.vector_store %arg4[%c0_6, %c0_7], %8 {strides = array<i32>} : memref<1024x20xbf16, #tpu.memory_space<vmem>>, vector<1024x20xbf16>,
    return
  }
  func.func @transform_0(%arg0: i32) -> (i32, i32) {
    %c0_i32 = arith.constant 0 : i32
    %c0_i32_0 = arith.constant 0 : i32
    return %arg0, %c0_i32 : i32, i32
  }
  func.func @transform_1(%arg0: i32) -> (i32, i32) {
    %c0_i32 = arith.constant 0 : i32
    %c0_i32_0 = arith.constant 0 : i32
    %c0_i32_1 = arith.constant 0 : i32
    return %c0_i32, %c0_i32_0 : i32, i32
  }
  func.func @transform_2(%arg0: i32) -> (i32, i32) {
    %c0_i32 = arith.constant 0 : i32
    %c0_i32_0 = arith.constant 0 : i32
    %c0_i32_1 = arith.constant 0 : i32
    return %c0_i32, %c0_i32_0 : i32, i32
  }
  func.func @transform_3(%arg0: i32) -> (i32, i32) {
    %c0_i32 = arith.constant 0 : i32
    %c0_i32_0 = arith.constant 0 : i32
    return %arg0, %c0_i32 : i32, i32
  }
}

module attributes {stable_mosaic.version = 11 : i64} {
  func.func @_matmul_bias_relu_kernel(%arg0: i32, %arg1: memref<1024x180xbf16, #tpu.memory_space<vmem>>, %arg2: memref<180x20xbf16, #tpu.memory_space<vmem>>, %arg3: memref<1x20xf32, #tpu.memory_space<vmem>>, %arg4: memref<1024x20xbf16, #tpu.memory_space<vmem>>) attributes {dimension_semantics = [#tpu.dimension_semantics<parallel>], iteration_bounds = array<i64: 2>, scalar_prefetch = 0 : i64, scratch_operands = 0 : i64, tpu.core_type = #tpu.core_type<tc>, window_params = [{transform_indices = @transform_0, window_bounds = array<i64: 1024, 180>}, {pipeline_mode = #tpu.pipeline_mode<synchronous>, transform_indices = @transform_1, window_bounds = array<i64: 180, 20>}, {pipeline_mode = #tpu.pipeline_mode<synchronous>, transform_indices = @transform_2, window_bounds = array<i64: 1, 20>}, {transform_indices = @transform_3, window_bounds = array<i64: 1024, 20>}]} {
    %c0 = arith.constant 0 : index
    %c0_0 = arith.constant 0 : index
    %0 = vector.load %arg1[%c0, %c0_0] : memref<1024x180xbf16, #tpu.memory_space<vmem>>, vector<1024x180xbf16>
    %c0_1 = arith.constant 0 : index
    %c0_2 = arith.constant 0 : index
    %1 = vector.load %arg2[%c0_1, %c0_2] : memref<180x20xbf16, #tpu.memory_space<vmem>>, vector<180x20xbf16>
    %cst = arith.constant dense<0.000000e+00> : vector<1024x20xf32>
    %2 = tpu.matmul %0, %1, %cst {dimension_numbers = #tpu.dot_dimension_numbers<[1], [0], [0], [1], [0, 0, 1, 1], [], []>} : vector<1024x180xbf16>, vector<180x20xbf16>, vector<1024x20xf32> -> vector<1024x20xf32>
    %c0_3 = arith.constant 0 : index
    %c0_4 = arith.constant 0 : index
    %3 = vector.load %arg3[%c0_3, %c0_4] : memref<1x20xf32, #tpu.memory_space<vmem>>, vector<1x20xf32>
    %4 = vector.broadcast %3 : vector<1x20xf32> to vector<1024x20xf32>
    %5 = arith.addf %2, %4 : vector<1024x20xf32>
    %cst_5 = arith.constant 0.000000e+00 : f32
    %6 = vector.broadcast %cst_5 : f32 to vector<1024x20xf32>
    %7 = arith.maximumf %5, %6 : vector<1024x20xf32>
    %8 = arith.truncf %7 : vector<1024x20xf32> to vector<1024x20xbf16>
    %c0_6 = arith.constant 0 : index
    %c0_7 = arith.constant 0 : index
    %9 = vector.load %arg4[%c0_6, %c0_7] : memref<1024x20xbf16, #tpu.memory_space<vmem>>, vector<1024x20xbf16>
    tpu.vector_store %arg4[%c0_6, %c0_7], %8 {strides = array<i32>} : memref<1024x20xbf16, #tpu.memory_space<vmem>>, vector<1024x20xbf16>,
    return
  }
  func.func @transform_0(%arg0: i32) -> (i32, i32) {
    %c0_i32 = arith.constant 0 : i32
    %c0_i32_0 = arith.constant 0 : i32
    return %arg0, %c0_i32 : i32, i32
  }
  func.func @transform_1(%arg0: i32) -> (i32, i32) {
    %c0_i32 = arith.constant 0 : i32
    %c0_i32_0 = arith.constant 0 : i32
    %c0_i32_1 = arith.constant 0 : i32
    return %c0_i32, %c0_i32_0 : i32, i32
  }
  func.func @transform_2(%arg0: i32) -> (i32, i32) {
    %c0_i32 = arith.constant 0 : i32
    %c0_i32_0 = arith.constant 0 : i32
    %c0_i32_1 = arith.constant 0 : i32
    return %c0_i32, %c0_i32_0 : i32, i32
  }
  func.func @transform_3(%arg0: i32) -> (i32, i32) {
    %c0_i32 = arith.constant 0 : i32
    %c0_i32_0 = arith.constant 0 : i32
    return %arg0, %c0_i32 : i32, i32
  }
}

module attributes {stable_mosaic.version = 11 : i64} {
  func.func @_matmul_bias_relu_kernel(%arg0: i32, %arg1: memref<968x180xbf16, #tpu.memory_space<vmem>>, %arg2: memref<180x40xbf16, #tpu.memory_space<vmem>>, %arg3: memref<1x40xf32, #tpu.memory_space<vmem>>, %arg4: memref<968x40xbf16, #tpu.memory_space<vmem>>) attributes {dimension_semantics = [#tpu.dimension_semantics<parallel>], iteration_bounds = array<i64: 1>, scalar_prefetch = 0 : i64, scratch_operands = 0 : i64, tpu.core_type = #tpu.core_type<tc>, window_params = [{transform_indices = @transform_0, window_bounds = array<i64: 968, 180>}, {pipeline_mode = #tpu.pipeline_mode<synchronous>, transform_indices = @transform_1, window_bounds = array<i64: 180, 40>}, {pipeline_mode = #tpu.pipeline_mode<synchronous>, transform_indices = @transform_2, window_bounds = array<i64: 1, 40>}, {transform_indices = @transform_3, window_bounds = array<i64: 968, 40>}]} {
    %c0 = arith.constant 0 : index
    %c0_0 = arith.constant 0 : index
    %0 = vector.load %arg1[%c0, %c0_0] : memref<968x180xbf16, #tpu.memory_space<vmem>>, vector<968x180xbf16>
    %c0_1 = arith.constant 0 : index
    %c0_2 = arith.constant 0 : index
    %1 = vector.load %arg2[%c0_1, %c0_2] : memref<180x40xbf16, #tpu.memory_space<vmem>>, vector<180x40xbf16>
    %cst = arith.constant dense<0.000000e+00> : vector<968x40xf32>
    %2 = tpu.matmul %0, %1, %cst {dimension_numbers = #tpu.dot_dimension_numbers<[1], [0], [0], [1], [0, 0, 1, 1], [], []>} : vector<968x180xbf16>, vector<180x40xbf16>, vector<968x40xf32> -> vector<968x40xf32>
    %c0_3 = arith.constant 0 : index
    %c0_4 = arith.constant 0 : index
    %3 = vector.load %arg3[%c0_3, %c0_4] : memref<1x40xf32, #tpu.memory_space<vmem>>, vector<1x40xf32>
    %4 = vector.broadcast %3 : vector<1x40xf32> to vector<968x40xf32>
    %5 = arith.addf %2, %4 : vector<968x40xf32>
    %cst_5 = arith.constant 0.000000e+00 : f32
    %6 = vector.broadcast %cst_5 : f32 to vector<968x40xf32>
    %7 = arith.maximumf %5, %6 : vector<968x40xf32>
    %8 = arith.truncf %7 : vector<968x40xf32> to vector<968x40xbf16>
    %c0_6 = arith.constant 0 : index
    %c0_7 = arith.constant 0 : index
    %9 = vector.load %arg4[%c0_6, %c0_7] : memref<968x40xbf16, #tpu.memory_space<vmem>>, vector<968x40xbf16>
    tpu.vector_store %arg4[%c0_6, %c0_7], %8 {strides = array<i32>} : memref<968x40xbf16, #tpu.memory_space<vmem>>, vector<968x40xbf16>,
    return
  }
  func.func @transform_0(%arg0: i32) -> (i32, i32) {
    %c0_i32 = arith.constant 0 : i32
    %c0_i32_0 = arith.constant 0 : i32
    return %arg0, %c0_i32 : i32, i32
  }
  func.func @transform_1(%arg0: i32) -> (i32, i32) {
    %c0_i32 = arith.constant 0 : i32
    %c0_i32_0 = arith.constant 0 : i32
    %c0_i32_1 = arith.constant 0 : i32
    return %c0_i32, %c0_i32_0 : i32, i32
  }
  func.func @transform_2(%arg0: i32) -> (i32, i32) {
    %c0_i32 = arith.constant 0 : i32
    %c0_i32_0 = arith.constant 0 : i32
    %c0_i32_1 = arith.constant 0 : i32
    return %c0_i32, %c0_i32_0 : i32, i32
  }
  func.func @transform_3(%arg0: i32) -> (i32, i32) {
    %c0_i32 = arith.constant 0 : i32
    %c0_i32_0 = arith.constant 0 : i32
    return %arg0, %c0_i32 : i32, i32
  }
}

module attributes {stable_mosaic.version = 11 : i64} {
  func.func @_maxpool_conv1x1_relu_kernel(%arg0: i32, %arg1: memref<242x40xbf16, #tpu.memory_space<vmem>>, %arg2: memref<242x40xbf16, #tpu.memory_space<vmem>>, %arg3: memref<242x40xbf16, #tpu.memory_space<vmem>>, %arg4: memref<242x40xbf16, #tpu.memory_space<vmem>>, %arg5: memref<40x20xbf16, #tpu.memory_space<vmem>>, %arg6: memref<1x20xf32, #tpu.memory_space<vmem>>, %arg7: memref<242x20xbf16, #tpu.memory_space<vmem>>) attributes {dimension_semantics = [#tpu.dimension_semantics<parallel>], iteration_bounds = array<i64: 1>, scalar_prefetch = 0 : i64, scratch_operands = 0 : i64, tpu.core_type = #tpu.core_type<tc>, window_params = [{transform_indices = @transform_0, window_bounds = array<i64: 242, 40>}, {transform_indices = @transform_1, window_bounds = array<i64: 242, 40>}, {transform_indices = @transform_2, window_bounds = array<i64: 242, 40>}, {transform_indices = @transform_3, window_bounds = array<i64: 242, 40>}, {pipeline_mode = #tpu.pipeline_mode<synchronous>, transform_indices = @transform_4, window_bounds = array<i64: 40, 20>}, {pipeline_mode = #tpu.pipeline_mode<synchronous>, transform_indices = @transform_5, window_bounds = array<i64: 1, 20>}, {transform_indices = @transform_6, window_bounds = array<i64: 242, 20>}]} {
    %c0 = arith.constant 0 : index
    %c0_0 = arith.constant 0 : index
    %0 = vector.load %arg1[%c0, %c0_0] : memref<242x40xbf16, #tpu.memory_space<vmem>>, vector<242x40xbf16>
    %1 = arith.extf %0 : vector<242x40xbf16> to vector<242x40xf32>
    %c0_1 = arith.constant 0 : index
    %c0_2 = arith.constant 0 : index
    %2 = vector.load %arg2[%c0_1, %c0_2] : memref<242x40xbf16, #tpu.memory_space<vmem>>, vector<242x40xbf16>
    %3 = arith.extf %2 : vector<242x40xbf16> to vector<242x40xf32>
    %c0_3 = arith.constant 0 : index
    %c0_4 = arith.constant 0 : index
    %4 = vector.load %arg3[%c0_3, %c0_4] : memref<242x40xbf16, #tpu.memory_space<vmem>>, vector<242x40xbf16>
    %5 = arith.extf %4 : vector<242x40xbf16> to vector<242x40xf32>
    %c0_5 = arith.constant 0 : index
    %c0_6 = arith.constant 0 : index
    %6 = vector.load %arg4[%c0_5, %c0_6] : memref<242x40xbf16, #tpu.memory_space<vmem>>, vector<242x40xbf16>
    %7 = arith.extf %6 : vector<242x40xbf16> to vector<242x40xf32>
    %8 = arith.maximumf %1, %3 : vector<242x40xf32>
    %9 = arith.maximumf %5, %7 : vector<242x40xf32>
    %10 = arith.maximumf %8, %9 : vector<242x40xf32>
    %11 = arith.truncf %10 : vector<242x40xf32> to vector<242x40xbf16>
    %c0_7 = arith.constant 0 : index
    %c0_8 = arith.constant 0 : index
    %12 = vector.load %arg5[%c0_7, %c0_8] : memref<40x20xbf16, #tpu.memory_space<vmem>>, vector<40x20xbf16>
    %cst = arith.constant dense<0.000000e+00> : vector<242x20xf32>
    %13 = tpu.matmul %11, %12, %cst {dimension_numbers = #tpu.dot_dimension_numbers<[1], [0], [0], [1], [0, 0, 1, 1], [], []>} : vector<242x40xbf16>, vector<40x20xbf16>, vector<242x20xf32> -> vector<242x20xf32>
    %c0_9 = arith.constant 0 : index
    %c0_10 = arith.constant 0 : index
    %14 = vector.load %arg6[%c0_9, %c0_10] : memref<1x20xf32, #tpu.memory_space<vmem>>, vector<1x20xf32>
    %15 = vector.broadcast %14 : vector<1x20xf32> to vector<242x20xf32>
    %16 = arith.addf %13, %15 : vector<242x20xf32>
    %cst_11 = arith.constant 0.000000e+00 : f32
    %17 = vector.broadcast %cst_11 : f32 to vector<242x20xf32>
    %18 = arith.maximumf %16, %17 : vector<242x20xf32>
    %19 = arith.truncf %18 : vector<242x20xf32> to vector<242x20xbf16>
    %c0_12 = arith.constant 0 : index
    %c0_13 = arith.constant 0 : index
    %20 = vector.load %arg7[%c0_12, %c0_13] : memref<242x20xbf16, #tpu.memory_space<vmem>>, vector<242x20xbf16>
    tpu.vector_store %arg7[%c0_12, %c0_13], %19 {strides = array<i32>} : memref<242x20xbf16, #tpu.memory_space<vmem>>, vector<242x20xbf16>,
    return
  }
  func.func @transform_0(%arg0: i32) -> (i32, i32) {
    %c0_i32 = arith.constant 0 : i32
    %c0_i32_0 = arith.constant 0 : i32
    return %arg0, %c0_i32 : i32, i32
  }
  func.func @transform_1(%arg0: i32) -> (i32, i32) {
    %c0_i32 = arith.constant 0 : i32
    %c0_i32_0 = arith.constant 0 : i32
    return %arg0, %c0_i32 : i32, i32
  }
  func.func @transform_2(%arg0: i32) -> (i32, i32) {
    %c0_i32 = arith.constant 0 : i32
    %c0_i32_0 = arith.constant 0 : i32
    return %arg0, %c0_i32 : i32, i32
  }
  func.func @transform_3(%arg0: i32) -> (i32, i32) {
    %c0_i32 = arith.constant 0 : i32
    %c0_i32_0 = arith.constant 0 : i32
    return %arg0, %c0_i32 : i32, i32
  }
  func.func @transform_4(%arg0: i32) -> (i32, i32) {
    %c0_i32 = arith.constant 0 : i32
    %c0_i32_0 = arith.constant 0 : i32
    %c0_i32_1 = arith.constant 0 : i32
    return %c0_i32, %c0_i32_0 : i32, i32
  }
  func.func @transform_5(%arg0: i32) -> (i32, i32) {
    %c0_i32 = arith.constant 0 : i32
    %c0_i32_0 = arith.constant 0 : i32
    %c0_i32_1 = arith.constant 0 : i32
    return %c0_i32, %c0_i32_0 : i32, i32
  }
  func.func @transform_6(%arg0: i32) -> (i32, i32) {
    %c0_i32 = arith.constant 0 : i32
    %c0_i32_0 = arith.constant 0 : i32
    return %arg0, %c0_i32 : i32, i32
  }
}

module attributes {stable_mosaic.version = 11 : i64} {
  func.func @_matmul_bias_relu_kernel(%arg0: i32, %arg1: memref<162x180xbf16, #tpu.memory_space<vmem>>, %arg2: memref<180x20xbf16, #tpu.memory_space<vmem>>, %arg3: memref<1x20xf32, #tpu.memory_space<vmem>>, %arg4: memref<162x20xbf16, #tpu.memory_space<vmem>>) attributes {dimension_semantics = [#tpu.dimension_semantics<parallel>], iteration_bounds = array<i64: 1>, scalar_prefetch = 0 : i64, scratch_operands = 0 : i64, tpu.core_type = #tpu.core_type<tc>, window_params = [{transform_indices = @transform_0, window_bounds = array<i64: 162, 180>}, {pipeline_mode = #tpu.pipeline_mode<synchronous>, transform_indices = @transform_1, window_bounds = array<i64: 180, 20>}, {pipeline_mode = #tpu.pipeline_mode<synchronous>, transform_indices = @transform_2, window_bounds = array<i64: 1, 20>}, {transform_indices = @transform_3, window_bounds = array<i64: 162, 20>}]} {
    %c0 = arith.constant 0 : index
    %c0_0 = arith.constant 0 : index
    %0 = vector.load %arg1[%c0, %c0_0] : memref<162x180xbf16, #tpu.memory_space<vmem>>, vector<162x180xbf16>
    %c0_1 = arith.constant 0 : index
    %c0_2 = arith.constant 0 : index
    %1 = vector.load %arg2[%c0_1, %c0_2] : memref<180x20xbf16, #tpu.memory_space<vmem>>, vector<180x20xbf16>
    %cst = arith.constant dense<0.000000e+00> : vector<162x20xf32>
    %2 = tpu.matmul %0, %1, %cst {dimension_numbers = #tpu.dot_dimension_numbers<[1], [0], [0], [1], [0, 0, 1, 1], [], []>} : vector<162x180xbf16>, vector<180x20xbf16>, vector<162x20xf32> -> vector<162x20xf32>
    %c0_3 = arith.constant 0 : index
    %c0_4 = arith.constant 0 : index
    %3 = vector.load %arg3[%c0_3, %c0_4] : memref<1x20xf32, #tpu.memory_space<vmem>>, vector<1x20xf32>
    %4 = vector.broadcast %3 : vector<1x20xf32> to vector<162x20xf32>
    %5 = arith.addf %2, %4 : vector<162x20xf32>
    %cst_5 = arith.constant 0.000000e+00 : f32
    %6 = vector.broadcast %cst_5 : f32 to vector<162x20xf32>
    %7 = arith.maximumf %5, %6 : vector<162x20xf32>
    %8 = arith.truncf %7 : vector<162x20xf32> to vector<162x20xbf16>
    %c0_6 = arith.constant 0 : index
    %c0_7 = arith.constant 0 : index
    %9 = vector.load %arg4[%c0_6, %c0_7] : memref<162x20xbf16, #tpu.memory_space<vmem>>, vector<162x20xbf16>
    tpu.vector_store %arg4[%c0_6, %c0_7], %8 {strides = array<i32>} : memref<162x20xbf16, #tpu.memory_space<vmem>>, vector<162x20xbf16>,
    return
  }
  func.func @transform_0(%arg0: i32) -> (i32, i32) {
    %c0_i32 = arith.constant 0 : i32
    %c0_i32_0 = arith.constant 0 : i32
    return %arg0, %c0_i32 : i32, i32
  }
  func.func @transform_1(%arg0: i32) -> (i32, i32) {
    %c0_i32 = arith.constant 0 : i32
    %c0_i32_0 = arith.constant 0 : i32
    %c0_i32_1 = arith.constant 0 : i32
    return %c0_i32, %c0_i32_0 : i32, i32
  }
  func.func @transform_2(%arg0: i32) -> (i32, i32) {
    %c0_i32 = arith.constant 0 : i32
    %c0_i32_0 = arith.constant 0 : i32
    %c0_i32_1 = arith.constant 0 : i32
    return %c0_i32, %c0_i32_0 : i32, i32
  }
  func.func @transform_3(%arg0: i32) -> (i32, i32) {
    %c0_i32 = arith.constant 0 : i32
    %c0_i32_0 = arith.constant 0 : i32
    return %arg0, %c0_i32 : i32, i32
  }
}

module attributes {stable_mosaic.version = 11 : i64} {
  func.func @_tail_kernel(%arg0: i32, %arg1: memref<392x180xbf16, #tpu.memory_space<vmem>>, %arg2: memref<8x3xf32, #tpu.memory_space<vmem>>, %arg3: memref<180x40xbf16, #tpu.memory_space<vmem>>, %arg4: memref<1x40xf32, #tpu.memory_space<vmem>>, %arg5: memref<40x20xbf16, #tpu.memory_space<vmem>>, %arg6: memref<1x20xf32, #tpu.memory_space<vmem>>, %arg7: memref<8x392xbf16, #tpu.memory_space<vmem>>, %arg8: memref<20x100xf32, #tpu.memory_space<vmem>>, %arg9: memref<3x100xf32, #tpu.memory_space<vmem>>, %arg10: memref<1x100xf32, #tpu.memory_space<vmem>>, %arg11: memref<100x20xf32, #tpu.memory_space<vmem>>, %arg12: memref<1x20xf32, #tpu.memory_space<vmem>>, %arg13: memref<20x2xf32, #tpu.memory_space<vmem>>, %arg14: memref<1x2xf32, #tpu.memory_space<vmem>>, %arg15: memref<8x2xf32, #tpu.memory_space<vmem>>) attributes {dimension_semantics = [#tpu.dimension_semantics<parallel>], iteration_bounds = array<i64: 1>, scalar_prefetch = 0 : i64, scratch_operands = 0 : i64, tpu.core_type = #tpu.core_type<tc>, window_params = [{transform_indices = @transform_0, window_bounds = array<i64: 392, 180>}, {transform_indices = @transform_1, window_bounds = array<i64: 8, 3>}, {pipeline_mode = #tpu.pipeline_mode<synchronous>, transform_indices = @transform_2, window_bounds = array<i64: 180, 40>}, {pipeline_mode = #tpu.pipeline_mode<synchronous>, transform_indices = @transform_3, window_bounds = array<i64: 1, 40>}, {pipeline_mode = #tpu.pipeline_mode<synchronous>, transform_indices = @transform_4, window_bounds = array<i64: 40, 20>}, {pipeline_mode = #tpu.pipeline_mode<synchronous>, transform_indices = @transform_5, window_bounds = array<i64: 1, 20>}, {pipeline_mode = #tpu.pipeline_mode<synchronous>, transform_indices = @transform_6, window_bounds = array<i64: 8, 392>}, {pipeline_mode = #tpu.pipeline_mode<synchronous>, transform_indices = @transform_7, window_bounds = array<i64: 20, 100>}, {pipeline_mode = #tpu.pipeline_mode<synchronous>, transform_indices = @transform_8, window_bounds = array<i64: 3, 100>}, {pipeline_mode = #tpu.pipeline_mode<synchronous>, transform_indices = @transform_9, window_bounds = array<i64: 1, 100>}, {pipeline_mode = #tpu.pipeline_mode<synchronous>, transform_indices = @transform_10, window_bounds = array<i64: 100, 20>}, {pipeline_mode = #tpu.pipeline_mode<synchronous>, transform_indices = @transform_11, window_bounds = array<i64: 1, 20>}, {pipeline_mode = #tpu.pipeline_mode<synchronous>, transform_indices = @transform_12, window_bounds = array<i64: 20, 2>}, {pipeline_mode = #tpu.pipeline_mode<synchronous>, transform_indices = @transform_13, window_bounds = array<i64: 1, 2>}, {transform_indices = @transform_14, window_bounds = array<i64: 8, 2>}]} {
    %c0 = arith.constant 0 : index
    %c0_0 = arith.constant 0 : index
    %0 = vector.load %arg1[%c0, %c0_0] : memref<392x180xbf16, #tpu.memory_space<vmem>>, vector<392x180xbf16>
    %c0_1 = arith.constant 0 : index
    %c0_2 = arith.constant 0 : index
    %1 = vector.load %arg3[%c0_1, %c0_2] : memref<180x40xbf16, #tpu.memory_space<vmem>>, vector<180x40xbf16>
    %cst = arith.constant dense<0.000000e+00> : vector<392x40xf32>
    %2 = tpu.matmul %0, %1, %cst {dimension_numbers = #tpu.dot_dimension_numbers<[1], [0], [0], [1], [0, 0, 1, 1], [], []>} : vector<392x180xbf16>, vector<180x40xbf16>, vector<392x40xf32> -> vector<392x40xf32>
    %c0_3 = arith.constant 0 : index
    %c0_4 = arith.constant 0 : index
    %3 = vector.load %arg4[%c0_3, %c0_4] : memref<1x40xf32, #tpu.memory_space<vmem>>, vector<1x40xf32>
    %4 = vector.broadcast %3 : vector<1x40xf32> to vector<392x40xf32>
    %5 = arith.addf %2, %4 : vector<392x40xf32>
    %cst_5 = arith.constant 0.000000e+00 : f32
    %6 = vector.broadcast %cst_5 : f32 to vector<392x40xf32>
    %7 = arith.maximumf %5, %6 : vector<392x40xf32>
    %8 = arith.truncf %7 : vector<392x40xf32> to vector<392x40xbf16>
    %c0_6 = arith.constant 0 : index
    %c0_7 = arith.constant 0 : index
    %9 = vector.load %arg5[%c0_6, %c0_7] : memref<40x20xbf16, #tpu.memory_space<vmem>>, vector<40x20xbf16>
    %cst_8 = arith.constant dense<0.000000e+00> : vector<392x20xf32>
    %10 = tpu.matmul %8, %9, %cst_8 {dimension_numbers = #tpu.dot_dimension_numbers<[1], [0], [0], [1], [0, 0, 1, 1], [], []>} : vector<392x40xbf16>, vector<40x20xbf16>, vector<392x20xf32> -> vector<392x20xf32>
    %c0_9 = arith.constant 0 : index
    %c0_10 = arith.constant 0 : index
    %11 = vector.load %arg6[%c0_9, %c0_10] : memref<1x20xf32, #tpu.memory_space<vmem>>, vector<1x20xf32>
    %12 = vector.broadcast %11 : vector<1x20xf32> to vector<392x20xf32>
    %13 = arith.addf %10, %12 : vector<392x20xf32>
    %cst_11 = arith.constant 0.000000e+00 : f32
    %14 = vector.broadcast %cst_11 : f32 to vector<392x20xf32>
    %15 = arith.maximumf %13, %14 : vector<392x20xf32>
    %c0_12 = arith.constant 0 : index
    %c0_13 = arith.constant 0 : index
    %16 = vector.load %arg7[%c0_12, %c0_13] : memref<8x392xbf16, #tpu.memory_space<vmem>>, vector<8x392xbf16>
    %17 = arith.truncf %15 : vector<392x20xf32> to vector<392x20xbf16>
    %cst_14 = arith.constant dense<0.000000e+00> : vector<8x20xf32>
    %18 = tpu.matmul %16, %17, %cst_14 {dimension_numbers = #tpu.dot_dimension_numbers<[1], [0], [0], [1], [0, 0, 1, 1], [], []>} : vector<8x392xbf16>, vector<392x20xbf16>, vector<8x20xf32> -> vector<8x20xf32>
    %cst_15 = arith.constant 0.0204081628 : f32
    %19 = vector.broadcast %cst_15 : f32 to vector<8x20xf32>
    %20 = arith.mulf %18, %19 : vector<8x20xf32>
    %c0_16 = arith.constant 0 : index
    %c0_17 = arith.constant 0 : index
    %21 = vector.load %arg8[%c0_16, %c0_17] : memref<20x100xf32, #tpu.memory_space<vmem>>, vector<20x100xf32>
    %cst_18 = arith.constant dense<0.000000e+00> : vector<8x100xf32>
    %22 = tpu.matmul %20, %21, %cst_18 {dimension_numbers = #tpu.dot_dimension_numbers<[1], [0], [0], [1], [0, 0, 1, 1], [], []>} : vector<8x20xf32>, vector<20x100xf32>, vector<8x100xf32> -> vector<8x100xf32>
    %c0_19 = arith.constant 0 : index
    %c0_20 = arith.constant 0 : index
    %23 = vector.load %arg2[%c0_19, %c0_20] : memref<8x3xf32, #tpu.memory_space<vmem>>, vector<8x3xf32>
    %c0_21 = arith.constant 0 : index
    %c0_22 = arith.constant 0 : index
    %24 = vector.load %arg9[%c0_21, %c0_22] : memref<3x100xf32, #tpu.memory_space<vmem>>, vector<3x100xf32>
    %cst_23 = arith.constant dense<0.000000e+00> : vector<8x100xf32>
    %25 = tpu.matmul %23, %24, %cst_23 {dimension_numbers = #tpu.dot_dimension_numbers<[1], [0], [0], [1], [0, 0, 1, 1], [], []>} : vector<8x3xf32>, vector<3x100xf32>, vector<8x100xf32> -> vector<8x100xf32>
    %26 = arith.addf %22, %25 : vector<8x100xf32>
    %c0_24 = arith.constant 0 : index
    %c0_25 = arith.constant 0 : index
    %27 = vector.load %arg10[%c0_24, %c0_25] : memref<1x100xf32, #tpu.memory_space<vmem>>, vector<1x100xf32>
    %28 = vector.broadcast %27 : vector<1x100xf32> to vector<8x100xf32>
    %29 = arith.addf %26, %28 : vector<8x100xf32>
    %cst_26 = arith.constant 0.000000e+00 : f32
    %30 = vector.broadcast %cst_26 : f32 to vector<8x100xf32>
    %31 = arith.maximumf %29, %30 : vector<8x100xf32>
    %c0_27 = arith.constant 0 : index
    %c0_28 = arith.constant 0 : index
    %32 = vector.load %arg11[%c0_27, %c0_28] : memref<100x20xf32, #tpu.memory_space<vmem>>, vector<100x20xf32>
    %cst_29 = arith.constant dense<0.000000e+00> : vector<8x20xf32>
    %33 = tpu.matmul %31, %32, %cst_29 {dimension_numbers = #tpu.dot_dimension_numbers<[1], [0], [0], [1], [0, 0, 1, 1], [], []>} : vector<8x100xf32>, vector<100x20xf32>, vector<8x20xf32> -> vector<8x20xf32>
    %c0_30 = arith.constant 0 : index
    %c0_31 = arith.constant 0 : index
    %34 = vector.load %arg12[%c0_30, %c0_31] : memref<1x20xf32, #tpu.memory_space<vmem>>, vector<1x20xf32>
    %35 = vector.broadcast %34 : vector<1x20xf32> to vector<8x20xf32>
    %36 = arith.addf %33, %35 : vector<8x20xf32>
    %cst_32 = arith.constant 0.000000e+00 : f32
    %37 = vector.broadcast %cst_32 : f32 to vector<8x20xf32>
    %38 = arith.maximumf %36, %37 : vector<8x20xf32>
    %c0_33 = arith.constant 0 : index
    %c0_34 = arith.constant 0 : index
    %39 = vector.load %arg13[%c0_33, %c0_34] : memref<20x2xf32, #tpu.memory_space<vmem>>, vector<20x2xf32>
    %cst_35 = arith.constant dense<0.000000e+00> : vector<8x2xf32>
    %40 = tpu.matmul %38, %39, %cst_35 {dimension_numbers = #tpu.dot_dimension_numbers<[1], [0], [0], [1], [0, 0, 1, 1], [], []>} : vector<8x20xf32>, vector<20x2xf32>, vector<8x2xf32> -> vector<8x2xf32>
    %c0_36 = arith.constant 0 : index
    %c0_37 = arith.constant 0 : index
    %41 = vector.load %arg14[%c0_36, %c0_37] : memref<1x2xf32, #tpu.memory_space<vmem>>, vector<1x2xf32>
    %42 = vector.broadcast %41 : vector<1x2xf32> to vector<8x2xf32>
    %43 = arith.addf %40, %42 : vector<8x2xf32>
    %c0_38 = arith.constant 0 : index
    %c0_39 = arith.constant 0 : index
    %44 = vector.load %arg15[%c0_38, %c0_39] : memref<8x2xf32, #tpu.memory_space<vmem>>, vector<8x2xf32>
    tpu.vector_store %arg15[%c0_38, %c0_39], %43 {strides = array<i32>} : memref<8x2xf32, #tpu.memory_space<vmem>>, vector<8x2xf32>,
    return
  }
  func.func @transform_0(%arg0: i32) -> (i32, i32) {
    %c0_i32 = arith.constant 0 : i32
    %c0_i32_0 = arith.constant 0 : i32
    return %arg0, %c0_i32 : i32, i32
  }
  func.func @transform_1(%arg0: i32) -> (i32, i32) {
    %c0_i32 = arith.constant 0 : i32
    %c0_i32_0 = arith.constant 0 : i32
    return %arg0, %c0_i32 : i32, i32
  }
  func.func @transform_2(%arg0: i32) -> (i32, i32) {
    %c0_i32 = arith.constant 0 : i32
    %c0_i32_0 = arith.constant 0 : i32
    %c0_i32_1 = arith.constant 0 : i32
    return %c0_i32, %c0_i32_0 : i32, i32
  }
  func.func @transform_3(%arg0: i32) -> (i32, i32) {
    %c0_i32 = arith.constant 0 : i32
    %c0_i32_0 = arith.constant 0 : i32
    %c0_i32_1 = arith.constant 0 : i32
    return %c0_i32, %c0_i32_0 : i32, i32
  }
  func.func @transform_4(%arg0: i32) -> (i32, i32) {
    %c0_i32 = arith.constant 0 : i32
    %c0_i32_0 = arith.constant 0 : i32
    %c0_i32_1 = arith.constant 0 : i32
    return %c0_i32, %c0_i32_0 : i32, i32
  }
  func.func @transform_5(%arg0: i32) -> (i32, i32) {
    %c0_i32 = arith.constant 0 : i32
    %c0_i32_0 = arith.constant 0 : i32
    %c0_i32_1 = arith.constant 0 : i32
    return %c0_i32, %c0_i32_0 : i32, i32
  }
  func.func @transform_6(%arg0: i32) -> (i32, i32) {
    %c0_i32 = arith.constant 0 : i32
    %c0_i32_0 = arith.constant 0 : i32
    %c0_i32_1 = arith.constant 0 : i32
    return %c0_i32, %c0_i32_0 : i32, i32
  }
  func.func @transform_7(%arg0: i32) -> (i32, i32) {
    %c0_i32 = arith.constant 0 : i32
    %c0_i32_0 = arith.constant 0 : i32
    %c0_i32_1 = arith.constant 0 : i32
    return %c0_i32, %c0_i32_0 : i32, i32
  }
  func.func @transform_8(%arg0: i32) -> (i32, i32) {
    %c0_i32 = arith.constant 0 : i32
    %c0_i32_0 = arith.constant 0 : i32
    %c0_i32_1 = arith.constant 0 : i32
    return %c0_i32, %c0_i32_0 : i32, i32
  }
  func.func @transform_9(%arg0: i32) -> (i32, i32) {
    %c0_i32 = arith.constant 0 : i32
    %c0_i32_0 = arith.constant 0 : i32
    %c0_i32_1 = arith.constant 0 : i32
    return %c0_i32, %c0_i32_0 : i32, i32
  }
  func.func @transform_10(%arg0: i32) -> (i32, i32) {
    %c0_i32 = arith.constant 0 : i32
    %c0_i32_0 = arith.constant 0 : i32
    %c0_i32_1 = arith.constant 0 : i32
    return %c0_i32, %c0_i32_0 : i32, i32
  }
  func.func @transform_11(%arg0: i32) -> (i32, i32) {
    %c0_i32 = arith.constant 0 : i32
    %c0_i32_0 = arith.constant 0 : i32
    %c0_i32_1 = arith.constant 0 : i32
    return %c0_i32, %c0_i32_0 : i32, i32
  }
  func.func @transform_12(%arg0: i32) -> (i32, i32) {
    %c0_i32 = arith.constant 0 : i32
    %c0_i32_0 = arith.constant 0 : i32
    %c0_i32_1 = arith.constant 0 : i32
    return %c0_i32, %c0_i32_0 : i32, i32
  }
  func.func @transform_13(%arg0: i32) -> (i32, i32) {
    %c0_i32 = arith.constant 0 : i32
    %c0_i32_0 = arith.constant 0 : i32
    %c0_i32_1 = arith.constant 0 : i32
    return %c0_i32, %c0_i32_0 : i32, i32
  }
  func.func @transform_14(%arg0: i32) -> (i32, i32) {
    %c0_i32 = arith.constant 0 : i32
    %c0_i32_0 = arith.constant 0 : i32
    return %arg0, %c0_i32 : i32, i32
  }
}

</mosaic_0001>

<llo_original>
// kernel: critic_forward.6
$region0: #{critic_forward.6}
  #allocation0 [shape = 'u32[]', space=smem, size = 0x4, offset = 0x4, fixed_abs, tag = 'smem constant byte address 0x4 - core index']
  #allocation1 [shape = 'u32[144,128]{1,0:T(1,128)}', space=vmem, size = 0x12000, scoped, tag = 'internal scratch']
  %s0 = inlined_call_operand.vmem [shape: bf16[1352,9], index: 0, kind: input, shape index: {}]
  %s1 = inlined_call_operand.vmem [shape: bf16[9,20], index: 1, kind: input, shape index: {}]
  %s2 = inlined_call_operand.vmem [shape: f32[1,20], index: 2, kind: input, shape index: {}]
  %s3 = inlined_call_operand.vmem [shape: bf16[1352,20], index: 3, kind: output, shape index: {}]
  %s4 = sld [smem:[#allocation0]]
  $region89: #{critic_forward.6} parent=0
    _
  %s6 = ssub.s32 1, %s4
  %s7 = scalar_select 0, %s6, %s4
  $region1: #{critic_forward.6} parent=0
    #allocation2 [shape = 'u8[524288]{0}', space=vmem, size = 0x80000, scoped, tag = 'output window, operand 0']
    loop: start=0, step=1, limit=4
    $region2: #{critic_forward.6} parent=1 // loop_pre_header
      _
    $region3: #{critic_forward.6} parent=1 // loop_header
      %s9 = sphi 0, %s13
      %p10 = scmp.ge.s32.totalorder %s9, 4
      %s19 = sphi 0, %s21
      %s22 = sphi 0, %s19
      %s23 = sphi 0, %s22
      %s39 = sphi 0, %s23
      %s43 = sphi 0, %s43
      %s45 = sphi 0, %s43
      %s46 = sphi 0, %s45
      %s60 = sphi 0, %s46
      %s64 = sphi 0, %s64
      %s66 = sphi 0, %s64
      %s67 = sphi 0, %s66
      %s81 = sphi 0, %s67
      %s87 = sphi 0, %s89
      %s90 = sphi 0, %s87
      %s91 = sphi 0, %s90
      %s107 = sphi 0, %s91
    $region4: #{critic_forward.6} parent=1 // loop_header_branch
      %12 = sbr.rel (%p10) target = $region8
    $region5: #{critic_forward.6} parent=1 // loop_body
      %s14 = ssub.s32 %s9, 1
      %s15 = ssub.s32 %s9, 2
      %s16 = sadd.s32 %s9, 1
      %s17 = ssub.s32 %s9, %s16
      %p18 = scmp.eq.s32.totalorder %s17, 0
      %s20 = sadd.s32 %s19, 1
      %s21 = scalar_select %p18, %s19, %s20
      %p24 = pneg %p18
      %p25 = scmp.eq.s32.totalorder %s9, 1
      %p26 = por %p24, %p25
      %p27 = scmp.ne.s32.totalorder %s19, %s22
      %p28 = scmp.eq.s32.totalorder %s9, 0
      %p29 = por %p27, %p28
      %p30 = scmp.ne.s32.totalorder %s19, %s22
      %p31 = scmp.eq.s32.totalorder %s14, 1
      %p32 = por %p30, %p31
      %p33 = scmp.ne.s32.totalorder %s22, %s23
      %p34 = scmp.eq.s32.totalorder %s14, 0
      %p35 = por %p33, %p34
      %p36 = scmp.ne.s32.totalorder %s22, %s23
      %p37 = scmp.eq.s32.totalorder %s15, 1
      %p38 = por %p36, %p37
      %p40 = scmp.ne.s32.totalorder %s23, %s39
      %p41 = scmp.eq.s32.totalorder %s15, 0
      %p42 = por %p40, %p41
      %s44 = sadd.s32 %s43, 1
      %p47 = scmp.eq.s32.totalorder %s9, 1
      %p48 = scmp.ne.s32.totalorder %s43, %s45
      %p49 = scmp.eq.s32.totalorder %s9, 0
      %p50 = por %p48, %p49
      %p51 = scmp.ne.s32.totalorder %s43, %s45
      %p52 = scmp.eq.s32.totalorder %s14, 1
      %p53 = por %p51, %p52
      %p54 = scmp.ne.s32.totalorder %s45, %s46
      %p55 = scmp.eq.s32.totalorder %s14, 0
      %p56 = por %p54, %p55
      %p57 = scmp.ne.s32.totalorder %s45, %s46
      %p58 = scmp.eq.s32.totalorder %s15, 1
      %p59 = por %p57, %p58
      %p61 = scmp.ne.s32.totalorder %s46, %s60
      %p62 = scmp.eq.s32.totalorder %s15, 0
      %p63 = por %p61, %p62
      %s65 = sadd.s32 %s64, 1
      %p68 = scmp.eq.s32.totalorder %s9, 1
      %p69 = scmp.ne.s32.totalorder %s64, %s66
      %p70 = scmp.eq.s32.totalorder %s9, 0
      %p71 = por %p69, %p70
      %p72 = scmp.ne.s32.totalorder %s64, %s66
      %p73 = scmp.eq.s32.totalorder %s14, 1
      %p74 = por %p72, %p73
      %p75 = scmp.ne.s32.totalorder %s66, %s67
      %p76 = scmp.eq.s32.totalorder %s14, 0
      %p77 = por %p75, %p76
      %p78 = scmp.ne.s32.totalorder %s66, %s67
      %p79 = scmp.eq.s32.totalorder %s15, 1
      %p80 = por %p78, %p79
      %p82 = scmp.ne.s32.totalorder %s67, %s81
      %p83 = scmp.eq.s32.totalorder %s15, 0
      %p84 = por %p82, %p83
      %s85 = ssub.s32 %s9, %s16
      %p86 = scmp.eq.s32.totalorder %s85, 0
      %s88 = sadd.s32 %s87, 1
      %s89 = scalar_select %p86, %s87, %s88
      %p92 = pneg %p86
      %p93 = scmp.eq.s32.totalorder %s9, 1
      %p94 = por %p92, %p93
      %p95 = scmp.ne.s32.totalorder %s87, %s90
      %p96 = scmp.eq.s32.totalorder %s9, 0
      %p97 = por %p95, %p96
      %p98 = scmp.ne.s32.totalorder %s87, %s90
      %p99 = scmp.eq.s32.totalorder %s14, 1
      %p100 = por %p98, %p99
      %p101 = scmp.ne.s32.totalorder %s90, %s91
      %p102 = scmp.eq.s32.totalorder %s14, 0
      %p103 = por %p101, %p102
      %p104 = scmp.ne.s32.totalorder %s90, %s91
      %p105 = scmp.eq.s32.totalorder %s15, 1
      %p106 = por %p104, %p105
      %p108 = scmp.ne.s32.totalorder %s91, %s107
      %p109 = scmp.eq.s32.totalorder %s15, 0
      %p110 = por %p108, %p109
      %p111 = scmp.le.s32.totalorder 1, %s9
      %p112 = scmp.lt.s32.totalorder %s9, 3
      %p113 = pnand %p111, %p112
      %p114 = pneg %p113
      // Predicated region
      $region9: #{critic_forward.6} parent=5 // pred_check
        _
      $region10: #{critic_forward.6} parent=5 // pred_check_branch
        %116 = sbr.rel (%p113) target = $region12
      $region11: #{critic_forward.6} parent=5 // pred_region
        %s117 = ssub.s32 %s9, 1
        // Predicated region
        $region13: #{critic_forward.6} parent=11 // pred_check
          %p118 = pneg %p56
        $region14: #{critic_forward.6} parent=11 // pred_check_branch
          %120 = sbr.rel (%p118) target = $region16
        $region15: #{critic_forward.6} parent=11 // pred_region
          _
        $region16: #{critic_forward.6} parent=11 // pred_fallthru
          _
        // Predicated region
        $region17: #{critic_forward.6} parent=11 // pred_check
          %p121 = pneg %p77
        $region18: #{critic_forward.6} parent=11 // pred_check_branch
          %123 = sbr.rel (%p121) target = $region20
        $region19: #{critic_forward.6} parent=11 // pred_region
          _
        $region20: #{critic_forward.6} parent=11 // pred_fallthru
          _
      $region12: #{critic_forward.6} parent=5 // pred_fallthru
        _
      %p124 = scmp.lt.s32.totalorder %s9, 2
      // Predicated region
      $region21: #{critic_forward.6} parent=5 // pred_check
        %p125 = pneg %p124
      $region22: #{critic_forward.6} parent=5 // pred_check_branch
        %127 = sbr.rel (%p125) target = $region24
      $region23: #{critic_forward.6} parent=5 // pred_region
        // Predicated region
        $region25: #{critic_forward.6} parent=23 // pred_check
          %p128 = pneg %p29
        $region26: #{critic_forward.6} parent=23 // pred_check_branch
          %130 = sbr.rel (%p128) target = $region28
        $region27: #{critic_forward.6} parent=23 // pred_region
          %s131 = smul.u32 128, %s9
          %s132 = ssub.s32 169, %s131
          %p133 = scmp.lt.s32.totalorder %s132, 128
          %s134 = scalar_select %p133, %s132, 128
          %s135 = smul.u32 64, %s134
          %p136 = scmp.lt.s32.totalorder %s131, 168
          %s137 = scalar_select %p136, %s131, 168
          %s138 = smul.addr %s137, 4
          %s139 = scalar_lea.vmem %s0, %s138
          %s140 = smul.u32 128, %s9
          %s141 = ssub.s32 169, %s140
          %p142 = scmp.lt.s32.totalorder %s141, 128
          %s143 = scalar_select %p142, %s141, 128
          %s144 = smul.u32 64, %s143
        $region28: #{critic_forward.6} parent=23 // pred_fallthru
          _
      $region24: #{critic_forward.6} parent=5 // pred_fallthru
        _
      %p145 = scmp.le.s32.totalorder 1, %s9
      %p146 = scmp.lt.s32.totalorder %s9, 3
      %p147 = pnand %p145, %p146
      %p148 = pneg %p147
      // Predicated region
      $region29: #{critic_forward.6} parent=5 // pred_check
        _
      $region30: #{critic_forward.6} parent=5 // pred_check_branch
        %150 = sbr.rel (%p147) target = $region32
      $region31: #{critic_forward.6} parent=5 // pred_region
        %s151 = ssub.s32 %s9, 1
        %s152 = smul.u32 128, %s14
        %s153 = ssub.s32 169, %s152
        %p154 = scmp.lt.s32.totalorder %s153, 128
        %s155 = scalar_select %p154, %s153, 128
        %s156 = smul.u32 64, %s155
        %p157 = scmp.lt.s32.totalorder %s152, 168
        %s158 = scalar_select %p157, %s152, 168
        %s159 = smul.addr %s158, 4
        %s160 = scalar_lea.vmem %s0, %s159
        %p161 = pneg %p35
        %p162 = pneg %p32
        %p163 = pneg %p56
        %p164 = pneg %p53
        %p165 = pneg %p77
        %p166 = pneg %p74
        %p167 = pneg %p103
        %p168 = pneg %p100
        %s169 = sand.u32 %s90, 1
        %s170 = sand.u32 %s90, 1
        %s171 = smul.addr %s170, 512
        %s172 = scalar_lea.vmem [#allocation2], %s171
        %s173 = smul.u32 128, %s14
        %s174 = ssub.s32 169, %s173
        %p175 = scmp.lt.s32.totalorder %s174, 128
        %s176 = scalar_select %p175, %s174, 128
        %s177 = smul.u32 64, %s176
        %p178 = scmp.lt.s32.totalorder %s173, 168
        %s179 = scalar_select %p178, %s173, 168
        %s180 = smul.addr %s179, 4
        %s181 = scalar_lea.vmem %s0, %s180
        %s182 = smul.u32 128, %s14
        %s183 = ssub.s32 169, %s182
        %p184 = scmp.lt.s32.totalorder %s183, 128
        %s185 = scalar_select %p184, %s183, 128
        %s186 = smul.u32 64, %s185
        %s187 = smul.u32 128, %s14
        %s188 = ssub.s32 169, %s187
        %p189 = scmp.lt.s32.totalorder %s188, 128
        %s190 = scalar_select %p189, %s188, 128
        %s191 = smul.u32 64, %s190
        %v193 = vld [vmem:[%s181] sm:$0xf]
        %v194 = vld [vmem:[%s181 + $0x4] sm:$0xf]
        %v195 = vld [vmem:[%s181 + $0x8] sm:$0xf]
        %v196 = vld [vmem:[%s181 + $0xc] sm:$0xf]
        %v197 = vld [vmem:[%s181 + $0x10] sm:$0xf]
        %v198 = vld [vmem:[%s181 + $0x14] sm:$0xf]
        %v199 = vld [vmem:[%s181 + $0x18] sm:$0xf]
        %v200 = vld [vmem:[%s181 + $0x1c] sm:$0xf]
        %v201 = vld [vmem:[%s181 + $0x20] sm:$0xf]
        %v202 = vld [vmem:[%s181 + $0x24] sm:$0xf]
        %v203 = vld [vmem:[%s181 + $0x28] sm:$0xf]
        %v204 = vld [vmem:[%s181 + $0x2c] sm:$0xf]
        %v205 = vld [vmem:[%s181 + $0x30] sm:$0xf]
        %v206 = vld [vmem:[%s181 + $0x34] sm:$0xf]
        %v207 = vld [vmem:[%s181 + $0x38] sm:$0xf]
        %v208 = vld [vmem:[%s181 + $0x3c] sm:$0xf]
        %v209 = vld [vmem:[%s181 + $0x40] sm:$0xf]
        %v210 = vld [vmem:[%s181 + $0x44] sm:$0xf]
        %v211 = vld [vmem:[%s181 + $0x48] sm:$0xf]
        %v212 = vld [vmem:[%s181 + $0x4c] sm:$0xf]
        %v213 = vld [vmem:[%s181 + $0x50] sm:$0xf]
        %v214 = vld [vmem:[%s181 + $0x54] sm:$0xf]
        %v215 = vld [vmem:[%s181 + $0x58] sm:$0xf]
        %v216 = vld [vmem:[%s181 + $0x5c] sm:$0xf]
        %v217 = vld [vmem:[%s181 + $0x60] sm:$0xf]
        %v218 = vld [vmem:[%s181 + $0x64] sm:$0xf]
        %v219 = vld [vmem:[%s181 + $0x68] sm:$0xf]
        %v220 = vld [vmem:[%s181 + $0x6c] sm:$0xf]
        %v221 = vld [vmem:[%s181 + $0x70] sm:$0xf]
        %v222 = vld [vmem:[%s181 + $0x74] sm:$0xf]
        %v223 = vld [vmem:[%s181 + $0x78] sm:$0xf]
        %v224 = vld [vmem:[%s181 + $0x7c] sm:$0xf]
        %v225 = vld [vmem:[%s181 + $0x80] sm:$0xf]
        %v226 = vld [vmem:[%s181 + $0x84] sm:$0xf]
        %v227 = vld [vmem:[%s181 + $0x88] sm:$0xf]
        %v228 = vld [vmem:[%s181 + $0x8c] sm:$0xf]
        %v229 = vld [vmem:[%s181 + $0x90] sm:$0xf]
        %v230 = vld [vmem:[%s181 + $0x94] sm:$0xf]
        %v231 = vld [vmem:[%s181 + $0x98] sm:$0xf]
        %v232 = vld [vmem:[%s181 + $0x9c] sm:$0xf]
        %v233 = vld [vmem:[%s181 + $0xa0] sm:$0xf]
        %v234 = vld [vmem:[%s181 + $0xa4] sm:$0xf]
        %v235 = vld [vmem:[%s181 + $0xa8] sm:$0xf]
        %v236 = vld [vmem:[%s181 + $0xac] sm:$0xf]
        %v237 = vld [vmem:[%s181 + $0xb0] sm:$0xf]
        %v238 = vld [vmem:[%s181 + $0xb4] sm:$0xf]
        %v239 = vld [vmem:[%s181 + $0xb8] sm:$0xf]
        %v240 = vld [vmem:[%s181 + $0xbc] sm:$0xf]
        %v241 = vld [vmem:[%s181 + $0xc0] sm:$0xf]
        %v242 = vld [vmem:[%s181 + $0xc4] sm:$0xf]
        %v243 = vld [vmem:[%s181 + $0xc8] sm:$0xf]
        %v244 = vld [vmem:[%s181 + $0xcc] sm:$0xf]
        %v245 = vld [vmem:[%s181 + $0xd0] sm:$0xf]
        %v246 = vld [vmem:[%s181 + $0xd4] sm:$0xf]
        %v247 = vld [vmem:[%s181 + $0xd8] sm:$0xf]
        %v248 = vld [vmem:[%s181 + $0xdc] sm:$0xf]
        %v249 = vld [vmem:[%s181 + $0xe0] sm:$0xf]
        %v250 = vld [vmem:[%s181 + $0xe4] sm:$0xf]
        %v251 = vld [vmem:[%s181 + $0xe8] sm:$0xf]
        %v252 = vld [vmem:[%s181 + $0xec] sm:$0xf]
        %v253 = vld [vmem:[%s181 + $0xf0] sm:$0xf]
        %v254 = vld [vmem:[%s181 + $0xf4] sm:$0xf]
        %v255 = vld [vmem:[%s181 + $0xf8] sm:$0xf]
        %v256 = vld [vmem:[%s181 + $0xfc] sm:$0xf]
        %v257 = vld [vmem:[%s181 + $0x100] sm:$0xf]
        %v258 = vld [vmem:[%s181 + $0x104] sm:$0xf]
        %v259 = vld [vmem:[%s181 + $0x108] sm:$0xf]
        %v260 = vld [vmem:[%s181 + $0x10c] sm:$0xf]
        %v261 = vld [vmem:[%s181 + $0x110] sm:$0xf]
        %v262 = vld [vmem:[%s181 + $0x114] sm:$0xf]
        %v263 = vld [vmem:[%s181 + $0x118] sm:$0xf]
        %v264 = vld [vmem:[%s181 + $0x11c] sm:$0xf]
        %v265 = vld [vmem:[%s181 + $0x120] sm:$0xf]
        %v266 = vld [vmem:[%s181 + $0x124] sm:$0xf]
        %v267 = vld [vmem:[%s181 + $0x128] sm:$0xf]
        %v268 = vld [vmem:[%s181 + $0x12c] sm:$0xf]
        %v269 = vld [vmem:[%s181 + $0x130] sm:$0xf]
        %v270 = vld [vmem:[%s181 + $0x134] sm:$0xf]
        %v271 = vld [vmem:[%s181 + $0x138] sm:$0xf]
        %v272 = vld [vmem:[%s181 + $0x13c] sm:$0xf]
        %v273 = vld [vmem:[%s181 + $0x140] sm:$0xf]
        %v274 = vld [vmem:[%s181 + $0x144] sm:$0xf]
        %v275 = vld [vmem:[%s181 + $0x148] sm:$0xf]
        %v276 = vld [vmem:[%s181 + $0x14c] sm:$0xf]
        %v277 = vld [vmem:[%s181 + $0x150] sm:$0xf]
        %v278 = vld [vmem:[%s181 + $0x154] sm:$0xf]
        %v279 = vld [vmem:[%s181 + $0x158] sm:$0xf]
        %v280 = vld [vmem:[%s181 + $0x15c] sm:$0xf]
        %v281 = vld [vmem:[%s181 + $0x160] sm:$0xf]
        %v282 = vld [vmem:[%s181 + $0x164] sm:$0xf]
        %v283 = vld [vmem:[%s181 + $0x168] sm:$0xf]
        %v284 = vld [vmem:[%s181 + $0x16c] sm:$0xf]
        %v285 = vld [vmem:[%s181 + $0x170] sm:$0xf]
        %v286 = vld [vmem:[%s181 + $0x174] sm:$0xf]
        %v287 = vld [vmem:[%s181 + $0x178] sm:$0xf]
        %v288 = vld [vmem:[%s181 + $0x17c] sm:$0xf]
        %v289 = vld [vmem:[%s181 + $0x180] sm:$0xf]
        %v290 = vld [vmem:[%s181 + $0x184] sm:$0xf]
        %v291 = vld [vmem:[%s181 + $0x188] sm:$0xf]
        %v292 = vld [vmem:[%s181 + $0x18c] sm:$0xf]
        %v293 = vld [vmem:[%s181 + $0x190] sm:$0xf]
        %v294 = vld [vmem:[%s181 + $0x194] sm:$0xf]
        %v295 = vld [vmem:[%s181 + $0x198] sm:$0xf]
        %v296 = vld [vmem:[%s181 + $0x19c] sm:$0xf]
        %v297 = vld [vmem:[%s181 + $0x1a0] sm:$0xf]
        %v298 = vld [vmem:[%s181 + $0x1a4] sm:$0xf]
        %v299 = vld [vmem:[%s181 + $0x1a8] sm:$0xf]
        %v300 = vld [vmem:[%s181 + $0x1ac] sm:$0xf]
        %v301 = vld [vmem:[%s181 + $0x1b0] sm:$0xf]
        %v302 = vld [vmem:[%s181 + $0x1b4] sm:$0xf]
        %v303 = vld [vmem:[%s181 + $0x1b8] sm:$0xf]
        %v304 = vld [vmem:[%s181 + $0x1bc] sm:$0xf]
        %v305 = vld [vmem:[%s181 + $0x1c0] sm:$0xf]
        %v306 = vld [vmem:[%s181 + $0x1c4] sm:$0xf]
        %v307 = vld [vmem:[%s181 + $0x1c8] sm:$0xf]
        %v308 = vld [vmem:[%s181 + $0x1cc] sm:$0xf]
        %v309 = vld [vmem:[%s181 + $0x1d0] sm:$0xf]
        %v310 = vld [vmem:[%s181 + $0x1d4] sm:$0xf]
        %v311 = vld [vmem:[%s181 + $0x1d8] sm:$0xf]
        %v312 = vld [vmem:[%s181 + $0x1dc] sm:$0xf]
        %v313 = vld [vmem:[%s181 + $0x1e0] sm:$0xf]
        %v314 = vld [vmem:[%s181 + $0x1e4] sm:$0xf]
        %v315 = vld [vmem:[%s181 + $0x1e8] sm:$0xf]
        %v316 = vld [vmem:[%s181 + $0x1ec] sm:$0xf]
        %v317 = vld [vmem:[%s181 + $0x1f0] sm:$0xf]
        %v318 = vld [vmem:[%s181 + $0x1f4] sm:$0xf]
        %v319 = vld [vmem:[%s181 + $0x1f8] sm:$0xf]
        %v320 = vld [vmem:[%s181 + $0x1fc] sm:$0xf]
        %v321 = vld [vmem:[%s1] sm:$0xf]
        %v322 = vld [vmem:[%s1 + $0x4] sm:$0x1]
        %v323 = vld [vmem:[%s2] sm:$0x1]
        %v325 = vlaneseq
        %v326 = vshrl.u32 %v325, 7
        %v327 = vsub.s32 0, %v326
        %v328 = vrot.slane %v323, %v327
        %v458 = vunpack.c.l.b16 %v193
        %v459 = vunpack.c.l.b16 %v194
        %v460 = vunpack.c.l.b16 %v195
        %v461 = vunpack.c.l.b16 %v196
        %v462 = vunpack.c.l.b16 %v197
        %v463 = vunpack.c.l.b16 %v198
        %v464 = vunpack.c.l.b16 %v199
        %v465 = vunpack.c.l.b16 %v200
        %v466 = vunpack.c.l.b16 %v201
        %v467 = vunpack.c.l.b16 %v202
        %v468 = vunpack.c.l.b16 %v203
        %v469 = vunpack.c.l.b16 %v204
        %v470 = vunpack.c.l.b16 %v205
        %v471 = vunpack.c.l.b16 %v206
        %v472 = vunpack.c.l.b16 %v207
        %v473 = vunpack.c.l.b16 %v208
        %v474 = vunpack.c.l.b16 %v209
        %v475 = vunpack.c.l.b16 %v210
        %v476 = vunpack.c.l.b16 %v211
        %v477 = vunpack.c.l.b16 %v212
        %v478 = vunpack.c.l.b16 %v213
        %v479 = vunpack.c.l.b16 %v214
        %v480 = vunpack.c.l.b16 %v215
        %v481 = vunpack.c.l.b16 %v216
        %v482 = vunpack.c.l.b16 %v217
        %v483 = vunpack.c.l.b16 %v218
        %v484 = vunpack.c.l.b16 %v219
        %v485 = vunpack.c.l.b16 %v220
        %v486 = vunpack.c.l.b16 %v221
        %v487 = vunpack.c.l.b16 %v222
        %v488 = vunpack.c.l.b16 %v223
        %v489 = vunpack.c.l.b16 %v224
        %v490 = vunpack.c.l.b16 %v225
        %v491 = vunpack.c.l.b16 %v226
        %v492 = vunpack.c.l.b16 %v227
        %v493 = vunpack.c.l.b16 %v228
        %v494 = vunpack.c.l.b16 %v229
        %v495 = vunpack.c.l.b16 %v230
        %v496 = vunpack.c.l.b16 %v231
        %v497 = vunpack.c.l.b16 %v232
        %v498 = vunpack.c.l.b16 %v233
        %v499 = vunpack.c.l.b16 %v234
        %v500 = vunpack.c.l.b16 %v235
        %v501 = vunpack.c.l.b16 %v236
        %v502 = vunpack.c.l.b16 %v237
        %v503 = vunpack.c.l.b16 %v238
        %v504 = vunpack.c.l.b16 %v239
        %v505 = vunpack.c.l.b16 %v240
        %v506 = vunpack.c.l.b16 %v241
        %v507 = vunpack.c.l.b16 %v242
        %v508 = vunpack.c.l.b16 %v243
        %v509 = vunpack.c.l.b16 %v244
        %v510 = vunpack.c.l.b16 %v245
        %v511 = vunpack.c.l.b16 %v246
        %v512 = vunpack.c.l.b16 %v247
        %v513 = vunpack.c.l.b16 %v248
        %v514 = vunpack.c.l.b16 %v249
        %v515 = vunpack.c.l.b16 %v250
        %v516 = vunpack.c.l.b16 %v251
        %v517 = vunpack.c.l.b16 %v252
        %v518 = vunpack.c.l.b16 %v253
        %v519 = vunpack.c.l.b16 %v254
        %v520 = vunpack.c.l.b16 %v255
        %v521 = vunpack.c.l.b16 %v256
        %v522 = vunpack.c.l.b16 %v257
        %v523 = vunpack.c.l.b16 %v258
        %v524 = vunpack.c.l.b16 %v259
        %v525 = vunpack.c.l.b16 %v260
        %v526 = vunpack.c.l.b16 %v261
        %v527 = vunpack.c.l.b16 %v262
        %v528 = vunpack.c.l.b16 %v263
        %v529 = vunpack.c.l.b16 %v264
        %v530 = vunpack.c.l.b16 %v265
        %v531 = vunpack.c.l.b16 %v266
        %v532 = vunpack.c.l.b16 %v267
        %v533 = vunpack.c.l.b16 %v268
        %v534 = vunpack.c.l.b16 %v269
        %v535 = vunpack.c.l.b16 %v270
        %v536 = vunpack.c.l.b16 %v271
        %v537 = vunpack.c.l.b16 %v272
        %v538 = vunpack.c.l.b16 %v273
        %v539 = vunpack.c.l.b16 %v274
        %v540 = vunpack.c.l.b16 %v275
        %v541 = vunpack.c.l.b16 %v276
        %v542 = vunpack.c.l.b16 %v277
        %v543 = vunpack.c.l.b16 %v278
        %v544 = vunpack.c.l.b16 %v279
        %v545 = vunpack.c.l.b16 %v280
        %v546 = vunpack.c.l.b16 %v281
        %v547 = vunpack.c.l.b16 %v282
        %v548 = vunpack.c.l.b16 %v283
        %v549 = vunpack.c.l.b16 %v284
        %v550 = vunpack.c.l.b16 %v285
        %v551 = vunpack.c.l.b16 %v286
        %v552 = vunpack.c.l.b16 %v287
        %v553 = vunpack.c.l.b16 %v288
        %v554 = vunpack.c.l.b16 %v289
        %v555 = vunpack.c.l.b16 %v290
        %v556 = vunpack.c.l.b16 %v291
        %v557 = vunpack.c.l.b16 %v292
        %v558 = vunpack.c.l.b16 %v293
        %v559 = vunpack.c.l.b16 %v294
        %v560 = vunpack.c.l.b16 %v295
        %v561 = vunpack.c.l.b16 %v296
        %v562 = vunpack.c.l.b16 %v297
        %v563 = vunpack.c.l.b16 %v298
        %v564 = vunpack.c.l.b16 %v299
        %v565 = vunpack.c.l.b16 %v300
        %v566 = vunpack.c.l.b16 %v301
        %v567 = vunpack.c.l.b16 %v302
        %v568 = vunpack.c.l.b16 %v303
        %v569 = vunpack.c.l.b16 %v304
        %v570 = vunpack.c.l.b16 %v305
        %v571 = vunpack.c.l.b16 %v306
        %v572 = vunpack.c.l.b16 %v307
        %v573 = vunpack.c.l.b16 %v308
        %v574 = vunpack.c.l.b16 %v309
        %v575 = vunpack.c.l.b16 %v310
        %v576 = vunpack.c.l.b16 %v311
        %v577 = vunpack.c.l.b16 %v312
        %v578 = vunpack.c.l.b16 %v313
        %v579 = vunpack.c.l.b16 %v314
        %v580 = vunpack.c.l.b16 %v315
        %v581 = vunpack.c.l.b16 %v316
        %v582 = vunpack.c.l.b16 %v317
        %v583 = vunpack.c.l.b16 %v318
        %v584 = vunpack.c.l.b16 %v319
        %v585 = vunpack.c.l.b16 %v320
        %v586 = vpack.c.b16 %v459, %v458
        %v587 = vpack.c.b16 %v461, %v460
        %v588 = vpack.c.b16 %v463, %v462
        %v589 = vpack.c.b16 %v465, %v464
        %v590 = vpack.c.b16 %v467, %v466
        %v591 = vpack.c.b16 %v469, %v468
        %v592 = vpack.c.b16 %v471, %v470
        %v593 = vpack.c.b16 %v473, %v472
        %v594 = vpack.c.b16 %v475, %v474
        %v595 = vpack.c.b16 %v477, %v476
        %v596 = vpack.c.b16 %v479, %v478
        %v597 = vpack.c.b16 %v481, %v480
        %v598 = vpack.c.b16 %v483, %v482
        %v599 = vpack.c.b16 %v485, %v484
        %v600 = vpack.c.b16 %v487, %v486
        %v601 = vpack.c.b16 %v489, %v488
        %v602 = vpack.c.b16 %v491, %v490
        %v603 = vpack.c.b16 %v493, %v492
        %v604 = vpack.c.b16 %v495, %v494
        %v605 = vpack.c.b16 %v497, %v496
        %v606 = vpack.c.b16 %v499, %v498
        %v607 = vpack.c.b16 %v501, %v500
        %v608 = vpack.c.b16 %v503, %v502
        %v609 = vpack.c.b16 %v505, %v504
        %v610 = vpack.c.b16 %v507, %v506
        %v611 = vpack.c.b16 %v509, %v508
        %v612 = vpack.c.b16 %v511, %v510
        %v613 = vpack.c.b16 %v513, %v512
        %v614 = vpack.c.b16 %v515, %v514
        %v615 = vpack.c.b16 %v517, %v516
        %v616 = vpack.c.b16 %v519, %v518
        %v617 = vpack.c.b16 %v521, %v520
        %v618 = vpack.c.b16 %v523, %v522
        %v619 = vpack.c.b16 %v525, %v524
        %v620 = vpack.c.b16 %v527, %v526
        %v621 = vpack.c.b16 %v529, %v528
        %v622 = vpack.c.b16 %v531, %v530
        %v623 = vpack.c.b16 %v533, %v532
        %v624 = vpack.c.b16 %v535, %v534
        %v625 = vpack.c.b16 %v537, %v536
        %v626 = vpack.c.b16 %v539, %v538
        %v627 = vpack.c.b16 %v541, %v540
        %v628 = vpack.c.b16 %v543, %v542
        %v629 = vpack.c.b16 %v545, %v544
        %v630 = vpack.c.b16 %v547, %v546
        %v631 = vpack.c.b16 %v549, %v548
        %v632 = vpack.c.b16 %v551, %v550
        %v633 = vpack.c.b16 %v553, %v552
        %v634 = vpack.c.b16 %v555, %v554
        %v635 = vpack.c.b16 %v557, %v556
        %v636 = vpack.c.b16 %v559, %v558
        %v637 = vpack.c.b16 %v561, %v560
        %v638 = vpack.c.b16 %v563, %v562
        %v639 = vpack.c.b16 %v565, %v564
        %v640 = vpack.c.b16 %v567, %v566
        %v641 = vpack.c.b16 %v569, %v568
        %v642 = vpack.c.b16 %v571, %v570
        %v643 = vpack.c.b16 %v573, %v572
        %v644 = vpack.c.b16 %v575, %v574
        %v645 = vpack.c.b16 %v577, %v576
        %v646 = vpack.c.b16 %v579, %v578
        %v647 = vpack.c.b16 %v581, %v580
        %v648 = vpack.c.b16 %v583, %v582
        %v649 = vpack.c.b16 %v585, %v584
        %v652 = vunpack.c.l.b16 %v321
        %v653 = vunpack.c.l.b16 %v322
        %v654 = vpack.c.b16 %v653, %v652
        %vm655 = vcmask 72704
        %v657 = vsel %vm655, %v586, 0
        %v660 = vsel %vm655, %v587, 0
        %v663 = vsel %vm655, %v588, 0
        %v666 = vsel %vm655, %v589, 0
        %v669 = vsel %vm655, %v590, 0
        %v672 = vsel %vm655, %v591, 0
        %v675 = vsel %vm655, %v592, 0
        %v678 = vsel %vm655, %v593, 0
        %v681 = vsel %vm655, %v594, 0
        %v684 = vsel %vm655, %v595, 0
        %v687 = vsel %vm655, %v596, 0
        %v690 = vsel %vm655, %v597, 0
        %v693 = vsel %vm655, %v598, 0
        %v696 = vsel %vm655, %v599, 0
        %v699 = vsel %vm655, %v600, 0
        %v702 = vsel %vm655, %v601, 0
        %v705 = vsel %vm655, %v602, 0
        %v708 = vsel %vm655, %v603, 0
        %v711 = vsel %vm655, %v604, 0
        %v714 = vsel %vm655, %v605, 0
        %v717 = vsel %vm655, %v606, 0
        %v720 = vsel %vm655, %v607, 0
        %v723 = vsel %vm655, %v608, 0
        %v726 = vsel %vm655, %v609, 0
        %v729 = vsel %vm655, %v610, 0
        %v732 = vsel %vm655, %v611, 0
        %v735 = vsel %vm655, %v612, 0
        %v738 = vsel %vm655, %v613, 0
        %v741 = vsel %vm655, %v614, 0
        %v744 = vsel %vm655, %v615, 0
        %v747 = vsel %vm655, %v616, 0
        %v750 = vsel %vm655, %v617, 0
        %v753 = vsel %vm655, %v618, 0
        %v756 = vsel %vm655, %v619, 0
        %v759 = vsel %vm655, %v620, 0
        %v762 = vsel %vm655, %v621, 0
        %v765 = vsel %vm655, %v622, 0
        %v768 = vsel %vm655, %v623, 0
        %v771 = vsel %vm655, %v624, 0
        %v774 = vsel %vm655, %v625, 0
        %v777 = vsel %vm655, %v626, 0
        %v780 = vsel %vm655, %v627, 0
        %v783 = vsel %vm655, %v628, 0
        %v786 = vsel %vm655, %v629, 0
        %v789 = vsel %vm655, %v630, 0
        %v792 = vsel %vm655, %v631, 0
        %v795 = vsel %vm655, %v632, 0
        %v798 = vsel %vm655, %v633, 0
        %v801 = vsel %vm655, %v634, 0
        %v804 = vsel %vm655, %v635, 0
        %v807 = vsel %vm655, %v636, 0
        %v810 = vsel %vm655, %v637, 0
        %v813 = vsel %vm655, %v638, 0
        %v816 = vsel %vm655, %v639, 0
        %v819 = vsel %vm655, %v640, 0
        %v822 = vsel %vm655, %v641, 0
        %v825 = vsel %vm655, %v642, 0
        %v828 = vsel %vm655, %v643, 0
        %v831 = vsel %vm655, %v644, 0
        %v834 = vsel %vm655, %v645, 0
        %v837 = vsel %vm655, %v646, 0
        %v840 = vsel %vm655, %v647, 0
        %v843 = vsel %vm655, %v648, 0
        %v846 = vsel %vm655, %v649, 0
        %vm848 = vcmask 1043456
        %vm849 = vcmask 1044480
        %v850 = vsel %vm848, 4294967295, 65535
        %v851 = vsel %vm849, %v850, 0
        %v853 = vand.u32 %v654, %v851
        %855 = vmatprep.subr.bf16.mxu0 0
        %856 = vmatpush1.bf16.msra.mxu0 0
        %857 = vmatprep.subr.bf16.mxu0 0
        %858 = vmatpush1.bf16.msra.mxu0 0
        %859 = vmatprep.subr.bf16.mxu0 0
        %860 = vmatpush1.bf16.msra.mxu0 0
        %861 = vmatprep.subr.bf16.mxu0 0
        %862 = vmatpush1.bf16.msra.mxu0 0
        %863 = vmatprep.subr.bf16.mxu0 0
        %864 = vmatpush1.bf16.msra.mxu0 0
        %865 = vmatprep.subr.bf16.mxu0 0
        %866 = vmatpush1.bf16.msra.mxu0 0
        %867 = vmatprep.subr.bf16.mxu0 0
        %868 = vmatpush1.bf16.msra.mxu0 0
        %869 = vmatprep.subr.bf16.mxu0 0
        %870 = vmatpush1.bf16.msra.mxu0 %v853
        %871 = vmatprep.subr.bf16.mxu0 0
        %872 = vmatpush2.bf16.msra.mxu0 0
        %873 = vmatprep.subr.bf16.mxu0 0
        %874 = vmatpush2.bf16.msra.mxu0 0
        %875 = vmatprep.subr.bf16.mxu0 0
        %876 = vmatpush2.bf16.msra.mxu0 0
        %877 = vmatprep.subr.bf16.mxu0 0
        %878 = vmatpush2.bf16.msra.mxu0 0
        %879 = vmatprep.subr.bf16.mxu0 0
        %880 = vmatpush2.bf16.msra.mxu0 0
        %881 = vmatprep.subr.bf16.mxu0 0
        %882 = vmatpush2.bf16.msra.mxu0 0
        %883 = vmatprep.subr.bf16.mxu0 0
        %884 = vmatpush2.bf16.msra.mxu0 0
        %885 = vmatprep.subr.bf16.mxu0 0
        %886 = vmatpush2.bf16.msra.mxu0 0
        %887 = vmatprep.mubr.bf16.mxu0 0
        %888 = vmatmul.mubr.bf16.gmra.mxu0 %v657
        %v889 = vpop.f32.mrf.mxu0
        %v890 = vadd.f32 %v328, %v889
        %v891 = vpop.f32.mrf.mxu0
        %v892 = vpop.f32.mrf.mxu0
        %v893 = vadd.f32 %v328, %v892
        %v894 = vpop.f32.mrf.mxu0
        %895 = vmatprep.mubr.bf16.mxu0 0
        %896 = vmatmul.mubr.bf16.gmra.mxu0 %v660
        %v897 = vpop.f32.mrf.mxu0
        %v898 = vadd.f32 %v328, %v897
        %v899 = vpop.f32.mrf.mxu0
        %v900 = vpop.f32.mrf.mxu0
        %v901 = vadd.f32 %v328, %v900
        %v902 = vpop.f32.mrf.mxu0
        %903 = vmatprep.mubr.bf16.mxu0 0
        %904 = vmatmul.mubr.bf16.gmra.mxu0 %v663
        %v905 = vpop.f32.mrf.mxu0
        %v906 = vadd.f32 %v328, %v905
        %v907 = vpop.f32.mrf.mxu0
        %v908 = vpop.f32.mrf.mxu0
        %v909 = vadd.f32 %v328, %v908
        %v910 = vpop.f32.mrf.mxu0
        %911 = vmatprep.mubr.bf16.mxu0 0
        %912 = vmatmul.mubr.bf16.gmra.mxu0 %v666
        %v913 = vpop.f32.mrf.mxu0
        %v914 = vadd.f32 %v328, %v913
        %v915 = vpop.f32.mrf.mxu0
        %v916 = vpop.f32.mrf.mxu0
        %v917 = vadd.f32 %v328, %v916
        %v918 = vpop.f32.mrf.mxu0
        %919 = vmatprep.mubr.bf16.mxu0 0
        %920 = vmatmul.mubr.bf16.gmra.mxu0 %v669
        %v921 = vpop.f32.mrf.mxu0
        %v922 = vadd.f32 %v328, %v921
        %v923 = vpop.f32.mrf.mxu0
        %v924 = vpop.f32.mrf.mxu0
        %v925 = vadd.f32 %v328, %v924
        %v926 = vpop.f32.mrf.mxu0
        %927 = vmatprep.mubr.bf16.mxu0 0
        %928 = vmatmul.mubr.bf16.gmra.mxu0 %v672
        %v929 = vpop.f32.mrf.mxu0
        %v930 = vadd.f32 %v328, %v929
        %v931 = vpop.f32.mrf.mxu0
        %v932 = vpop.f32.mrf.mxu0
        %v933 = vadd.f32 %v328, %v932
        %v934 = vpop.f32.mrf.mxu0
        %935 = vmatprep.mubr.bf16.mxu0 0
        %936 = vmatmul.mubr.bf16.gmra.mxu0 %v675
        %v937 = vpop.f32.mrf.mxu0
        %v938 = vadd.f32 %v328, %v937
        %v939 = vpop.f32.mrf.mxu0
        %v940 = vpop.f32.mrf.mxu0
        %v941 = vadd.f32 %v328, %v940
        %v942 = vpop.f32.mrf.mxu0
        %943 = vmatprep.mubr.bf16.mxu0 0
        %944 = vmatmul.mubr.bf16.gmra.mxu0 %v678
        %v945 = vpop.f32.mrf.mxu0
        %v946 = vadd.f32 %v328, %v945
        %v947 = vpop.f32.mrf.mxu0
        %v948 = vpop.f32.mrf.mxu0
        %v949 = vadd.f32 %v328, %v948
        %v950 = vpop.f32.mrf.mxu0
        %951 = vmatprep.mubr.bf16.mxu0 0
        %952 = vmatmul.mubr.bf16.gmra.mxu0 %v681
        %v953 = vpop.f32.mrf.mxu0
        %v954 = vadd.f32 %v328, %v953
        %v955 = vpop.f32.mrf.mxu0
        %v956 = vpop.f32.mrf.mxu0
        %v957 = vadd.f32 %v328, %v956
        %v958 = vpop.f32.mrf.mxu0
        %959 = vmatprep.mubr.bf16.mxu0 0
        %960 = vmatmul.mubr.bf16.gmra.mxu0 %v684
        %v961 = vpop.f32.mrf.mxu0
        %v962 = vadd.f32 %v328, %v961
        %v963 = vpop.f32.mrf.mxu0
        %v964 = vpop.f32.mrf.mxu0
        %v965 = vadd.f32 %v328, %v964
        %v966 = vpop.f32.mrf.mxu0
        %967 = vmatprep.mubr.bf16.mxu0 0
        %968 = vmatmul.mubr.bf16.gmra.mxu0 %v687
        %v969 = vpop.f32.mrf.mxu0
        %v970 = vadd.f32 %v328, %v969
        %v971 = vpop.f32.mrf.mxu0
        %v972 = vpop.f32.mrf.mxu0
        %v973 = vadd.f32 %v328, %v972
        %v974 = vpop.f32.mrf.mxu0
        %975 = vmatprep.mubr.bf16.mxu0 0
        %976 = vmatmul.mubr.bf16.gmra.mxu0 %v690
        %v977 = vpop.f32.mrf.mxu0
        %v978 = vadd.f32 %v328, %v977
        %v979 = vpop.f32.mrf.mxu0
        %v980 = vpop.f32.mrf.mxu0
        %v981 = vadd.f32 %v328, %v980
        %v982 = vpop.f32.mrf.mxu0
        %983 = vmatprep.mubr.bf16.mxu0 0
        %984 = vmatmul.mubr.bf16.gmra.mxu0 %v693
        %v985 = vpop.f32.mrf.mxu0
        %v986 = vadd.f32 %v328, %v985
        %v987 = vpop.f32.mrf.mxu0
        %v988 = vpop.f32.mrf.mxu0
        %v989 = vadd.f32 %v328, %v988
        %v990 = vpop.f32.mrf.mxu0
        %991 = vmatprep.mubr.bf16.mxu0 0
        %992 = vmatmul.mubr.bf16.gmra.mxu0 %v696
        %v993 = vpop.f32.mrf.mxu0
        %v994 = vadd.f32 %v328, %v993
        %v995 = vpop.f32.mrf.mxu0
        %v996 = vpop.f32.mrf.mxu0
        %v997 = vadd.f32 %v328, %v996
        %v998 = vpop.f32.mrf.mxu0
        %999 = vmatprep.mubr.bf16.mxu0 0
        %1000 = vmatmul.mubr.bf16.gmra.mxu0 %v699
        %v1001 = vpop.f32.mrf.mxu0
        %v1002 = vadd.f32 %v328, %v1001
        %v1003 = vpop.f32.mrf.mxu0
        %v1004 = vpop.f32.mrf.mxu0
        %v1005 = vadd.f32 %v328, %v1004
        %v1006 = vpop.f32.mrf.mxu0
        %1007 = vmatprep.mubr.bf16.mxu0 0
        %1008 = vmatmul.mubr.bf16.gmra.mxu0 %v702
        %v1009 = vpop.f32.mrf.mxu0
        %v1010 = vadd.f32 %v328, %v1009
        %v1011 = vpop.f32.mrf.mxu0
        %v1012 = vpop.f32.mrf.mxu0
        %v1013 = vadd.f32 %v328, %v1012
        %v1014 = vpop.f32.mrf.mxu0
        %1015 = vmatprep.mubr.bf16.mxu0 0
        %1016 = vmatmul.mubr.bf16.gmra.mxu0 %v705
        %v1017 = vpop.f32.mrf.mxu0
        %v1018 = vadd.f32 %v328, %v1017
        %v1019 = vpop.f32.mrf.mxu0
        %v1020 = vpop.f32.mrf.mxu0
        %v1021 = vadd.f32 %v328, %v1020
        %v1022 = vpop.f32.mrf.mxu0
        %1023 = vmatprep.mubr.bf16.mxu0 0
        %1024 = vmatmul.mubr.bf16.gmra.mxu0 %v708
        %v1025 = vpop.f32.mrf.mxu0
        %v1026 = vadd.f32 %v328, %v1025
        %v1027 = vpop.f32.mrf.mxu0
        %v1028 = vpop.f32.mrf.mxu0
        %v1029 = vadd.f32 %v328, %v1028
        %v1030 = vpop.f32.mrf.mxu0
        %1031 = vmatprep.mubr.bf16.mxu0 0
        %1032 = vmatmul.mubr.bf16.gmra.mxu0 %v711
        %v1033 = vpop.f32.mrf.mxu0
        %v1034 = vadd.f32 %v328, %v1033
        %v1035 = vpop.f32.mrf.mxu0
        %v1036 = vpop.f32.mrf.mxu0
        %v1037 = vadd.f32 %v328, %v1036
        %v1038 = vpop.f32.mrf.mxu0
        %1039 = vmatprep.mubr.bf16.mxu0 0
        %1040 = vmatmul.mubr.bf16.gmra.mxu0 %v714
        %v1041 = vpop.f32.mrf.mxu0
        %v1042 = vadd.f32 %v328, %v1041
        %v1043 = vpop.f32.mrf.mxu0
        %v1044 = vpop.f32.mrf.mxu0
        %v1045 = vadd.f32 %v328, %v1044
        %v1046 = vpop.f32.mrf.mxu0
        %1047 = vmatprep.mubr.bf16.mxu0 0
        %1048 = vmatmul.mubr.bf16.gmra.mxu0 %v717
        %v1049 = vpop.f32.mrf.mxu0
        %v1050 = vadd.f32 %v328, %v1049
        %v1051 = vpop.f32.mrf.mxu0
        %v1052 = vpop.f32.mrf.mxu0
        %v1053 = vadd.f32 %v328, %v1052
        %v1054 = vpop.f32.mrf.mxu0
        %1055 = vmatprep.mubr.bf16.mxu0 0
        %1056 = vmatmul.mubr.bf16.gmra.mxu0 %v720
        %v1057 = vpop.f32.mrf.mxu0
        %v1058 = vadd.f32 %v328, %v1057
        %v1059 = vpop.f32.mrf.mxu0
        %v1060 = vpop.f32.mrf.mxu0
        %v1061 = vadd.f32 %v328, %v1060
        %v1062 = vpop.f32.mrf.mxu0
        %1063 = vmatprep.mubr.bf16.mxu0 0
        %1064 = vmatmul.mubr.bf16.gmra.mxu0 %v723
        %v1065 = vpop.f32.mrf.mxu0
        %v1066 = vadd.f32 %v328, %v1065
        %v1067 = vpop.f32.mrf.mxu0
        %v1068 = vpop.f32.mrf.mxu0
        %v1069 = vadd.f32 %v328, %v1068
        %v1070 = vpop.f32.mrf.mxu0
        %1071 = vmatprep.mubr.bf16.mxu0 0
        %1072 = vmatmul.mubr.bf16.gmra.mxu0 %v726
        %v1073 = vpop.f32.mrf.mxu0
        %v1074 = vadd.f32 %v328, %v1073
        %v1075 = vpop.f32.mrf.mxu0
        %v1076 = vpop.f32.mrf.mxu0
        %v1077 = vadd.f32 %v328, %v1076
        %v1078 = vpop.f32.mrf.mxu0
        %1079 = vmatprep.mubr.bf16.mxu0 0
        %1080 = vmatmul.mubr.bf16.gmra.mxu0 %v729
        %v1081 = vpop.f32.mrf.mxu0
        %v1082 = vadd.f32 %v328, %v1081
        %v1083 = vpop.f32.mrf.mxu0
        %v1084 = vpop.f32.mrf.mxu0
        %v1085 = vadd.f32 %v328, %v1084
        %v1086 = vpop.f32.mrf.mxu0
        %1087 = vmatprep.mubr.bf16.mxu0 0
        %1088 = vmatmul.mubr.bf16.gmra.mxu0 %v732
        %v1089 = vpop.f32.mrf.mxu0
        %v1090 = vadd.f32 %v328, %v1089
        %v1091 = vpop.f32.mrf.mxu0
        %v1092 = vpop.f32.mrf.mxu0
        %v1093 = vadd.f32 %v328, %v1092
        %v1094 = vpop.f32.mrf.mxu0
        %1095 = vmatprep.mubr.bf16.mxu0 0
        %1096 = vmatmul.mubr.bf16.gmra.mxu0 %v735
        %v1097 = vpop.f32.mrf.mxu0
        %v1098 = vadd.f32 %v328, %v1097
        %v1099 = vpop.f32.mrf.mxu0
        %v1100 = vpop.f32.mrf.mxu0
        %v1101 = vadd.f32 %v328, %v1100
        %v1102 = vpop.f32.mrf.mxu0
        %1103 = vmatprep.mubr.bf16.mxu0 0
        %1104 = vmatmul.mubr.bf16.gmra.mxu0 %v738
        %v1105 = vpop.f32.mrf.mxu0
        %v1106 = vadd.f32 %v328, %v1105
        %v1107 = vpop.f32.mrf.mxu0
        %v1108 = vpop.f32.mrf.mxu0
        %v1109 = vadd.f32 %v328, %v1108
        %v1110 = vpop.f32.mrf.mxu0
        %1111 = vmatprep.mubr.bf16.mxu0 0
        %1112 = vmatmul.mubr.bf16.gmra.mxu0 %v741
        %v1113 = vpop.f32.mrf.mxu0
        %v1114 = vadd.f32 %v328, %v1113
        %v1115 = vpop.f32.mrf.mxu0
        %v1116 = vpop.f32.mrf.mxu0
        %v1117 = vadd.f32 %v328, %v1116
        %v1118 = vpop.f32.mrf.mxu0
        %1119 = vmatprep.mubr.bf16.mxu0 0
        %1120 = vmatmul.mubr.bf16.gmra.mxu0 %v744
        %v1121 = vpop.f32.mrf.mxu0
        %v1122 = vadd.f32 %v328, %v1121
        %v1123 = vpop.f32.mrf.mxu0
        %v1124 = vpop.f32.mrf.mxu0
        %v1125 = vadd.f32 %v328, %v1124
        %v1126 = vpop.f32.mrf.mxu0
        %1127 = vmatprep.mubr.bf16.mxu0 0
        %1128 = vmatmul.mubr.bf16.gmra.mxu0 %v747
        %v1129 = vpop.f32.mrf.mxu0
        %v1130 = vadd.f32 %v328, %v1129
        %v1131 = vpop.f32.mrf.mxu0
        %v1132 = vpop.f32.mrf.mxu0
        %v1133 = vadd.f32 %v328, %v1132
        %v1134 = vpop.f32.mrf.mxu0
        %1135 = vmatprep.mubr.bf16.mxu0 0
        %1136 = vmatmul.mubr.bf16.gmra.mxu0 %v750
        %v1137 = vpop.f32.mrf.mxu0
        %v1138 = vadd.f32 %v328, %v1137
        %v1139 = vpop.f32.mrf.mxu0
        %v1140 = vpop.f32.mrf.mxu0
        %v1141 = vadd.f32 %v328, %v1140
        %v1142 = vpop.f32.mrf.mxu0
        %1143 = vmatprep.mubr.bf16.mxu0 0
        %1144 = vmatmul.mubr.bf16.gmra.mxu0 %v753
        %v1145 = vpop.f32.mrf.mxu0
        %v1146 = vadd.f32 %v328, %v1145
        %v1147 = vpop.f32.mrf.mxu0
        %v1148 = vpop.f32.mrf.mxu0
        %v1149 = vadd.f32 %v328, %v1148
        %v1150 = vpop.f32.mrf.mxu0
        %1151 = vmatprep.mubr.bf16.mxu0 0
        %1152 = vmatmul.mubr.bf16.gmra.mxu0 %v756
        %v1153 = vpop.f32.mrf.mxu0
        %v1154 = vadd.f32 %v328, %v1153
        %v1155 = vpop.f32.mrf.mxu0
        %v1156 = vpop.f32.mrf.mxu0
        %v1157 = vadd.f32 %v328, %v1156
        %v1158 = vpop.f32.mrf.mxu0
        %1159 = vmatprep.mubr.bf16.mxu0 0
        %1160 = vmatmul.mubr.bf16.gmra.mxu0 %v759
        %v1161 = vpop.f32.mrf.mxu0
        %v1162 = vadd.f32 %v328, %v1161
        %v1163 = vpop.f32.mrf.mxu0
        %v1164 = vpop.f32.mrf.mxu0
        %v1165 = vadd.f32 %v328, %v1164
        %v1166 = vpop.f32.mrf.mxu0
        %1167 = vmatprep.mubr.bf16.mxu0 0
        %1168 = vmatmul.mubr.bf16.gmra.mxu0 %v762
        %v1169 = vpop.f32.mrf.mxu0
        %v1170 = vadd.f32 %v328, %v1169
        %v1171 = vpop.f32.mrf.mxu0
        %v1172 = vpop.f32.mrf.mxu0
        %v1173 = vadd.f32 %v328, %v1172
        %v1174 = vpop.f32.mrf.mxu0
        %1175 = vmatprep.mubr.bf16.mxu0 0
        %1176 = vmatmul.mubr.bf16.gmra.mxu0 %v765
        %v1177 = vpop.f32.mrf.mxu0
        %v1178 = vadd.f32 %v328, %v1177
        %v1179 = vpop.f32.mrf.mxu0
        %v1180 = vpop.f32.mrf.mxu0
        %v1181 = vadd.f32 %v328, %v1180
        %v1182 = vpop.f32.mrf.mxu0
        %1183 = vmatprep.mubr.bf16.mxu0 0
        %1184 = vmatmul.mubr.bf16.gmra.mxu0 %v768
        %v1185 = vpop.f32.mrf.mxu0
        %v1186 = vadd.f32 %v328, %v1185
        %v1187 = vpop.f32.mrf.mxu0
        %v1188 = vpop.f32.mrf.mxu0
        %v1189 = vadd.f32 %v328, %v1188
        %v1190 = vpop.f32.mrf.mxu0
        %1191 = vmatprep.mubr.bf16.mxu0 0
        %1192 = vmatmul.mubr.bf16.gmra.mxu0 %v771
        %v1193 = vpop.f32.mrf.mxu0
        %v1194 = vadd.f32 %v328, %v1193
        %v1195 = vpop.f32.mrf.mxu0
        %v1196 = vpop.f32.mrf.mxu0
        %v1197 = vadd.f32 %v328, %v1196
        %v1198 = vpop.f32.mrf.mxu0
        %1199 = vmatprep.mubr.bf16.mxu0 0
        %1200 = vmatmul.mubr.bf16.gmra.mxu0 %v774
        %v1201 = vpop.f32.mrf.mxu0
        %v1202 = vadd.f32 %v328, %v1201
        %v1203 = vpop.f32.mrf.mxu0
        %v1204 = vpop.f32.mrf.mxu0
        %v1205 = vadd.f32 %v328, %v1204
        %v1206 = vpop.f32.mrf.mxu0
        %1207 = vmatprep.mubr.bf16.mxu0 0
        %1208 = vmatmul.mubr.bf16.gmra.mxu0 %v777
        %v1209 = vpop.f32.mrf.mxu0
        %v1210 = vadd.f32 %v328, %v1209
        %v1211 = vpop.f32.mrf.mxu0
        %v1212 = vpop.f32.mrf.mxu0
        %v1213 = vadd.f32 %v328, %v1212
        %v1214 = vpop.f32.mrf.mxu0
        %1215 = vmatprep.mubr.bf16.mxu0 0
        %1216 = vmatmul.mubr.bf16.gmra.mxu0 %v780
        %v1217 = vpop.f32.mrf.mxu0
        %v1218 = vadd.f32 %v328, %v1217
        %v1219 = vpop.f32.mrf.mxu0
        %v1220 = vpop.f32.mrf.mxu0
        %v1221 = vadd.f32 %v328, %v1220
        %v1222 = vpop.f32.mrf.mxu0
        %1223 = vmatprep.mubr.bf16.mxu0 0
        %1224 = vmatmul.mubr.bf16.gmra.mxu0 %v783
        %v1225 = vpop.f32.mrf.mxu0
        %v1226 = vadd.f32 %v328, %v1225
        %v1227 = vpop.f32.mrf.mxu0
        %v1228 = vpop.f32.mrf.mxu0
        %v1229 = vadd.f32 %v328, %v1228
        %v1230 = vpop.f32.mrf.mxu0
        %1231 = vmatprep.mubr.bf16.mxu0 0
        %1232 = vmatmul.mubr.bf16.gmra.mxu0 %v786
        %v1233 = vpop.f32.mrf.mxu0
        %v1234 = vadd.f32 %v328, %v1233
        %v1235 = vpop.f32.mrf.mxu0
        %v1236 = vpop.f32.mrf.mxu0
        %v1237 = vadd.f32 %v328, %v1236
        %v1238 = vpop.f32.mrf.mxu0
        %1239 = vmatprep.mubr.bf16.mxu0 0
        %1240 = vmatmul.mubr.bf16.gmra.mxu0 %v789
        %v1241 = vpop.f32.mrf.mxu0
        %v1242 = vadd.f32 %v328, %v1241
        %v1243 = vpop.f32.mrf.mxu0
        %v1244 = vpop.f32.mrf.mxu0
        %v1245 = vadd.f32 %v328, %v1244
        %v1246 = vpop.f32.mrf.mxu0
        %1247 = vmatprep.mubr.bf16.mxu0 0
        %1248 = vmatmul.mubr.bf16.gmra.mxu0 %v792
        %v1249 = vpop.f32.mrf.mxu0
        %v1250 = vadd.f32 %v328, %v1249
        %v1251 = vpop.f32.mrf.mxu0
        %v1252 = vpop.f32.mrf.mxu0
        %v1253 = vadd.f32 %v328, %v1252
        %v1254 = vpop.f32.mrf.mxu0
        %1255 = vmatprep.mubr.bf16.mxu0 0
        %1256 = vmatmul.mubr.bf16.gmra.mxu0 %v795
        %v1257 = vpop.f32.mrf.mxu0
        %v1258 = vadd.f32 %v328, %v1257
        %v1259 = vpop.f32.mrf.mxu0
        %v1260 = vpop.f32.mrf.mxu0
        %v1261 = vadd.f32 %v328, %v1260
        %v1262 = vpop.f32.mrf.mxu0
        %1263 = vmatprep.mubr.bf16.mxu0 0
        %1264 = vmatmul.mubr.bf16.gmra.mxu0 %v798
        %v1265 = vpop.f32.mrf.mxu0
        %v1266 = vadd.f32 %v328, %v1265
        %v1267 = vpop.f32.mrf.mxu0
        %v1268 = vpop.f32.mrf.mxu0
        %v1269 = vadd.f32 %v328, %v1268
        %v1270 = vpop.f32.mrf.mxu0
        %1271 = vmatprep.mubr.bf16.mxu0 0
        %1272 = vmatmul.mubr.bf16.gmra.mxu0 %v801
        %v1273 = vpop.f32.mrf.mxu0
        %v1274 = vadd.f32 %v328, %v1273
        %v1275 = vpop.f32.mrf.mxu0
        %v1276 = vpop.f32.mrf.mxu0
        %v1277 = vadd.f32 %v328, %v1276
        %v1278 = vpop.f32.mrf.mxu0
        %1279 = vmatprep.mubr.bf16.mxu0 0
        %1280 = vmatmul.mubr.bf16.gmra.mxu0 %v804
        %v1281 = vpop.f32.mrf.mxu0
        %v1282 = vadd.f32 %v328, %v1281
        %v1283 = vpop.f32.mrf.mxu0
        %v1284 = vpop.f32.mrf.mxu0
        %v1285 = vadd.f32 %v328, %v1284
        %v1286 = vpop.f32.mrf.mxu0
        %1287 = vmatprep.mubr.bf16.mxu0 0
        %1288 = vmatmul.mubr.bf16.gmra.mxu0 %v807
        %v1289 = vpop.f32.mrf.mxu0
        %v1290 = vadd.f32 %v328, %v1289
        %v1291 = vpop.f32.mrf.mxu0
        %v1292 = vpop.f32.mrf.mxu0
        %v1293 = vadd.f32 %v328, %v1292
        %v1294 = vpop.f32.mrf.mxu0
        %1295 = vmatprep.mubr.bf16.mxu0 0
        %1296 = vmatmul.mubr.bf16.gmra.mxu0 %v810
        %v1297 = vpop.f32.mrf.mxu0
        %v1298 = vadd.f32 %v328, %v1297
        %v1299 = vpop.f32.mrf.mxu0
        %v1300 = vpop.f32.mrf.mxu0
        %v1301 = vadd.f32 %v328, %v1300
        %v1302 = vpop.f32.mrf.mxu0
        %1303 = vmatprep.mubr.bf16.mxu0 0
        %1304 = vmatmul.mubr.bf16.gmra.mxu0 %v813
        %v1305 = vpop.f32.mrf.mxu0
        %v1306 = vadd.f32 %v328, %v1305
        %v1307 = vpop.f32.mrf.mxu0
        %v1308 = vpop.f32.mrf.mxu0
        %v1309 = vadd.f32 %v328, %v1308
        %v1310 = vpop.f32.mrf.mxu0
        %1311 = vmatprep.mubr.bf16.mxu0 0
        %1312 = vmatmul.mubr.bf16.gmra.mxu0 %v816
        %v1313 = vpop.f32.mrf.mxu0
        %v1314 = vadd.f32 %v328, %v1313
        %v1315 = vpop.f32.mrf.mxu0
        %v1316 = vpop.f32.mrf.mxu0
        %v1317 = vadd.f32 %v328, %v1316
        %v1318 = vpop.f32.mrf.mxu0
        %1319 = vmatprep.mubr.bf16.mxu0 0
        %1320 = vmatmul.mubr.bf16.gmra.mxu0 %v819
        %v1321 = vpop.f32.mrf.mxu0
        %v1322 = vadd.f32 %v328, %v1321
        %v1323 = vpop.f32.mrf.mxu0
        %v1324 = vpop.f32.mrf.mxu0
        %v1325 = vadd.f32 %v328, %v1324
        %v1326 = vpop.f32.mrf.mxu0
        %1327 = vmatprep.mubr.bf16.mxu0 0
        %1328 = vmatmul.mubr.bf16.gmra.mxu0 %v822
        %v1329 = vpop.f32.mrf.mxu0
        %v1330 = vadd.f32 %v328, %v1329
        %v1331 = vpop.f32.mrf.mxu0
        %v1332 = vpop.f32.mrf.mxu0
        %v1333 = vadd.f32 %v328, %v1332
        %v1334 = vpop.f32.mrf.mxu0
        %1335 = vmatprep.mubr.bf16.mxu0 0
        %1336 = vmatmul.mubr.bf16.gmra.mxu0 %v825
        %v1337 = vpop.f32.mrf.mxu0
        %v1338 = vadd.f32 %v328, %v1337
        %v1339 = vpop.f32.mrf.mxu0
        %v1340 = vpop.f32.mrf.mxu0
        %v1341 = vadd.f32 %v328, %v1340
        %v1342 = vpop.f32.mrf.mxu0
        %1343 = vmatprep.mubr.bf16.mxu0 0
        %1344 = vmatmul.mubr.bf16.gmra.mxu0 %v828
        %v1345 = vpop.f32.mrf.mxu0
        %v1346 = vadd.f32 %v328, %v1345
        %v1347 = vpop.f32.mrf.mxu0
        %v1348 = vpop.f32.mrf.mxu0
        %v1349 = vadd.f32 %v328, %v1348
        %v1350 = vpop.f32.mrf.mxu0
        %1351 = vmatprep.mubr.bf16.mxu0 0
        %1352 = vmatmul.mubr.bf16.gmra.mxu0 %v831
        %v1353 = vpop.f32.mrf.mxu0
        %v1354 = vadd.f32 %v328, %v1353
        %v1355 = vpop.f32.mrf.mxu0
        %v1356 = vpop.f32.mrf.mxu0
        %v1357 = vadd.f32 %v328, %v1356
        %v1358 = vpop.f32.mrf.mxu0
        %1359 = vmatprep.mubr.bf16.mxu0 0
        %1360 = vmatmul.mubr.bf16.gmra.mxu0 %v834
        %v1361 = vpop.f32.mrf.mxu0
        %v1362 = vadd.f32 %v328, %v1361
        %v1363 = vpop.f32.mrf.mxu0
        %v1364 = vpop.f32.mrf.mxu0
        %v1365 = vadd.f32 %v328, %v1364
        %v1366 = vpop.f32.mrf.mxu0
        %1367 = vmatprep.mubr.bf16.mxu0 0
        %1368 = vmatmul.mubr.bf16.gmra.mxu0 %v837
        %v1369 = vpop.f32.mrf.mxu0
        %v1370 = vadd.f32 %v328, %v1369
        %v1371 = vpop.f32.mrf.mxu0
        %v1372 = vpop.f32.mrf.mxu0
        %v1373 = vadd.f32 %v328, %v1372
        %v1374 = vpop.f32.mrf.mxu0
        %1375 = vmatprep.mubr.bf16.mxu0 0
        %1376 = vmatmul.mubr.bf16.gmra.mxu0 %v840
        %v1377 = vpop.f32.mrf.mxu0
        %v1378 = vadd.f32 %v328, %v1377
        %v1379 = vpop.f32.mrf.mxu0
        %v1380 = vpop.f32.mrf.mxu0
        %v1381 = vadd.f32 %v328, %v1380
        %v1382 = vpop.f32.mrf.mxu0
        %1383 = vmatprep.mubr.bf16.mxu0 0
        %1384 = vmatmul.mubr.bf16.gmra.mxu0 %v843
        %v1385 = vpop.f32.mrf.mxu0
        %v1386 = vadd.f32 %v328, %v1385
        %v1387 = vpop.f32.mrf.mxu0
        %v1388 = vpop.f32.mrf.mxu0
        %v1389 = vadd.f32 %v328, %v1388
        %v1390 = vpop.f32.mrf.mxu0
        %1391 = vmatprep.mubr.bf16.mxu0 0
        %1392 = vmatmul.mubr.bf16.gmra.mxu0 %v846
        %v1393 = vpop.f32.mrf.mxu0
        %v1394 = vadd.f32 %v328, %v1393
        %v1395 = vpop.f32.mrf.mxu0
        %v1396 = vpop.f32.mrf.mxu0
        %v1397 = vadd.f32 %v328, %v1396
        %v1398 = vpop.f32.mrf.mxu0
        %1399 = vdwg.mxu0
        %v1400 = vmax.f32 %v890, 0.0
        %v1401 = vmax.f32 %v893, 0.0
        %v1402 = vmax.f32 %v898, 0.0
        %v1403 = vmax.f32 %v901, 0.0
        %v1404 = vmax.f32 %v906, 0.0
        %v1405 = vmax.f32 %v909, 0.0
        %v1406 = vmax.f32 %v914, 0.0
        %v1407 = vmax.f32 %v917, 0.0
        %v1408 = vmax.f32 %v922, 0.0
        %v1409 = vmax.f32 %v925, 0.0
        %v1410 = vmax.f32 %v930, 0.0
        %v1411 = vmax.f32 %v933, 0.0
        %v1412 = vmax.f32 %v938, 0.0
        %v1413 = vmax.f32 %v941, 0.0
        %v1414 = vmax.f32 %v946, 0.0
        %v1415 = vmax.f32 %v949, 0.0
        %v1416 = vmax.f32 %v954, 0.0
        %v1417 = vmax.f32 %v957, 0.0
        %v1418 = vmax.f32 %v962, 0.0
        %v1419 = vmax.f32 %v965, 0.0
        %v1420 = vmax.f32 %v970, 0.0
        %v1421 = vmax.f32 %v973, 0.0
        %v1422 = vmax.f32 %v978, 0.0
        %v1423 = vmax.f32 %v981, 0.0
        %v1424 = vmax.f32 %v986, 0.0
        %v1425 = vmax.f32 %v989, 0.0
        %v1426 = vmax.f32 %v994, 0.0
        %v1427 = vmax.f32 %v997, 0.0
        %v1428 = vmax.f32 %v1002, 0.0
        %v1429 = vmax.f32 %v1005, 0.0
        %v1430 = vmax.f32 %v1010, 0.0
        %v1431 = vmax.f32 %v1013, 0.0
        %v1432 = vmax.f32 %v1018, 0.0
        %v1433 = vmax.f32 %v1021, 0.0
        %v1434 = vmax.f32 %v1026, 0.0
        %v1435 = vmax.f32 %v1029, 0.0
        %v1436 = vmax.f32 %v1034, 0.0
        %v1437 = vmax.f32 %v1037, 0.0
        %v1438 = vmax.f32 %v1042, 0.0
        %v1439 = vmax.f32 %v1045, 0.0
        %v1440 = vmax.f32 %v1050, 0.0
        %v1441 = vmax.f32 %v1053, 0.0
        %v1442 = vmax.f32 %v1058, 0.0
        %v1443 = vmax.f32 %v1061, 0.0
        %v1444 = vmax.f32 %v1066, 0.0
        %v1445 = vmax.f32 %v1069, 0.0
        %v1446 = vmax.f32 %v1074, 0.0
        %v1447 = vmax.f32 %v1077, 0.0
        %v1448 = vmax.f32 %v1082, 0.0
        %v1449 = vmax.f32 %v1085, 0.0
        %v1450 = vmax.f32 %v1090, 0.0
        %v1451 = vmax.f32 %v1093, 0.0
        %v1452 = vmax.f32 %v1098, 0.0
        %v1453 = vmax.f32 %v1101, 0.0
        %v1454 = vmax.f32 %v1106, 0.0
        %v1455 = vmax.f32 %v1109, 0.0
        %v1456 = vmax.f32 %v1114, 0.0
        %v1457 = vmax.f32 %v1117, 0.0
        %v1458 = vmax.f32 %v1122, 0.0
        %v1459 = vmax.f32 %v1125, 0.0
        %v1460 = vmax.f32 %v1130, 0.0
        %v1461 = vmax.f32 %v1133, 0.0
        %v1462 = vmax.f32 %v1138, 0.0
        %v1463 = vmax.f32 %v1141, 0.0
        %v1464 = vmax.f32 %v1146, 0.0
        %v1465 = vmax.f32 %v1149, 0.0
        %v1466 = vmax.f32 %v1154, 0.0
        %v1467 = vmax.f32 %v1157, 0.0
        %v1468 = vmax.f32 %v1162, 0.0
        %v1469 = vmax.f32 %v1165, 0.0
        %v1470 = vmax.f32 %v1170, 0.0
        %v1471 = vmax.f32 %v1173, 0.0
        %v1472 = vmax.f32 %v1178, 0.0
        %v1473 = vmax.f32 %v1181, 0.0
        %v1474 = vmax.f32 %v1186, 0.0
        %v1475 = vmax.f32 %v1189, 0.0
        %v1476 = vmax.f32 %v1194, 0.0
        %v1477 = vmax.f32 %v1197, 0.0
        %v1478 = vmax.f32 %v1202, 0.0
        %v1479 = vmax.f32 %v1205, 0.0
        %v1480 = vmax.f32 %v1210, 0.0
        %v1481 = vmax.f32 %v1213, 0.0
        %v1482 = vmax.f32 %v1218, 0.0
        %v1483 = vmax.f32 %v1221, 0.0
        %v1484 = vmax.f32 %v1226, 0.0
        %v1485 = vmax.f32 %v1229, 0.0
        %v1486 = vmax.f32 %v1234, 0.0
        %v1487 = vmax.f32 %v1237, 0.0
        %v1488 = vmax.f32 %v1242, 0.0
        %v1489 = vmax.f32 %v1245, 0.0
        %v1490 = vmax.f32 %v1250, 0.0
        %v1491 = vmax.f32 %v1253, 0.0
        %v1492 = vmax.f32 %v1258, 0.0
        %v1493 = vmax.f32 %v1261, 0.0
        %v1494 = vmax.f32 %v1266, 0.0
        %v1495 = vmax.f32 %v1269, 0.0
        %v1496 = vmax.f32 %v1274, 0.0
        %v1497 = vmax.f32 %v1277, 0.0
        %v1498 = vmax.f32 %v1282, 0.0
        %v1499 = vmax.f32 %v1285, 0.0
        %v1500 = vmax.f32 %v1290, 0.0
        %v1501 = vmax.f32 %v1293, 0.0
        %v1502 = vmax.f32 %v1298, 0.0
        %v1503 = vmax.f32 %v1301, 0.0
        %v1504 = vmax.f32 %v1306, 0.0
        %v1505 = vmax.f32 %v1309, 0.0
        %v1506 = vmax.f32 %v1314, 0.0
        %v1507 = vmax.f32 %v1317, 0.0
        %v1508 = vmax.f32 %v1322, 0.0
        %v1509 = vmax.f32 %v1325, 0.0
        %v1510 = vmax.f32 %v1330, 0.0
        %v1511 = vmax.f32 %v1333, 0.0
        %v1512 = vmax.f32 %v1338, 0.0
        %v1513 = vmax.f32 %v1341, 0.0
        %v1514 = vmax.f32 %v1346, 0.0
        %v1515 = vmax.f32 %v1349, 0.0
        %v1516 = vmax.f32 %v1354, 0.0
        %v1517 = vmax.f32 %v1357, 0.0
        %v1518 = vmax.f32 %v1362, 0.0
        %v1519 = vmax.f32 %v1365, 0.0
        %v1520 = vmax.f32 %v1370, 0.0
        %v1521 = vmax.f32 %v1373, 0.0
        %v1522 = vmax.f32 %v1378, 0.0
        %v1523 = vmax.f32 %v1381, 0.0
        %v1524 = vmax.f32 %v1386, 0.0
        %v1525 = vmax.f32 %v1389, 0.0
        %v1526 = vmax.f32 %v1394, 0.0
        %v1527 = vmax.f32 %v1397, 0.0
        %v1528 = vpack.c.bf16 %v1401, %v1400
        %v1529 = vpack.c.bf16 %v1403, %v1402
        %v1530 = vpack.c.bf16 %v1405, %v1404
        %v1531 = vpack.c.bf16 %v1407, %v1406
        %v1532 = vpack.c.bf16 %v1409, %v1408
        %v1533 = vpack.c.bf16 %v1411, %v1410
        %v1534 = vpack.c.bf16 %v1413, %v1412
        %v1535 = vpack.c.bf16 %v1415, %v1414
        %v1536 = vpack.c.bf16 %v1417, %v1416
        %v1537 = vpack.c.bf16 %v1419, %v1418
        %v1538 = vpack.c.bf16 %v1421, %v1420
        %v1539 = vpack.c.bf16 %v1423, %v1422
        %v1540 = vpack.c.bf16 %v1425, %v1424
        %v1541 = vpack.c.bf16 %v1427, %v1426
        %v1542 = vpack.c.bf16 %v1429, %v1428
        %v1543 = vpack.c.bf16 %v1431, %v1430
        %v1544 = vpack.c.bf16 %v1433, %v1432
        %v1545 = vpack.c.bf16 %v1435, %v1434
        %v1546 = vpack.c.bf16 %v1437, %v1436
        %v1547 = vpack.c.bf16 %v1439, %v1438
        %v1548 = vpack.c.bf16 %v1441, %v1440
        %v1549 = vpack.c.bf16 %v1443, %v1442
        %v1550 = vpack.c.bf16 %v1445, %v1444
        %v1551 = vpack.c.bf16 %v1447, %v1446
        %v1552 = vpack.c.bf16 %v1449, %v1448
        %v1553 = vpack.c.bf16 %v1451, %v1450
        %v1554 = vpack.c.bf16 %v1453, %v1452
        %v1555 = vpack.c.bf16 %v1455, %v1454
        %v1556 = vpack.c.bf16 %v1457, %v1456
        %v1557 = vpack.c.bf16 %v1459, %v1458
        %v1558 = vpack.c.bf16 %v1461, %v1460
        %v1559 = vpack.c.bf16 %v1463, %v1462
        %v1560 = vpack.c.bf16 %v1465, %v1464
        %v1561 = vpack.c.bf16 %v1467, %v1466
        %v1562 = vpack.c.bf16 %v1469, %v1468
        %v1563 = vpack.c.bf16 %v1471, %v1470
        %v1564 = vpack.c.bf16 %v1473, %v1472
        %v1565 = vpack.c.bf16 %v1475, %v1474
        %v1566 = vpack.c.bf16 %v1477, %v1476
        %v1567 = vpack.c.bf16 %v1479, %v1478
        %v1568 = vpack.c.bf16 %v1481, %v1480
        %v1569 = vpack.c.bf16 %v1483, %v1482
        %v1570 = vpack.c.bf16 %v1485, %v1484
        %v1571 = vpack.c.bf16 %v1487, %v1486
        %v1572 = vpack.c.bf16 %v1489, %v1488
        %v1573 = vpack.c.bf16 %v1491, %v1490
        %v1574 = vpack.c.bf16 %v1493, %v1492
        %v1575 = vpack.c.bf16 %v1495, %v1494
        %v1576 = vpack.c.bf16 %v1497, %v1496
        %v1577 = vpack.c.bf16 %v1499, %v1498
        %v1578 = vpack.c.bf16 %v1501, %v1500
        %v1579 = vpack.c.bf16 %v1503, %v1502
        %v1580 = vpack.c.bf16 %v1505, %v1504
        %v1581 = vpack.c.bf16 %v1507, %v1506
        %v1582 = vpack.c.bf16 %v1509, %v1508
        %v1583 = vpack.c.bf16 %v1511, %v1510
        %v1584 = vpack.c.bf16 %v1513, %v1512
        %v1585 = vpack.c.bf16 %v1515, %v1514
        %v1586 = vpack.c.bf16 %v1517, %v1516
        %v1587 = vpack.c.bf16 %v1519, %v1518
        %v1588 = vpack.c.bf16 %v1521, %v1520
        %v1589 = vpack.c.bf16 %v1523, %v1522
        %v1590 = vpack.c.bf16 %v1525, %v1524
        %v1591 = vpack.c.bf16 %v1527, %v1526
        %v1656 = vunpack.c.l.b16 %v1528
        %v1657 = vunpack.c.h.b16 %v1528
        %v1658 = vunpack.c.l.b16 %v1529
        %v1659 = vunpack.c.h.b16 %v1529
        %v1660 = vunpack.c.l.b16 %v1530
        %v1661 = vunpack.c.h.b16 %v1530
        %v1662 = vunpack.c.l.b16 %v1531
        %v1663 = vunpack.c.h.b16 %v1531
        %v1664 = vunpack.c.l.b16 %v1532
        %v1665 = vunpack.c.h.b16 %v1532
        %v1666 = vunpack.c.l.b16 %v1533
        %v1667 = vunpack.c.h.b16 %v1533
        %v1668 = vunpack.c.l.b16 %v1534
        %v1669 = vunpack.c.h.b16 %v1534
        %v1670 = vunpack.c.l.b16 %v1535
        %v1671 = vunpack.c.h.b16 %v1535
        %v1672 = vunpack.c.l.b16 %v1536
        %v1673 = vunpack.c.h.b16 %v1536
        %v1674 = vunpack.c.l.b16 %v1537
        %v1675 = vunpack.c.h.b16 %v1537
        %v1676 = vunpack.c.l.b16 %v1538
        %v1677 = vunpack.c.h.b16 %v1538
        %v1678 = vunpack.c.l.b16 %v1539
        %v1679 = vunpack.c.h.b16 %v1539
        %v1680 = vunpack.c.l.b16 %v1540
        %v1681 = vunpack.c.h.b16 %v1540
        %v1682 = vunpack.c.l.b16 %v1541
        %v1683 = vunpack.c.h.b16 %v1541
        %v1684 = vunpack.c.l.b16 %v1542
        %v1685 = vunpack.c.h.b16 %v1542
        %v1686 = vunpack.c.l.b16 %v1543
        %v1687 = vunpack.c.h.b16 %v1543
        %v1688 = vunpack.c.l.b16 %v1544
        %v1689 = vunpack.c.h.b16 %v1544
        %v1690 = vunpack.c.l.b16 %v1545
        %v1691 = vunpack.c.h.b16 %v1545
        %v1692 = vunpack.c.l.b16 %v1546
        %v1693 = vunpack.c.h.b16 %v1546
        %v1694 = vunpack.c.l.b16 %v1547
        %v1695 = vunpack.c.h.b16 %v1547
        %v1696 = vunpack.c.l.b16 %v1548
        %v1697 = vunpack.c.h.b16 %v1548
        %v1698 = vunpack.c.l.b16 %v1549
        %v1699 = vunpack.c.h.b16 %v1549
        %v1700 = vunpack.c.l.b16 %v1550
        %v1701 = vunpack.c.h.b16 %v1550
        %v1702 = vunpack.c.l.b16 %v1551
        %v1703 = vunpack.c.h.b16 %v1551
        %v1704 = vunpack.c.l.b16 %v1552
        %v1705 = vunpack.c.h.b16 %v1552
        %v1706 = vunpack.c.l.b16 %v1553
        %v1707 = vunpack.c.h.b16 %v1553
        %v1708 = vunpack.c.l.b16 %v1554
        %v1709 = vunpack.c.h.b16 %v1554
        %v1710 = vunpack.c.l.b16 %v1555
        %v1711 = vunpack.c.h.b16 %v1555
        %v1712 = vunpack.c.l.b16 %v1556
        %v1713 = vunpack.c.h.b16 %v1556
        %v1714 = vunpack.c.l.b16 %v1557
        %v1715 = vunpack.c.h.b16 %v1557
        %v1716 = vunpack.c.l.b16 %v1558
        %v1717 = vunpack.c.h.b16 %v1558
        %v1718 = vunpack.c.l.b16 %v1559
        %v1719 = vunpack.c.h.b16 %v1559
        %v1720 = vunpack.c.l.b16 %v1560
        %v1721 = vunpack.c.h.b16 %v1560
        %v1722 = vunpack.c.l.b16 %v1561
        %v1723 = vunpack.c.h.b16 %v1561
        %v1724 = vunpack.c.l.b16 %v1562
        %v1725 = vunpack.c.h.b16 %v1562
        %v1726 = vunpack.c.l.b16 %v1563
        %v1727 = vunpack.c.h.b16 %v1563
        %v1728 = vunpack.c.l.b16 %v1564
        %v1729 = vunpack.c.h.b16 %v1564
        %v1730 = vunpack.c.l.b16 %v1565
        %v1731 = vunpack.c.h.b16 %v1565
        %v1732 = vunpack.c.l.b16 %v1566
        %v1733 = vunpack.c.h.b16 %v1566
        %v1734 = vunpack.c.l.b16 %v1567
        %v1735 = vunpack.c.h.b16 %v1567
        %v1736 = vunpack.c.l.b16 %v1568
        %v1737 = vunpack.c.h.b16 %v1568
        %v1738 = vunpack.c.l.b16 %v1569
        %v1739 = vunpack.c.h.b16 %v1569
        %v1740 = vunpack.c.l.b16 %v1570
        %v1741 = vunpack.c.h.b16 %v1570
        %v1742 = vunpack.c.l.b16 %v1571
        %v1743 = vunpack.c.h.b16 %v1571
        %v1744 = vunpack.c.l.b16 %v1572
        %v1745 = vunpack.c.h.b16 %v1572
        %v1746 = vunpack.c.l.b16 %v1573
        %v1747 = vunpack.c.h.b16 %v1573
        %v1748 = vunpack.c.l.b16 %v1574
        %v1749 = vunpack.c.h.b16 %v1574
        %v1750 = vunpack.c.l.b16 %v1575
        %v1751 = vunpack.c.h.b16 %v1575
        %v1752 = vunpack.c.l.b16 %v1576
        %v1753 = vunpack.c.h.b16 %v1576
        %v1754 = vunpack.c.l.b16 %v1577
        %v1755 = vunpack.c.h.b16 %v1577
        %v1756 = vunpack.c.l.b16 %v1578
        %v1757 = vunpack.c.h.b16 %v1578
        %v1758 = vunpack.c.l.b16 %v1579
        %v1759 = vunpack.c.h.b16 %v1579
        %v1760 = vunpack.c.l.b16 %v1580
        %v1761 = vunpack.c.h.b16 %v1580
        %v1762 = vunpack.c.l.b16 %v1581
        %v1763 = vunpack.c.h.b16 %v1581
        %v1764 = vunpack.c.l.b16 %v1582
        %v1765 = vunpack.c.h.b16 %v1582
        %v1766 = vunpack.c.l.b16 %v1583
        %v1767 = vunpack.c.h.b16 %v1583
        %v1768 = vunpack.c.l.b16 %v1584
        %v1769 = vunpack.c.h.b16 %v1584
        %v1770 = vunpack.c.l.b16 %v1585
        %v1771 = vunpack.c.h.b16 %v1585
        %v1772 = vunpack.c.l.b16 %v1586
        %v1773 = vunpack.c.h.b16 %v1586
        %v1774 = vunpack.c.l.b16 %v1587
        %v1775 = vunpack.c.h.b16 %v1587
        %v1776 = vunpack.c.l.b16 %v1588
        %v1777 = vunpack.c.h.b16 %v1588
        %v1778 = vunpack.c.l.b16 %v1589
        %v1779 = vunpack.c.h.b16 %v1589
        %v1780 = vunpack.c.l.b16 %v1590
        %v1781 = vunpack.c.h.b16 %v1590
        %v1782 = vunpack.c.l.b16 %v1591
        %v1783 = vunpack.c.h.b16 %v1591
        %v1784 = vpack.c.b16 %v1656, %v1656
        %v1785 = vpack.c.b16 %v1657, %v1657
        %v1786 = vpack.c.b16 %v1658, %v1658
        %v1787 = vpack.c.b16 %v1659, %v1659
        %v1788 = vpack.c.b16 %v1660, %v1660
        %v1789 = vpack.c.b16 %v1661, %v1661
        %v1790 = vpack.c.b16 %v1662, %v1662
        %v1791 = vpack.c.b16 %v1663, %v1663
        %v1792 = vpack.c.b16 %v1664, %v1664
        %v1793 = vpack.c.b16 %v1665, %v1665
        %v1794 = vpack.c.b16 %v1666, %v1666
        %v1795 = vpack.c.b16 %v1667, %v1667
        %v1796 = vpack.c.b16 %v1668, %v1668
        %v1797 = vpack.c.b16 %v1669, %v1669
        %v1798 = vpack.c.b16 %v1670, %v1670
        %v1799 = vpack.c.b16 %v1671, %v1671
        %v1800 = vpack.c.b16 %v1672, %v1672
        %v1801 = vpack.c.b16 %v1673, %v1673
        %v1802 = vpack.c.b16 %v1674, %v1674
        %v1803 = vpack.c.b16 %v1675, %v1675
        %v1804 = vpack.c.b16 %v1676, %v1676
        %v1805 = vpack.c.b16 %v1677, %v1677
        %v1806 = vpack.c.b16 %v1678, %v1678
        %v1807 = vpack.c.b16 %v1679, %v1679
        %v1808 = vpack.c.b16 %v1680, %v1680
        %v1809 = vpack.c.b16 %v1681, %v1681
        %v1810 = vpack.c.b16 %v1682, %v1682
        %v1811 = vpack.c.b16 %v1683, %v1683
        %v1812 = vpack.c.b16 %v1684, %v1684
        %v1813 = vpack.c.b16 %v1685, %v1685
        %v1814 = vpack.c.b16 %v1686, %v1686
        %v1815 = vpack.c.b16 %v1687, %v1687
        %v1816 = vpack.c.b16 %v1688, %v1688
        %v1817 = vpack.c.b16 %v1689, %v1689
        %v1818 = vpack.c.b16 %v1690, %v1690
        %v1819 = vpack.c.b16 %v1691, %v1691
        %v1820 = vpack.c.b16 %v1692, %v1692
        %v1821 = vpack.c.b16 %v1693, %v1693
        %v1822 = vpack.c.b16 %v1694, %v1694
        %v1823 = vpack.c.b16 %v1695, %v1695
        %v1824 = vpack.c.b16 %v1696, %v1696
        %v1825 = vpack.c.b16 %v1697, %v1697
        %v1826 = vpack.c.b16 %v1698, %v1698
        %v1827 = vpack.c.b16 %v1699, %v1699
        %v1828 = vpack.c.b16 %v1700, %v1700
        %v1829 = vpack.c.b16 %v1701, %v1701
        %v1830 = vpack.c.b16 %v1702, %v1702
        %v1831 = vpack.c.b16 %v1703, %v1703
        %v1832 = vpack.c.b16 %v1704, %v1704
        %v1833 = vpack.c.b16 %v1705, %v1705
        %v1834 = vpack.c.b16 %v1706, %v1706
        %v1835 = vpack.c.b16 %v1707, %v1707
        %v1836 = vpack.c.b16 %v1708, %v1708
        %v1837 = vpack.c.b16 %v1709, %v1709
        %v1838 = vpack.c.b16 %v1710, %v1710
        %v1839 = vpack.c.b16 %v1711, %v1711
        %v1840 = vpack.c.b16 %v1712, %v1712
        %v1841 = vpack.c.b16 %v1713, %v1713
        %v1842 = vpack.c.b16 %v1714, %v1714
        %v1843 = vpack.c.b16 %v1715, %v1715
        %v1844 = vpack.c.b16 %v1716, %v1716
        %v1845 = vpack.c.b16 %v1717, %v1717
        %v1846 = vpack.c.b16 %v1718, %v1718
        %v1847 = vpack.c.b16 %v1719, %v1719
        %v1848 = vpack.c.b16 %v1720, %v1720
        %v1849 = vpack.c.b16 %v1721, %v1721
        %v1850 = vpack.c.b16 %v1722, %v1722
        %v1851 = vpack.c.b16 %v1723, %v1723
        %v1852 = vpack.c.b16 %v1724, %v1724
        %v1853 = vpack.c.b16 %v1725, %v1725
        %v1854 = vpack.c.b16 %v1726, %v1726
        %v1855 = vpack.c.b16 %v1727, %v1727
        %v1856 = vpack.c.b16 %v1728, %v1728
        %v1857 = vpack.c.b16 %v1729, %v1729
        %v1858 = vpack.c.b16 %v1730, %v1730
        %v1859 = vpack.c.b16 %v1731, %v1731
        %v1860 = vpack.c.b16 %v1732, %v1732
        %v1861 = vpack.c.b16 %v1733, %v1733
        %v1862 = vpack.c.b16 %v1734, %v1734
        %v1863 = vpack.c.b16 %v1735, %v1735
        %v1864 = vpack.c.b16 %v1736, %v1736
        %v1865 = vpack.c.b16 %v1737, %v1737
        %v1866 = vpack.c.b16 %v1738, %v1738
        %v1867 = vpack.c.b16 %v1739, %v1739
        %v1868 = vpack.c.b16 %v1740, %v1740
        %v1869 = vpack.c.b16 %v1741, %v1741
        %v1870 = vpack.c.b16 %v1742, %v1742
        %v1871 = vpack.c.b16 %v1743, %v1743
        %v1872 = vpack.c.b16 %v1744, %v1744
        %v1873 = vpack.c.b16 %v1745, %v1745
        %v1874 = vpack.c.b16 %v1746, %v1746
        %v1875 = vpack.c.b16 %v1747, %v1747
        %v1876 = vpack.c.b16 %v1748, %v1748
        %v1877 = vpack.c.b16 %v1749, %v1749
        %v1878 = vpack.c.b16 %v1750, %v1750
        %v1879 = vpack.c.b16 %v1751, %v1751
        %v1880 = vpack.c.b16 %v1752, %v1752
        %v1881 = vpack.c.b16 %v1753, %v1753
        %v1882 = vpack.c.b16 %v1754, %v1754
        %v1883 = vpack.c.b16 %v1755, %v1755
        %v1884 = vpack.c.b16 %v1756, %v1756
        %v1885 = vpack.c.b16 %v1757, %v1757
        %v1886 = vpack.c.b16 %v1758, %v1758
        %v1887 = vpack.c.b16 %v1759, %v1759
        %v1888 = vpack.c.b16 %v1760, %v1760
        %v1889 = vpack.c.b16 %v1761, %v1761
        %v1890 = vpack.c.b16 %v1762, %v1762
        %v1891 = vpack.c.b16 %v1763, %v1763
        %v1892 = vpack.c.b16 %v1764, %v1764
        %v1893 = vpack.c.b16 %v1765, %v1765
        %v1894 = vpack.c.b16 %v1766, %v1766
        %v1895 = vpack.c.b16 %v1767, %v1767
        %v1896 = vpack.c.b16 %v1768, %v1768
        %v1897 = vpack.c.b16 %v1769, %v1769
        %v1898 = vpack.c.b16 %v1770, %v1770
        %v1899 = vpack.c.b16 %v1771, %v1771
        %v1900 = vpack.c.b16 %v1772, %v1772
        %v1901 = vpack.c.b16 %v1773, %v1773
        %v1902 = vpack.c.b16 %v1774, %v1774
        %v1903 = vpack.c.b16 %v1775, %v1775
        %v1904 = vpack.c.b16 %v1776, %v1776
        %v1905 = vpack.c.b16 %v1777, %v1777
        %v1906 = vpack.c.b16 %v1778, %v1778
        %v1907 = vpack.c.b16 %v1779, %v1779
        %v1908 = vpack.c.b16 %v1780, %v1780
        %v1909 = vpack.c.b16 %v1781, %v1781
        %v1910 = vpack.c.b16 %v1782, %v1782
        %v1911 = vpack.c.b16 %v1783, %v1783
        %vm2040 = vcmask 158720
        %2041 = vst.msk [vmem:[%s172] sm:$0xf] %vm2040, %v1784
        %2042 = vst.msk [vmem:[%s172 + $0x4] sm:$0xf] %vm2040, %v1785
        %2043 = vst.msk [vmem:[%s172 + $0x8] sm:$0xf] %vm2040, %v1786
        %2044 = vst.msk [vmem:[%s172 + $0xc] sm:$0xf] %vm2040, %v1787
        %2045 = vst.msk [vmem:[%s172 + $0x10] sm:$0xf] %vm2040, %v1788
        %2046 = vst.msk [vmem:[%s172 + $0x14] sm:$0xf] %vm2040, %v1789
        %2047 = vst.msk [vmem:[%s172 + $0x18] sm:$0xf] %vm2040, %v1790
        %2048 = vst.msk [vmem:[%s172 + $0x1c] sm:$0xf] %vm2040, %v1791
        %2049 = vst.msk [vmem:[%s172 + $0x20] sm:$0xf] %vm2040, %v1792
        %2050 = vst.msk [vmem:[%s172 + $0x24] sm:$0xf] %vm2040, %v1793
        %2051 = vst.msk [vmem:[%s172 + $0x28] sm:$0xf] %vm2040, %v1794
        %2052 = vst.msk [vmem:[%s172 + $0x2c] sm:$0xf] %vm2040, %v1795
        %2053 = vst.msk [vmem:[%s172 + $0x30] sm:$0xf] %vm2040, %v1796
        %2054 = vst.msk [vmem:[%s172 + $0x34] sm:$0xf] %vm2040, %v1797
        %2055 = vst.msk [vmem:[%s172 + $0x38] sm:$0xf] %vm2040, %v1798
        %2056 = vst.msk [vmem:[%s172 + $0x3c] sm:$0xf] %vm2040, %v1799
        %2057 = vst.msk [vmem:[%s172 + $0x40] sm:$0xf] %vm2040, %v1800
        %2058 = vst.msk [vmem:[%s172 + $0x44] sm:$0xf] %vm2040, %v1801
        %2059 = vst.msk [vmem:[%s172 + $0x48] sm:$0xf] %vm2040, %v1802
        %2060 = vst.msk [vmem:[%s172 + $0x4c] sm:$0xf] %vm2040, %v1803
        %2061 = vst.msk [vmem:[%s172 + $0x50] sm:$0xf] %vm2040, %v1804
        %2062 = vst.msk [vmem:[%s172 + $0x54] sm:$0xf] %vm2040, %v1805
        %2063 = vst.msk [vmem:[%s172 + $0x58] sm:$0xf] %vm2040, %v1806
        %2064 = vst.msk [vmem:[%s172 + $0x5c] sm:$0xf] %vm2040, %v1807
        %2065 = vst.msk [vmem:[%s172 + $0x60] sm:$0xf] %vm2040, %v1808
        %2066 = vst.msk [vmem:[%s172 + $0x64] sm:$0xf] %vm2040, %v1809
        %2067 = vst.msk [vmem:[%s172 + $0x68] sm:$0xf] %vm2040, %v1810
        %2068 = vst.msk [vmem:[%s172 + $0x6c] sm:$0xf] %vm2040, %v1811
        %2069 = vst.msk [vmem:[%s172 + $0x70] sm:$0xf] %vm2040, %v1812
        %2070 = vst.msk [vmem:[%s172 + $0x74] sm:$0xf] %vm2040, %v1813
        %2071 = vst.msk [vmem:[%s172 + $0x78] sm:$0xf] %vm2040, %v1814
        %2072 = vst.msk [vmem:[%s172 + $0x7c] sm:$0xf] %vm2040, %v1815
        %2073 = vst.msk [vmem:[%s172 + $0x80] sm:$0xf] %vm2040, %v1816
        %2074 = vst.msk [vmem:[%s172 + $0x84] sm:$0xf] %vm2040, %v1817
        %2075 = vst.msk [vmem:[%s172 + $0x88] sm:$0xf] %vm2040, %v1818
        %2076 = vst.msk [vmem:[%s172 + $0x8c] sm:$0xf] %vm2040, %v1819
        %2077 = vst.msk [vmem:[%s172 + $0x90] sm:$0xf] %vm2040, %v1820
        %2078 = vst.msk [vmem:[%s172 + $0x94] sm:$0xf] %vm2040, %v1821
        %2079 = vst.msk [vmem:[%s172 + $0x98] sm:$0xf] %vm2040, %v1822
        %2080 = vst.msk [vmem:[%s172 + $0x9c] sm:$0xf] %vm2040, %v1823
        %2081 = vst.msk [vmem:[%s172 + $0xa0] sm:$0xf] %vm2040, %v1824
        %2082 = vst.msk [vmem:[%s172 + $0xa4] sm:$0xf] %vm2040, %v1825
        %2083 = vst.msk [vmem:[%s172 + $0xa8] sm:$0xf] %vm2040, %v1826
        %2084 = vst.msk [vmem:[%s172 + $0xac] sm:$0xf] %vm2040, %v1827
        %2085 = vst.msk [vmem:[%s172 + $0xb0] sm:$0xf] %vm2040, %v1828
        %2086 = vst.msk [vmem:[%s172 + $0xb4] sm:$0xf] %vm2040, %v1829
        %2087 = vst.msk [vmem:[%s172 + $0xb8] sm:$0xf] %vm2040, %v1830
        %2088 = vst.msk [vmem:[%s172 + $0xbc] sm:$0xf] %vm2040, %v1831
        %2089 = vst.msk [vmem:[%s172 + $0xc0] sm:$0xf] %vm2040, %v1832
        %2090 = vst.msk [vmem:[%s172 + $0xc4] sm:$0xf] %vm2040, %v1833
        %2091 = vst.msk [vmem:[%s172 + $0xc8] sm:$0xf] %vm2040, %v1834
        %2092 = vst.msk [vmem:[%s172 + $0xcc] sm:$0xf] %vm2040, %v1835
        %2093 = vst.msk [vmem:[%s172 + $0xd0] sm:$0xf] %vm2040, %v1836
        %2094 = vst.msk [vmem:[%s172 + $0xd4] sm:$0xf] %vm2040, %v1837
        %2095 = vst.msk [vmem:[%s172 + $0xd8] sm:$0xf] %vm2040, %v1838
        %2096 = vst.msk [vmem:[%s172 + $0xdc] sm:$0xf] %vm2040, %v1839
        %2097 = vst.msk [vmem:[%s172 + $0xe0] sm:$0xf] %vm2040, %v1840
        %2098 = vst.msk [vmem:[%s172 + $0xe4] sm:$0xf] %vm2040, %v1841
        %2099 = vst.msk [vmem:[%s172 + $0xe8] sm:$0xf] %vm2040, %v1842
        %2100 = vst.msk [vmem:[%s172 + $0xec] sm:$0xf] %vm2040, %v1843
        %2101 = vst.msk [vmem:[%s172 + $0xf0] sm:$0xf] %vm2040, %v1844
        %2102 = vst.msk [vmem:[%s172 + $0xf4] sm:$0xf] %vm2040, %v1845
        %2103 = vst.msk [vmem:[%s172 + $0xf8] sm:$0xf] %vm2040, %v1846
        %2104 = vst.msk [vmem:[%s172 + $0xfc] sm:$0xf] %vm2040, %v1847
        %2105 = vst.msk [vmem:[%s172 + $0x100] sm:$0xf] %vm2040, %v1848
        %2106 = vst.msk [vmem:[%s172 + $0x104] sm:$0xf] %vm2040, %v1849
        %2107 = vst.msk [vmem:[%s172 + $0x108] sm:$0xf] %vm2040, %v1850
        %2108 = vst.msk [vmem:[%s172 + $0x10c] sm:$0xf] %vm2040, %v1851
        %2109 = vst.msk [vmem:[%s172 + $0x110] sm:$0xf] %vm2040, %v1852
        %2110 = vst.msk [vmem:[%s172 + $0x114] sm:$0xf] %vm2040, %v1853
        %2111 = vst.msk [vmem:[%s172 + $0x118] sm:$0xf] %vm2040, %v1854
        %2112 = vst.msk [vmem:[%s172 + $0x11c] sm:$0xf] %vm2040, %v1855
        %2113 = vst.msk [vmem:[%s172 + $0x120] sm:$0xf] %vm2040, %v1856
        %2114 = vst.msk [vmem:[%s172 + $0x124] sm:$0xf] %vm2040, %v1857
        %2115 = vst.msk [vmem:[%s172 + $0x128] sm:$0xf] %vm2040, %v1858
        %2116 = vst.msk [vmem:[%s172 + $0x12c] sm:$0xf] %vm2040, %v1859
        %2117 = vst.msk [vmem:[%s172 + $0x130] sm:$0xf] %vm2040, %v1860
        %2118 = vst.msk [vmem:[%s172 + $0x134] sm:$0xf] %vm2040, %v1861
        %2119 = vst.msk [vmem:[%s172 + $0x138] sm:$0xf] %vm2040, %v1862
        %2120 = vst.msk [vmem:[%s172 + $0x13c] sm:$0xf] %vm2040, %v1863
        %2121 = vst.msk [vmem:[%s172 + $0x140] sm:$0xf] %vm2040, %v1864
        %2122 = vst.msk [vmem:[%s172 + $0x144] sm:$0xf] %vm2040, %v1865
        %2123 = vst.msk [vmem:[%s172 + $0x148] sm:$0xf] %vm2040, %v1866
        %2124 = vst.msk [vmem:[%s172 + $0x14c] sm:$0xf] %vm2040, %v1867
        %2125 = vst.msk [vmem:[%s172 + $0x150] sm:$0xf] %vm2040, %v1868
        %2126 = vst.msk [vmem:[%s172 + $0x154] sm:$0xf] %vm2040, %v1869
        %2127 = vst.msk [vmem:[%s172 + $0x158] sm:$0xf] %vm2040, %v1870
        %2128 = vst.msk [vmem:[%s172 + $0x15c] sm:$0xf] %vm2040, %v1871
        %2129 = vst.msk [vmem:[%s172 + $0x160] sm:$0xf] %vm2040, %v1872
        %2130 = vst.msk [vmem:[%s172 + $0x164] sm:$0xf] %vm2040, %v1873
        %2131 = vst.msk [vmem:[%s172 + $0x168] sm:$0xf] %vm2040, %v1874
        %2132 = vst.msk [vmem:[%s172 + $0x16c] sm:$0xf] %vm2040, %v1875
        %2133 = vst.msk [vmem:[%s172 + $0x170] sm:$0xf] %vm2040, %v1876
        %2134 = vst.msk [vmem:[%s172 + $0x174] sm:$0xf] %vm2040, %v1877
        %2135 = vst.msk [vmem:[%s172 + $0x178] sm:$0xf] %vm2040, %v1878
        %2136 = vst.msk [vmem:[%s172 + $0x17c] sm:$0xf] %vm2040, %v1879
        %2137 = vst.msk [vmem:[%s172 + $0x180] sm:$0xf] %vm2040, %v1880
        %2138 = vst.msk [vmem:[%s172 + $0x184] sm:$0xf] %vm2040, %v1881
        %2139 = vst.msk [vmem:[%s172 + $0x188] sm:$0xf] %vm2040, %v1882
        %2140 = vst.msk [vmem:[%s172 + $0x18c] sm:$0xf] %vm2040, %v1883
        %2141 = vst.msk [vmem:[%s172 + $0x190] sm:$0xf] %vm2040, %v1884
        %2142 = vst.msk [vmem:[%s172 + $0x194] sm:$0xf] %vm2040, %v1885
        %2143 = vst.msk [vmem:[%s172 + $0x198] sm:$0xf] %vm2040, %v1886
        %2144 = vst.msk [vmem:[%s172 + $0x19c] sm:$0xf] %vm2040, %v1887
        %2145 = vst.msk [vmem:[%s172 + $0x1a0] sm:$0xf] %vm2040, %v1888
        %2146 = vst.msk [vmem:[%s172 + $0x1a4] sm:$0xf] %vm2040, %v1889
        %2147 = vst.msk [vmem:[%s172 + $0x1a8] sm:$0xf] %vm2040, %v1890
        %2148 = vst.msk [vmem:[%s172 + $0x1ac] sm:$0xf] %vm2040, %v1891
        %2149 = vst.msk [vmem:[%s172 + $0x1b0] sm:$0xf] %vm2040, %v1892
        %2150 = vst.msk [vmem:[%s172 + $0x1b4] sm:$0xf] %vm2040, %v1893
        %2151 = vst.msk [vmem:[%s172 + $0x1b8] sm:$0xf] %vm2040, %v1894
        %2152 = vst.msk [vmem:[%s172 + $0x1bc] sm:$0xf] %vm2040, %v1895
        %2153 = vst.msk [vmem:[%s172 + $0x1c0] sm:$0xf] %vm2040, %v1896
        %2154 = vst.msk [vmem:[%s172 + $0x1c4] sm:$0xf] %vm2040, %v1897
        %2155 = vst.msk [vmem:[%s172 + $0x1c8] sm:$0xf] %vm2040, %v1898
        %2156 = vst.msk [vmem:[%s172 + $0x1cc] sm:$0xf] %vm2040, %v1899
        %2157 = vst.msk [vmem:[%s172 + $0x1d0] sm:$0xf] %vm2040, %v1900
        %2158 = vst.msk [vmem:[%s172 + $0x1d4] sm:$0xf] %vm2040, %v1901
        %2159 = vst.msk [vmem:[%s172 + $0x1d8] sm:$0xf] %vm2040, %v1902
        %2160 = vst.msk [vmem:[%s172 + $0x1dc] sm:$0xf] %vm2040, %v1903
        %2161 = vst.msk [vmem:[%s172 + $0x1e0] sm:$0xf] %vm2040, %v1904
        %2162 = vst.msk [vmem:[%s172 + $0x1e4] sm:$0xf] %vm2040, %v1905
        %2163 = vst.msk [vmem:[%s172 + $0x1e8] sm:$0xf] %vm2040, %v1906
        %2164 = vst.msk [vmem:[%s172 + $0x1ec] sm:$0xf] %vm2040, %v1907
        %2165 = vst.msk [vmem:[%s172 + $0x1f0] sm:$0xf] %vm2040, %v1908
        %2166 = vst.msk [vmem:[%s172 + $0x1f4] sm:$0xf] %vm2040, %v1909
        %2167 = vst.msk [vmem:[%s172 + $0x1f8] sm:$0xf] %vm2040, %v1910
        %2168 = vst.msk [vmem:[%s172 + $0x1fc] sm:$0xf] %vm2040, %v1911
        %s2169 = sand.u32 %s90, 1
        %s2170 = sand.u32 %s90, 1
        %s2171 = smul.addr %s2170, 512
        %s2172 = scalar_lea.vmem [#allocation2], %s2171
        // Predicated region
        $region33: #{critic_forward.6} parent=31 // pred_check
          %p2173 = pneg %p100
        $region34: #{critic_forward.6} parent=31 // pred_check_branch
          %2175 = sbr.rel (%p2173) target = $region36
        $region35: #{critic_forward.6} parent=31 // pred_region
          %s2176 = smul.u32 128, %s14
          %s2177 = ssub.s32 169, %s2176
          %p2178 = scmp.lt.s32.totalorder %s2177, 128
          %s2179 = scalar_select %p2178, %s2177, 128
          %s2180 = smul.u32 64, %s2179
          %p2181 = scmp.ne.s32.totalorder 0, %s2180
          %s2182 = smul.addr %s2176, 4
          %s2183 = scalar_lea.vmem %s3, %s2182
          // Predicated region
          $region37: #{critic_forward.6} parent=35 // pred_check
            %p2184 = pneg %p2181
          $region38: #{critic_forward.6} parent=35 // pred_check_branch
            %2186 = sbr.rel (%p2184) target = $region40
          $region39: #{critic_forward.6} parent=35 // pred_region
            // Predicated region
            $region41: #{critic_forward.6} parent=39 // pred_check
              _
            $region42: #{critic_forward.6} parent=39 // pred_check_branch
              %2188 = sbr.rel target = $region44
            $region43: #{critic_forward.6} parent=39 // pred_region
              // Predicated region
              $region63: #{critic_forward.6} parent=43 // pred_check
                _
              $region64: #{critic_forward.6} parent=43 // pred_check_branch
                %2364 = sbr.rel (0) target = $region66
              $region65: #{critic_forward.6} parent=43 // pred_region
                %s2366 = ssub.s32 16, 1
                %s2367 = sshrl.u32 %s2179, 6
                // While loop
                $region67: #{critic_forward.6} parent=65 // loop_pre_header
                  _
                $region68: #{critic_forward.6} parent=65 // loop_header
                  %s2369 = sphi 0, %s2371
                  %p2370 = scmp.ge.s32.totalorder %s2369, %s2367
                  %s2374 = sphi 0, %s2507
                  %s2375 = sphi %s2172, %s2510
                  %s2376 = sphi %s2183, %s2511
                $region69: #{critic_forward.6} parent=65 // loop_header_branch
                  %2373 = sbr.rel (%p2370) target = $region73
                $region70: #{critic_forward.6} parent=65 // loop_body
                  %v2377 = vld [vmem:[%s2375] sm:%s2366]
                  %2378 = vst [vmem:[%s2376] sm:%s2366] %v2377
                  %v2379 = vld [vmem:[%s2375 + $0x4] sm:%s2366]
                  %2380 = vst [vmem:[%s2376 + $0x4] sm:%s2366] %v2379
                  %v2381 = vld [vmem:[%s2375 + $0x8] sm:%s2366]
                  %2382 = vst [vmem:[%s2376 + $0x8] sm:%s2366] %v2381
                  %v2383 = vld [vmem:[%s2375 + $0xc] sm:%s2366]
                  %2384 = vst [vmem:[%s2376 + $0xc] sm:%s2366] %v2383
                  %v2385 = vld [vmem:[%s2375 + $0x10] sm:%s2366]
                  %2386 = vst [vmem:[%s2376 + $0x10] sm:%s2366] %v2385
                  %v2387 = vld [vmem:[%s2375 + $0x14] sm:%s2366]
                  %2388 = vst [vmem:[%s2376 + $0x14] sm:%s2366] %v2387
                  %v2389 = vld [vmem:[%s2375 + $0x18] sm:%s2366]
                  %2390 = vst [vmem:[%s2376 + $0x18] sm:%s2366] %v2389
                  %v2391 = vld [vmem:[%s2375 + $0x1c] sm:%s2366]
                  %2392 = vst [vmem:[%s2376 + $0x1c] sm:%s2366] %v2391
                  %v2393 = vld [vmem:[%s2375 + $0x20] sm:%s2366]
                  %2394 = vst [vmem:[%s2376 + $0x20] sm:%s2366] %v2393
                  %v2395 = vld [vmem:[%s2375 + $0x24] sm:%s2366]
                  %2396 = vst [vmem:[%s2376 + $0x24] sm:%s2366] %v2395
                  %v2397 = vld [vmem:[%s2375 + $0x28] sm:%s2366]
                  %2398 = vst [vmem:[%s2376 + $0x28] sm:%s2366] %v2397
                  %v2399 = vld [vmem:[%s2375 + $0x2c] sm:%s2366]
                  %2400 = vst [vmem:[%s2376 + $0x2c] sm:%s2366] %v2399
                  %v2401 = vld [vmem:[%s2375 + $0x30] sm:%s2366]
                  %2402 = vst [vmem:[%s2376 + $0x30] sm:%s2366] %v2401
                  %v2403 = vld [vmem:[%s2375 + $0x34] sm:%s2366]
                  %2404 = vst [vmem:[%s2376 + $0x34] sm:%s2366] %v2403
                  %v2405 = vld [vmem:[%s2375 + $0x38] sm:%s2366]
                  %2406 = vst [vmem:[%s2376 + $0x38] sm:%s2366] %v2405
                  %v2407 = vld [vmem:[%s2375 + $0x3c] sm:%s2366]
                  %2408 = vst [vmem:[%s2376 + $0x3c] sm:%s2366] %v2407
                  %v2409 = vld [vmem:[%s2375 + $0x40] sm:%s2366]
                  %2410 = vst [vmem:[%s2376 + $0x40] sm:%s2366] %v2409
                  %v2411 = vld [vmem:[%s2375 + $0x44] sm:%s2366]
                  %2412 = vst [vmem:[%s2376 + $0x44] sm:%s2366] %v2411
                  %v2413 = vld [vmem:[%s2375 + $0x48] sm:%s2366]
                  %2414 = vst [vmem:[%s2376 + $0x48] sm:%s2366] %v2413
                  %v2415 = vld [vmem:[%s2375 + $0x4c] sm:%s2366]
                  %2416 = vst [vmem:[%s2376 + $0x4c] sm:%s2366] %v2415
                  %v2417 = vld [vmem:[%s2375 + $0x50] sm:%s2366]
                  %2418 = vst [vmem:[%s2376 + $0x50] sm:%s2366] %v2417
                  %v2419 = vld [vmem:[%s2375 + $0x54] sm:%s2366]
                  %2420 = vst [vmem:[%s2376 + $0x54] sm:%s2366] %v2419
                  %v2421 = vld [vmem:[%s2375 + $0x58] sm:%s2366]
                  %2422 = vst [vmem:[%s2376 + $0x58] sm:%s2366] %v2421
                  %v2423 = vld [vmem:[%s2375 + $0x5c] sm:%s2366]
                  %2424 = vst [vmem:[%s2376 + $0x5c] sm:%s2366] %v2423
                  %v2425 = vld [vmem:[%s2375 + $0x60] sm:%s2366]
                  %2426 = vst [vmem:[%s2376 + $0x60] sm:%s2366] %v2425
                  %v2427 = vld [vmem:[%s2375 + $0x64] sm:%s2366]
                  %2428 = vst [vmem:[%s2376 + $0x64] sm:%s2366] %v2427
                  %v2429 = vld [vmem:[%s2375 + $0x68] sm:%s2366]
                  %2430 = vst [vmem:[%s2376 + $0x68] sm:%s2366] %v2429
                  %v2431 = vld [vmem:[%s2375 + $0x6c] sm:%s2366]
                  %2432 = vst [vmem:[%s2376 + $0x6c] sm:%s2366] %v2431
                  %v2433 = vld [vmem:[%s2375 + $0x70] sm:%s2366]
                  %2434 = vst [vmem:[%s2376 + $0x70] sm:%s2366] %v2433
                  %v2435 = vld [vmem:[%s2375 + $0x74] sm:%s2366]
                  %2436 = vst [vmem:[%s2376 + $0x74] sm:%s2366] %v2435
                  %v2437 = vld [vmem:[%s2375 + $0x78] sm:%s2366]
                  %2438 = vst [vmem:[%s2376 + $0x78] sm:%s2366] %v2437
                  %v2439 = vld [vmem:[%s2375 + $0x7c] sm:%s2366]
                  %2440 = vst [vmem:[%s2376 + $0x7c] sm:%s2366] %v2439
                  %v2441 = vld [vmem:[%s2375 + $0x80] sm:%s2366]
                  %2442 = vst [vmem:[%s2376 + $0x80] sm:%s2366] %v2441
                  %v2443 = vld [vmem:[%s2375 + $0x84] sm:%s2366]
                  %2444 = vst [vmem:[%s2376 + $0x84] sm:%s2366] %v2443
                  %v2445 = vld [vmem:[%s2375 + $0x88] sm:%s2366]
                  %2446 = vst [vmem:[%s2376 + $0x88] sm:%s2366] %v2445
                  %v2447 = vld [vmem:[%s2375 + $0x8c] sm:%s2366]
                  %2448 = vst [vmem:[%s2376 + $0x8c] sm:%s2366] %v2447
                  %v2449 = vld [vmem:[%s2375 + $0x90] sm:%s2366]
                  %2450 = vst [vmem:[%s2376 + $0x90] sm:%s2366] %v2449
                  %v2451 = vld [vmem:[%s2375 + $0x94] sm:%s2366]
                  %2452 = vst [vmem:[%s2376 + $0x94] sm:%s2366] %v2451
                  %v2453 = vld [vmem:[%s2375 + $0x98] sm:%s2366]
                  %2454 = vst [vmem:[%s2376 + $0x98] sm:%s2366] %v2453
                  %v2455 = vld [vmem:[%s2375 + $0x9c] sm:%s2366]
                  %2456 = vst [vmem:[%s2376 + $0x9c] sm:%s2366] %v2455
                  %v2457 = vld [vmem:[%s2375 + $0xa0] sm:%s2366]
                  %2458 = vst [vmem:[%s2376 + $0xa0] sm:%s2366] %v2457
                  %v2459 = vld [vmem:[%s2375 + $0xa4] sm:%s2366]
                  %2460 = vst [vmem:[%s2376 + $0xa4] sm:%s2366] %v2459
                  %v2461 = vld [vmem:[%s2375 + $0xa8] sm:%s2366]
                  %2462 = vst [vmem:[%s2376 + $0xa8] sm:%s2366] %v2461
                  %v2463 = vld [vmem:[%s2375 + $0xac] sm:%s2366]
                  %2464 = vst [vmem:[%s2376 + $0xac] sm:%s2366] %v2463
                  %v2465 = vld [vmem:[%s2375 + $0xb0] sm:%s2366]
                  %2466 = vst [vmem:[%s2376 + $0xb0] sm:%s2366] %v2465
                  %v2467 = vld [vmem:[%s2375 + $0xb4] sm:%s2366]
                  %2468 = vst [vmem:[%s2376 + $0xb4] sm:%s2366] %v2467
                  %v2469 = vld [vmem:[%s2375 + $0xb8] sm:%s2366]
                  %2470 = vst [vmem:[%s2376 + $0xb8] sm:%s2366] %v2469
                  %v2471 = vld [vmem:[%s2375 + $0xbc] sm:%s2366]
                  %2472 = vst [vmem:[%s2376 + $0xbc] sm:%s2366] %v2471
                  %v2473 = vld [vmem:[%s2375 + $0xc0] sm:%s2366]
                  %2474 = vst [vmem:[%s2376 + $0xc0] sm:%s2366] %v2473
                  %v2475 = vld [vmem:[%s2375 + $0xc4] sm:%s2366]
                  %2476 = vst [vmem:[%s2376 + $0xc4] sm:%s2366] %v2475
                  %v2477 = vld [vmem:[%s2375 + $0xc8] sm:%s2366]
                  %2478 = vst [vmem:[%s2376 + $0xc8] sm:%s2366] %v2477
                  %v2479 = vld [vmem:[%s2375 + $0xcc] sm:%s2366]
                  %2480 = vst [vmem:[%s2376 + $0xcc] sm:%s2366] %v2479
                  %v2481 = vld [vmem:[%s2375 + $0xd0] sm:%s2366]
                  %2482 = vst [vmem:[%s2376 + $0xd0] sm:%s2366] %v2481
                  %v2483 = vld [vmem:[%s2375 + $0xd4] sm:%s2366]
                  %2484 = vst [vmem:[%s2376 + $0xd4] sm:%s2366] %v2483
                  %v2485 = vld [vmem:[%s2375 + $0xd8] sm:%s2366]
                  %2486 = vst [vmem:[%s2376 + $0xd8] sm:%s2366] %v2485
                  %v2487 = vld [vmem:[%s2375 + $0xdc] sm:%s2366]
                  %2488 = vst [vmem:[%s2376 + $0xdc] sm:%s2366] %v2487
                  %v2489 = vld [vmem:[%s2375 + $0xe0] sm:%s2366]
                  %2490 = vst [vmem:[%s2376 + $0xe0] sm:%s2366] %v2489
                  %v2491 = vld [vmem:[%s2375 + $0xe4] sm:%s2366]
                  %2492 = vst [vmem:[%s2376 + $0xe4] sm:%s2366] %v2491
                  %v2493 = vld [vmem:[%s2375 + $0xe8] sm:%s2366]
                  %2494 = vst [vmem:[%s2376 + $0xe8] sm:%s2366] %v2493
                  %v2495 = vld [vmem:[%s2375 + $0xec] sm:%s2366]
                  %2496 = vst [vmem:[%s2376 + $0xec] sm:%s2366] %v2495
                  %v2497 = vld [vmem:[%s2375 + $0xf0] sm:%s2366]
                  %2498 = vst [vmem:[%s2376 + $0xf0] sm:%s2366] %v2497
                  %v2499 = vld [vmem:[%s2375 + $0xf4] sm:%s2366]
                  %2500 = vst [vmem:[%s2376 + $0xf4] sm:%s2366] %v2499
                  %v2501 = vld [vmem:[%s2375 + $0xf8] sm:%s2366]
                  %2502 = vst [vmem:[%s2376 + $0xf8] sm:%s2366] %v2501
                  %v2503 = vld [vmem:[%s2375 + $0xfc] sm:%s2366]
                  %2504 = vst [vmem:[%s2376 + $0xfc] sm:%s2366] %v2503
                  %s2505 = sadd.s32 1, %s2374
                  %p2506 = scmp.ge.s32.totalorder %s2505, %s2367
                  %s2507 = scalar_select %p2506, 0, %s2505
                  %s2508 = smul.u32 %s2507, 256
                  %s2509 = smul.u32 %s2507, 256
                  %s2510 = scalar_lea.vmem %s2172, %s2508 [#allocation2]
                  %s2511 = scalar_lea.vmem %s2183, %s2509
                $region71: #{critic_forward.6} parent=65 // loop_footer
                  %s2371 = sadd.s32 %s2369, 1
                $region72: #{critic_forward.6} parent=65 // loop_footer_branch
                  %2368 = sbr.rel target = $region68
                $region73: #{critic_forward.6} parent=65 // loop_exit
                  _
                %s2512 = sshrl.u32 %s2179, 6
                %s2513 = sand.u32 %s2179, 63
                %s2514 = smul.u32 %s2512, 64
                %s2515 = smul.u32 4, %s2514
                %s2516 = scalar_lea.vmem %s2172, %s2515 [#allocation2]
                %s2517 = smul.u32 4, %s2514
                %s2518 = scalar_lea.vmem %s2183, %s2517
                // While loop
                $region74: #{critic_forward.6} parent=65 // loop_pre_header
                  _
                $region75: #{critic_forward.6} parent=65 // loop_header
                  %s2520 = sphi 0, %s2522
                  %p2521 = scmp.ge.s32.totalorder %s2520, %s2513
                  %s2525 = sphi 0, %s2532
                  %s2526 = sphi %s2516, %s2535
                  %s2527 = sphi %s2518, %s2536
                $region76: #{critic_forward.6} parent=65 // loop_header_branch
                  %2524 = sbr.rel (%p2521) target = $region80
                $region77: #{critic_forward.6} parent=65 // loop_body
                  %v2528 = vld [vmem:[%s2526] sm:%s2366]
                  %2529 = vst [vmem:[%s2527] sm:%s2366] %v2528
                  %s2530 = sadd.s32 1, %s2525
                  %p2531 = scmp.ge.s32.totalorder %s2530, %s2513
                  %s2532 = scalar_select %p2531, 0, %s2530
                  %s2533 = smul.u32 %s2532, 4
                  %s2534 = smul.u32 %s2532, 4
                  %s2535 = scalar_lea.vmem %s2516, %s2533 [#allocation2]
                  %s2536 = scalar_lea.vmem %s2518, %s2534
                $region78: #{critic_forward.6} parent=65 // loop_footer
                  %s2522 = sadd.s32 %s2520, 1
                $region79: #{critic_forward.6} parent=65 // loop_footer_branch
                  %2519 = sbr.rel target = $region75
                $region80: #{critic_forward.6} parent=65 // loop_exit
                  _
              $region66: #{critic_forward.6} parent=43 // pred_fallthru
                _
            $region44: #{critic_forward.6} parent=39 // pred_fallthru
              _
            // Predicated region
            $region45: #{critic_forward.6} parent=39 // pred_check
              _
            $region46: #{critic_forward.6} parent=39 // pred_check_branch
              %2190 = sbr.rel (0) target = $region48
            $region47: #{critic_forward.6} parent=39 // pred_region
              %s2192 = ssub.s32 16, 1
              %s2193 = sshrl.u32 %s2179, 6
              // While loop
              $region49: #{critic_forward.6} parent=47 // loop_pre_header
                _
              $region50: #{critic_forward.6} parent=47 // loop_header
                %s2195 = sphi 0, %s2197
                %p2196 = scmp.ge.s32.totalorder %s2195, %s2193
                %s2200 = sphi 0, %s2333
                %s2201 = sphi %s2172, %s2336
                %s2202 = sphi %s2183, %s2337
              $region51: #{critic_forward.6} parent=47 // loop_header_branch
                %2199 = sbr.rel (%p2196) target = $region55
              $region52: #{critic_forward.6} parent=47 // loop_body
                %v2203 = vld [vmem:[%s2201] sm:%s2192]
                %2204 = vst [vmem:[%s2202] sm:%s2192] %v2203
                %v2205 = vld [vmem:[%s2201 + $0x4] sm:%s2192]
                %2206 = vst [vmem:[%s2202 + $0x4] sm:%s2192] %v2205
                %v2207 = vld [vmem:[%s2201 + $0x8] sm:%s2192]
                %2208 = vst [vmem:[%s2202 + $0x8] sm:%s2192] %v2207
                %v2209 = vld [vmem:[%s2201 + $0xc] sm:%s2192]
                %2210 = vst [vmem:[%s2202 + $0xc] sm:%s2192] %v2209
                %v2211 = vld [vmem:[%s2201 + $0x10] sm:%s2192]
                %2212 = vst [vmem:[%s2202 + $0x10] sm:%s2192] %v2211
                %v2213 = vld [vmem:[%s2201 + $0x14] sm:%s2192]
                %2214 = vst [vmem:[%s2202 + $0x14] sm:%s2192] %v2213
                %v2215 = vld [vmem:[%s2201 + $0x18] sm:%s2192]
                %2216 = vst [vmem:[%s2202 + $0x18] sm:%s2192] %v2215
                %v2217 = vld [vmem:[%s2201 + $0x1c] sm:%s2192]
                %2218 = vst [vmem:[%s2202 + $0x1c] sm:%s2192] %v2217
                %v2219 = vld [vmem:[%s2201 + $0x20] sm:%s2192]
                %2220 = vst [vmem:[%s2202 + $0x20] sm:%s2192] %v2219
                %v2221 = vld [vmem:[%s2201 + $0x24] sm:%s2192]
                %2222 = vst [vmem:[%s2202 + $0x24] sm:%s2192] %v2221
                %v2223 = vld [vmem:[%s2201 + $0x28] sm:%s2192]
                %2224 = vst [vmem:[%s2202 + $0x28] sm:%s2192] %v2223
                %v2225 = vld [vmem:[%s2201 + $0x2c] sm:%s2192]
                %2226 = vst [vmem:[%s2202 + $0x2c] sm:%s2192] %v2225
                %v2227 = vld [vmem:[%s2201 + $0x30] sm:%s2192]
                %2228 = vst [vmem:[%s2202 + $0x30] sm:%s2192] %v2227
                %v2229 = vld [vmem:[%s2201 + $0x34] sm:%s2192]
                %2230 = vst [vmem:[%s2202 + $0x34] sm:%s2192] %v2229
                %v2231 = vld [vmem:[%s2201 + $0x38] sm:%s2192]
                %2232 = vst [vmem:[%s2202 + $0x38] sm:%s2192] %v2231
                %v2233 = vld [vmem:[%s2201 + $0x3c] sm:%s2192]
                %2234 = vst [vmem:[%s2202 + $0x3c] sm:%s2192] %v2233
                %v2235 = vld [vmem:[%s2201 + $0x40] sm:%s2192]
                %2236 = vst [vmem:[%s2202 + $0x40] sm:%s2192] %v2235
                %v2237 = vld [vmem:[%s2201 + $0x44] sm:%s2192]
                %2238 = vst [vmem:[%s2202 + $0x44] sm:%s2192] %v2237
                %v2239 = vld [vmem:[%s2201 + $0x48] sm:%s2192]
                %2240 = vst [vmem:[%s2202 + $0x48] sm:%s2192] %v2239
                %v2241 = vld [vmem:[%s2201 + $0x4c] sm:%s2192]
                %2242 = vst [vmem:[%s2202 + $0x4c] sm:%s2192] %v2241
                %v2243 = vld [vmem:[%s2201 + $0x50] sm:%s2192]
                %2244 = vst [vmem:[%s2202 + $0x50] sm:%s2192] %v2243
                %v2245 = vld [vmem:[%s2201 + $0x54] sm:%s2192]
                %2246 = vst [vmem:[%s2202 + $0x54] sm:%s2192] %v2245
                %v2247 = vld [vmem:[%s2201 + $0x58] sm:%s2192]
                %2248 = vst [vmem:[%s2202 + $0x58] sm:%s2192] %v2247
                %v2249 = vld [vmem:[%s2201 + $0x5c] sm:%s2192]
                %2250 = vst [vmem:[%s2202 + $0x5c] sm:%s2192] %v2249
                %v2251 = vld [vmem:[%s2201 + $0x60] sm:%s2192]
                %2252 = vst [vmem:[%s2202 + $0x60] sm:%s2192] %v2251
                %v2253 = vld [vmem:[%s2201 + $0x64] sm:%s2192]
                %2254 = vst [vmem:[%s2202 + $0x64] sm:%s2192] %v2253
                %v2255 = vld [vmem:[%s2201 + $0x68] sm:%s2192]
                %2256 = vst [vmem:[%s2202 + $0x68] sm:%s2192] %v2255
                %v2257 = vld [vmem:[%s2201 + $0x6c] sm:%s2192]
                %2258 = vst [vmem:[%s2202 + $0x6c] sm:%s2192] %v2257
                %v2259 = vld [vmem:[%s2201 + $0x70] sm:%s2192]
                %2260 = vst [vmem:[%s2202 + $0x70] sm:%s2192] %v2259
                %v2261 = vld [vmem:[%s2201 + $0x74] sm:%s2192]
                %2262 = vst [vmem:[%s2202 + $0x74] sm:%s2192] %v2261
                %v2263 = vld [vmem:[%s2201 + $0x78] sm:%s2192]
                %2264 = vst [vmem:[%s2202 + $0x78] sm:%s2192] %v2263
                %v2265 = vld [vmem:[%s2201 + $0x7c] sm:%s2192]
                %2266 = vst [vmem:[%s2202 + $0x7c] sm:%s2192] %v2265
                %v2267 = vld [vmem:[%s2201 + $0x80] sm:%s2192]
                %2268 = vst [vmem:[%s2202 + $0x80] sm:%s2192] %v2267
                %v2269 = vld [vmem:[%s2201 + $0x84] sm:%s2192]
                %2270 = vst [vmem:[%s2202 + $0x84] sm:%s2192] %v2269
                %v2271 = vld [vmem:[%s2201 + $0x88] sm:%s2192]
                %2272 = vst [vmem:[%s2202 + $0x88] sm:%s2192] %v2271
                %v2273 = vld [vmem:[%s2201 + $0x8c] sm:%s2192]
                %2274 = vst [vmem:[%s2202 + $0x8c] sm:%s2192] %v2273
                %v2275 = vld [vmem:[%s2201 + $0x90] sm:%s2192]
                %2276 = vst [vmem:[%s2202 + $0x90] sm:%s2192] %v2275
                %v2277 = vld [vmem:[%s2201 + $0x94] sm:%s2192]
                %2278 = vst [vmem:[%s2202 + $0x94] sm:%s2192] %v2277
                %v2279 = vld [vmem:[%s2201 + $0x98] sm:%s2192]
                %2280 = vst [vmem:[%s2202 + $0x98] sm:%s2192] %v2279
                %v2281 = vld [vmem:[%s2201 + $0x9c] sm:%s2192]
                %2282 = vst [vmem:[%s2202 + $0x9c] sm:%s2192] %v2281
                %v2283 = vld [vmem:[%s2201 + $0xa0] sm:%s2192]
                %2284 = vst [vmem:[%s2202 + $0xa0] sm:%s2192] %v2283
                %v2285 = vld [vmem:[%s2201 + $0xa4] sm:%s2192]
                %2286 = vst [vmem:[%s2202 + $0xa4] sm:%s2192] %v2285
                %v2287 = vld [vmem:[%s2201 + $0xa8] sm:%s2192]
                %2288 = vst [vmem:[%s2202 + $0xa8] sm:%s2192] %v2287
                %v2289 = vld [vmem:[%s2201 + $0xac] sm:%s2192]
                %2290 = vst [vmem:[%s2202 + $0xac] sm:%s2192] %v2289
                %v2291 = vld [vmem:[%s2201 + $0xb0] sm:%s2192]
                %2292 = vst [vmem:[%s2202 + $0xb0] sm:%s2192] %v2291
                %v2293 = vld [vmem:[%s2201 + $0xb4] sm:%s2192]
                %2294 = vst [vmem:[%s2202 + $0xb4] sm:%s2192] %v2293
                %v2295 = vld [vmem:[%s2201 + $0xb8] sm:%s2192]
                %2296 = vst [vmem:[%s2202 + $0xb8] sm:%s2192] %v2295
                %v2297 = vld [vmem:[%s2201 + $0xbc] sm:%s2192]
                %2298 = vst [vmem:[%s2202 + $0xbc] sm:%s2192] %v2297
                %v2299 = vld [vmem:[%s2201 + $0xc0] sm:%s2192]
                %2300 = vst [vmem:[%s2202 + $0xc0] sm:%s2192] %v2299
                %v2301 = vld [vmem:[%s2201 + $0xc4] sm:%s2192]
                %2302 = vst [vmem:[%s2202 + $0xc4] sm:%s2192] %v2301
                %v2303 = vld [vmem:[%s2201 + $0xc8] sm:%s2192]
                %2304 = vst [vmem:[%s2202 + $0xc8] sm:%s2192] %v2303
                %v2305 = vld [vmem:[%s2201 + $0xcc] sm:%s2192]
                %2306 = vst [vmem:[%s2202 + $0xcc] sm:%s2192] %v2305
                %v2307 = vld [vmem:[%s2201 + $0xd0] sm:%s2192]
                %2308 = vst [vmem:[%s2202 + $0xd0] sm:%s2192] %v2307
                %v2309 = vld [vmem:[%s2201 + $0xd4] sm:%s2192]
                %2310 = vst [vmem:[%s2202 + $0xd4] sm:%s2192] %v2309
                %v2311 = vld [vmem:[%s2201 + $0xd8] sm:%s2192]
                %2312 = vst [vmem:[%s2202 + $0xd8] sm:%s2192] %v2311
                %v2313 = vld [vmem:[%s2201 + $0xdc] sm:%s2192]
                %2314 = vst [vmem:[%s2202 + $0xdc] sm:%s2192] %v2313
                %v2315 = vld [vmem:[%s2201 + $0xe0] sm:%s2192]
                %2316 = vst [vmem:[%s2202 + $0xe0] sm:%s2192] %v2315
                %v2317 = vld [vmem:[%s2201 + $0xe4] sm:%s2192]
                %2318 = vst [vmem:[%s2202 + $0xe4] sm:%s2192] %v2317
                %v2319 = vld [vmem:[%s2201 + $0xe8] sm:%s2192]
                %2320 = vst [vmem:[%s2202 + $0xe8] sm:%s2192] %v2319
                %v2321 = vld [vmem:[%s2201 + $0xec] sm:%s2192]
                %2322 = vst [vmem:[%s2202 + $0xec] sm:%s2192] %v2321
                %v2323 = vld [vmem:[%s2201 + $0xf0] sm:%s2192]
                %2324 = vst [vmem:[%s2202 + $0xf0] sm:%s2192] %v2323
                %v2325 = vld [vmem:[%s2201 + $0xf4] sm:%s2192]
                %2326 = vst [vmem:[%s2202 + $0xf4] sm:%s2192] %v2325
                %v2327 = vld [vmem:[%s2201 + $0xf8] sm:%s2192]
                %2328 = vst [vmem:[%s2202 + $0xf8] sm:%s2192] %v2327
                %v2329 = vld [vmem:[%s2201 + $0xfc] sm:%s2192]
                %2330 = vst [vmem:[%s2202 + $0xfc] sm:%s2192] %v2329
                %s2331 = sadd.s32 1, %s2200
                %p2332 = scmp.ge.s32.totalorder %s2331, %s2193
                %s2333 = scalar_select %p2332, 0, %s2331
                %s2334 = smul.u32 %s2333, 256
                %s2335 = smul.u32 %s2333, 256
                %s2336 = scalar_lea.vmem %s2172, %s2334 [#allocation2]
                %s2337 = scalar_lea.vmem %s2183, %s2335
              $region53: #{critic_forward.6} parent=47 // loop_footer
                %s2197 = sadd.s32 %s2195, 1
              $region54: #{critic_forward.6} parent=47 // loop_footer_branch
                %2194 = sbr.rel target = $region50
              $region55: #{critic_forward.6} parent=47 // loop_exit
                _
              %s2338 = sshrl.u32 %s2179, 6
              %s2339 = sand.u32 %s2179, 63
              %s2340 = smul.u32 %s2338, 64
              %s2341 = smul.u32 4, %s2340
              %s2342 = scalar_lea.vmem %s2172, %s2341 [#allocation2]
              %s2343 = smul.u32 4, %s2340
              %s2344 = scalar_lea.vmem %s2183, %s2343
              // While loop
              $region56: #{critic_forward.6} parent=47 // loop_pre_header
                _
              $region57: #{critic_forward.6} parent=47 // loop_header
                %s2346 = sphi 0, %s2348
                %p2347 = scmp.ge.s32.totalorder %s2346, %s2339
                %s2351 = sphi 0, %s2358
                %s2352 = sphi %s2342, %s2361
                %s2353 = sphi %s2344, %s2362
              $region58: #{critic_forward.6} parent=47 // loop_header_branch
                %2350 = sbr.rel (%p2347) target = $region62
              $region59: #{critic_forward.6} parent=47 // loop_body
                %v2354 = vld [vmem:[%s2352] sm:%s2192]
                %2355 = vst [vmem:[%s2353] sm:%s2192] %v2354
                %s2356 = sadd.s32 1, %s2351
                %p2357 = scmp.ge.s32.totalorder %s2356, %s2339
                %s2358 = scalar_select %p2357, 0, %s2356
                %s2359 = smul.u32 %s2358, 4
                %s2360 = smul.u32 %s2358, 4
                %s2361 = scalar_lea.vmem %s2342, %s2359 [#allocation2]
                %s2362 = scalar_lea.vmem %s2344, %s2360
              $region60: #{critic_forward.6} parent=47 // loop_footer
                %s2348 = sadd.s32 %s2346, 1
              $region61: #{critic_forward.6} parent=47 // loop_footer_branch
                %2345 = sbr.rel target = $region57
              $region62: #{critic_forward.6} parent=47 // loop_exit
                _
            $region48: #{critic_forward.6} parent=39 // pred_fallthru
              _
          $region40: #{critic_forward.6} parent=35 // pred_fallthru
            _
          %2537 = vnop
        $region36: #{critic_forward.6} parent=31 // pred_fallthru
          _
      $region32: #{critic_forward.6} parent=5 // pred_fallthru
        _
      %p2538 = scmp.le.s32.totalorder 2, %s9
      // Predicated region
      $region81: #{critic_forward.6} parent=5 // pred_check
        %p2539 = pneg %p2538
      $region82: #{critic_forward.6} parent=5 // pred_check_branch
        %2541 = sbr.rel (%p2539) target = $region84
      $region83: #{critic_forward.6} parent=5 // pred_region
        %s2542 = ssub.s32 %s9, 2
        // Predicated region
        $region85: #{critic_forward.6} parent=83 // pred_check
          %p2543 = pneg %p106
        $region86: #{critic_forward.6} parent=83 // pred_check_branch
          %2545 = sbr.rel (%p2543) target = $region88
        $region87: #{critic_forward.6} parent=83 // pred_region
          %s2546 = sand.u32 %s91, 1
          %s2547 = sand.u32 %s91, 1
          %s2548 = smul.addr %s2547, 512
          %s2549 = scalar_lea.vmem [#allocation2], %s2548
        $region88: #{critic_forward.6} parent=83 // pred_fallthru
          _
      $region84: #{critic_forward.6} parent=5 // pred_fallthru
        _
    $region6: #{critic_forward.6} parent=1 // loop_footer
      %s13 = sadd.s32 1, %s9
    $region7: #{critic_forward.6} parent=1 // loop_footer_branch
      %8 = sbr.rel target = $region3
    $region8: #{critic_forward.6} parent=1 // loop_exit
      _

// kernel: critic_forward.7
$region0: #{critic_forward.7}
  #allocation0 [shape = 'u32[]', space=smem, size = 0x4, offset = 0x4, fixed_abs, tag = 'smem constant byte address 0x4 - core index']
  #allocation1 [shape = 'u32[144,128]{1,0:T(1,128)}', space=vmem, size = 0x12000, scoped, tag = 'internal scratch']
  %s0 = inlined_call_operand.vmem [shape: bf16[1152,180], index: 0, kind: input, shape index: {}]
  %s1 = inlined_call_operand.vmem [shape: bf16[180,20], index: 1, kind: input, shape index: {}]
  %s2 = inlined_call_operand.vmem [shape: f32[1,20], index: 2, kind: input, shape index: {}]
  %s3 = inlined_call_operand.vmem [shape: bf16[1152,20], index: 3, kind: output, shape index: {}]
  %s4 = sld [smem:[#allocation0]]
  $region89: #{critic_forward.7} parent=0
    _
  %s6 = ssub.s32 1, %s4
  %s7 = scalar_select 0, %s6, %s4
  $region1: #{critic_forward.7} parent=0
    #allocation2 [shape = 'u8[524288]{0}', space=vmem, size = 0x80000, scoped, tag = 'output window, operand 0']
    loop: start=0, step=1, limit=4
    $region2: #{critic_forward.7} parent=1 // loop_pre_header
      _
    $region3: #{critic_forward.7} parent=1 // loop_header
      %s9 = sphi 0, %s13
      %p10 = scmp.ge.s32.totalorder %s9, 4
      %s19 = sphi 0, %s21
      %s22 = sphi 0, %s19
      %s23 = sphi 0, %s22
      %s39 = sphi 0, %s23
      %s43 = sphi 0, %s43
      %s45 = sphi 0, %s43
      %s46 = sphi 0, %s45
      %s60 = sphi 0, %s46
      %s64 = sphi 0, %s64
      %s66 = sphi 0, %s64
      %s67 = sphi 0, %s66
      %s81 = sphi 0, %s67
      %s87 = sphi 0, %s89
      %s90 = sphi 0, %s87
      %s91 = sphi 0, %s90
      %s107 = sphi 0, %s91
    $region4: #{critic_forward.7} parent=1 // loop_header_branch
      %12 = sbr.rel (%p10) target = $region8
    $region5: #{critic_forward.7} parent=1 // loop_body
      %s14 = ssub.s32 %s9, 1
      %s15 = ssub.s32 %s9, 2
      %s16 = sadd.s32 %s9, 1
      %s17 = ssub.s32 %s9, %s16
      %p18 = scmp.eq.s32.totalorder %s17, 0
      %s20 = sadd.s32 %s19, 1
      %s21 = scalar_select %p18, %s19, %s20
      %p24 = pneg %p18
      %p25 = scmp.eq.s32.totalorder %s9, 1
      %p26 = por %p24, %p25
      %p27 = scmp.ne.s32.totalorder %s19, %s22
      %p28 = scmp.eq.s32.totalorder %s9, 0
      %p29 = por %p27, %p28
      %p30 = scmp.ne.s32.totalorder %s19, %s22
      %p31 = scmp.eq.s32.totalorder %s14, 1
      %p32 = por %p30, %p31
      %p33 = scmp.ne.s32.totalorder %s22, %s23
      %p34 = scmp.eq.s32.totalorder %s14, 0
      %p35 = por %p33, %p34
      %p36 = scmp.ne.s32.totalorder %s22, %s23
      %p37 = scmp.eq.s32.totalorder %s15, 1
      %p38 = por %p36, %p37
      %p40 = scmp.ne.s32.totalorder %s23, %s39
      %p41 = scmp.eq.s32.totalorder %s15, 0
      %p42 = por %p40, %p41
      %s44 = sadd.s32 %s43, 1
      %p47 = scmp.eq.s32.totalorder %s9, 1
      %p48 = scmp.ne.s32.totalorder %s43, %s45
      %p49 = scmp.eq.s32.totalorder %s9, 0
      %p50 = por %p48, %p49
      %p51 = scmp.ne.s32.totalorder %s43, %s45
      %p52 = scmp.eq.s32.totalorder %s14, 1
      %p53 = por %p51, %p52
      %p54 = scmp.ne.s32.totalorder %s45, %s46
      %p55 = scmp.eq.s32.totalorder %s14, 0
      %p56 = por %p54, %p55
      %p57 = scmp.ne.s32.totalorder %s45, %s46
      %p58 = scmp.eq.s32.totalorder %s15, 1
      %p59 = por %p57, %p58
      %p61 = scmp.ne.s32.totalorder %s46, %s60
      %p62 = scmp.eq.s32.totalorder %s15, 0
      %p63 = por %p61, %p62
      %s65 = sadd.s32 %s64, 1
      %p68 = scmp.eq.s32.totalorder %s9, 1
      %p69 = scmp.ne.s32.totalorder %s64, %s66
      %p70 = scmp.eq.s32.totalorder %s9, 0
      %p71 = por %p69, %p70
      %p72 = scmp.ne.s32.totalorder %s64, %s66
      %p73 = scmp.eq.s32.totalorder %s14, 1
      %p74 = por %p72, %p73
      %p75 = scmp.ne.s32.totalorder %s66, %s67
      %p76 = scmp.eq.s32.totalorder %s14, 0
      %p77 = por %p75, %p76
      %p78 = scmp.ne.s32.totalorder %s66, %s67
      %p79 = scmp.eq.s32.totalorder %s15, 1
      %p80 = por %p78, %p79
      %p82 = scmp.ne.s32.totalorder %s67, %s81
      %p83 = scmp.eq.s32.totalorder %s15, 0
      %p84 = por %p82, %p83
      %s85 = ssub.s32 %s9, %s16
      %p86 = scmp.eq.s32.totalorder %s85, 0
      %s88 = sadd.s32 %s87, 1
      %s89 = scalar_select %p86, %s87, %s88
      %p92 = pneg %p86
      %p93 = scmp.eq.s32.totalorder %s9, 1
      %p94 = por %p92, %p93
      %p95 = scmp.ne.s32.totalorder %s87, %s90
      %p96 = scmp.eq.s32.totalorder %s9, 0
      %p97 = por %p95, %p96
      %p98 = scmp.ne.s32.totalorder %s87, %s90
      %p99 = scmp.eq.s32.totalorder %s14, 1
      %p100 = por %p98, %p99
      %p101 = scmp.ne.s32.totalorder %s90, %s91
      %p102 = scmp.eq.s32.totalorder %s14, 0
      %p103 = por %p101, %p102
      %p104 = scmp.ne.s32.totalorder %s90, %s91
      %p105 = scmp.eq.s32.totalorder %s15, 1
      %p106 = por %p104, %p105
      %p108 = scmp.ne.s32.totalorder %s91, %s107
      %p109 = scmp.eq.s32.totalorder %s15, 0
      %p110 = por %p108, %p109
      %p111 = scmp.le.s32.totalorder 1, %s9
      %p112 = scmp.lt.s32.totalorder %s9, 3
      %p113 = pnand %p111, %p112
      %p114 = pneg %p113
      // Predicated region
      $region9: #{critic_forward.7} parent=5 // pred_check
        _
      $region10: #{critic_forward.7} parent=5 // pred_check_branch
        %116 = sbr.rel (%p113) target = $region12
      $region11: #{critic_forward.7} parent=5 // pred_region
        %s117 = ssub.s32 %s9, 1
        // Predicated region
        $region13: #{critic_forward.7} parent=11 // pred_check
          %p118 = pneg %p56
        $region14: #{critic_forward.7} parent=11 // pred_check_branch
          %120 = sbr.rel (%p118) target = $region16
        $region15: #{critic_forward.7} parent=11 // pred_region
          _
        $region16: #{critic_forward.7} parent=11 // pred_fallthru
          _
        // Predicated region
        $region17: #{critic_forward.7} parent=11 // pred_check
          %p121 = pneg %p77
        $region18: #{critic_forward.7} parent=11 // pred_check_branch
          %123 = sbr.rel (%p121) target = $region20
        $region19: #{critic_forward.7} parent=11 // pred_region
          _
        $region20: #{critic_forward.7} parent=11 // pred_fallthru
          _
      $region12: #{critic_forward.7} parent=5 // pred_fallthru
        _
      %p124 = scmp.lt.s32.totalorder %s9, 2
      // Predicated region
      $region21: #{critic_forward.7} parent=5 // pred_check
        %p125 = pneg %p124
      $region22: #{critic_forward.7} parent=5 // pred_check_branch
        %127 = sbr.rel (%p125) target = $region24
      $region23: #{critic_forward.7} parent=5 // pred_region
        // Predicated region
        $region25: #{critic_forward.7} parent=23 // pred_check
          %p128 = pneg %p29
        $region26: #{critic_forward.7} parent=23 // pred_check_branch
          %130 = sbr.rel (%p128) target = $region28
        $region27: #{critic_forward.7} parent=23 // pred_region
          %s131 = smul.u32 128, %s9
          %s132 = ssub.s32 144, %s131
          %p133 = scmp.lt.s32.totalorder %s132, 128
          %s134 = scalar_select %p133, %s132, 128
          %s135 = smul.u32 64, %s134
          %s136 = smul.u32 %s135, 2
          %p137 = scmp.lt.s32.totalorder %s131, 143
          %s138 = scalar_select %p137, %s131, 143
          %s139 = smul.addr %s138, 2
          %s140 = smul.addr %s139, 4
          %s141 = scalar_lea.vmem %s0, %s140
          %s142 = smul.u32 128, %s9
          %s143 = ssub.s32 144, %s142
          %p144 = scmp.lt.s32.totalorder %s143, 128
          %s145 = scalar_select %p144, %s143, 128
          %s146 = smul.u32 64, %s145
          %s147 = smul.u32 %s146, 2
        $region28: #{critic_forward.7} parent=23 // pred_fallthru
          _
      $region24: #{critic_forward.7} parent=5 // pred_fallthru
        _
      %p148 = scmp.le.s32.totalorder 1, %s9
      %p149 = scmp.lt.s32.totalorder %s9, 3
      %p150 = pnand %p148, %p149
      %p151 = pneg %p150
      // Predicated region
      $region29: #{critic_forward.7} parent=5 // pred_check
        _
      $region30: #{critic_forward.7} parent=5 // pred_check_branch
        %153 = sbr.rel (%p150) target = $region32
      $region31: #{critic_forward.7} parent=5 // pred_region
        %s154 = ssub.s32 %s9, 1
        %s155 = smul.u32 128, %s14
        %s156 = ssub.s32 144, %s155
        %p157 = scmp.lt.s32.totalorder %s156, 128
        %s158 = scalar_select %p157, %s156, 128
        %s159 = smul.u32 64, %s158
        %s160 = smul.u32 %s159, 2
        %p161 = scmp.lt.s32.totalorder %s155, 143
        %s162 = scalar_select %p161, %s155, 143
        %s163 = smul.addr %s162, 2
        %s164 = smul.addr %s163, 4
        %s165 = scalar_lea.vmem %s0, %s164
        %p166 = pneg %p35
        %p167 = pneg %p32
        %p168 = pneg %p56
        %p169 = pneg %p53
        %p170 = pneg %p77
        %p171 = pneg %p74
        %p172 = pneg %p103
        %p173 = pneg %p100
        %s174 = sand.u32 %s90, 1
        %s175 = sand.u32 %s90, 1
        %s176 = smul.addr %s175, 512
        %s177 = scalar_lea.vmem [#allocation2], %s176
        %s178 = smul.u32 128, %s14
        %s179 = ssub.s32 144, %s178
        %p180 = scmp.lt.s32.totalorder %s179, 128
        %s181 = scalar_select %p180, %s179, 128
        %s182 = smul.u32 64, %s181
        %s183 = smul.u32 %s182, 2
        %p184 = scmp.lt.s32.totalorder %s178, 143
        %s185 = scalar_select %p184, %s178, 143
        %s186 = smul.addr %s185, 2
        %s187 = smul.addr %s186, 4
        %s188 = scalar_lea.vmem %s0, %s187
        %s189 = smul.u32 128, %s14
        %s190 = ssub.s32 144, %s189
        %p191 = scmp.lt.s32.totalorder %s190, 128
        %s192 = scalar_select %p191, %s190, 128
        %s193 = smul.u32 64, %s192
        %s194 = smul.u32 %s193, 2
        %s195 = smul.u32 128, %s14
        %s196 = ssub.s32 144, %s195
        %p197 = scmp.lt.s32.totalorder %s196, 128
        %s198 = scalar_select %p197, %s196, 128
        %s199 = smul.u32 64, %s198
        %v201 = vld [vmem:[%s188] sm:$0xff]
        %v202 = vld [vmem:[%s188 + $0x8] sm:$0xff]
        %v203 = vld [vmem:[%s188 + $0x10] sm:$0xff]
        %v204 = vld [vmem:[%s188 + $0x18] sm:$0xff]
        %v205 = vld [vmem:[%s188 + $0x20] sm:$0xff]
        %v206 = vld [vmem:[%s188 + $0x28] sm:$0xff]
        %v207 = vld [vmem:[%s188 + $0x30] sm:$0xff]
        %v208 = vld [vmem:[%s188 + $0x38] sm:$0xff]
        %v209 = vld [vmem:[%s188 + $0x40] sm:$0xff]
        %v210 = vld [vmem:[%s188 + $0x48] sm:$0xff]
        %v211 = vld [vmem:[%s188 + $0x50] sm:$0xff]
        %v212 = vld [vmem:[%s188 + $0x58] sm:$0xff]
        %v213 = vld [vmem:[%s188 + $0x60] sm:$0xff]
        %v214 = vld [vmem:[%s188 + $0x68] sm:$0xff]
        %v215 = vld [vmem:[%s188 + $0x70] sm:$0xff]
        %v216 = vld [vmem:[%s188 + $0x78] sm:$0xff]
        %v217 = vld [vmem:[%s188 + $0x80] sm:$0xff]
        %v218 = vld [vmem:[%s188 + $0x88] sm:$0xff]
        %v219 = vld [vmem:[%s188 + $0x90] sm:$0xff]
        %v220 = vld [vmem:[%s188 + $0x98] sm:$0xff]
        %v221 = vld [vmem:[%s188 + $0xa0] sm:$0xff]
        %v222 = vld [vmem:[%s188 + $0xa8] sm:$0xff]
        %v223 = vld [vmem:[%s188 + $0xb0] sm:$0xff]
        %v224 = vld [vmem:[%s188 + $0xb8] sm:$0xff]
        %v225 = vld [vmem:[%s188 + $0xc0] sm:$0xff]
        %v226 = vld [vmem:[%s188 + $0xc8] sm:$0xff]
        %v227 = vld [vmem:[%s188 + $0xd0] sm:$0xff]
        %v228 = vld [vmem:[%s188 + $0xd8] sm:$0xff]
        %v229 = vld [vmem:[%s188 + $0xe0] sm:$0xff]
        %v230 = vld [vmem:[%s188 + $0xe8] sm:$0xff]
        %v231 = vld [vmem:[%s188 + $0xf0] sm:$0xff]
        %v232 = vld [vmem:[%s188 + $0xf8] sm:$0xff]
        %v233 = vld [vmem:[%s188 + $0x100] sm:$0xff]
        %v234 = vld [vmem:[%s188 + $0x108] sm:$0xff]
        %v235 = vld [vmem:[%s188 + $0x110] sm:$0xff]
        %v236 = vld [vmem:[%s188 + $0x118] sm:$0xff]
        %v237 = vld [vmem:[%s188 + $0x120] sm:$0xff]
        %v238 = vld [vmem:[%s188 + $0x128] sm:$0xff]
        %v239 = vld [vmem:[%s188 + $0x130] sm:$0xff]
        %v240 = vld [vmem:[%s188 + $0x138] sm:$0xff]
        %v241 = vld [vmem:[%s188 + $0x140] sm:$0xff]
        %v242 = vld [vmem:[%s188 + $0x148] sm:$0xff]
        %v243 = vld [vmem:[%s188 + $0x150] sm:$0xff]
        %v244 = vld [vmem:[%s188 + $0x158] sm:$0xff]
        %v245 = vld [vmem:[%s188 + $0x160] sm:$0xff]
        %v246 = vld [vmem:[%s188 + $0x168] sm:$0xff]
        %v247 = vld [vmem:[%s188 + $0x170] sm:$0xff]
        %v248 = vld [vmem:[%s188 + $0x178] sm:$0xff]
        %v249 = vld [vmem:[%s188 + $0x180] sm:$0xff]
        %v250 = vld [vmem:[%s188 + $0x188] sm:$0xff]
        %v251 = vld [vmem:[%s188 + $0x190] sm:$0xff]
        %v252 = vld [vmem:[%s188 + $0x198] sm:$0xff]
        %v253 = vld [vmem:[%s188 + $0x1a0] sm:$0xff]
        %v254 = vld [vmem:[%s188 + $0x1a8] sm:$0xff]
        %v255 = vld [vmem:[%s188 + $0x1b0] sm:$0xff]
        %v256 = vld [vmem:[%s188 + $0x1b8] sm:$0xff]
        %v257 = vld [vmem:[%s188 + $0x1c0] sm:$0xff]
        %v258 = vld [vmem:[%s188 + $0x1c8] sm:$0xff]
        %v259 = vld [vmem:[%s188 + $0x1d0] sm:$0xff]
        %v260 = vld [vmem:[%s188 + $0x1d8] sm:$0xff]
        %v261 = vld [vmem:[%s188 + $0x1e0] sm:$0xff]
        %v262 = vld [vmem:[%s188 + $0x1e8] sm:$0xff]
        %v263 = vld [vmem:[%s188 + $0x1f0] sm:$0xff]
        %v264 = vld [vmem:[%s188 + $0x1f8] sm:$0xff]
        %v265 = vld [vmem:[%s188 + $0x200] sm:$0xff]
        %v266 = vld [vmem:[%s188 + $0x208] sm:$0xff]
        %v267 = vld [vmem:[%s188 + $0x210] sm:$0xff]
        %v268 = vld [vmem:[%s188 + $0x218] sm:$0xff]
        %v269 = vld [vmem:[%s188 + $0x220] sm:$0xff]
        %v270 = vld [vmem:[%s188 + $0x228] sm:$0xff]
        %v271 = vld [vmem:[%s188 + $0x230] sm:$0xff]
        %v272 = vld [vmem:[%s188 + $0x238] sm:$0xff]
        %v273 = vld [vmem:[%s188 + $0x240] sm:$0xff]
        %v274 = vld [vmem:[%s188 + $0x248] sm:$0xff]
        %v275 = vld [vmem:[%s188 + $0x250] sm:$0xff]
        %v276 = vld [vmem:[%s188 + $0x258] sm:$0xff]
        %v277 = vld [vmem:[%s188 + $0x260] sm:$0xff]
        %v278 = vld [vmem:[%s188 + $0x268] sm:$0xff]
        %v279 = vld [vmem:[%s188 + $0x270] sm:$0xff]
        %v280 = vld [vmem:[%s188 + $0x278] sm:$0xff]
        %v281 = vld [vmem:[%s188 + $0x280] sm:$0xff]
        %v282 = vld [vmem:[%s188 + $0x288] sm:$0xff]
        %v283 = vld [vmem:[%s188 + $0x290] sm:$0xff]
        %v284 = vld [vmem:[%s188 + $0x298] sm:$0xff]
        %v285 = vld [vmem:[%s188 + $0x2a0] sm:$0xff]
        %v286 = vld [vmem:[%s188 + $0x2a8] sm:$0xff]
        %v287 = vld [vmem:[%s188 + $0x2b0] sm:$0xff]
        %v288 = vld [vmem:[%s188 + $0x2b8] sm:$0xff]
        %v289 = vld [vmem:[%s188 + $0x2c0] sm:$0xff]
        %v290 = vld [vmem:[%s188 + $0x2c8] sm:$0xff]
        %v291 = vld [vmem:[%s188 + $0x2d0] sm:$0xff]
        %v292 = vld [vmem:[%s188 + $0x2d8] sm:$0xff]
        %v293 = vld [vmem:[%s188 + $0x2e0] sm:$0xff]
        %v294 = vld [vmem:[%s188 + $0x2e8] sm:$0xff]
        %v295 = vld [vmem:[%s188 + $0x2f0] sm:$0xff]
        %v296 = vld [vmem:[%s188 + $0x2f8] sm:$0xff]
        %v297 = vld [vmem:[%s188 + $0x300] sm:$0xff]
        %v298 = vld [vmem:[%s188 + $0x308] sm:$0xff]
        %v299 = vld [vmem:[%s188 + $0x310] sm:$0xff]
        %v300 = vld [vmem:[%s188 + $0x318] sm:$0xff]
        %v301 = vld [vmem:[%s188 + $0x320] sm:$0xff]
        %v302 = vld [vmem:[%s188 + $0x328] sm:$0xff]
        %v303 = vld [vmem:[%s188 + $0x330] sm:$0xff]
        %v304 = vld [vmem:[%s188 + $0x338] sm:$0xff]
        %v305 = vld [vmem:[%s188 + $0x340] sm:$0xff]
        %v306 = vld [vmem:[%s188 + $0x348] sm:$0xff]
        %v307 = vld [vmem:[%s188 + $0x350] sm:$0xff]
        %v308 = vld [vmem:[%s188 + $0x358] sm:$0xff]
        %v309 = vld [vmem:[%s188 + $0x360] sm:$0xff]
        %v310 = vld [vmem:[%s188 + $0x368] sm:$0xff]
        %v311 = vld [vmem:[%s188 + $0x370] sm:$0xff]
        %v312 = vld [vmem:[%s188 + $0x378] sm:$0xff]
        %v313 = vld [vmem:[%s188 + $0x380] sm:$0xff]
        %v314 = vld [vmem:[%s188 + $0x388] sm:$0xff]
        %v315 = vld [vmem:[%s188 + $0x390] sm:$0xff]
        %v316 = vld [vmem:[%s188 + $0x398] sm:$0xff]
        %v317 = vld [vmem:[%s188 + $0x3a0] sm:$0xff]
        %v318 = vld [vmem:[%s188 + $0x3a8] sm:$0xff]
        %v319 = vld [vmem:[%s188 + $0x3b0] sm:$0xff]
        %v320 = vld [vmem:[%s188 + $0x3b8] sm:$0xff]
        %v321 = vld [vmem:[%s188 + $0x3c0] sm:$0xff]
        %v322 = vld [vmem:[%s188 + $0x3c8] sm:$0xff]
        %v323 = vld [vmem:[%s188 + $0x3d0] sm:$0xff]
        %v324 = vld [vmem:[%s188 + $0x3d8] sm:$0xff]
        %v325 = vld [vmem:[%s188 + $0x3e0] sm:$0xff]
        %v326 = vld [vmem:[%s188 + $0x3e8] sm:$0xff]
        %v327 = vld [vmem:[%s188 + $0x3f0] sm:$0xff]
        %v328 = vld [vmem:[%s188 + $0x3f8] sm:$0xff]
        %v329 = vld [vmem:[%s1] sm:$0xf]
        %v330 = vld [vmem:[%s1 + $0x4] sm:$0xf]
        %v331 = vld [vmem:[%s1 + $0x8] sm:$0xf]
        %v332 = vld [vmem:[%s1 + $0xc] sm:$0xf]
        %v333 = vld [vmem:[%s1 + $0x10] sm:$0xf]
        %v334 = vld [vmem:[%s1 + $0x14] sm:$0xf]
        %v335 = vld [vmem:[%s1 + $0x18] sm:$0xf]
        %v336 = vld [vmem:[%s1 + $0x1c] sm:$0xf]
        %v337 = vld [vmem:[%s1 + $0x20] sm:$0xf]
        %v338 = vld [vmem:[%s1 + $0x24] sm:$0xf]
        %v339 = vld [vmem:[%s1 + $0x28] sm:$0xf]
        %v340 = vld [vmem:[%s1 + $0x2c] sm:$0xf]
        %v341 = vld [vmem:[%s1 + $0x30] sm:$0xf]
        %v342 = vld [vmem:[%s1 + $0x34] sm:$0xf]
        %v343 = vld [vmem:[%s1 + $0x38] sm:$0xf]
        %v344 = vld [vmem:[%s1 + $0x3c] sm:$0xf]
        %v345 = vld [vmem:[%s1 + $0x40] sm:$0xf]
        %v346 = vld [vmem:[%s1 + $0x44] sm:$0xf]
        %v347 = vld [vmem:[%s1 + $0x48] sm:$0xf]
        %v348 = vld [vmem:[%s1 + $0x4c] sm:$0xf]
        %v349 = vld [vmem:[%s1 + $0x50] sm:$0xf]
        %v350 = vld [vmem:[%s1 + $0x54] sm:$0xf]
        %v351 = vld [vmem:[%s1 + $0x58] sm:$0x3]
        %v352 = vld [vmem:[%s2] sm:$0x1]
        %v354 = vlaneseq
        %v355 = vshrl.u32 %v354, 7
        %v356 = vsub.s32 0, %v355
        %v357 = vrot.slane %v352, %v356
        %v487 = vunpack.c.l.b16 %v201
        %v488 = vunpack.c.h.b16 %v201
        %v489 = vunpack.c.l.b16 %v202
        %v490 = vunpack.c.h.b16 %v202
        %v491 = vunpack.c.l.b16 %v203
        %v492 = vunpack.c.h.b16 %v203
        %v493 = vunpack.c.l.b16 %v204
        %v494 = vunpack.c.h.b16 %v204
        %v495 = vunpack.c.l.b16 %v205
        %v496 = vunpack.c.h.b16 %v205
        %v497 = vunpack.c.l.b16 %v206
        %v498 = vunpack.c.h.b16 %v206
        %v499 = vunpack.c.l.b16 %v207
        %v500 = vunpack.c.h.b16 %v207
        %v501 = vunpack.c.l.b16 %v208
        %v502 = vunpack.c.h.b16 %v208
        %v503 = vunpack.c.l.b16 %v209
        %v504 = vunpack.c.h.b16 %v209
        %v505 = vunpack.c.l.b16 %v210
        %v506 = vunpack.c.h.b16 %v210
        %v507 = vunpack.c.l.b16 %v211
        %v508 = vunpack.c.h.b16 %v211
        %v509 = vunpack.c.l.b16 %v212
        %v510 = vunpack.c.h.b16 %v212
        %v511 = vunpack.c.l.b16 %v213
        %v512 = vunpack.c.h.b16 %v213
        %v513 = vunpack.c.l.b16 %v214
        %v514 = vunpack.c.h.b16 %v214
        %v515 = vunpack.c.l.b16 %v215
        %v516 = vunpack.c.h.b16 %v215
        %v517 = vunpack.c.l.b16 %v216
        %v518 = vunpack.c.h.b16 %v216
        %v519 = vunpack.c.l.b16 %v217
        %v520 = vunpack.c.h.b16 %v217
        %v521 = vunpack.c.l.b16 %v218
        %v522 = vunpack.c.h.b16 %v218
        %v523 = vunpack.c.l.b16 %v219
        %v524 = vunpack.c.h.b16 %v219
        %v525 = vunpack.c.l.b16 %v220
        %v526 = vunpack.c.h.b16 %v220
        %v527 = vunpack.c.l.b16 %v221
        %v528 = vunpack.c.h.b16 %v221
        %v529 = vunpack.c.l.b16 %v222
        %v530 = vunpack.c.h.b16 %v222
        %v531 = vunpack.c.l.b16 %v223
        %v532 = vunpack.c.h.b16 %v223
        %v533 = vunpack.c.l.b16 %v224
        %v534 = vunpack.c.h.b16 %v224
        %v535 = vunpack.c.l.b16 %v225
        %v536 = vunpack.c.h.b16 %v225
        %v537 = vunpack.c.l.b16 %v226
        %v538 = vunpack.c.h.b16 %v226
        %v539 = vunpack.c.l.b16 %v227
        %v540 = vunpack.c.h.b16 %v227
        %v541 = vunpack.c.l.b16 %v228
        %v542 = vunpack.c.h.b16 %v228
        %v543 = vunpack.c.l.b16 %v229
        %v544 = vunpack.c.h.b16 %v229
        %v545 = vunpack.c.l.b16 %v230
        %v546 = vunpack.c.h.b16 %v230
        %v547 = vunpack.c.l.b16 %v231
        %v548 = vunpack.c.h.b16 %v231
        %v549 = vunpack.c.l.b16 %v232
        %v550 = vunpack.c.h.b16 %v232
        %v551 = vunpack.c.l.b16 %v233
        %v552 = vunpack.c.h.b16 %v233
        %v553 = vunpack.c.l.b16 %v234
        %v554 = vunpack.c.h.b16 %v234
        %v555 = vunpack.c.l.b16 %v235
        %v556 = vunpack.c.h.b16 %v235
        %v557 = vunpack.c.l.b16 %v236
        %v558 = vunpack.c.h.b16 %v236
        %v559 = vunpack.c.l.b16 %v237
        %v560 = vunpack.c.h.b16 %v237
        %v561 = vunpack.c.l.b16 %v238
        %v562 = vunpack.c.h.b16 %v238
        %v563 = vunpack.c.l.b16 %v239
        %v564 = vunpack.c.h.b16 %v239
        %v565 = vunpack.c.l.b16 %v240
        %v566 = vunpack.c.h.b16 %v240
        %v567 = vunpack.c.l.b16 %v241
        %v568 = vunpack.c.h.b16 %v241
        %v569 = vunpack.c.l.b16 %v242
        %v570 = vunpack.c.h.b16 %v242
        %v571 = vunpack.c.l.b16 %v243
        %v572 = vunpack.c.h.b16 %v243
        %v573 = vunpack.c.l.b16 %v244
        %v574 = vunpack.c.h.b16 %v244
        %v575 = vunpack.c.l.b16 %v245
        %v576 = vunpack.c.h.b16 %v245
        %v577 = vunpack.c.l.b16 %v246
        %v578 = vunpack.c.h.b16 %v246
        %v579 = vunpack.c.l.b16 %v247
        %v580 = vunpack.c.h.b16 %v247
        %v581 = vunpack.c.l.b16 %v248
        %v582 = vunpack.c.h.b16 %v248
        %v583 = vunpack.c.l.b16 %v249
        %v584 = vunpack.c.h.b16 %v249
        %v585 = vunpack.c.l.b16 %v250
        %v586 = vunpack.c.h.b16 %v250
        %v587 = vunpack.c.l.b16 %v251
        %v588 = vunpack.c.h.b16 %v251
        %v589 = vunpack.c.l.b16 %v252
        %v590 = vunpack.c.h.b16 %v252
        %v591 = vunpack.c.l.b16 %v253
        %v592 = vunpack.c.h.b16 %v253
        %v593 = vunpack.c.l.b16 %v254
        %v594 = vunpack.c.h.b16 %v254
        %v595 = vunpack.c.l.b16 %v255
        %v596 = vunpack.c.h.b16 %v255
        %v597 = vunpack.c.l.b16 %v256
        %v598 = vunpack.c.h.b16 %v256
        %v599 = vunpack.c.l.b16 %v257
        %v600 = vunpack.c.h.b16 %v257
        %v601 = vunpack.c.l.b16 %v258
        %v602 = vunpack.c.h.b16 %v258
        %v603 = vunpack.c.l.b16 %v259
        %v604 = vunpack.c.h.b16 %v259
        %v605 = vunpack.c.l.b16 %v260
        %v606 = vunpack.c.h.b16 %v260
        %v607 = vunpack.c.l.b16 %v261
        %v608 = vunpack.c.h.b16 %v261
        %v609 = vunpack.c.l.b16 %v262
        %v610 = vunpack.c.h.b16 %v262
        %v611 = vunpack.c.l.b16 %v263
        %v612 = vunpack.c.h.b16 %v263
        %v613 = vunpack.c.l.b16 %v264
        %v614 = vunpack.c.h.b16 %v264
        %v615 = vunpack.c.l.b16 %v265
        %v616 = vunpack.c.h.b16 %v265
        %v617 = vunpack.c.l.b16 %v266
        %v618 = vunpack.c.h.b16 %v266
        %v619 = vunpack.c.l.b16 %v267
        %v620 = vunpack.c.h.b16 %v267
        %v621 = vunpack.c.l.b16 %v268
        %v622 = vunpack.c.h.b16 %v268
        %v623 = vunpack.c.l.b16 %v269
        %v624 = vunpack.c.h.b16 %v269
        %v625 = vunpack.c.l.b16 %v270
        %v626 = vunpack.c.h.b16 %v270
        %v627 = vunpack.c.l.b16 %v271
        %v628 = vunpack.c.h.b16 %v271
        %v629 = vunpack.c.l.b16 %v272
        %v630 = vunpack.c.h.b16 %v272
        %v631 = vunpack.c.l.b16 %v273
        %v632 = vunpack.c.h.b16 %v273
        %v633 = vunpack.c.l.b16 %v274
        %v634 = vunpack.c.h.b16 %v274
        %v635 = vunpack.c.l.b16 %v275
        %v636 = vunpack.c.h.b16 %v275
        %v637 = vunpack.c.l.b16 %v276
        %v638 = vunpack.c.h.b16 %v276
        %v639 = vunpack.c.l.b16 %v277
        %v640 = vunpack.c.h.b16 %v277
        %v641 = vunpack.c.l.b16 %v278
        %v642 = vunpack.c.h.b16 %v278
        %v643 = vunpack.c.l.b16 %v279
        %v644 = vunpack.c.h.b16 %v279
        %v645 = vunpack.c.l.b16 %v280
        %v646 = vunpack.c.h.b16 %v280
        %v647 = vunpack.c.l.b16 %v281
        %v648 = vunpack.c.h.b16 %v281
        %v649 = vunpack.c.l.b16 %v282
        %v650 = vunpack.c.h.b16 %v282
        %v651 = vunpack.c.l.b16 %v283
        %v652 = vunpack.c.h.b16 %v283
        %v653 = vunpack.c.l.b16 %v284
        %v654 = vunpack.c.h.b16 %v284
        %v655 = vunpack.c.l.b16 %v285
        %v656 = vunpack.c.h.b16 %v285
        %v657 = vunpack.c.l.b16 %v286
        %v658 = vunpack.c.h.b16 %v286
        %v659 = vunpack.c.l.b16 %v287
        %v660 = vunpack.c.h.b16 %v287
        %v661 = vunpack.c.l.b16 %v288
        %v662 = vunpack.c.h.b16 %v288
        %v663 = vunpack.c.l.b16 %v289
        %v664 = vunpack.c.h.b16 %v289
        %v665 = vunpack.c.l.b16 %v290
        %v666 = vunpack.c.h.b16 %v290
        %v667 = vunpack.c.l.b16 %v291
        %v668 = vunpack.c.h.b16 %v291
        %v669 = vunpack.c.l.b16 %v292
        %v670 = vunpack.c.h.b16 %v292
        %v671 = vunpack.c.l.b16 %v293
        %v672 = vunpack.c.h.b16 %v293
        %v673 = vunpack.c.l.b16 %v294
        %v674 = vunpack.c.h.b16 %v294
        %v675 = vunpack.c.l.b16 %v295
        %v676 = vunpack.c.h.b16 %v295
        %v677 = vunpack.c.l.b16 %v296
        %v678 = vunpack.c.h.b16 %v296
        %v679 = vunpack.c.l.b16 %v297
        %v680 = vunpack.c.h.b16 %v297
        %v681 = vunpack.c.l.b16 %v298
        %v682 = vunpack.c.h.b16 %v298
        %v683 = vunpack.c.l.b16 %v299
        %v684 = vunpack.c.h.b16 %v299
        %v685 = vunpack.c.l.b16 %v300
        %v686 = vunpack.c.h.b16 %v300
        %v687 = vunpack.c.l.b16 %v301
        %v688 = vunpack.c.h.b16 %v301
        %v689 = vunpack.c.l.b16 %v302
        %v690 = vunpack.c.h.b16 %v302
        %v691 = vunpack.c.l.b16 %v303
        %v692 = vunpack.c.h.b16 %v303
        %v693 = vunpack.c.l.b16 %v304
        %v694 = vunpack.c.h.b16 %v304
        %v695 = vunpack.c.l.b16 %v305
        %v696 = vunpack.c.h.b16 %v305
        %v697 = vunpack.c.l.b16 %v306
        %v698 = vunpack.c.h.b16 %v306
        %v699 = vunpack.c.l.b16 %v307
        %v700 = vunpack.c.h.b16 %v307
        %v701 = vunpack.c.l.b16 %v308
        %v702 = vunpack.c.h.b16 %v308
        %v703 = vunpack.c.l.b16 %v309
        %v704 = vunpack.c.h.b16 %v309
        %v705 = vunpack.c.l.b16 %v310
        %v706 = vunpack.c.h.b16 %v310
        %v707 = vunpack.c.l.b16 %v311
        %v708 = vunpack.c.h.b16 %v311
        %v709 = vunpack.c.l.b16 %v312
        %v710 = vunpack.c.h.b16 %v312
        %v711 = vunpack.c.l.b16 %v313
        %v712 = vunpack.c.h.b16 %v313
        %v713 = vunpack.c.l.b16 %v314
        %v714 = vunpack.c.h.b16 %v314
        %v715 = vunpack.c.l.b16 %v315
        %v716 = vunpack.c.h.b16 %v315
        %v717 = vunpack.c.l.b16 %v316
        %v718 = vunpack.c.h.b16 %v316
        %v719 = vunpack.c.l.b16 %v317
        %v720 = vunpack.c.h.b16 %v317
        %v721 = vunpack.c.l.b16 %v318
        %v722 = vunpack.c.h.b16 %v318
        %v723 = vunpack.c.l.b16 %v319
        %v724 = vunpack.c.h.b16 %v319
        %v725 = vunpack.c.l.b16 %v320
        %v726 = vunpack.c.h.b16 %v320
        %v727 = vunpack.c.l.b16 %v321
        %v728 = vunpack.c.h.b16 %v321
        %v729 = vunpack.c.l.b16 %v322
        %v730 = vunpack.c.h.b16 %v322
        %v731 = vunpack.c.l.b16 %v323
        %v732 = vunpack.c.h.b16 %v323
        %v733 = vunpack.c.l.b16 %v324
        %v734 = vunpack.c.h.b16 %v324
        %v735 = vunpack.c.l.b16 %v325
        %v736 = vunpack.c.h.b16 %v325
        %v737 = vunpack.c.l.b16 %v326
        %v738 = vunpack.c.h.b16 %v326
        %v739 = vunpack.c.l.b16 %v327
        %v740 = vunpack.c.h.b16 %v327
        %v741 = vunpack.c.l.b16 %v328
        %v742 = vunpack.c.h.b16 %v328
        %v743 = vpack.c.b16 %v489, %v487
        %v744 = vpack.c.b16 %v490, %v488
        %v745 = vpack.c.b16 %v493, %v491
        %v746 = vpack.c.b16 %v494, %v492
        %v747 = vpack.c.b16 %v497, %v495
        %v748 = vpack.c.b16 %v498, %v496
        %v749 = vpack.c.b16 %v501, %v499
        %v750 = vpack.c.b16 %v502, %v500
        %v751 = vpack.c.b16 %v505, %v503
        %v752 = vpack.c.b16 %v506, %v504
        %v753 = vpack.c.b16 %v509, %v507
        %v754 = vpack.c.b16 %v510, %v508
        %v755 = vpack.c.b16 %v513, %v511
        %v756 = vpack.c.b16 %v514, %v512
        %v757 = vpack.c.b16 %v517, %v515
        %v758 = vpack.c.b16 %v518, %v516
        %v759 = vpack.c.b16 %v521, %v519
        %v760 = vpack.c.b16 %v522, %v520
        %v761 = vpack.c.b16 %v525, %v523
        %v762 = vpack.c.b16 %v526, %v524
        %v763 = vpack.c.b16 %v529, %v527
        %v764 = vpack.c.b16 %v530, %v528
        %v765 = vpack.c.b16 %v533, %v531
        %v766 = vpack.c.b16 %v534, %v532
        %v767 = vpack.c.b16 %v537, %v535
        %v768 = vpack.c.b16 %v538, %v536
        %v769 = vpack.c.b16 %v541, %v539
        %v770 = vpack.c.b16 %v542, %v540
        %v771 = vpack.c.b16 %v545, %v543
        %v772 = vpack.c.b16 %v546, %v544
        %v773 = vpack.c.b16 %v549, %v547
        %v774 = vpack.c.b16 %v550, %v548
        %v775 = vpack.c.b16 %v553, %v551
        %v776 = vpack.c.b16 %v554, %v552
        %v777 = vpack.c.b16 %v557, %v555
        %v778 = vpack.c.b16 %v558, %v556
        %v779 = vpack.c.b16 %v561, %v559
        %v780 = vpack.c.b16 %v562, %v560
        %v781 = vpack.c.b16 %v565, %v563
        %v782 = vpack.c.b16 %v566, %v564
        %v783 = vpack.c.b16 %v569, %v567
        %v784 = vpack.c.b16 %v570, %v568
        %v785 = vpack.c.b16 %v573, %v571
        %v786 = vpack.c.b16 %v574, %v572
        %v787 = vpack.c.b16 %v577, %v575
        %v788 = vpack.c.b16 %v578, %v576
        %v789 = vpack.c.b16 %v581, %v579
        %v790 = vpack.c.b16 %v582, %v580
        %v791 = vpack.c.b16 %v585, %v583
        %v792 = vpack.c.b16 %v586, %v584
        %v793 = vpack.c.b16 %v589, %v587
        %v794 = vpack.c.b16 %v590, %v588
        %v795 = vpack.c.b16 %v593, %v591
        %v796 = vpack.c.b16 %v594, %v592
        %v797 = vpack.c.b16 %v597, %v595
        %v798 = vpack.c.b16 %v598, %v596
        %v799 = vpack.c.b16 %v601, %v599
        %v800 = vpack.c.b16 %v602, %v600
        %v801 = vpack.c.b16 %v605, %v603
        %v802 = vpack.c.b16 %v606, %v604
        %v803 = vpack.c.b16 %v609, %v607
        %v804 = vpack.c.b16 %v610, %v608
        %v805 = vpack.c.b16 %v613, %v611
        %v806 = vpack.c.b16 %v614, %v612
        %v807 = vpack.c.b16 %v617, %v615
        %v808 = vpack.c.b16 %v618, %v616
        %v809 = vpack.c.b16 %v621, %v619
        %v810 = vpack.c.b16 %v622, %v620
        %v811 = vpack.c.b16 %v625, %v623
        %v812 = vpack.c.b16 %v626, %v624
        %v813 = vpack.c.b16 %v629, %v627
        %v814 = vpack.c.b16 %v630, %v628
        %v815 = vpack.c.b16 %v633, %v631
        %v816 = vpack.c.b16 %v634, %v632
        %v817 = vpack.c.b16 %v637, %v635
        %v818 = vpack.c.b16 %v638, %v636
        %v819 = vpack.c.b16 %v641, %v639
        %v820 = vpack.c.b16 %v642, %v640
        %v821 = vpack.c.b16 %v645, %v643
        %v822 = vpack.c.b16 %v646, %v644
        %v823 = vpack.c.b16 %v649, %v647
        %v824 = vpack.c.b16 %v650, %v648
        %v825 = vpack.c.b16 %v653, %v651
        %v826 = vpack.c.b16 %v654, %v652
        %v827 = vpack.c.b16 %v657, %v655
        %v828 = vpack.c.b16 %v658, %v656
        %v829 = vpack.c.b16 %v661, %v659
        %v830 = vpack.c.b16 %v662, %v660
        %v831 = vpack.c.b16 %v665, %v663
        %v832 = vpack.c.b16 %v666, %v664
        %v833 = vpack.c.b16 %v669, %v667
        %v834 = vpack.c.b16 %v670, %v668
        %v835 = vpack.c.b16 %v673, %v671
        %v836 = vpack.c.b16 %v674, %v672
        %v837 = vpack.c.b16 %v677, %v675
        %v838 = vpack.c.b16 %v678, %v676
        %v839 = vpack.c.b16 %v681, %v679
        %v840 = vpack.c.b16 %v682, %v680
        %v841 = vpack.c.b16 %v685, %v683
        %v842 = vpack.c.b16 %v686, %v684
        %v843 = vpack.c.b16 %v689, %v687
        %v844 = vpack.c.b16 %v690, %v688
        %v845 = vpack.c.b16 %v693, %v691
        %v846 = vpack.c.b16 %v694, %v692
        %v847 = vpack.c.b16 %v697, %v695
        %v848 = vpack.c.b16 %v698, %v696
        %v849 = vpack.c.b16 %v701, %v699
        %v850 = vpack.c.b16 %v702, %v700
        %v851 = vpack.c.b16 %v705, %v703
        %v852 = vpack.c.b16 %v706, %v704
        %v853 = vpack.c.b16 %v709, %v707
        %v854 = vpack.c.b16 %v710, %v708
        %v855 = vpack.c.b16 %v713, %v711
        %v856 = vpack.c.b16 %v714, %v712
        %v857 = vpack.c.b16 %v717, %v715
        %v858 = vpack.c.b16 %v718, %v716
        %v859 = vpack.c.b16 %v721, %v719
        %v860 = vpack.c.b16 %v722, %v720
        %v861 = vpack.c.b16 %v725, %v723
        %v862 = vpack.c.b16 %v726, %v724
        %v863 = vpack.c.b16 %v729, %v727
        %v864 = vpack.c.b16 %v730, %v728
        %v865 = vpack.c.b16 %v733, %v731
        %v866 = vpack.c.b16 %v734, %v732
        %v867 = vpack.c.b16 %v737, %v735
        %v868 = vpack.c.b16 %v738, %v736
        %v869 = vpack.c.b16 %v741, %v739
        %v870 = vpack.c.b16 %v742, %v740
        %v958 = vunpack.c.l.b16 %v329
        %v959 = vunpack.c.l.b16 %v330
        %v960 = vunpack.c.l.b16 %v331
        %v961 = vunpack.c.l.b16 %v332
        %v962 = vunpack.c.l.b16 %v333
        %v963 = vunpack.c.l.b16 %v334
        %v964 = vunpack.c.l.b16 %v335
        %v965 = vunpack.c.l.b16 %v336
        %v966 = vunpack.c.l.b16 %v337
        %v967 = vunpack.c.l.b16 %v338
        %v968 = vunpack.c.l.b16 %v339
        %v969 = vunpack.c.l.b16 %v340
        %v970 = vunpack.c.l.b16 %v341
        %v971 = vunpack.c.l.b16 %v342
        %v972 = vunpack.c.l.b16 %v343
        %v973 = vunpack.c.l.b16 %v344
        %v974 = vunpack.c.l.b16 %v345
        %v975 = vunpack.c.l.b16 %v346
        %v976 = vunpack.c.l.b16 %v347
        %v977 = vunpack.c.l.b16 %v348
        %v978 = vunpack.c.l.b16 %v349
        %v979 = vunpack.c.l.b16 %v350
        %v980 = vunpack.c.l.b16 %v351
        %v981 = vpack.c.b16 %v959, %v958
        %v982 = vpack.c.b16 %v961, %v960
        %v983 = vpack.c.b16 %v963, %v962
        %v984 = vpack.c.b16 %v965, %v964
        %v985 = vpack.c.b16 %v967, %v966
        %v986 = vpack.c.b16 %v969, %v968
        %v987 = vpack.c.b16 %v971, %v970
        %v988 = vpack.c.b16 %v973, %v972
        %v989 = vpack.c.b16 %v975, %v974
        %v990 = vpack.c.b16 %v977, %v976
        %v991 = vpack.c.b16 %v979, %v978
        %v992 = vpack.c.b16 %v980, %v980
        %vm1004 = vcmask 424960
        %v1006 = vsel %vm1004, %v744, 0
        %v1009 = vsel %vm1004, %v746, 0
        %v1012 = vsel %vm1004, %v748, 0
        %v1015 = vsel %vm1004, %v750, 0
        %v1018 = vsel %vm1004, %v752, 0
        %v1021 = vsel %vm1004, %v754, 0
        %v1024 = vsel %vm1004, %v756, 0
        %v1027 = vsel %vm1004, %v758, 0
        %v1030 = vsel %vm1004, %v760, 0
        %v1033 = vsel %vm1004, %v762, 0
        %v1036 = vsel %vm1004, %v764, 0
        %v1039 = vsel %vm1004, %v766, 0
        %v1042 = vsel %vm1004, %v768, 0
        %v1045 = vsel %vm1004, %v770, 0
        %v1048 = vsel %vm1004, %v772, 0
        %v1051 = vsel %vm1004, %v774, 0
        %v1054 = vsel %vm1004, %v776, 0
        %v1057 = vsel %vm1004, %v778, 0
        %v1060 = vsel %vm1004, %v780, 0
        %v1063 = vsel %vm1004, %v782, 0
        %v1066 = vsel %vm1004, %v784, 0
        %v1069 = vsel %vm1004, %v786, 0
        %v1072 = vsel %vm1004, %v788, 0
        %v1075 = vsel %vm1004, %v790, 0
        %v1078 = vsel %vm1004, %v792, 0
        %v1081 = vsel %vm1004, %v794, 0
        %v1084 = vsel %vm1004, %v796, 0
        %v1087 = vsel %vm1004, %v798, 0
        %v1090 = vsel %vm1004, %v800, 0
        %v1093 = vsel %vm1004, %v802, 0
        %v1096 = vsel %vm1004, %v804, 0
        %v1099 = vsel %vm1004, %v806, 0
        %v1102 = vsel %vm1004, %v808, 0
        %v1105 = vsel %vm1004, %v810, 0
        %v1108 = vsel %vm1004, %v812, 0
        %v1111 = vsel %vm1004, %v814, 0
        %v1114 = vsel %vm1004, %v816, 0
        %v1117 = vsel %vm1004, %v818, 0
        %v1120 = vsel %vm1004, %v820, 0
        %v1123 = vsel %vm1004, %v822, 0
        %v1126 = vsel %vm1004, %v824, 0
        %v1129 = vsel %vm1004, %v826, 0
        %v1132 = vsel %vm1004, %v828, 0
        %v1135 = vsel %vm1004, %v830, 0
        %v1138 = vsel %vm1004, %v832, 0
        %v1141 = vsel %vm1004, %v834, 0
        %v1144 = vsel %vm1004, %v836, 0
        %v1147 = vsel %vm1004, %v838, 0
        %v1150 = vsel %vm1004, %v840, 0
        %v1153 = vsel %vm1004, %v842, 0
        %v1156 = vsel %vm1004, %v844, 0
        %v1159 = vsel %vm1004, %v846, 0
        %v1162 = vsel %vm1004, %v848, 0
        %v1165 = vsel %vm1004, %v850, 0
        %v1168 = vsel %vm1004, %v852, 0
        %v1171 = vsel %vm1004, %v854, 0
        %v1174 = vsel %vm1004, %v856, 0
        %v1177 = vsel %vm1004, %v858, 0
        %v1180 = vsel %vm1004, %v860, 0
        %v1183 = vsel %vm1004, %v862, 0
        %v1186 = vsel %vm1004, %v864, 0
        %v1189 = vsel %vm1004, %v866, 0
        %v1192 = vsel %vm1004, %v868, 0
        %v1195 = vsel %vm1004, %v870, 0
        %vm1197 = vcmask 1041408
        %v1199 = vsel %vm1197, %v992, 0
        %1201 = vmatprep.subr.bf16.mxu0 0
        %1202 = vmatpush1.bf16.msra.mxu0 %v988
        %1203 = vmatprep.subr.bf16.mxu0 0
        %1204 = vmatpush1.bf16.msra.mxu0 %v987
        %1205 = vmatprep.subr.bf16.mxu0 0
        %1206 = vmatpush1.bf16.msra.mxu0 %v986
        %1207 = vmatprep.subr.bf16.mxu0 0
        %1208 = vmatpush1.bf16.msra.mxu0 %v985
        %1209 = vmatprep.subr.bf16.mxu0 0
        %1210 = vmatpush1.bf16.msra.mxu0 %v984
        %1211 = vmatprep.subr.bf16.mxu0 0
        %1212 = vmatpush1.bf16.msra.mxu0 %v983
        %1213 = vmatprep.subr.bf16.mxu0 0
        %1214 = vmatpush1.bf16.msra.mxu0 %v982
        %1215 = vmatprep.subr.bf16.mxu0 0
        %1216 = vmatpush1.bf16.msra.mxu0 %v981
        %1217 = vmatprep.subr.bf16.mxu0 0
        %1218 = vmatpush2.bf16.msra.mxu0 0
        %1219 = vmatprep.subr.bf16.mxu0 0
        %1220 = vmatpush2.bf16.msra.mxu0 0
        %1221 = vmatprep.subr.bf16.mxu0 0
        %1222 = vmatpush2.bf16.msra.mxu0 0
        %1223 = vmatprep.subr.bf16.mxu0 0
        %1224 = vmatpush2.bf16.msra.mxu0 0
        %1225 = vmatprep.subr.bf16.mxu0 0
        %1226 = vmatpush2.bf16.msra.mxu0 %v1199
        %1227 = vmatprep.subr.bf16.mxu0 0
        %1228 = vmatpush2.bf16.msra.mxu0 %v991
        %1229 = vmatprep.subr.bf16.mxu0 0
        %1230 = vmatpush2.bf16.msra.mxu0 %v990
        %1231 = vmatprep.subr.bf16.mxu0 0
        %1232 = vmatpush2.bf16.msra.mxu0 %v989
        %1233 = vmatprep.mubr.bf16.mxu0 %v1006
        %1234 = vmatmul.mubr.bf16.gmra.mxu0 %v743
        %v1235 = vpop.f32.mrf.mxu0
        %v1236 = vadd.f32 %v357, %v1235
        %v1237 = vpop.f32.mrf.mxu0
        %v1238 = vpop.f32.mrf.mxu0
        %v1239 = vadd.f32 %v357, %v1238
        %v1240 = vpop.f32.mrf.mxu0
        %1241 = vmatprep.mubr.bf16.mxu0 %v1009
        %1242 = vmatmul.mubr.bf16.gmra.mxu0 %v745
        %v1243 = vpop.f32.mrf.mxu0
        %v1244 = vadd.f32 %v357, %v1243
        %v1245 = vpop.f32.mrf.mxu0
        %v1246 = vpop.f32.mrf.mxu0
        %v1247 = vadd.f32 %v357, %v1246
        %v1248 = vpop.f32.mrf.mxu0
        %1249 = vmatprep.mubr.bf16.mxu0 %v1012
        %1250 = vmatmul.mubr.bf16.gmra.mxu0 %v747
        %v1251 = vpop.f32.mrf.mxu0
        %v1252 = vadd.f32 %v357, %v1251
        %v1253 = vpop.f32.mrf.mxu0
        %v1254 = vpop.f32.mrf.mxu0
        %v1255 = vadd.f32 %v357, %v1254
        %v1256 = vpop.f32.mrf.mxu0
        %1257 = vmatprep.mubr.bf16.mxu0 %v1015
        %1258 = vmatmul.mubr.bf16.gmra.mxu0 %v749
        %v1259 = vpop.f32.mrf.mxu0
        %v1260 = vadd.f32 %v357, %v1259
        %v1261 = vpop.f32.mrf.mxu0
        %v1262 = vpop.f32.mrf.mxu0
        %v1263 = vadd.f32 %v357, %v1262
        %v1264 = vpop.f32.mrf.mxu0
        %1265 = vmatprep.mubr.bf16.mxu0 %v1018
        %1266 = vmatmul.mubr.bf16.gmra.mxu0 %v751
        %v1267 = vpop.f32.mrf.mxu0
        %v1268 = vadd.f32 %v357, %v1267
        %v1269 = vpop.f32.mrf.mxu0
        %v1270 = vpop.f32.mrf.mxu0
        %v1271 = vadd.f32 %v357, %v1270
        %v1272 = vpop.f32.mrf.mxu0
        %1273 = vmatprep.mubr.bf16.mxu0 %v1021
        %1274 = vmatmul.mubr.bf16.gmra.mxu0 %v753
        %v1275 = vpop.f32.mrf.mxu0
        %v1276 = vadd.f32 %v357, %v1275
        %v1277 = vpop.f32.mrf.mxu0
        %v1278 = vpop.f32.mrf.mxu0
        %v1279 = vadd.f32 %v357, %v1278
        %v1280 = vpop.f32.mrf.mxu0
        %1281 = vmatprep.mubr.bf16.mxu0 %v1024
        %1282 = vmatmul.mubr.bf16.gmra.mxu0 %v755
        %v1283 = vpop.f32.mrf.mxu0
        %v1284 = vadd.f32 %v357, %v1283
        %v1285 = vpop.f32.mrf.mxu0
        %v1286 = vpop.f32.mrf.mxu0
        %v1287 = vadd.f32 %v357, %v1286
        %v1288 = vpop.f32.mrf.mxu0
        %1289 = vmatprep.mubr.bf16.mxu0 %v1027
        %1290 = vmatmul.mubr.bf16.gmra.mxu0 %v757
        %v1291 = vpop.f32.mrf.mxu0
        %v1292 = vadd.f32 %v357, %v1291
        %v1293 = vpop.f32.mrf.mxu0
        %v1294 = vpop.f32.mrf.mxu0
        %v1295 = vadd.f32 %v357, %v1294
        %v1296 = vpop.f32.mrf.mxu0
        %1297 = vmatprep.mubr.bf16.mxu0 %v1030
        %1298 = vmatmul.mubr.bf16.gmra.mxu0 %v759
        %v1299 = vpop.f32.mrf.mxu0
        %v1300 = vadd.f32 %v357, %v1299
        %v1301 = vpop.f32.mrf.mxu0
        %v1302 = vpop.f32.mrf.mxu0
        %v1303 = vadd.f32 %v357, %v1302
        %v1304 = vpop.f32.mrf.mxu0
        %1305 = vmatprep.mubr.bf16.mxu0 %v1033
        %1306 = vmatmul.mubr.bf16.gmra.mxu0 %v761
        %v1307 = vpop.f32.mrf.mxu0
        %v1308 = vadd.f32 %v357, %v1307
        %v1309 = vpop.f32.mrf.mxu0
        %v1310 = vpop.f32.mrf.mxu0
        %v1311 = vadd.f32 %v357, %v1310
        %v1312 = vpop.f32.mrf.mxu0
        %1313 = vmatprep.mubr.bf16.mxu0 %v1036
        %1314 = vmatmul.mubr.bf16.gmra.mxu0 %v763
        %v1315 = vpop.f32.mrf.mxu0
        %v1316 = vadd.f32 %v357, %v1315
        %v1317 = vpop.f32.mrf.mxu0
        %v1318 = vpop.f32.mrf.mxu0
        %v1319 = vadd.f32 %v357, %v1318
        %v1320 = vpop.f32.mrf.mxu0
        %1321 = vmatprep.mubr.bf16.mxu0 %v1039
        %1322 = vmatmul.mubr.bf16.gmra.mxu0 %v765
        %v1323 = vpop.f32.mrf.mxu0
        %v1324 = vadd.f32 %v357, %v1323
        %v1325 = vpop.f32.mrf.mxu0
        %v1326 = vpop.f32.mrf.mxu0
        %v1327 = vadd.f32 %v357, %v1326
        %v1328 = vpop.f32.mrf.mxu0
        %1329 = vmatprep.mubr.bf16.mxu0 %v1042
        %1330 = vmatmul.mubr.bf16.gmra.mxu0 %v767
        %v1331 = vpop.f32.mrf.mxu0
        %v1332 = vadd.f32 %v357, %v1331
        %v1333 = vpop.f32.mrf.mxu0
        %v1334 = vpop.f32.mrf.mxu0
        %v1335 = vadd.f32 %v357, %v1334
        %v1336 = vpop.f32.mrf.mxu0
        %1337 = vmatprep.mubr.bf16.mxu0 %v1045
        %1338 = vmatmul.mubr.bf16.gmra.mxu0 %v769
        %v1339 = vpop.f32.mrf.mxu0
        %v1340 = vadd.f32 %v357, %v1339
        %v1341 = vpop.f32.mrf.mxu0
        %v1342 = vpop.f32.mrf.mxu0
        %v1343 = vadd.f32 %v357, %v1342
        %v1344 = vpop.f32.mrf.mxu0
        %1345 = vmatprep.mubr.bf16.mxu0 %v1048
        %1346 = vmatmul.mubr.bf16.gmra.mxu0 %v771
        %v1347 = vpop.f32.mrf.mxu0
        %v1348 = vadd.f32 %v357, %v1347
        %v1349 = vpop.f32.mrf.mxu0
        %v1350 = vpop.f32.mrf.mxu0
        %v1351 = vadd.f32 %v357, %v1350
        %v1352 = vpop.f32.mrf.mxu0
        %1353 = vmatprep.mubr.bf16.mxu0 %v1051
        %1354 = vmatmul.mubr.bf16.gmra.mxu0 %v773
        %v1355 = vpop.f32.mrf.mxu0
        %v1356 = vadd.f32 %v357, %v1355
        %v1357 = vpop.f32.mrf.mxu0
        %v1358 = vpop.f32.mrf.mxu0
        %v1359 = vadd.f32 %v357, %v1358
        %v1360 = vpop.f32.mrf.mxu0
        %1361 = vmatprep.mubr.bf16.mxu0 %v1054
        %1362 = vmatmul.mubr.bf16.gmra.mxu0 %v775
        %v1363 = vpop.f32.mrf.mxu0
        %v1364 = vadd.f32 %v357, %v1363
        %v1365 = vpop.f32.mrf.mxu0
        %v1366 = vpop.f32.mrf.mxu0
        %v1367 = vadd.f32 %v357, %v1366
        %v1368 = vpop.f32.mrf.mxu0
        %1369 = vmatprep.mubr.bf16.mxu0 %v1057
        %1370 = vmatmul.mubr.bf16.gmra.mxu0 %v777
        %v1371 = vpop.f32.mrf.mxu0
        %v1372 = vadd.f32 %v357, %v1371
        %v1373 = vpop.f32.mrf.mxu0
        %v1374 = vpop.f32.mrf.mxu0
        %v1375 = vadd.f32 %v357, %v1374
        %v1376 = vpop.f32.mrf.mxu0
        %1377 = vmatprep.mubr.bf16.mxu0 %v1060
        %1378 = vmatmul.mubr.bf16.gmra.mxu0 %v779
        %v1379 = vpop.f32.mrf.mxu0
        %v1380 = vadd.f32 %v357, %v1379
        %v1381 = vpop.f32.mrf.mxu0
        %v1382 = vpop.f32.mrf.mxu0
        %v1383 = vadd.f32 %v357, %v1382
        %v1384 = vpop.f32.mrf.mxu0
        %1385 = vmatprep.mubr.bf16.mxu0 %v1063
        %1386 = vmatmul.mubr.bf16.gmra.mxu0 %v781
        %v1387 = vpop.f32.mrf.mxu0
        %v1388 = vadd.f32 %v357, %v1387
        %v1389 = vpop.f32.mrf.mxu0
        %v1390 = vpop.f32.mrf.mxu0
        %v1391 = vadd.f32 %v357, %v1390
        %v1392 = vpop.f32.mrf.mxu0
        %1393 = vmatprep.mubr.bf16.mxu0 %v1066
        %1394 = vmatmul.mubr.bf16.gmra.mxu0 %v783
        %v1395 = vpop.f32.mrf.mxu0
        %v1396 = vadd.f32 %v357, %v1395
        %v1397 = vpop.f32.mrf.mxu0
        %v1398 = vpop.f32.mrf.mxu0
        %v1399 = vadd.f32 %v357, %v1398
        %v1400 = vpop.f32.mrf.mxu0
        %1401 = vmatprep.mubr.bf16.mxu0 %v1069
        %1402 = vmatmul.mubr.bf16.gmra.mxu0 %v785
        %v1403 = vpop.f32.mrf.mxu0
        %v1404 = vadd.f32 %v357, %v1403
        %v1405 = vpop.f32.mrf.mxu0
        %v1406 = vpop.f32.mrf.mxu0
        %v1407 = vadd.f32 %v357, %v1406
        %v1408 = vpop.f32.mrf.mxu0
        %1409 = vmatprep.mubr.bf16.mxu0 %v1072
        %1410 = vmatmul.mubr.bf16.gmra.mxu0 %v787
        %v1411 = vpop.f32.mrf.mxu0
        %v1412 = vadd.f32 %v357, %v1411
        %v1413 = vpop.f32.mrf.mxu0
        %v1414 = vpop.f32.mrf.mxu0
        %v1415 = vadd.f32 %v357, %v1414
        %v1416 = vpop.f32.mrf.mxu0
        %1417 = vmatprep.mubr.bf16.mxu0 %v1075
        %1418 = vmatmul.mubr.bf16.gmra.mxu0 %v789
        %v1419 = vpop.f32.mrf.mxu0
        %v1420 = vadd.f32 %v357, %v1419
        %v1421 = vpop.f32.mrf.mxu0
        %v1422 = vpop.f32.mrf.mxu0
        %v1423 = vadd.f32 %v357, %v1422
        %v1424 = vpop.f32.mrf.mxu0
        %1425 = vmatprep.mubr.bf16.mxu0 %v1078
        %1426 = vmatmul.mubr.bf16.gmra.mxu0 %v791
        %v1427 = vpop.f32.mrf.mxu0
        %v1428 = vadd.f32 %v357, %v1427
        %v1429 = vpop.f32.mrf.mxu0
        %v1430 = vpop.f32.mrf.mxu0
        %v1431 = vadd.f32 %v357, %v1430
        %v1432 = vpop.f32.mrf.mxu0
        %1433 = vmatprep.mubr.bf16.mxu0 %v1081
        %1434 = vmatmul.mubr.bf16.gmra.mxu0 %v793
        %v1435 = vpop.f32.mrf.mxu0
        %v1436 = vadd.f32 %v357, %v1435
        %v1437 = vpop.f32.mrf.mxu0
        %v1438 = vpop.f32.mrf.mxu0
        %v1439 = vadd.f32 %v357, %v1438
        %v1440 = vpop.f32.mrf.mxu0
        %1441 = vmatprep.mubr.bf16.mxu0 %v1084
        %1442 = vmatmul.mubr.bf16.gmra.mxu0 %v795
        %v1443 = vpop.f32.mrf.mxu0
        %v1444 = vadd.f32 %v357, %v1443
        %v1445 = vpop.f32.mrf.mxu0
        %v1446 = vpop.f32.mrf.mxu0
        %v1447 = vadd.f32 %v357, %v1446
        %v1448 = vpop.f32.mrf.mxu0
        %1449 = vmatprep.mubr.bf16.mxu0 %v1087
        %1450 = vmatmul.mubr.bf16.gmra.mxu0 %v797
        %v1451 = vpop.f32.mrf.mxu0
        %v1452 = vadd.f32 %v357, %v1451
        %v1453 = vpop.f32.mrf.mxu0
        %v1454 = vpop.f32.mrf.mxu0
        %v1455 = vadd.f32 %v357, %v1454
        %v1456 = vpop.f32.mrf.mxu0
        %1457 = vmatprep.mubr.bf16.mxu0 %v1090
        %1458 = vmatmul.mubr.bf16.gmra.mxu0 %v799
        %v1459 = vpop.f32.mrf.mxu0
        %v1460 = vadd.f32 %v357, %v1459
        %v1461 = vpop.f32.mrf.mxu0
        %v1462 = vpop.f32.mrf.mxu0
        %v1463 = vadd.f32 %v357, %v1462
        %v1464 = vpop.f32.mrf.mxu0
        %1465 = vmatprep.mubr.bf16.mxu0 %v1093
        %1466 = vmatmul.mubr.bf16.gmra.mxu0 %v801
        %v1467 = vpop.f32.mrf.mxu0
        %v1468 = vadd.f32 %v357, %v1467
        %v1469 = vpop.f32.mrf.mxu0
        %v1470 = vpop.f32.mrf.mxu0
        %v1471 = vadd.f32 %v357, %v1470
        %v1472 = vpop.f32.mrf.mxu0
        %1473 = vmatprep.mubr.bf16.mxu0 %v1096
        %1474 = vmatmul.mubr.bf16.gmra.mxu0 %v803
        %v1475 = vpop.f32.mrf.mxu0
        %v1476 = vadd.f32 %v357, %v1475
        %v1477 = vpop.f32.mrf.mxu0
        %v1478 = vpop.f32.mrf.mxu0
        %v1479 = vadd.f32 %v357, %v1478
        %v1480 = vpop.f32.mrf.mxu0
        %1481 = vmatprep.mubr.bf16.mxu0 %v1099
        %1482 = vmatmul.mubr.bf16.gmra.mxu0 %v805
        %v1483 = vpop.f32.mrf.mxu0
        %v1484 = vadd.f32 %v357, %v1483
        %v1485 = vpop.f32.mrf.mxu0
        %v1486 = vpop.f32.mrf.mxu0
        %v1487 = vadd.f32 %v357, %v1486
        %v1488 = vpop.f32.mrf.mxu0
        %1489 = vmatprep.mubr.bf16.mxu0 %v1102
        %1490 = vmatmul.mubr.bf16.gmra.mxu0 %v807
        %v1491 = vpop.f32.mrf.mxu0
        %v1492 = vadd.f32 %v357, %v1491
        %v1493 = vpop.f32.mrf.mxu0
        %v1494 = vpop.f32.mrf.mxu0
        %v1495 = vadd.f32 %v357, %v1494
        %v1496 = vpop.f32.mrf.mxu0
        %1497 = vmatprep.mubr.bf16.mxu0 %v1105
        %1498 = vmatmul.mubr.bf16.gmra.mxu0 %v809
        %v1499 = vpop.f32.mrf.mxu0
        %v1500 = vadd.f32 %v357, %v1499
        %v1501 = vpop.f32.mrf.mxu0
        %v1502 = vpop.f32.mrf.mxu0
        %v1503 = vadd.f32 %v357, %v1502
        %v1504 = vpop.f32.mrf.mxu0
        %1505 = vmatprep.mubr.bf16.mxu0 %v1108
        %1506 = vmatmul.mubr.bf16.gmra.mxu0 %v811
        %v1507 = vpop.f32.mrf.mxu0
        %v1508 = vadd.f32 %v357, %v1507
        %v1509 = vpop.f32.mrf.mxu0
        %v1510 = vpop.f32.mrf.mxu0
        %v1511 = vadd.f32 %v357, %v1510
        %v1512 = vpop.f32.mrf.mxu0
        %1513 = vmatprep.mubr.bf16.mxu0 %v1111
        %1514 = vmatmul.mubr.bf16.gmra.mxu0 %v813
        %v1515 = vpop.f32.mrf.mxu0
        %v1516 = vadd.f32 %v357, %v1515
        %v1517 = vpop.f32.mrf.mxu0
        %v1518 = vpop.f32.mrf.mxu0
        %v1519 = vadd.f32 %v357, %v1518
        %v1520 = vpop.f32.mrf.mxu0
        %1521 = vmatprep.mubr.bf16.mxu0 %v1114
        %1522 = vmatmul.mubr.bf16.gmra.mxu0 %v815
        %v1523 = vpop.f32.mrf.mxu0
        %v1524 = vadd.f32 %v357, %v1523
        %v1525 = vpop.f32.mrf.mxu0
        %v1526 = vpop.f32.mrf.mxu0
        %v1527 = vadd.f32 %v357, %v1526
        %v1528 = vpop.f32.mrf.mxu0
        %1529 = vmatprep.mubr.bf16.mxu0 %v1117
        %1530 = vmatmul.mubr.bf16.gmra.mxu0 %v817
        %v1531 = vpop.f32.mrf.mxu0
        %v1532 = vadd.f32 %v357, %v1531
        %v1533 = vpop.f32.mrf.mxu0
        %v1534 = vpop.f32.mrf.mxu0
        %v1535 = vadd.f32 %v357, %v1534
        %v1536 = vpop.f32.mrf.mxu0
        %1537 = vmatprep.mubr.bf16.mxu0 %v1120
        %1538 = vmatmul.mubr.bf16.gmra.mxu0 %v819
        %v1539 = vpop.f32.mrf.mxu0
        %v1540 = vadd.f32 %v357, %v1539
        %v1541 = vpop.f32.mrf.mxu0
        %v1542 = vpop.f32.mrf.mxu0
        %v1543 = vadd.f32 %v357, %v1542
        %v1544 = vpop.f32.mrf.mxu0
        %1545 = vmatprep.mubr.bf16.mxu0 %v1123
        %1546 = vmatmul.mubr.bf16.gmra.mxu0 %v821
        %v1547 = vpop.f32.mrf.mxu0
        %v1548 = vadd.f32 %v357, %v1547
        %v1549 = vpop.f32.mrf.mxu0
        %v1550 = vpop.f32.mrf.mxu0
        %v1551 = vadd.f32 %v357, %v1550
        %v1552 = vpop.f32.mrf.mxu0
        %1553 = vmatprep.mubr.bf16.mxu0 %v1126
        %1554 = vmatmul.mubr.bf16.gmra.mxu0 %v823
        %v1555 = vpop.f32.mrf.mxu0
        %v1556 = vadd.f32 %v357, %v1555
        %v1557 = vpop.f32.mrf.mxu0
        %v1558 = vpop.f32.mrf.mxu0
        %v1559 = vadd.f32 %v357, %v1558
        %v1560 = vpop.f32.mrf.mxu0
        %1561 = vmatprep.mubr.bf16.mxu0 %v1129
        %1562 = vmatmul.mubr.bf16.gmra.mxu0 %v825
        %v1563 = vpop.f32.mrf.mxu0
        %v1564 = vadd.f32 %v357, %v1563
        %v1565 = vpop.f32.mrf.mxu0
        %v1566 = vpop.f32.mrf.mxu0
        %v1567 = vadd.f32 %v357, %v1566
        %v1568 = vpop.f32.mrf.mxu0
        %1569 = vmatprep.mubr.bf16.mxu0 %v1132
        %1570 = vmatmul.mubr.bf16.gmra.mxu0 %v827
        %v1571 = vpop.f32.mrf.mxu0
        %v1572 = vadd.f32 %v357, %v1571
        %v1573 = vpop.f32.mrf.mxu0
        %v1574 = vpop.f32.mrf.mxu0
        %v1575 = vadd.f32 %v357, %v1574
        %v1576 = vpop.f32.mrf.mxu0
        %1577 = vmatprep.mubr.bf16.mxu0 %v1135
        %1578 = vmatmul.mubr.bf16.gmra.mxu0 %v829
        %v1579 = vpop.f32.mrf.mxu0
        %v1580 = vadd.f32 %v357, %v1579
        %v1581 = vpop.f32.mrf.mxu0
        %v1582 = vpop.f32.mrf.mxu0
        %v1583 = vadd.f32 %v357, %v1582
        %v1584 = vpop.f32.mrf.mxu0
        %1585 = vmatprep.mubr.bf16.mxu0 %v1138
        %1586 = vmatmul.mubr.bf16.gmra.mxu0 %v831
        %v1587 = vpop.f32.mrf.mxu0
        %v1588 = vadd.f32 %v357, %v1587
        %v1589 = vpop.f32.mrf.mxu0
        %v1590 = vpop.f32.mrf.mxu0
        %v1591 = vadd.f32 %v357, %v1590
        %v1592 = vpop.f32.mrf.mxu0
        %1593 = vmatprep.mubr.bf16.mxu0 %v1141
        %1594 = vmatmul.mubr.bf16.gmra.mxu0 %v833
        %v1595 = vpop.f32.mrf.mxu0
        %v1596 = vadd.f32 %v357, %v1595
        %v1597 = vpop.f32.mrf.mxu0
        %v1598 = vpop.f32.mrf.mxu0
        %v1599 = vadd.f32 %v357, %v1598
        %v1600 = vpop.f32.mrf.mxu0
        %1601 = vmatprep.mubr.bf16.mxu0 %v1144
        %1602 = vmatmul.mubr.bf16.gmra.mxu0 %v835
        %v1603 = vpop.f32.mrf.mxu0
        %v1604 = vadd.f32 %v357, %v1603
        %v1605 = vpop.f32.mrf.mxu0
        %v1606 = vpop.f32.mrf.mxu0
        %v1607 = vadd.f32 %v357, %v1606
        %v1608 = vpop.f32.mrf.mxu0
        %1609 = vmatprep.mubr.bf16.mxu0 %v1147
        %1610 = vmatmul.mubr.bf16.gmra.mxu0 %v837
        %v1611 = vpop.f32.mrf.mxu0
        %v1612 = vadd.f32 %v357, %v1611
        %v1613 = vpop.f32.mrf.mxu0
        %v1614 = vpop.f32.mrf.mxu0
        %v1615 = vadd.f32 %v357, %v1614
        %v1616 = vpop.f32.mrf.mxu0
        %1617 = vmatprep.mubr.bf16.mxu0 %v1150
        %1618 = vmatmul.mubr.bf16.gmra.mxu0 %v839
        %v1619 = vpop.f32.mrf.mxu0
        %v1620 = vadd.f32 %v357, %v1619
        %v1621 = vpop.f32.mrf.mxu0
        %v1622 = vpop.f32.mrf.mxu0
        %v1623 = vadd.f32 %v357, %v1622
        %v1624 = vpop.f32.mrf.mxu0
        %1625 = vmatprep.mubr.bf16.mxu0 %v1153
        %1626 = vmatmul.mubr.bf16.gmra.mxu0 %v841
        %v1627 = vpop.f32.mrf.mxu0
        %v1628 = vadd.f32 %v357, %v1627
        %v1629 = vpop.f32.mrf.mxu0
        %v1630 = vpop.f32.mrf.mxu0
        %v1631 = vadd.f32 %v357, %v1630
        %v1632 = vpop.f32.mrf.mxu0
        %1633 = vmatprep.mubr.bf16.mxu0 %v1156
        %1634 = vmatmul.mubr.bf16.gmra.mxu0 %v843
        %v1635 = vpop.f32.mrf.mxu0
        %v1636 = vadd.f32 %v357, %v1635
        %v1637 = vpop.f32.mrf.mxu0
        %v1638 = vpop.f32.mrf.mxu0
        %v1639 = vadd.f32 %v357, %v1638
        %v1640 = vpop.f32.mrf.mxu0
        %1641 = vmatprep.mubr.bf16.mxu0 %v1159
        %1642 = vmatmul.mubr.bf16.gmra.mxu0 %v845
        %v1643 = vpop.f32.mrf.mxu0
        %v1644 = vadd.f32 %v357, %v1643
        %v1645 = vpop.f32.mrf.mxu0
        %v1646 = vpop.f32.mrf.mxu0
        %v1647 = vadd.f32 %v357, %v1646
        %v1648 = vpop.f32.mrf.mxu0
        %1649 = vmatprep.mubr.bf16.mxu0 %v1162
        %1650 = vmatmul.mubr.bf16.gmra.mxu0 %v847
        %v1651 = vpop.f32.mrf.mxu0
        %v1652 = vadd.f32 %v357, %v1651
        %v1653 = vpop.f32.mrf.mxu0
        %v1654 = vpop.f32.mrf.mxu0
        %v1655 = vadd.f32 %v357, %v1654
        %v1656 = vpop.f32.mrf.mxu0
        %1657 = vmatprep.mubr.bf16.mxu0 %v1165
        %1658 = vmatmul.mubr.bf16.gmra.mxu0 %v849
        %v1659 = vpop.f32.mrf.mxu0
        %v1660 = vadd.f32 %v357, %v1659
        %v1661 = vpop.f32.mrf.mxu0
        %v1662 = vpop.f32.mrf.mxu0
        %v1663 = vadd.f32 %v357, %v1662
        %v1664 = vpop.f32.mrf.mxu0
        %1665 = vmatprep.mubr.bf16.mxu0 %v1168
        %1666 = vmatmul.mubr.bf16.gmra.mxu0 %v851
        %v1667 = vpop.f32.mrf.mxu0
        %v1668 = vadd.f32 %v357, %v1667
        %v1669 = vpop.f32.mrf.mxu0
        %v1670 = vpop.f32.mrf.mxu0
        %v1671 = vadd.f32 %v357, %v1670
        %v1672 = vpop.f32.mrf.mxu0
        %1673 = vmatprep.mubr.bf16.mxu0 %v1171
        %1674 = vmatmul.mubr.bf16.gmra.mxu0 %v853
        %v1675 = vpop.f32.mrf.mxu0
        %v1676 = vadd.f32 %v357, %v1675
        %v1677 = vpop.f32.mrf.mxu0
        %v1678 = vpop.f32.mrf.mxu0
        %v1679 = vadd.f32 %v357, %v1678
        %v1680 = vpop.f32.mrf.mxu0
        %1681 = vmatprep.mubr.bf16.mxu0 %v1174
        %1682 = vmatmul.mubr.bf16.gmra.mxu0 %v855
        %v1683 = vpop.f32.mrf.mxu0
        %v1684 = vadd.f32 %v357, %v1683
        %v1685 = vpop.f32.mrf.mxu0
        %v1686 = vpop.f32.mrf.mxu0
        %v1687 = vadd.f32 %v357, %v1686
        %v1688 = vpop.f32.mrf.mxu0
        %1689 = vmatprep.mubr.bf16.mxu0 %v1177
        %1690 = vmatmul.mubr.bf16.gmra.mxu0 %v857
        %v1691 = vpop.f32.mrf.mxu0
        %v1692 = vadd.f32 %v357, %v1691
        %v1693 = vpop.f32.mrf.mxu0
        %v1694 = vpop.f32.mrf.mxu0
        %v1695 = vadd.f32 %v357, %v1694
        %v1696 = vpop.f32.mrf.mxu0
        %1697 = vmatprep.mubr.bf16.mxu0 %v1180
        %1698 = vmatmul.mubr.bf16.gmra.mxu0 %v859
        %v1699 = vpop.f32.mrf.mxu0
        %v1700 = vadd.f32 %v357, %v1699
        %v1701 = vpop.f32.mrf.mxu0
        %v1702 = vpop.f32.mrf.mxu0
        %v1703 = vadd.f32 %v357, %v1702
        %v1704 = vpop.f32.mrf.mxu0
        %1705 = vmatprep.mubr.bf16.mxu0 %v1183
        %1706 = vmatmul.mubr.bf16.gmra.mxu0 %v861
        %v1707 = vpop.f32.mrf.mxu0
        %v1708 = vadd.f32 %v357, %v1707
        %v1709 = vpop.f32.mrf.mxu0
        %v1710 = vpop.f32.mrf.mxu0
        %v1711 = vadd.f32 %v357, %v1710
        %v1712 = vpop.f32.mrf.mxu0
        %1713 = vmatprep.mubr.bf16.mxu0 %v1186
        %1714 = vmatmul.mubr.bf16.gmra.mxu0 %v863
        %v1715 = vpop.f32.mrf.mxu0
        %v1716 = vadd.f32 %v357, %v1715
        %v1717 = vpop.f32.mrf.mxu0
        %v1718 = vpop.f32.mrf.mxu0
        %v1719 = vadd.f32 %v357, %v1718
        %v1720 = vpop.f32.mrf.mxu0
        %1721 = vmatprep.mubr.bf16.mxu0 %v1189
        %1722 = vmatmul.mubr.bf16.gmra.mxu0 %v865
        %v1723 = vpop.f32.mrf.mxu0
        %v1724 = vadd.f32 %v357, %v1723
        %v1725 = vpop.f32.mrf.mxu0
        %v1726 = vpop.f32.mrf.mxu0
        %v1727 = vadd.f32 %v357, %v1726
        %v1728 = vpop.f32.mrf.mxu0
        %1729 = vmatprep.mubr.bf16.mxu0 %v1192
        %1730 = vmatmul.mubr.bf16.gmra.mxu0 %v867
        %v1731 = vpop.f32.mrf.mxu0
        %v1732 = vadd.f32 %v357, %v1731
        %v1733 = vpop.f32.mrf.mxu0
        %v1734 = vpop.f32.mrf.mxu0
        %v1735 = vadd.f32 %v357, %v1734
        %v1736 = vpop.f32.mrf.mxu0
        %1737 = vmatprep.mubr.bf16.mxu0 %v1195
        %1738 = vmatmul.mubr.bf16.gmra.mxu0 %v869
        %v1739 = vpop.f32.mrf.mxu0
        %v1740 = vadd.f32 %v357, %v1739
        %v1741 = vpop.f32.mrf.mxu0
        %v1742 = vpop.f32.mrf.mxu0
        %v1743 = vadd.f32 %v357, %v1742
        %v1744 = vpop.f32.mrf.mxu0
        %1745 = vdwg.mxu0
        %v1746 = vmax.f32 %v1236, 0.0
        %v1747 = vmax.f32 %v1239, 0.0
        %v1748 = vmax.f32 %v1244, 0.0
        %v1749 = vmax.f32 %v1247, 0.0
        %v1750 = vmax.f32 %v1252, 0.0
        %v1751 = vmax.f32 %v1255, 0.0
        %v1752 = vmax.f32 %v1260, 0.0
        %v1753 = vmax.f32 %v1263, 0.0
        %v1754 = vmax.f32 %v1268, 0.0
        %v1755 = vmax.f32 %v1271, 0.0
        %v1756 = vmax.f32 %v1276, 0.0
        %v1757 = vmax.f32 %v1279, 0.0
        %v1758 = vmax.f32 %v1284, 0.0
        %v1759 = vmax.f32 %v1287, 0.0
        %v1760 = vmax.f32 %v1292, 0.0
        %v1761 = vmax.f32 %v1295, 0.0
        %v1762 = vmax.f32 %v1300, 0.0
        %v1763 = vmax.f32 %v1303, 0.0
        %v1764 = vmax.f32 %v1308, 0.0
        %v1765 = vmax.f32 %v1311, 0.0
        %v1766 = vmax.f32 %v1316, 0.0
        %v1767 = vmax.f32 %v1319, 0.0
        %v1768 = vmax.f32 %v1324, 0.0
        %v1769 = vmax.f32 %v1327, 0.0
        %v1770 = vmax.f32 %v1332, 0.0
        %v1771 = vmax.f32 %v1335, 0.0
        %v1772 = vmax.f32 %v1340, 0.0
        %v1773 = vmax.f32 %v1343, 0.0
        %v1774 = vmax.f32 %v1348, 0.0
        %v1775 = vmax.f32 %v1351, 0.0
        %v1776 = vmax.f32 %v1356, 0.0
        %v1777 = vmax.f32 %v1359, 0.0
        %v1778 = vmax.f32 %v1364, 0.0
        %v1779 = vmax.f32 %v1367, 0.0
        %v1780 = vmax.f32 %v1372, 0.0
        %v1781 = vmax.f32 %v1375, 0.0
        %v1782 = vmax.f32 %v1380, 0.0
        %v1783 = vmax.f32 %v1383, 0.0
        %v1784 = vmax.f32 %v1388, 0.0
        %v1785 = vmax.f32 %v1391, 0.0
        %v1786 = vmax.f32 %v1396, 0.0
        %v1787 = vmax.f32 %v1399, 0.0
        %v1788 = vmax.f32 %v1404, 0.0
        %v1789 = vmax.f32 %v1407, 0.0
        %v1790 = vmax.f32 %v1412, 0.0
        %v1791 = vmax.f32 %v1415, 0.0
        %v1792 = vmax.f32 %v1420, 0.0
        %v1793 = vmax.f32 %v1423, 0.0
        %v1794 = vmax.f32 %v1428, 0.0
        %v1795 = vmax.f32 %v1431, 0.0
        %v1796 = vmax.f32 %v1436, 0.0
        %v1797 = vmax.f32 %v1439, 0.0
        %v1798 = vmax.f32 %v1444, 0.0
        %v1799 = vmax.f32 %v1447, 0.0
        %v1800 = vmax.f32 %v1452, 0.0
        %v1801 = vmax.f32 %v1455, 0.0
        %v1802 = vmax.f32 %v1460, 0.0
        %v1803 = vmax.f32 %v1463, 0.0
        %v1804 = vmax.f32 %v1468, 0.0
        %v1805 = vmax.f32 %v1471, 0.0
        %v1806 = vmax.f32 %v1476, 0.0
        %v1807 = vmax.f32 %v1479, 0.0
        %v1808 = vmax.f32 %v1484, 0.0
        %v1809 = vmax.f32 %v1487, 0.0
        %v1810 = vmax.f32 %v1492, 0.0
        %v1811 = vmax.f32 %v1495, 0.0
        %v1812 = vmax.f32 %v1500, 0.0
        %v1813 = vmax.f32 %v1503, 0.0
        %v1814 = vmax.f32 %v1508, 0.0
        %v1815 = vmax.f32 %v1511, 0.0
        %v1816 = vmax.f32 %v1516, 0.0
        %v1817 = vmax.f32 %v1519, 0.0
        %v1818 = vmax.f32 %v1524, 0.0
        %v1819 = vmax.f32 %v1527, 0.0
        %v1820 = vmax.f32 %v1532, 0.0
        %v1821 = vmax.f32 %v1535, 0.0
        %v1822 = vmax.f32 %v1540, 0.0
        %v1823 = vmax.f32 %v1543, 0.0
        %v1824 = vmax.f32 %v1548, 0.0
        %v1825 = vmax.f32 %v1551, 0.0
        %v1826 = vmax.f32 %v1556, 0.0
        %v1827 = vmax.f32 %v1559, 0.0
        %v1828 = vmax.f32 %v1564, 0.0
        %v1829 = vmax.f32 %v1567, 0.0
        %v1830 = vmax.f32 %v1572, 0.0
        %v1831 = vmax.f32 %v1575, 0.0
        %v1832 = vmax.f32 %v1580, 0.0
        %v1833 = vmax.f32 %v1583, 0.0
        %v1834 = vmax.f32 %v1588, 0.0
        %v1835 = vmax.f32 %v1591, 0.0
        %v1836 = vmax.f32 %v1596, 0.0
        %v1837 = vmax.f32 %v1599, 0.0
        %v1838 = vmax.f32 %v1604, 0.0
        %v1839 = vmax.f32 %v1607, 0.0
        %v1840 = vmax.f32 %v1612, 0.0
        %v1841 = vmax.f32 %v1615, 0.0
        %v1842 = vmax.f32 %v1620, 0.0
        %v1843 = vmax.f32 %v1623, 0.0
        %v1844 = vmax.f32 %v1628, 0.0
        %v1845 = vmax.f32 %v1631, 0.0
        %v1846 = vmax.f32 %v1636, 0.0
        %v1847 = vmax.f32 %v1639, 0.0
        %v1848 = vmax.f32 %v1644, 0.0
        %v1849 = vmax.f32 %v1647, 0.0
        %v1850 = vmax.f32 %v1652, 0.0
        %v1851 = vmax.f32 %v1655, 0.0
        %v1852 = vmax.f32 %v1660, 0.0
        %v1853 = vmax.f32 %v1663, 0.0
        %v1854 = vmax.f32 %v1668, 0.0
        %v1855 = vmax.f32 %v1671, 0.0
        %v1856 = vmax.f32 %v1676, 0.0
        %v1857 = vmax.f32 %v1679, 0.0
        %v1858 = vmax.f32 %v1684, 0.0
        %v1859 = vmax.f32 %v1687, 0.0
        %v1860 = vmax.f32 %v1692, 0.0
        %v1861 = vmax.f32 %v1695, 0.0
        %v1862 = vmax.f32 %v1700, 0.0
        %v1863 = vmax.f32 %v1703, 0.0
        %v1864 = vmax.f32 %v1708, 0.0
        %v1865 = vmax.f32 %v1711, 0.0
        %v1866 = vmax.f32 %v1716, 0.0
        %v1867 = vmax.f32 %v1719, 0.0
        %v1868 = vmax.f32 %v1724, 0.0
        %v1869 = vmax.f32 %v1727, 0.0
        %v1870 = vmax.f32 %v1732, 0.0
        %v1871 = vmax.f32 %v1735, 0.0
        %v1872 = vmax.f32 %v1740, 0.0
        %v1873 = vmax.f32 %v1743, 0.0
        %v1874 = vpack.c.bf16 %v1747, %v1746
        %v1875 = vpack.c.bf16 %v1749, %v1748
        %v1876 = vpack.c.bf16 %v1751, %v1750
        %v1877 = vpack.c.bf16 %v1753, %v1752
        %v1878 = vpack.c.bf16 %v1755, %v1754
        %v1879 = vpack.c.bf16 %v1757, %v1756
        %v1880 = vpack.c.bf16 %v1759, %v1758
        %v1881 = vpack.c.bf16 %v1761, %v1760
        %v1882 = vpack.c.bf16 %v1763, %v1762
        %v1883 = vpack.c.bf16 %v1765, %v1764
        %v1884 = vpack.c.bf16 %v1767, %v1766
        %v1885 = vpack.c.bf16 %v1769, %v1768
        %v1886 = vpack.c.bf16 %v1771, %v1770
        %v1887 = vpack.c.bf16 %v1773, %v1772
        %v1888 = vpack.c.bf16 %v1775, %v1774
        %v1889 = vpack.c.bf16 %v1777, %v1776
        %v1890 = vpack.c.bf16 %v1779, %v1778
        %v1891 = vpack.c.bf16 %v1781, %v1780
        %v1892 = vpack.c.bf16 %v1783, %v1782
        %v1893 = vpack.c.bf16 %v1785, %v1784
        %v1894 = vpack.c.bf16 %v1787, %v1786
        %v1895 = vpack.c.bf16 %v1789, %v1788
        %v1896 = vpack.c.bf16 %v1791, %v1790
        %v1897 = vpack.c.bf16 %v1793, %v1792
        %v1898 = vpack.c.bf16 %v1795, %v1794
        %v1899 = vpack.c.bf16 %v1797, %v1796
        %v1900 = vpack.c.bf16 %v1799, %v1798
        %v1901 = vpack.c.bf16 %v1801, %v1800
        %v1902 = vpack.c.bf16 %v1803, %v1802
        %v1903 = vpack.c.bf16 %v1805, %v1804
        %v1904 = vpack.c.bf16 %v1807, %v1806
        %v1905 = vpack.c.bf16 %v1809, %v1808
        %v1906 = vpack.c.bf16 %v1811, %v1810
        %v1907 = vpack.c.bf16 %v1813, %v1812
        %v1908 = vpack.c.bf16 %v1815, %v1814
        %v1909 = vpack.c.bf16 %v1817, %v1816
        %v1910 = vpack.c.bf16 %v1819, %v1818
        %v1911 = vpack.c.bf16 %v1821, %v1820
        %v1912 = vpack.c.bf16 %v1823, %v1822
        %v1913 = vpack.c.bf16 %v1825, %v1824
        %v1914 = vpack.c.bf16 %v1827, %v1826
        %v1915 = vpack.c.bf16 %v1829, %v1828
        %v1916 = vpack.c.bf16 %v1831, %v1830
        %v1917 = vpack.c.bf16 %v1833, %v1832
        %v1918 = vpack.c.bf16 %v1835, %v1834
        %v1919 = vpack.c.bf16 %v1837, %v1836
        %v1920 = vpack.c.bf16 %v1839, %v1838
        %v1921 = vpack.c.bf16 %v1841, %v1840
        %v1922 = vpack.c.bf16 %v1843, %v1842
        %v1923 = vpack.c.bf16 %v1845, %v1844
        %v1924 = vpack.c.bf16 %v1847, %v1846
        %v1925 = vpack.c.bf16 %v1849, %v1848
        %v1926 = vpack.c.bf16 %v1851, %v1850
        %v1927 = vpack.c.bf16 %v1853, %v1852
        %v1928 = vpack.c.bf16 %v1855, %v1854
        %v1929 = vpack.c.bf16 %v1857, %v1856
        %v1930 = vpack.c.bf16 %v1859, %v1858
        %v1931 = vpack.c.bf16 %v1861, %v1860
        %v1932 = vpack.c.bf16 %v1863, %v1862
        %v1933 = vpack.c.bf16 %v1865, %v1864
        %v1934 = vpack.c.bf16 %v1867, %v1866
        %v1935 = vpack.c.bf16 %v1869, %v1868
        %v1936 = vpack.c.bf16 %v1871, %v1870
        %v1937 = vpack.c.bf16 %v1873, %v1872
        %v2002 = vunpack.c.l.b16 %v1874
        %v2003 = vunpack.c.h.b16 %v1874
        %v2004 = vunpack.c.l.b16 %v1875
        %v2005 = vunpack.c.h.b16 %v1875
        %v2006 = vunpack.c.l.b16 %v1876
        %v2007 = vunpack.c.h.b16 %v1876
        %v2008 = vunpack.c.l.b16 %v1877
        %v2009 = vunpack.c.h.b16 %v1877
        %v2010 = vunpack.c.l.b16 %v1878
        %v2011 = vunpack.c.h.b16 %v1878
        %v2012 = vunpack.c.l.b16 %v1879
        %v2013 = vunpack.c.h.b16 %v1879
        %v2014 = vunpack.c.l.b16 %v1880
        %v2015 = vunpack.c.h.b16 %v1880
        %v2016 = vunpack.c.l.b16 %v1881
        %v2017 = vunpack.c.h.b16 %v1881
        %v2018 = vunpack.c.l.b16 %v1882
        %v2019 = vunpack.c.h.b16 %v1882
        %v2020 = vunpack.c.l.b16 %v1883
        %v2021 = vunpack.c.h.b16 %v1883
        %v2022 = vunpack.c.l.b16 %v1884
        %v2023 = vunpack.c.h.b16 %v1884
        %v2024 = vunpack.c.l.b16 %v1885
        %v2025 = vunpack.c.h.b16 %v1885
        %v2026 = vunpack.c.l.b16 %v1886
        %v2027 = vunpack.c.h.b16 %v1886
        %v2028 = vunpack.c.l.b16 %v1887
        %v2029 = vunpack.c.h.b16 %v1887
        %v2030 = vunpack.c.l.b16 %v1888
        %v2031 = vunpack.c.h.b16 %v1888
        %v2032 = vunpack.c.l.b16 %v1889
        %v2033 = vunpack.c.h.b16 %v1889
        %v2034 = vunpack.c.l.b16 %v1890
        %v2035 = vunpack.c.h.b16 %v1890
        %v2036 = vunpack.c.l.b16 %v1891
        %v2037 = vunpack.c.h.b16 %v1891
        %v2038 = vunpack.c.l.b16 %v1892
        %v2039 = vunpack.c.h.b16 %v1892
        %v2040 = vunpack.c.l.b16 %v1893
        %v2041 = vunpack.c.h.b16 %v1893
        %v2042 = vunpack.c.l.b16 %v1894
        %v2043 = vunpack.c.h.b16 %v1894
        %v2044 = vunpack.c.l.b16 %v1895
        %v2045 = vunpack.c.h.b16 %v1895
        %v2046 = vunpack.c.l.b16 %v1896
        %v2047 = vunpack.c.h.b16 %v1896
        %v2048 = vunpack.c.l.b16 %v1897
        %v2049 = vunpack.c.h.b16 %v1897
        %v2050 = vunpack.c.l.b16 %v1898
        %v2051 = vunpack.c.h.b16 %v1898
        %v2052 = vunpack.c.l.b16 %v1899
        %v2053 = vunpack.c.h.b16 %v1899
        %v2054 = vunpack.c.l.b16 %v1900
        %v2055 = vunpack.c.h.b16 %v1900
        %v2056 = vunpack.c.l.b16 %v1901
        %v2057 = vunpack.c.h.b16 %v1901
        %v2058 = vunpack.c.l.b16 %v1902
        %v2059 = vunpack.c.h.b16 %v1902
        %v2060 = vunpack.c.l.b16 %v1903
        %v2061 = vunpack.c.h.b16 %v1903
        %v2062 = vunpack.c.l.b16 %v1904
        %v2063 = vunpack.c.h.b16 %v1904
        %v2064 = vunpack.c.l.b16 %v1905
        %v2065 = vunpack.c.h.b16 %v1905
        %v2066 = vunpack.c.l.b16 %v1906
        %v2067 = vunpack.c.h.b16 %v1906
        %v2068 = vunpack.c.l.b16 %v1907
        %v2069 = vunpack.c.h.b16 %v1907
        %v2070 = vunpack.c.l.b16 %v1908
        %v2071 = vunpack.c.h.b16 %v1908
        %v2072 = vunpack.c.l.b16 %v1909
        %v2073 = vunpack.c.h.b16 %v1909
        %v2074 = vunpack.c.l.b16 %v1910
        %v2075 = vunpack.c.h.b16 %v1910
        %v2076 = vunpack.c.l.b16 %v1911
        %v2077 = vunpack.c.h.b16 %v1911
        %v2078 = vunpack.c.l.b16 %v1912
        %v2079 = vunpack.c.h.b16 %v1912
        %v2080 = vunpack.c.l.b16 %v1913
        %v2081 = vunpack.c.h.b16 %v1913
        %v2082 = vunpack.c.l.b16 %v1914
        %v2083 = vunpack.c.h.b16 %v1914
        %v2084 = vunpack.c.l.b16 %v1915
        %v2085 = vunpack.c.h.b16 %v1915
        %v2086 = vunpack.c.l.b16 %v1916
        %v2087 = vunpack.c.h.b16 %v1916
        %v2088 = vunpack.c.l.b16 %v1917
        %v2089 = vunpack.c.h.b16 %v1917
        %v2090 = vunpack.c.l.b16 %v1918
        %v2091 = vunpack.c.h.b16 %v1918
        %v2092 = vunpack.c.l.b16 %v1919
        %v2093 = vunpack.c.h.b16 %v1919
        %v2094 = vunpack.c.l.b16 %v1920
        %v2095 = vunpack.c.h.b16 %v1920
        %v2096 = vunpack.c.l.b16 %v1921
        %v2097 = vunpack.c.h.b16 %v1921
        %v2098 = vunpack.c.l.b16 %v1922
        %v2099 = vunpack.c.h.b16 %v1922
        %v2100 = vunpack.c.l.b16 %v1923
        %v2101 = vunpack.c.h.b16 %v1923
        %v2102 = vunpack.c.l.b16 %v1924
        %v2103 = vunpack.c.h.b16 %v1924
        %v2104 = vunpack.c.l.b16 %v1925
        %v2105 = vunpack.c.h.b16 %v1925
        %v2106 = vunpack.c.l.b16 %v1926
        %v2107 = vunpack.c.h.b16 %v1926
        %v2108 = vunpack.c.l.b16 %v1927
        %v2109 = vunpack.c.h.b16 %v1927
        %v2110 = vunpack.c.l.b16 %v1928
        %v2111 = vunpack.c.h.b16 %v1928
        %v2112 = vunpack.c.l.b16 %v1929
        %v2113 = vunpack.c.h.b16 %v1929
        %v2114 = vunpack.c.l.b16 %v1930
        %v2115 = vunpack.c.h.b16 %v1930
        %v2116 = vunpack.c.l.b16 %v1931
        %v2117 = vunpack.c.h.b16 %v1931
        %v2118 = vunpack.c.l.b16 %v1932
        %v2119 = vunpack.c.h.b16 %v1932
        %v2120 = vunpack.c.l.b16 %v1933
        %v2121 = vunpack.c.h.b16 %v1933
        %v2122 = vunpack.c.l.b16 %v1934
        %v2123 = vunpack.c.h.b16 %v1934
        %v2124 = vunpack.c.l.b16 %v1935
        %v2125 = vunpack.c.h.b16 %v1935
        %v2126 = vunpack.c.l.b16 %v1936
        %v2127 = vunpack.c.h.b16 %v1936
        %v2128 = vunpack.c.l.b16 %v1937
        %v2129 = vunpack.c.h.b16 %v1937
        %v2130 = vpack.c.b16 %v2002, %v2002
        %v2131 = vpack.c.b16 %v2003, %v2003
        %v2132 = vpack.c.b16 %v2004, %v2004
        %v2133 = vpack.c.b16 %v2005, %v2005
        %v2134 = vpack.c.b16 %v2006, %v2006
        %v2135 = vpack.c.b16 %v2007, %v2007
        %v2136 = vpack.c.b16 %v2008, %v2008
        %v2137 = vpack.c.b16 %v2009, %v2009
        %v2138 = vpack.c.b16 %v2010, %v2010
        %v2139 = vpack.c.b16 %v2011, %v2011
        %v2140 = vpack.c.b16 %v2012, %v2012
        %v2141 = vpack.c.b16 %v2013, %v2013
        %v2142 = vpack.c.b16 %v2014, %v2014
        %v2143 = vpack.c.b16 %v2015, %v2015
        %v2144 = vpack.c.b16 %v2016, %v2016
        %v2145 = vpack.c.b16 %v2017, %v2017
        %v2146 = vpack.c.b16 %v2018, %v2018
        %v2147 = vpack.c.b16 %v2019, %v2019
        %v2148 = vpack.c.b16 %v2020, %v2020
        %v2149 = vpack.c.b16 %v2021, %v2021
        %v2150 = vpack.c.b16 %v2022, %v2022
        %v2151 = vpack.c.b16 %v2023, %v2023
        %v2152 = vpack.c.b16 %v2024, %v2024
        %v2153 = vpack.c.b16 %v2025, %v2025
        %v2154 = vpack.c.b16 %v2026, %v2026
        %v2155 = vpack.c.b16 %v2027, %v2027
        %v2156 = vpack.c.b16 %v2028, %v2028
        %v2157 = vpack.c.b16 %v2029, %v2029
        %v2158 = vpack.c.b16 %v2030, %v2030
        %v2159 = vpack.c.b16 %v2031, %v2031
        %v2160 = vpack.c.b16 %v2032, %v2032
        %v2161 = vpack.c.b16 %v2033, %v2033
        %v2162 = vpack.c.b16 %v2034, %v2034
        %v2163 = vpack.c.b16 %v2035, %v2035
        %v2164 = vpack.c.b16 %v2036, %v2036
        %v2165 = vpack.c.b16 %v2037, %v2037
        %v2166 = vpack.c.b16 %v2038, %v2038
        %v2167 = vpack.c.b16 %v2039, %v2039
        %v2168 = vpack.c.b16 %v2040, %v2040
        %v2169 = vpack.c.b16 %v2041, %v2041
        %v2170 = vpack.c.b16 %v2042, %v2042
        %v2171 = vpack.c.b16 %v2043, %v2043
        %v2172 = vpack.c.b16 %v2044, %v2044
        %v2173 = vpack.c.b16 %v2045, %v2045
        %v2174 = vpack.c.b16 %v2046, %v2046
        %v2175 = vpack.c.b16 %v2047, %v2047
        %v2176 = vpack.c.b16 %v2048, %v2048
        %v2177 = vpack.c.b16 %v2049, %v2049
        %v2178 = vpack.c.b16 %v2050, %v2050
        %v2179 = vpack.c.b16 %v2051, %v2051
        %v2180 = vpack.c.b16 %v2052, %v2052
        %v2181 = vpack.c.b16 %v2053, %v2053
        %v2182 = vpack.c.b16 %v2054, %v2054
        %v2183 = vpack.c.b16 %v2055, %v2055
        %v2184 = vpack.c.b16 %v2056, %v2056
        %v2185 = vpack.c.b16 %v2057, %v2057
        %v2186 = vpack.c.b16 %v2058, %v2058
        %v2187 = vpack.c.b16 %v2059, %v2059
        %v2188 = vpack.c.b16 %v2060, %v2060
        %v2189 = vpack.c.b16 %v2061, %v2061
        %v2190 = vpack.c.b16 %v2062, %v2062
        %v2191 = vpack.c.b16 %v2063, %v2063
        %v2192 = vpack.c.b16 %v2064, %v2064
        %v2193 = vpack.c.b16 %v2065, %v2065
        %v2194 = vpack.c.b16 %v2066, %v2066
        %v2195 = vpack.c.b16 %v2067, %v2067
        %v2196 = vpack.c.b16 %v2068, %v2068
        %v2197 = vpack.c.b16 %v2069, %v2069
        %v2198 = vpack.c.b16 %v2070, %v2070
        %v2199 = vpack.c.b16 %v2071, %v2071
        %v2200 = vpack.c.b16 %v2072, %v2072
        %v2201 = vpack.c.b16 %v2073, %v2073
        %v2202 = vpack.c.b16 %v2074, %v2074
        %v2203 = vpack.c.b16 %v2075, %v2075
        %v2204 = vpack.c.b16 %v2076, %v2076
        %v2205 = vpack.c.b16 %v2077, %v2077
        %v2206 = vpack.c.b16 %v2078, %v2078
        %v2207 = vpack.c.b16 %v2079, %v2079
        %v2208 = vpack.c.b16 %v2080, %v2080
        %v2209 = vpack.c.b16 %v2081, %v2081
        %v2210 = vpack.c.b16 %v2082, %v2082
        %v2211 = vpack.c.b16 %v2083, %v2083
        %v2212 = vpack.c.b16 %v2084, %v2084
        %v2213 = vpack.c.b16 %v2085, %v2085
        %v2214 = vpack.c.b16 %v2086, %v2086
        %v2215 = vpack.c.b16 %v2087, %v2087
        %v2216 = vpack.c.b16 %v2088, %v2088
        %v2217 = vpack.c.b16 %v2089, %v2089
        %v2218 = vpack.c.b16 %v2090, %v2090
        %v2219 = vpack.c.b16 %v2091, %v2091
        %v2220 = vpack.c.b16 %v2092, %v2092
        %v2221 = vpack.c.b16 %v2093, %v2093
        %v2222 = vpack.c.b16 %v2094, %v2094
        %v2223 = vpack.c.b16 %v2095, %v2095
        %v2224 = vpack.c.b16 %v2096, %v2096
        %v2225 = vpack.c.b16 %v2097, %v2097
        %v2226 = vpack.c.b16 %v2098, %v2098
        %v2227 = vpack.c.b16 %v2099, %v2099
        %v2228 = vpack.c.b16 %v2100, %v2100
        %v2229 = vpack.c.b16 %v2101, %v2101
        %v2230 = vpack.c.b16 %v2102, %v2102
        %v2231 = vpack.c.b16 %v2103, %v2103
        %v2232 = vpack.c.b16 %v2104, %v2104
        %v2233 = vpack.c.b16 %v2105, %v2105
        %v2234 = vpack.c.b16 %v2106, %v2106
        %v2235 = vpack.c.b16 %v2107, %v2107
        %v2236 = vpack.c.b16 %v2108, %v2108
        %v2237 = vpack.c.b16 %v2109, %v2109
        %v2238 = vpack.c.b16 %v2110, %v2110
        %v2239 = vpack.c.b16 %v2111, %v2111
        %v2240 = vpack.c.b16 %v2112, %v2112
        %v2241 = vpack.c.b16 %v2113, %v2113
        %v2242 = vpack.c.b16 %v2114, %v2114
        %v2243 = vpack.c.b16 %v2115, %v2115
        %v2244 = vpack.c.b16 %v2116, %v2116
        %v2245 = vpack.c.b16 %v2117, %v2117
        %v2246 = vpack.c.b16 %v2118, %v2118
        %v2247 = vpack.c.b16 %v2119, %v2119
        %v2248 = vpack.c.b16 %v2120, %v2120
        %v2249 = vpack.c.b16 %v2121, %v2121
        %v2250 = vpack.c.b16 %v2122, %v2122
        %v2251 = vpack.c.b16 %v2123, %v2123
        %v2252 = vpack.c.b16 %v2124, %v2124
        %v2253 = vpack.c.b16 %v2125, %v2125
        %v2254 = vpack.c.b16 %v2126, %v2126
        %v2255 = vpack.c.b16 %v2127, %v2127
        %v2256 = vpack.c.b16 %v2128, %v2128
        %v2257 = vpack.c.b16 %v2129, %v2129
        %vm2386 = vcmask 158720
        %2387 = vst.msk [vmem:[%s177] sm:$0xf] %vm2386, %v2130
        %2388 = vst.msk [vmem:[%s177 + $0x4] sm:$0xf] %vm2386, %v2131
        %2389 = vst.msk [vmem:[%s177 + $0x8] sm:$0xf] %vm2386, %v2132
        %2390 = vst.msk [vmem:[%s177 + $0xc] sm:$0xf] %vm2386, %v2133
        %2391 = vst.msk [vmem:[%s177 + $0x10] sm:$0xf] %vm2386, %v2134
        %2392 = vst.msk [vmem:[%s177 + $0x14] sm:$0xf] %vm2386, %v2135
        %2393 = vst.msk [vmem:[%s177 + $0x18] sm:$0xf] %vm2386, %v2136
        %2394 = vst.msk [vmem:[%s177 + $0x1c] sm:$0xf] %vm2386, %v2137
        %2395 = vst.msk [vmem:[%s177 + $0x20] sm:$0xf] %vm2386, %v2138
        %2396 = vst.msk [vmem:[%s177 + $0x24] sm:$0xf] %vm2386, %v2139
        %2397 = vst.msk [vmem:[%s177 + $0x28] sm:$0xf] %vm2386, %v2140
        %2398 = vst.msk [vmem:[%s177 + $0x2c] sm:$0xf] %vm2386, %v2141
        %2399 = vst.msk [vmem:[%s177 + $0x30] sm:$0xf] %vm2386, %v2142
        %2400 = vst.msk [vmem:[%s177 + $0x34] sm:$0xf] %vm2386, %v2143
        %2401 = vst.msk [vmem:[%s177 + $0x38] sm:$0xf] %vm2386, %v2144
        %2402 = vst.msk [vmem:[%s177 + $0x3c] sm:$0xf] %vm2386, %v2145
        %2403 = vst.msk [vmem:[%s177 + $0x40] sm:$0xf] %vm2386, %v2146
        %2404 = vst.msk [vmem:[%s177 + $0x44] sm:$0xf] %vm2386, %v2147
        %2405 = vst.msk [vmem:[%s177 + $0x48] sm:$0xf] %vm2386, %v2148
        %2406 = vst.msk [vmem:[%s177 + $0x4c] sm:$0xf] %vm2386, %v2149
        %2407 = vst.msk [vmem:[%s177 + $0x50] sm:$0xf] %vm2386, %v2150
        %2408 = vst.msk [vmem:[%s177 + $0x54] sm:$0xf] %vm2386, %v2151
        %2409 = vst.msk [vmem:[%s177 + $0x58] sm:$0xf] %vm2386, %v2152
        %2410 = vst.msk [vmem:[%s177 + $0x5c] sm:$0xf] %vm2386, %v2153
        %2411 = vst.msk [vmem:[%s177 + $0x60] sm:$0xf] %vm2386, %v2154
        %2412 = vst.msk [vmem:[%s177 + $0x64] sm:$0xf] %vm2386, %v2155
        %2413 = vst.msk [vmem:[%s177 + $0x68] sm:$0xf] %vm2386, %v2156
        %2414 = vst.msk [vmem:[%s177 + $0x6c] sm:$0xf] %vm2386, %v2157
        %2415 = vst.msk [vmem:[%s177 + $0x70] sm:$0xf] %vm2386, %v2158
        %2416 = vst.msk [vmem:[%s177 + $0x74] sm:$0xf] %vm2386, %v2159
        %2417 = vst.msk [vmem:[%s177 + $0x78] sm:$0xf] %vm2386, %v2160
        %2418 = vst.msk [vmem:[%s177 + $0x7c] sm:$0xf] %vm2386, %v2161
        %2419 = vst.msk [vmem:[%s177 + $0x80] sm:$0xf] %vm2386, %v2162
        %2420 = vst.msk [vmem:[%s177 + $0x84] sm:$0xf] %vm2386, %v2163
        %2421 = vst.msk [vmem:[%s177 + $0x88] sm:$0xf] %vm2386, %v2164
        %2422 = vst.msk [vmem:[%s177 + $0x8c] sm:$0xf] %vm2386, %v2165
        %2423 = vst.msk [vmem:[%s177 + $0x90] sm:$0xf] %vm2386, %v2166
        %2424 = vst.msk [vmem:[%s177 + $0x94] sm:$0xf] %vm2386, %v2167
        %2425 = vst.msk [vmem:[%s177 + $0x98] sm:$0xf] %vm2386, %v2168
        %2426 = vst.msk [vmem:[%s177 + $0x9c] sm:$0xf] %vm2386, %v2169
        %2427 = vst.msk [vmem:[%s177 + $0xa0] sm:$0xf] %vm2386, %v2170
        %2428 = vst.msk [vmem:[%s177 + $0xa4] sm:$0xf] %vm2386, %v2171
        %2429 = vst.msk [vmem:[%s177 + $0xa8] sm:$0xf] %vm2386, %v2172
        %2430 = vst.msk [vmem:[%s177 + $0xac] sm:$0xf] %vm2386, %v2173
        %2431 = vst.msk [vmem:[%s177 + $0xb0] sm:$0xf] %vm2386, %v2174
        %2432 = vst.msk [vmem:[%s177 + $0xb4] sm:$0xf] %vm2386, %v2175
        %2433 = vst.msk [vmem:[%s177 + $0xb8] sm:$0xf] %vm2386, %v2176
        %2434 = vst.msk [vmem:[%s177 + $0xbc] sm:$0xf] %vm2386, %v2177
        %2435 = vst.msk [vmem:[%s177 + $0xc0] sm:$0xf] %vm2386, %v2178
        %2436 = vst.msk [vmem:[%s177 + $0xc4] sm:$0xf] %vm2386, %v2179
        %2437 = vst.msk [vmem:[%s177 + $0xc8] sm:$0xf] %vm2386, %v2180
        %2438 = vst.msk [vmem:[%s177 + $0xcc] sm:$0xf] %vm2386, %v2181
        %2439 = vst.msk [vmem:[%s177 + $0xd0] sm:$0xf] %vm2386, %v2182
        %2440 = vst.msk [vmem:[%s177 + $0xd4] sm:$0xf] %vm2386, %v2183
        %2441 = vst.msk [vmem:[%s177 + $0xd8] sm:$0xf] %vm2386, %v2184
        %2442 = vst.msk [vmem:[%s177 + $0xdc] sm:$0xf] %vm2386, %v2185
        %2443 = vst.msk [vmem:[%s177 + $0xe0] sm:$0xf] %vm2386, %v2186
        %2444 = vst.msk [vmem:[%s177 + $0xe4] sm:$0xf] %vm2386, %v2187
        %2445 = vst.msk [vmem:[%s177 + $0xe8] sm:$0xf] %vm2386, %v2188
        %2446 = vst.msk [vmem:[%s177 + $0xec] sm:$0xf] %vm2386, %v2189
        %2447 = vst.msk [vmem:[%s177 + $0xf0] sm:$0xf] %vm2386, %v2190
        %2448 = vst.msk [vmem:[%s177 + $0xf4] sm:$0xf] %vm2386, %v2191
        %2449 = vst.msk [vmem:[%s177 + $0xf8] sm:$0xf] %vm2386, %v2192
        %2450 = vst.msk [vmem:[%s177 + $0xfc] sm:$0xf] %vm2386, %v2193
        %2451 = vst.msk [vmem:[%s177 + $0x100] sm:$0xf] %vm2386, %v2194
        %2452 = vst.msk [vmem:[%s177 + $0x104] sm:$0xf] %vm2386, %v2195
        %2453 = vst.msk [vmem:[%s177 + $0x108] sm:$0xf] %vm2386, %v2196
        %2454 = vst.msk [vmem:[%s177 + $0x10c] sm:$0xf] %vm2386, %v2197
        %2455 = vst.msk [vmem:[%s177 + $0x110] sm:$0xf] %vm2386, %v2198
        %2456 = vst.msk [vmem:[%s177 + $0x114] sm:$0xf] %vm2386, %v2199
        %2457 = vst.msk [vmem:[%s177 + $0x118] sm:$0xf] %vm2386, %v2200
        %2458 = vst.msk [vmem:[%s177 + $0x11c] sm:$0xf] %vm2386, %v2201
        %2459 = vst.msk [vmem:[%s177 + $0x120] sm:$0xf] %vm2386, %v2202
        %2460 = vst.msk [vmem:[%s177 + $0x124] sm:$0xf] %vm2386, %v2203
        %2461 = vst.msk [vmem:[%s177 + $0x128] sm:$0xf] %vm2386, %v2204
        %2462 = vst.msk [vmem:[%s177 + $0x12c] sm:$0xf] %vm2386, %v2205
        %2463 = vst.msk [vmem:[%s177 + $0x130] sm:$0xf] %vm2386, %v2206
        %2464 = vst.msk [vmem:[%s177 + $0x134] sm:$0xf] %vm2386, %v2207
        %2465 = vst.msk [vmem:[%s177 + $0x138] sm:$0xf] %vm2386, %v2208
        %2466 = vst.msk [vmem:[%s177 + $0x13c] sm:$0xf] %vm2386, %v2209
        %2467 = vst.msk [vmem:[%s177 + $0x140] sm:$0xf] %vm2386, %v2210
        %2468 = vst.msk [vmem:[%s177 + $0x144] sm:$0xf] %vm2386, %v2211
        %2469 = vst.msk [vmem:[%s177 + $0x148] sm:$0xf] %vm2386, %v2212
        %2470 = vst.msk [vmem:[%s177 + $0x14c] sm:$0xf] %vm2386, %v2213
        %2471 = vst.msk [vmem:[%s177 + $0x150] sm:$0xf] %vm2386, %v2214
        %2472 = vst.msk [vmem:[%s177 + $0x154] sm:$0xf] %vm2386, %v2215
        %2473 = vst.msk [vmem:[%s177 + $0x158] sm:$0xf] %vm2386, %v2216
        %2474 = vst.msk [vmem:[%s177 + $0x15c] sm:$0xf] %vm2386, %v2217
        %2475 = vst.msk [vmem:[%s177 + $0x160] sm:$0xf] %vm2386, %v2218
        %2476 = vst.msk [vmem:[%s177 + $0x164] sm:$0xf] %vm2386, %v2219
        %2477 = vst.msk [vmem:[%s177 + $0x168] sm:$0xf] %vm2386, %v2220
        %2478 = vst.msk [vmem:[%s177 + $0x16c] sm:$0xf] %vm2386, %v2221
        %2479 = vst.msk [vmem:[%s177 + $0x170] sm:$0xf] %vm2386, %v2222
        %2480 = vst.msk [vmem:[%s177 + $0x174] sm:$0xf] %vm2386, %v2223
        %2481 = vst.msk [vmem:[%s177 + $0x178] sm:$0xf] %vm2386, %v2224
        %2482 = vst.msk [vmem:[%s177 + $0x17c] sm:$0xf] %vm2386, %v2225
        %2483 = vst.msk [vmem:[%s177 + $0x180] sm:$0xf] %vm2386, %v2226
        %2484 = vst.msk [vmem:[%s177 + $0x184] sm:$0xf] %vm2386, %v2227
        %2485 = vst.msk [vmem:[%s177 + $0x188] sm:$0xf] %vm2386, %v2228
        %2486 = vst.msk [vmem:[%s177 + $0x18c] sm:$0xf] %vm2386, %v2229
        %2487 = vst.msk [vmem:[%s177 + $0x190] sm:$0xf] %vm2386, %v2230
        %2488 = vst.msk [vmem:[%s177 + $0x194] sm:$0xf] %vm2386, %v2231
        %2489 = vst.msk [vmem:[%s177 + $0x198] sm:$0xf] %vm2386, %v2232
        %2490 = vst.msk [vmem:[%s177 + $0x19c] sm:$0xf] %vm2386, %v2233
        %2491 = vst.msk [vmem:[%s177 + $0x1a0] sm:$0xf] %vm2386, %v2234
        %2492 = vst.msk [vmem:[%s177 + $0x1a4] sm:$0xf] %vm2386, %v2235
        %2493 = vst.msk [vmem:[%s177 + $0x1a8] sm:$0xf] %vm2386, %v2236
        %2494 = vst.msk [vmem:[%s177 + $0x1ac] sm:$0xf] %vm2386, %v2237
        %2495 = vst.msk [vmem:[%s177 + $0x1b0] sm:$0xf] %vm2386, %v2238
        %2496 = vst.msk [vmem:[%s177 + $0x1b4] sm:$0xf] %vm2386, %v2239
        %2497 = vst.msk [vmem:[%s177 + $0x1b8] sm:$0xf] %vm2386, %v2240
        %2498 = vst.msk [vmem:[%s177 + $0x1bc] sm:$0xf] %vm2386, %v2241
        %2499 = vst.msk [vmem:[%s177 + $0x1c0] sm:$0xf] %vm2386, %v2242
        %2500 = vst.msk [vmem:[%s177 + $0x1c4] sm:$0xf] %vm2386, %v2243
        %2501 = vst.msk [vmem:[%s177 + $0x1c8] sm:$0xf] %vm2386, %v2244
        %2502 = vst.msk [vmem:[%s177 + $0x1cc] sm:$0xf] %vm2386, %v2245
        %2503 = vst.msk [vmem:[%s177 + $0x1d0] sm:$0xf] %vm2386, %v2246
        %2504 = vst.msk [vmem:[%s177 + $0x1d4] sm:$0xf] %vm2386, %v2247
        %2505 = vst.msk [vmem:[%s177 + $0x1d8] sm:$0xf] %vm2386, %v2248
        %2506 = vst.msk [vmem:[%s177 + $0x1dc] sm:$0xf] %vm2386, %v2249
        %2507 = vst.msk [vmem:[%s177 + $0x1e0] sm:$0xf] %vm2386, %v2250
        %2508 = vst.msk [vmem:[%s177 + $0x1e4] sm:$0xf] %vm2386, %v2251
        %2509 = vst.msk [vmem:[%s177 + $0x1e8] sm:$0xf] %vm2386, %v2252
        %2510 = vst.msk [vmem:[%s177 + $0x1ec] sm:$0xf] %vm2386, %v2253
        %2511 = vst.msk [vmem:[%s177 + $0x1f0] sm:$0xf] %vm2386, %v2254
        %2512 = vst.msk [vmem:[%s177 + $0x1f4] sm:$0xf] %vm2386, %v2255
        %2513 = vst.msk [vmem:[%s177 + $0x1f8] sm:$0xf] %vm2386, %v2256
        %2514 = vst.msk [vmem:[%s177 + $0x1fc] sm:$0xf] %vm2386, %v2257
        %s2515 = sand.u32 %s90, 1
        %s2516 = sand.u32 %s90, 1
        %s2517 = smul.addr %s2516, 512
        %s2518 = scalar_lea.vmem [#allocation2], %s2517
        // Predicated region
        $region33: #{critic_forward.7} parent=31 // pred_check
          %p2519 = pneg %p100
        $region34: #{critic_forward.7} parent=31 // pred_check_branch
          %2521 = sbr.rel (%p2519) target = $region36
        $region35: #{critic_forward.7} parent=31 // pred_region
          %s2522 = smul.u32 128, %s14
          %s2523 = ssub.s32 144, %s2522
          %p2524 = scmp.lt.s32.totalorder %s2523, 128
          %s2525 = scalar_select %p2524, %s2523, 128
          %s2526 = smul.u32 64, %s2525
          %p2527 = scmp.ne.s32.totalorder 0, %s2526
          %s2528 = smul.addr %s2522, 4
          %s2529 = scalar_lea.vmem %s3, %s2528
          // Predicated region
          $region37: #{critic_forward.7} parent=35 // pred_check
            %p2530 = pneg %p2527
          $region38: #{critic_forward.7} parent=35 // pred_check_branch
            %2532 = sbr.rel (%p2530) target = $region40
          $region39: #{critic_forward.7} parent=35 // pred_region
            // Predicated region
            $region41: #{critic_forward.7} parent=39 // pred_check
              _
            $region42: #{critic_forward.7} parent=39 // pred_check_branch
              %2534 = sbr.rel target = $region44
            $region43: #{critic_forward.7} parent=39 // pred_region
              // Predicated region
              $region63: #{critic_forward.7} parent=43 // pred_check
                _
              $region64: #{critic_forward.7} parent=43 // pred_check_branch
                %2710 = sbr.rel (0) target = $region66
              $region65: #{critic_forward.7} parent=43 // pred_region
                %s2712 = ssub.s32 16, 1
                %s2713 = sshrl.u32 %s2525, 6
                // While loop
                $region67: #{critic_forward.7} parent=65 // loop_pre_header
                  _
                $region68: #{critic_forward.7} parent=65 // loop_header
                  %s2715 = sphi 0, %s2717
                  %p2716 = scmp.ge.s32.totalorder %s2715, %s2713
                  %s2720 = sphi 0, %s2853
                  %s2721 = sphi %s2518, %s2856
                  %s2722 = sphi %s2529, %s2857
                $region69: #{critic_forward.7} parent=65 // loop_header_branch
                  %2719 = sbr.rel (%p2716) target = $region73
                $region70: #{critic_forward.7} parent=65 // loop_body
                  %v2723 = vld [vmem:[%s2721] sm:%s2712]
                  %2724 = vst [vmem:[%s2722] sm:%s2712] %v2723
                  %v2725 = vld [vmem:[%s2721 + $0x4] sm:%s2712]
                  %2726 = vst [vmem:[%s2722 + $0x4] sm:%s2712] %v2725
                  %v2727 = vld [vmem:[%s2721 + $0x8] sm:%s2712]
                  %2728 = vst [vmem:[%s2722 + $0x8] sm:%s2712] %v2727
                  %v2729 = vld [vmem:[%s2721 + $0xc] sm:%s2712]
                  %2730 = vst [vmem:[%s2722 + $0xc] sm:%s2712] %v2729
                  %v2731 = vld [vmem:[%s2721 + $0x10] sm:%s2712]
                  %2732 = vst [vmem:[%s2722 + $0x10] sm:%s2712] %v2731
                  %v2733 = vld [vmem:[%s2721 + $0x14] sm:%s2712]
                  %2734 = vst [vmem:[%s2722 + $0x14] sm:%s2712] %v2733
                  %v2735 = vld [vmem:[%s2721 + $0x18] sm:%s2712]
                  %2736 = vst [vmem:[%s2722 + $0x18] sm:%s2712] %v2735
                  %v2737 = vld [vmem:[%s2721 + $0x1c] sm:%s2712]
                  %2738 = vst [vmem:[%s2722 + $0x1c] sm:%s2712] %v2737
                  %v2739 = vld [vmem:[%s2721 + $0x20] sm:%s2712]
                  %2740 = vst [vmem:[%s2722 + $0x20] sm:%s2712] %v2739
                  %v2741 = vld [vmem:[%s2721 + $0x24] sm:%s2712]
                  %2742 = vst [vmem:[%s2722 + $0x24] sm:%s2712] %v2741
                  %v2743 = vld [vmem:[%s2721 + $0x28] sm:%s2712]
                  %2744 = vst [vmem:[%s2722 + $0x28] sm:%s2712] %v2743
                  %v2745 = vld [vmem:[%s2721 + $0x2c] sm:%s2712]
                  %2746 = vst [vmem:[%s2722 + $0x2c] sm:%s2712] %v2745
                  %v2747 = vld [vmem:[%s2721 + $0x30] sm:%s2712]
                  %2748 = vst [vmem:[%s2722 + $0x30] sm:%s2712] %v2747
                  %v2749 = vld [vmem:[%s2721 + $0x34] sm:%s2712]
                  %2750 = vst [vmem:[%s2722 + $0x34] sm:%s2712] %v2749
                  %v2751 = vld [vmem:[%s2721 + $0x38] sm:%s2712]
                  %2752 = vst [vmem:[%s2722 + $0x38] sm:%s2712] %v2751
                  %v2753 = vld [vmem:[%s2721 + $0x3c] sm:%s2712]
                  %2754 = vst [vmem:[%s2722 + $0x3c] sm:%s2712] %v2753
                  %v2755 = vld [vmem:[%s2721 + $0x40] sm:%s2712]
                  %2756 = vst [vmem:[%s2722 + $0x40] sm:%s2712] %v2755
                  %v2757 = vld [vmem:[%s2721 + $0x44] sm:%s2712]
                  %2758 = vst [vmem:[%s2722 + $0x44] sm:%s2712] %v2757
                  %v2759 = vld [vmem:[%s2721 + $0x48] sm:%s2712]
                  %2760 = vst [vmem:[%s2722 + $0x48] sm:%s2712] %v2759
                  %v2761 = vld [vmem:[%s2721 + $0x4c] sm:%s2712]
                  %2762 = vst [vmem:[%s2722 + $0x4c] sm:%s2712] %v2761
                  %v2763 = vld [vmem:[%s2721 + $0x50] sm:%s2712]
                  %2764 = vst [vmem:[%s2722 + $0x50] sm:%s2712] %v2763
                  %v2765 = vld [vmem:[%s2721 + $0x54] sm:%s2712]
                  %2766 = vst [vmem:[%s2722 + $0x54] sm:%s2712] %v2765
                  %v2767 = vld [vmem:[%s2721 + $0x58] sm:%s2712]
                  %2768 = vst [vmem:[%s2722 + $0x58] sm:%s2712] %v2767
                  %v2769 = vld [vmem:[%s2721 + $0x5c] sm:%s2712]
                  %2770 = vst [vmem:[%s2722 + $0x5c] sm:%s2712] %v2769
                  %v2771 = vld [vmem:[%s2721 + $0x60] sm:%s2712]
                  %2772 = vst [vmem:[%s2722 + $0x60] sm:%s2712] %v2771
                  %v2773 = vld [vmem:[%s2721 + $0x64] sm:%s2712]
                  %2774 = vst [vmem:[%s2722 + $0x64] sm:%s2712] %v2773
                  %v2775 = vld [vmem:[%s2721 + $0x68] sm:%s2712]
                  %2776 = vst [vmem:[%s2722 + $0x68] sm:%s2712] %v2775
                  %v2777 = vld [vmem:[%s2721 + $0x6c] sm:%s2712]
                  %2778 = vst [vmem:[%s2722 + $0x6c] sm:%s2712] %v2777
                  %v2779 = vld [vmem:[%s2721 + $0x70] sm:%s2712]
                  %2780 = vst [vmem:[%s2722 + $0x70] sm:%s2712] %v2779
                  %v2781 = vld [vmem:[%s2721 + $0x74] sm:%s2712]
                  %2782 = vst [vmem:[%s2722 + $0x74] sm:%s2712] %v2781
                  %v2783 = vld [vmem:[%s2721 + $0x78] sm:%s2712]
                  %2784 = vst [vmem:[%s2722 + $0x78] sm:%s2712] %v2783
                  %v2785 = vld [vmem:[%s2721 + $0x7c] sm:%s2712]
                  %2786 = vst [vmem:[%s2722 + $0x7c] sm:%s2712] %v2785
                  %v2787 = vld [vmem:[%s2721 + $0x80] sm:%s2712]
                  %2788 = vst [vmem:[%s2722 + $0x80] sm:%s2712] %v2787
                  %v2789 = vld [vmem:[%s2721 + $0x84] sm:%s2712]
                  %2790 = vst [vmem:[%s2722 + $0x84] sm:%s2712] %v2789
                  %v2791 = vld [vmem:[%s2721 + $0x88] sm:%s2712]
                  %2792 = vst [vmem:[%s2722 + $0x88] sm:%s2712] %v2791
                  %v2793 = vld [vmem:[%s2721 + $0x8c] sm:%s2712]
                  %2794 = vst [vmem:[%s2722 + $0x8c] sm:%s2712] %v2793
                  %v2795 = vld [vmem:[%s2721 + $0x90] sm:%s2712]
                  %2796 = vst [vmem:[%s2722 + $0x90] sm:%s2712] %v2795
                  %v2797 = vld [vmem:[%s2721 + $0x94] sm:%s2712]
                  %2798 = vst [vmem:[%s2722 + $0x94] sm:%s2712] %v2797
                  %v2799 = vld [vmem:[%s2721 + $0x98] sm:%s2712]
                  %2800 = vst [vmem:[%s2722 + $0x98] sm:%s2712] %v2799
                  %v2801 = vld [vmem:[%s2721 + $0x9c] sm:%s2712]
                  %2802 = vst [vmem:[%s2722 + $0x9c] sm:%s2712] %v2801
                  %v2803 = vld [vmem:[%s2721 + $0xa0] sm:%s2712]
                  %2804 = vst [vmem:[%s2722 + $0xa0] sm:%s2712] %v2803
                  %v2805 = vld [vmem:[%s2721 + $0xa4] sm:%s2712]
                  %2806 = vst [vmem:[%s2722 + $0xa4] sm:%s2712] %v2805
                  %v2807 = vld [vmem:[%s2721 + $0xa8] sm:%s2712]
                  %2808 = vst [vmem:[%s2722 + $0xa8] sm:%s2712] %v2807
                  %v2809 = vld [vmem:[%s2721 + $0xac] sm:%s2712]
                  %2810 = vst [vmem:[%s2722 + $0xac] sm:%s2712] %v2809
                  %v2811 = vld [vmem:[%s2721 + $0xb0] sm:%s2712]
                  %2812 = vst [vmem:[%s2722 + $0xb0] sm:%s2712] %v2811
                  %v2813 = vld [vmem:[%s2721 + $0xb4] sm:%s2712]
                  %2814 = vst [vmem:[%s2722 + $0xb4] sm:%s2712] %v2813
                  %v2815 = vld [vmem:[%s2721 + $0xb8] sm:%s2712]
                  %2816 = vst [vmem:[%s2722 + $0xb8] sm:%s2712] %v2815
                  %v2817 = vld [vmem:[%s2721 + $0xbc] sm:%s2712]
                  %2818 = vst [vmem:[%s2722 + $0xbc] sm:%s2712] %v2817
                  %v2819 = vld [vmem:[%s2721 + $0xc0] sm:%s2712]
                  %2820 = vst [vmem:[%s2722 + $0xc0] sm:%s2712] %v2819
                  %v2821 = vld [vmem:[%s2721 + $0xc4] sm:%s2712]
                  %2822 = vst [vmem:[%s2722 + $0xc4] sm:%s2712] %v2821
                  %v2823 = vld [vmem:[%s2721 + $0xc8] sm:%s2712]
                  %2824 = vst [vmem:[%s2722 + $0xc8] sm:%s2712] %v2823
                  %v2825 = vld [vmem:[%s2721 + $0xcc] sm:%s2712]
                  %2826 = vst [vmem:[%s2722 + $0xcc] sm:%s2712] %v2825
                  %v2827 = vld [vmem:[%s2721 + $0xd0] sm:%s2712]
                  %2828 = vst [vmem:[%s2722 + $0xd0] sm:%s2712] %v2827
                  %v2829 = vld [vmem:[%s2721 + $0xd4] sm:%s2712]
                  %2830 = vst [vmem:[%s2722 + $0xd4] sm:%s2712] %v2829
                  %v2831 = vld [vmem:[%s2721 + $0xd8] sm:%s2712]
                  %2832 = vst [vmem:[%s2722 + $0xd8] sm:%s2712] %v2831
                  %v2833 = vld [vmem:[%s2721 + $0xdc] sm:%s2712]
                  %2834 = vst [vmem:[%s2722 + $0xdc] sm:%s2712] %v2833
                  %v2835 = vld [vmem:[%s2721 + $0xe0] sm:%s2712]
                  %2836 = vst [vmem:[%s2722 + $0xe0] sm:%s2712] %v2835
                  %v2837 = vld [vmem:[%s2721 + $0xe4] sm:%s2712]
                  %2838 = vst [vmem:[%s2722 + $0xe4] sm:%s2712] %v2837
                  %v2839 = vld [vmem:[%s2721 + $0xe8] sm:%s2712]
                  %2840 = vst [vmem:[%s2722 + $0xe8] sm:%s2712] %v2839
                  %v2841 = vld [vmem:[%s2721 + $0xec] sm:%s2712]
                  %2842 = vst [vmem:[%s2722 + $0xec] sm:%s2712] %v2841
                  %v2843 = vld [vmem:[%s2721 + $0xf0] sm:%s2712]
                  %2844 = vst [vmem:[%s2722 + $0xf0] sm:%s2712] %v2843
                  %v2845 = vld [vmem:[%s2721 + $0xf4] sm:%s2712]
                  %2846 = vst [vmem:[%s2722 + $0xf4] sm:%s2712] %v2845
                  %v2847 = vld [vmem:[%s2721 + $0xf8] sm:%s2712]
                  %2848 = vst [vmem:[%s2722 + $0xf8] sm:%s2712] %v2847
                  %v2849 = vld [vmem:[%s2721 + $0xfc] sm:%s2712]
                  %2850 = vst [vmem:[%s2722 + $0xfc] sm:%s2712] %v2849
                  %s2851 = sadd.s32 1, %s2720
                  %p2852 = scmp.ge.s32.totalorder %s2851, %s2713
                  %s2853 = scalar_select %p2852, 0, %s2851
                  %s2854 = smul.u32 %s2853, 256
                  %s2855 = smul.u32 %s2853, 256
                  %s2856 = scalar_lea.vmem %s2518, %s2854 [#allocation2]
                  %s2857 = scalar_lea.vmem %s2529, %s2855
                $region71: #{critic_forward.7} parent=65 // loop_footer
                  %s2717 = sadd.s32 %s2715, 1
                $region72: #{critic_forward.7} parent=65 // loop_footer_branch
                  %2714 = sbr.rel target = $region68
                $region73: #{critic_forward.7} parent=65 // loop_exit
                  _
                %s2858 = sshrl.u32 %s2525, 6
                %s2859 = sand.u32 %s2525, 63
                %s2860 = smul.u32 %s2858, 64
                %s2861 = smul.u32 4, %s2860
                %s2862 = scalar_lea.vmem %s2518, %s2861 [#allocation2]
                %s2863 = smul.u32 4, %s2860
                %s2864 = scalar_lea.vmem %s2529, %s2863
                // While loop
                $region74: #{critic_forward.7} parent=65 // loop_pre_header
                  _
                $region75: #{critic_forward.7} parent=65 // loop_header
                  %s2866 = sphi 0, %s2868
                  %p2867 = scmp.ge.s32.totalorder %s2866, %s2859
                  %s2871 = sphi 0, %s2878
                  %s2872 = sphi %s2862, %s2881
                  %s2873 = sphi %s2864, %s2882
                $region76: #{critic_forward.7} parent=65 // loop_header_branch
                  %2870 = sbr.rel (%p2867) target = $region80
                $region77: #{critic_forward.7} parent=65 // loop_body
                  %v2874 = vld [vmem:[%s2872] sm:%s2712]
                  %2875 = vst [vmem:[%s2873] sm:%s2712] %v2874
                  %s2876 = sadd.s32 1, %s2871
                  %p2877 = scmp.ge.s32.totalorder %s2876, %s2859
                  %s2878 = scalar_select %p2877, 0, %s2876
                  %s2879 = smul.u32 %s2878, 4
                  %s2880 = smul.u32 %s2878, 4
                  %s2881 = scalar_lea.vmem %s2862, %s2879 [#allocation2]
                  %s2882 = scalar_lea.vmem %s2864, %s2880
                $region78: #{critic_forward.7} parent=65 // loop_footer
                  %s2868 = sadd.s32 %s2866, 1
                $region79: #{critic_forward.7} parent=65 // loop_footer_branch
                  %2865 = sbr.rel target = $region75
                $region80: #{critic_forward.7} parent=65 // loop_exit
                  _
              $region66: #{critic_forward.7} parent=43 // pred_fallthru
                _
            $region44: #{critic_forward.7} parent=39 // pred_fallthru
              _
            // Predicated region
            $region45: #{critic_forward.7} parent=39 // pred_check
              _
            $region46: #{critic_forward.7} parent=39 // pred_check_branch
              %2536 = sbr.rel (0) target = $region48
            $region47: #{critic_forward.7} parent=39 // pred_region
              %s2538 = ssub.s32 16, 1
              %s2539 = sshrl.u32 %s2525, 6
              // While loop
              $region49: #{critic_forward.7} parent=47 // loop_pre_header
                _
              $region50: #{critic_forward.7} parent=47 // loop_header
                %s2541 = sphi 0, %s2543
                %p2542 = scmp.ge.s32.totalorder %s2541, %s2539
                %s2546 = sphi 0, %s2679
                %s2547 = sphi %s2518, %s2682
                %s2548 = sphi %s2529, %s2683
              $region51: #{critic_forward.7} parent=47 // loop_header_branch
                %2545 = sbr.rel (%p2542) target = $region55
              $region52: #{critic_forward.7} parent=47 // loop_body
                %v2549 = vld [vmem:[%s2547] sm:%s2538]
                %2550 = vst [vmem:[%s2548] sm:%s2538] %v2549
                %v2551 = vld [vmem:[%s2547 + $0x4] sm:%s2538]
                %2552 = vst [vmem:[%s2548 + $0x4] sm:%s2538] %v2551
                %v2553 = vld [vmem:[%s2547 + $0x8] sm:%s2538]
                %2554 = vst [vmem:[%s2548 + $0x8] sm:%s2538] %v2553
                %v2555 = vld [vmem:[%s2547 + $0xc] sm:%s2538]
                %2556 = vst [vmem:[%s2548 + $0xc] sm:%s2538] %v2555
                %v2557 = vld [vmem:[%s2547 + $0x10] sm:%s2538]
                %2558 = vst [vmem:[%s2548 + $0x10] sm:%s2538] %v2557
                %v2559 = vld [vmem:[%s2547 + $0x14] sm:%s2538]
                %2560 = vst [vmem:[%s2548 + $0x14] sm:%s2538] %v2559
                %v2561 = vld [vmem:[%s2547 + $0x18] sm:%s2538]
                %2562 = vst [vmem:[%s2548 + $0x18] sm:%s2538] %v2561
                %v2563 = vld [vmem:[%s2547 + $0x1c] sm:%s2538]
                %2564 = vst [vmem:[%s2548 + $0x1c] sm:%s2538] %v2563
                %v2565 = vld [vmem:[%s2547 + $0x20] sm:%s2538]
                %2566 = vst [vmem:[%s2548 + $0x20] sm:%s2538] %v2565
                %v2567 = vld [vmem:[%s2547 + $0x24] sm:%s2538]
                %2568 = vst [vmem:[%s2548 + $0x24] sm:%s2538] %v2567
                %v2569 = vld [vmem:[%s2547 + $0x28] sm:%s2538]
                %2570 = vst [vmem:[%s2548 + $0x28] sm:%s2538] %v2569
                %v2571 = vld [vmem:[%s2547 + $0x2c] sm:%s2538]
                %2572 = vst [vmem:[%s2548 + $0x2c] sm:%s2538] %v2571
                %v2573 = vld [vmem:[%s2547 + $0x30] sm:%s2538]
                %2574 = vst [vmem:[%s2548 + $0x30] sm:%s2538] %v2573
                %v2575 = vld [vmem:[%s2547 + $0x34] sm:%s2538]
                %2576 = vst [vmem:[%s2548 + $0x34] sm:%s2538] %v2575
                %v2577 = vld [vmem:[%s2547 + $0x38] sm:%s2538]
                %2578 = vst [vmem:[%s2548 + $0x38] sm:%s2538] %v2577
                %v2579 = vld [vmem:[%s2547 + $0x3c] sm:%s2538]
                %2580 = vst [vmem:[%s2548 + $0x3c] sm:%s2538] %v2579
                %v2581 = vld [vmem:[%s2547 + $0x40] sm:%s2538]
                %2582 = vst [vmem:[%s2548 + $0x40] sm:%s2538] %v2581
                %v2583 = vld [vmem:[%s2547 + $0x44] sm:%s2538]
                %2584 = vst [vmem:[%s2548 + $0x44] sm:%s2538] %v2583
                %v2585 = vld [vmem:[%s2547 + $0x48] sm:%s2538]
                %2586 = vst [vmem:[%s2548 + $0x48] sm:%s2538] %v2585
                %v2587 = vld [vmem:[%s2547 + $0x4c] sm:%s2538]
                %2588 = vst [vmem:[%s2548 + $0x4c] sm:%s2538] %v2587
                %v2589 = vld [vmem:[%s2547 + $0x50] sm:%s2538]
                %2590 = vst [vmem:[%s2548 + $0x50] sm:%s2538] %v2589
                %v2591 = vld [vmem:[%s2547 + $0x54] sm:%s2538]
                %2592 = vst [vmem:[%s2548 + $0x54] sm:%s2538] %v2591
                %v2593 = vld [vmem:[%s2547 + $0x58] sm:%s2538]
                %2594 = vst [vmem:[%s2548 + $0x58] sm:%s2538] %v2593
                %v2595 = vld [vmem:[%s2547 + $0x5c] sm:%s2538]
                %2596 = vst [vmem:[%s2548 + $0x5c] sm:%s2538] %v2595
                %v2597 = vld [vmem:[%s2547 + $0x60] sm:%s2538]
                %2598 = vst [vmem:[%s2548 + $0x60] sm:%s2538] %v2597
                %v2599 = vld [vmem:[%s2547 + $0x64] sm:%s2538]
                %2600 = vst [vmem:[%s2548 + $0x64] sm:%s2538] %v2599
                %v2601 = vld [vmem:[%s2547 + $0x68] sm:%s2538]
                %2602 = vst [vmem:[%s2548 + $0x68] sm:%s2538] %v2601
                %v2603 = vld [vmem:[%s2547 + $0x6c] sm:%s2538]
                %2604 = vst [vmem:[%s2548 + $0x6c] sm:%s2538] %v2603
                %v2605 = vld [vmem:[%s2547 + $0x70] sm:%s2538]
                %2606 = vst [vmem:[%s2548 + $0x70] sm:%s2538] %v2605
                %v2607 = vld [vmem:[%s2547 + $0x74] sm:%s2538]
                %2608 = vst [vmem:[%s2548 + $0x74] sm:%s2538] %v2607
                %v2609 = vld [vmem:[%s2547 + $0x78] sm:%s2538]
                %2610 = vst [vmem:[%s2548 + $0x78] sm:%s2538] %v2609
                %v2611 = vld [vmem:[%s2547 + $0x7c] sm:%s2538]
                %2612 = vst [vmem:[%s2548 + $0x7c] sm:%s2538] %v2611
                %v2613 = vld [vmem:[%s2547 + $0x80] sm:%s2538]
                %2614 = vst [vmem:[%s2548 + $0x80] sm:%s2538] %v2613
                %v2615 = vld [vmem:[%s2547 + $0x84] sm:%s2538]
                %2616 = vst [vmem:[%s2548 + $0x84] sm:%s2538] %v2615
                %v2617 = vld [vmem:[%s2547 + $0x88] sm:%s2538]
                %2618 = vst [vmem:[%s2548 + $0x88] sm:%s2538] %v2617
                %v2619 = vld [vmem:[%s2547 + $0x8c] sm:%s2538]
                %2620 = vst [vmem:[%s2548 + $0x8c] sm:%s2538] %v2619
                %v2621 = vld [vmem:[%s2547 + $0x90] sm:%s2538]
                %2622 = vst [vmem:[%s2548 + $0x90] sm:%s2538] %v2621
                %v2623 = vld [vmem:[%s2547 + $0x94] sm:%s2538]
                %2624 = vst [vmem:[%s2548 + $0x94] sm:%s2538] %v2623
                %v2625 = vld [vmem:[%s2547 + $0x98] sm:%s2538]
                %2626 = vst [vmem:[%s2548 + $0x98] sm:%s2538] %v2625
                %v2627 = vld [vmem:[%s2547 + $0x9c] sm:%s2538]
                %2628 = vst [vmem:[%s2548 + $0x9c] sm:%s2538] %v2627
                %v2629 = vld [vmem:[%s2547 + $0xa0] sm:%s2538]
                %2630 = vst [vmem:[%s2548 + $0xa0] sm:%s2538] %v2629
                %v2631 = vld [vmem:[%s2547 + $0xa4] sm:%s2538]
                %2632 = vst [vmem:[%s2548 + $0xa4] sm:%s2538] %v2631
                %v2633 = vld [vmem:[%s2547 + $0xa8] sm:%s2538]
                %2634 = vst [vmem:[%s2548 + $0xa8] sm:%s2538] %v2633
                %v2635 = vld [vmem:[%s2547 + $0xac] sm:%s2538]
                %2636 = vst [vmem:[%s2548 + $0xac] sm:%s2538] %v2635
                %v2637 = vld [vmem:[%s2547 + $0xb0] sm:%s2538]
                %2638 = vst [vmem:[%s2548 + $0xb0] sm:%s2538] %v2637
                %v2639 = vld [vmem:[%s2547 + $0xb4] sm:%s2538]
                %2640 = vst [vmem:[%s2548 + $0xb4] sm:%s2538] %v2639
                %v2641 = vld [vmem:[%s2547 + $0xb8] sm:%s2538]
                %2642 = vst [vmem:[%s2548 + $0xb8] sm:%s2538] %v2641
                %v2643 = vld [vmem:[%s2547 + $0xbc] sm:%s2538]
                %2644 = vst [vmem:[%s2548 + $0xbc] sm:%s2538] %v2643
                %v2645 = vld [vmem:[%s2547 + $0xc0] sm:%s2538]
                %2646 = vst [vmem:[%s2548 + $0xc0] sm:%s2538] %v2645
                %v2647 = vld [vmem:[%s2547 + $0xc4] sm:%s2538]
                %2648 = vst [vmem:[%s2548 + $0xc4] sm:%s2538] %v2647
                %v2649 = vld [vmem:[%s2547 + $0xc8] sm:%s2538]
                %2650 = vst [vmem:[%s2548 + $0xc8] sm:%s2538] %v2649
                %v2651 = vld [vmem:[%s2547 + $0xcc] sm:%s2538]
                %2652 = vst [vmem:[%s2548 + $0xcc] sm:%s2538] %v2651
                %v2653 = vld [vmem:[%s2547 + $0xd0] sm:%s2538]
                %2654 = vst [vmem:[%s2548 + $0xd0] sm:%s2538] %v2653
                %v2655 = vld [vmem:[%s2547 + $0xd4] sm:%s2538]
                %2656 = vst [vmem:[%s2548 + $0xd4] sm:%s2538] %v2655
                %v2657 = vld [vmem:[%s2547 + $0xd8] sm:%s2538]
                %2658 = vst [vmem:[%s2548 + $0xd8] sm:%s2538] %v2657
                %v2659 = vld [vmem:[%s2547 + $0xdc] sm:%s2538]
                %2660 = vst [vmem:[%s2548 + $0xdc] sm:%s2538] %v2659
                %v2661 = vld [vmem:[%s2547 + $0xe0] sm:%s2538]
                %2662 = vst [vmem:[%s2548 + $0xe0] sm:%s2538] %v2661
                %v2663 = vld [vmem:[%s2547 + $0xe4] sm:%s2538]
                %2664 = vst [vmem:[%s2548 + $0xe4] sm:%s2538] %v2663
                %v2665 = vld [vmem:[%s2547 + $0xe8] sm:%s2538]
                %2666 = vst [vmem:[%s2548 + $0xe8] sm:%s2538] %v2665
                %v2667 = vld [vmem:[%s2547 + $0xec] sm:%s2538]
                %2668 = vst [vmem:[%s2548 + $0xec] sm:%s2538] %v2667
                %v2669 = vld [vmem:[%s2547 + $0xf0] sm:%s2538]
                %2670 = vst [vmem:[%s2548 + $0xf0] sm:%s2538] %v2669
                %v2671 = vld [vmem:[%s2547 + $0xf4] sm:%s2538]
                %2672 = vst [vmem:[%s2548 + $0xf4] sm:%s2538] %v2671
                %v2673 = vld [vmem:[%s2547 + $0xf8] sm:%s2538]
                %2674 = vst [vmem:[%s2548 + $0xf8] sm:%s2538] %v2673
                %v2675 = vld [vmem:[%s2547 + $0xfc] sm:%s2538]
                %2676 = vst [vmem:[%s2548 + $0xfc] sm:%s2538] %v2675
                %s2677 = sadd.s32 1, %s2546
                %p2678 = scmp.ge.s32.totalorder %s2677, %s2539
                %s2679 = scalar_select %p2678, 0, %s2677
                %s2680 = smul.u32 %s2679, 256
                %s2681 = smul.u32 %s2679, 256
                %s2682 = scalar_lea.vmem %s2518, %s2680 [#allocation2]
                %s2683 = scalar_lea.vmem %s2529, %s2681
              $region53: #{critic_forward.7} parent=47 // loop_footer
                %s2543 = sadd.s32 %s2541, 1
              $region54: #{critic_forward.7} parent=47 // loop_footer_branch
                %2540 = sbr.rel target = $region50
              $region55: #{critic_forward.7} parent=47 // loop_exit
                _
              %s2684 = sshrl.u32 %s2525, 6
              %s2685 = sand.u32 %s2525, 63
              %s2686 = smul.u32 %s2684, 64
              %s2687 = smul.u32 4, %s2686
              %s2688 = scalar_lea.vmem %s2518, %s2687 [#allocation2]
              %s2689 = smul.u32 4, %s2686
              %s2690 = scalar_lea.vmem %s2529, %s2689
              // While loop
              $region56: #{critic_forward.7} parent=47 // loop_pre_header
                _
              $region57: #{critic_forward.7} parent=47 // loop_header
                %s2692 = sphi 0, %s2694
                %p2693 = scmp.ge.s32.totalorder %s2692, %s2685
                %s2697 = sphi 0, %s2704
                %s2698 = sphi %s2688, %s2707
                %s2699 = sphi %s2690, %s2708
              $region58: #{critic_forward.7} parent=47 // loop_header_branch
                %2696 = sbr.rel (%p2693) target = $region62
              $region59: #{critic_forward.7} parent=47 // loop_body
                %v2700 = vld [vmem:[%s2698] sm:%s2538]
                %2701 = vst [vmem:[%s2699] sm:%s2538] %v2700
                %s2702 = sadd.s32 1, %s2697
                %p2703 = scmp.ge.s32.totalorder %s2702, %s2685
                %s2704 = scalar_select %p2703, 0, %s2702
                %s2705 = smul.u32 %s2704, 4
                %s2706 = smul.u32 %s2704, 4
                %s2707 = scalar_lea.vmem %s2688, %s2705 [#allocation2]
                %s2708 = scalar_lea.vmem %s2690, %s2706
              $region60: #{critic_forward.7} parent=47 // loop_footer
                %s2694 = sadd.s32 %s2692, 1
              $region61: #{critic_forward.7} parent=47 // loop_footer_branch
                %2691 = sbr.rel target = $region57
              $region62: #{critic_forward.7} parent=47 // loop_exit
                _
            $region48: #{critic_forward.7} parent=39 // pred_fallthru
              _
          $region40: #{critic_forward.7} parent=35 // pred_fallthru
            _
          %2883 = vnop
        $region36: #{critic_forward.7} parent=31 // pred_fallthru
          _
      $region32: #{critic_forward.7} parent=5 // pred_fallthru
        _
      %p2884 = scmp.le.s32.totalorder 2, %s9
      // Predicated region
      $region81: #{critic_forward.7} parent=5 // pred_check
        %p2885 = pneg %p2884
      $region82: #{critic_forward.7} parent=5 // pred_check_branch
        %2887 = sbr.rel (%p2885) target = $region84
      $region83: #{critic_forward.7} parent=5 // pred_region
        %s2888 = ssub.s32 %s9, 2
        // Predicated region
        $region85: #{critic_forward.7} parent=83 // pred_check
          %p2889 = pneg %p106
        $region86: #{critic_forward.7} parent=83 // pred_check_branch
          %2891 = sbr.rel (%p2889) target = $region88
        $region87: #{critic_forward.7} parent=83 // pred_region
          %s2892 = sand.u32 %s91, 1
          %s2893 = sand.u32 %s91, 1
          %s2894 = smul.addr %s2893, 512
          %s2895 = scalar_lea.vmem [#allocation2], %s2894
        $region88: #{critic_forward.7} parent=83 // pred_fallthru
          _
      $region84: #{critic_forward.7} parent=5 // pred_fallthru
        _
    $region6: #{critic_forward.7} parent=1 // loop_footer
      %s13 = sadd.s32 1, %s9
    $region7: #{critic_forward.7} parent=1 // loop_footer_branch
      %8 = sbr.rel target = $region3
    $region8: #{critic_forward.7} parent=1 // loop_exit
      _

// kernel: critic_forward.8
$region0: #{critic_forward.8}
  #allocation0 [shape = 'u32[]', space=smem, size = 0x4, offset = 0x4, fixed_abs, tag = 'smem constant byte address 0x4 - core index']
  #allocation1 [shape = 'u32[144,128]{1,0:T(1,128)}', space=vmem, size = 0x12000, scoped, tag = 'internal scratch']
  %s0 = inlined_call_operand.vmem [shape: bf16[968,180], index: 0, kind: input, shape index: {}]
  %s1 = inlined_call_operand.vmem [shape: bf16[180,40], index: 1, kind: input, shape index: {}]
  %s2 = inlined_call_operand.vmem [shape: f32[1,40], index: 2, kind: input, shape index: {}]
  %s3 = inlined_call_operand.vmem [shape: bf16[968,40], index: 3, kind: output, shape index: {}]
  %s4 = sld [smem:[#allocation0]]
  $region22: #{critic_forward.8} parent=0
    _
  %s6 = ssub.s32 1, %s4
  %s7 = scalar_select 0, %s6, %s4
  // Predicated region
  $region2: #{critic_forward.8} parent=0 // pred_check
    _
  $region3: #{critic_forward.8} parent=0 // pred_check_branch
    %9 = sbr.rel (0) target = $region5
  $region4: #{critic_forward.8} parent=0 // pred_region
    _
  $region5: #{critic_forward.8} parent=0 // pred_fallthru
    _
  // Predicated region
  $region6: #{critic_forward.8} parent=0 // pred_check
    _
  $region7: #{critic_forward.8} parent=0 // pred_check_branch
    %11 = sbr.rel (0) target = $region9
  $region8: #{critic_forward.8} parent=0 // pred_region
    _
  $region9: #{critic_forward.8} parent=0 // pred_fallthru
    _
  // Predicated region
  $region10: #{critic_forward.8} parent=0 // pred_check
    _
  $region11: #{critic_forward.8} parent=0 // pred_check_branch
    %13 = sbr.rel (0) target = $region13
  $region12: #{critic_forward.8} parent=0 // pred_region
    _
  $region13: #{critic_forward.8} parent=0 // pred_fallthru
    _
  %v15 = vld [vmem:[%s0] sm:$0xff]
  %v16 = vld [vmem:[%s0 + $0x8] sm:$0xff]
  %v17 = vld [vmem:[%s0 + $0x10] sm:$0xff]
  %v18 = vld [vmem:[%s0 + $0x18] sm:$0xff]
  %v19 = vld [vmem:[%s0 + $0x20] sm:$0xff]
  %v20 = vld [vmem:[%s0 + $0x28] sm:$0xff]
  %v21 = vld [vmem:[%s0 + $0x30] sm:$0xff]
  %v22 = vld [vmem:[%s0 + $0x38] sm:$0xff]
  %v23 = vld [vmem:[%s0 + $0x40] sm:$0xff]
  %v24 = vld [vmem:[%s0 + $0x48] sm:$0xff]
  %v25 = vld [vmem:[%s0 + $0x50] sm:$0xff]
  %v26 = vld [vmem:[%s0 + $0x58] sm:$0xff]
  %v27 = vld [vmem:[%s0 + $0x60] sm:$0xff]
  %v28 = vld [vmem:[%s0 + $0x68] sm:$0xff]
  %v29 = vld [vmem:[%s0 + $0x70] sm:$0xff]
  %v30 = vld [vmem:[%s0 + $0x78] sm:$0xff]
  %v31 = vld [vmem:[%s0 + $0x80] sm:$0xff]
  %v32 = vld [vmem:[%s0 + $0x88] sm:$0xff]
  %v33 = vld [vmem:[%s0 + $0x90] sm:$0xff]
  %v34 = vld [vmem:[%s0 + $0x98] sm:$0xff]
  %v35 = vld [vmem:[%s0 + $0xa0] sm:$0xff]
  %v36 = vld [vmem:[%s0 + $0xa8] sm:$0xff]
  %v37 = vld [vmem:[%s0 + $0xb0] sm:$0xff]
  %v38 = vld [vmem:[%s0 + $0xb8] sm:$0xff]
  %v39 = vld [vmem:[%s0 + $0xc0] sm:$0xff]
  %v40 = vld [vmem:[%s0 + $0xc8] sm:$0xff]
  %v41 = vld [vmem:[%s0 + $0xd0] sm:$0xff]
  %v42 = vld [vmem:[%s0 + $0xd8] sm:$0xff]
  %v43 = vld [vmem:[%s0 + $0xe0] sm:$0xff]
  %v44 = vld [vmem:[%s0 + $0xe8] sm:$0xff]
  %v45 = vld [vmem:[%s0 + $0xf0] sm:$0xff]
  %v46 = vld [vmem:[%s0 + $0xf8] sm:$0xff]
  %v47 = vld [vmem:[%s0 + $0x100] sm:$0xff]
  %v48 = vld [vmem:[%s0 + $0x108] sm:$0xff]
  %v49 = vld [vmem:[%s0 + $0x110] sm:$0xff]
  %v50 = vld [vmem:[%s0 + $0x118] sm:$0xff]
  %v51 = vld [vmem:[%s0 + $0x120] sm:$0xff]
  %v52 = vld [vmem:[%s0 + $0x128] sm:$0xff]
  %v53 = vld [vmem:[%s0 + $0x130] sm:$0xff]
  %v54 = vld [vmem:[%s0 + $0x138] sm:$0xff]
  %v55 = vld [vmem:[%s0 + $0x140] sm:$0xff]
  %v56 = vld [vmem:[%s0 + $0x148] sm:$0xff]
  %v57 = vld [vmem:[%s0 + $0x150] sm:$0xff]
  %v58 = vld [vmem:[%s0 + $0x158] sm:$0xff]
  %v59 = vld [vmem:[%s0 + $0x160] sm:$0xff]
  %v60 = vld [vmem:[%s0 + $0x168] sm:$0xff]
  %v61 = vld [vmem:[%s0 + $0x170] sm:$0xff]
  %v62 = vld [vmem:[%s0 + $0x178] sm:$0xff]
  %v63 = vld [vmem:[%s0 + $0x180] sm:$0xff]
  %v64 = vld [vmem:[%s0 + $0x188] sm:$0xff]
  %v65 = vld [vmem:[%s0 + $0x190] sm:$0xff]
  %v66 = vld [vmem:[%s0 + $0x198] sm:$0xff]
  %v67 = vld [vmem:[%s0 + $0x1a0] sm:$0xff]
  %v68 = vld [vmem:[%s0 + $0x1a8] sm:$0xff]
  %v69 = vld [vmem:[%s0 + $0x1b0] sm:$0xff]
  %v70 = vld [vmem:[%s0 + $0x1b8] sm:$0xff]
  %v71 = vld [vmem:[%s0 + $0x1c0] sm:$0xff]
  %v72 = vld [vmem:[%s0 + $0x1c8] sm:$0xff]
  %v73 = vld [vmem:[%s0 + $0x1d0] sm:$0xff]
  %v74 = vld [vmem:[%s0 + $0x1d8] sm:$0xff]
  %v75 = vld [vmem:[%s0 + $0x1e0] sm:$0xff]
  %v76 = vld [vmem:[%s0 + $0x1e8] sm:$0xff]
  %v77 = vld [vmem:[%s0 + $0x1f0] sm:$0xff]
  %v78 = vld [vmem:[%s0 + $0x1f8] sm:$0xff]
  %v79 = vld [vmem:[%s0 + $0x200] sm:$0xff]
  %v80 = vld [vmem:[%s0 + $0x208] sm:$0xff]
  %v81 = vld [vmem:[%s0 + $0x210] sm:$0xff]
  %v82 = vld [vmem:[%s0 + $0x218] sm:$0xff]
  %v83 = vld [vmem:[%s0 + $0x220] sm:$0xff]
  %v84 = vld [vmem:[%s0 + $0x228] sm:$0xff]
  %v85 = vld [vmem:[%s0 + $0x230] sm:$0xff]
  %v86 = vld [vmem:[%s0 + $0x238] sm:$0xff]
  %v87 = vld [vmem:[%s0 + $0x240] sm:$0xff]
  %v88 = vld [vmem:[%s0 + $0x248] sm:$0xff]
  %v89 = vld [vmem:[%s0 + $0x250] sm:$0xff]
  %v90 = vld [vmem:[%s0 + $0x258] sm:$0xff]
  %v91 = vld [vmem:[%s0 + $0x260] sm:$0xff]
  %v92 = vld [vmem:[%s0 + $0x268] sm:$0xff]
  %v93 = vld [vmem:[%s0 + $0x270] sm:$0xff]
  %v94 = vld [vmem:[%s0 + $0x278] sm:$0xff]
  %v95 = vld [vmem:[%s0 + $0x280] sm:$0xff]
  %v96 = vld [vmem:[%s0 + $0x288] sm:$0xff]
  %v97 = vld [vmem:[%s0 + $0x290] sm:$0xff]
  %v98 = vld [vmem:[%s0 + $0x298] sm:$0xff]
  %v99 = vld [vmem:[%s0 + $0x2a0] sm:$0xff]
  %v100 = vld [vmem:[%s0 + $0x2a8] sm:$0xff]
  %v101 = vld [vmem:[%s0 + $0x2b0] sm:$0xff]
  %v102 = vld [vmem:[%s0 + $0x2b8] sm:$0xff]
  %v103 = vld [vmem:[%s0 + $0x2c0] sm:$0xff]
  %v104 = vld [vmem:[%s0 + $0x2c8] sm:$0xff]
  %v105 = vld [vmem:[%s0 + $0x2d0] sm:$0xff]
  %v106 = vld [vmem:[%s0 + $0x2d8] sm:$0xff]
  %v107 = vld [vmem:[%s0 + $0x2e0] sm:$0xff]
  %v108 = vld [vmem:[%s0 + $0x2e8] sm:$0xff]
  %v109 = vld [vmem:[%s0 + $0x2f0] sm:$0xff]
  %v110 = vld [vmem:[%s0 + $0x2f8] sm:$0xff]
  %v111 = vld [vmem:[%s0 + $0x300] sm:$0xff]
  %v112 = vld [vmem:[%s0 + $0x308] sm:$0xff]
  %v113 = vld [vmem:[%s0 + $0x310] sm:$0xff]
  %v114 = vld [vmem:[%s0 + $0x318] sm:$0xff]
  %v115 = vld [vmem:[%s0 + $0x320] sm:$0xff]
  %v116 = vld [vmem:[%s0 + $0x328] sm:$0xff]
  %v117 = vld [vmem:[%s0 + $0x330] sm:$0xff]
  %v118 = vld [vmem:[%s0 + $0x338] sm:$0xff]
  %v119 = vld [vmem:[%s0 + $0x340] sm:$0xff]
  %v120 = vld [vmem:[%s0 + $0x348] sm:$0xff]
  %v121 = vld [vmem:[%s0 + $0x350] sm:$0xff]
  %v122 = vld [vmem:[%s0 + $0x358] sm:$0xff]
  %v123 = vld [vmem:[%s0 + $0x360] sm:$0xff]
  %v124 = vld [vmem:[%s0 + $0x368] sm:$0xff]
  %v125 = vld [vmem:[%s0 + $0x370] sm:$0xff]
  %v126 = vld [vmem:[%s0 + $0x378] sm:$0xff]
  %v127 = vld [vmem:[%s0 + $0x380] sm:$0xff]
  %v128 = vld [vmem:[%s0 + $0x388] sm:$0xff]
  %v129 = vld [vmem:[%s0 + $0x390] sm:$0xff]
  %v130 = vld [vmem:[%s0 + $0x398] sm:$0xff]
  %v131 = vld [vmem:[%s0 + $0x3a0] sm:$0xff]
  %v132 = vld [vmem:[%s0 + $0x3a8] sm:$0xff]
  %v133 = vld [vmem:[%s0 + $0x3b0] sm:$0xff]
  %v134 = vld [vmem:[%s0 + $0x3b8] sm:$0xff]
  %v135 = vld [vmem:[%s0 + $0x3c0] sm:$0xff]
  %v136 = vld [vmem:[%s1] sm:$0xf]
  %v137 = vld [vmem:[%s1 + $0x4] sm:$0xf]
  %v138 = vld [vmem:[%s1 + $0x8] sm:$0xf]
  %v139 = vld [vmem:[%s1 + $0xc] sm:$0xf]
  %v140 = vld [vmem:[%s1 + $0x10] sm:$0xf]
  %v141 = vld [vmem:[%s1 + $0x14] sm:$0xf]
  %v142 = vld [vmem:[%s1 + $0x18] sm:$0xf]
  %v143 = vld [vmem:[%s1 + $0x1c] sm:$0xf]
  %v144 = vld [vmem:[%s1 + $0x20] sm:$0xf]
  %v145 = vld [vmem:[%s1 + $0x24] sm:$0xf]
  %v146 = vld [vmem:[%s1 + $0x28] sm:$0xf]
  %v147 = vld [vmem:[%s1 + $0x2c] sm:$0xf]
  %v148 = vld [vmem:[%s1 + $0x30] sm:$0xf]
  %v149 = vld [vmem:[%s1 + $0x34] sm:$0xf]
  %v150 = vld [vmem:[%s1 + $0x38] sm:$0xf]
  %v151 = vld [vmem:[%s1 + $0x3c] sm:$0xf]
  %v152 = vld [vmem:[%s1 + $0x40] sm:$0xf]
  %v153 = vld [vmem:[%s1 + $0x44] sm:$0xf]
  %v154 = vld [vmem:[%s1 + $0x48] sm:$0xf]
  %v155 = vld [vmem:[%s1 + $0x4c] sm:$0xf]
  %v156 = vld [vmem:[%s1 + $0x50] sm:$0xf]
  %v157 = vld [vmem:[%s1 + $0x54] sm:$0xf]
  %v158 = vld [vmem:[%s1 + $0x58] sm:$0x3]
  %v159 = vld [vmem:[%s2] sm:$0x1]
  %v161 = vlaneseq
  %v162 = vshrl.u32 %v161, 7
  %v163 = vsub.s32 0, %v162
  %v164 = vrot.slane %v159, %v163
  %v287 = vunpack.c.l.b16 %v15
  %v288 = vunpack.c.h.b16 %v15
  %v289 = vunpack.c.l.b16 %v16
  %v290 = vunpack.c.h.b16 %v16
  %v291 = vunpack.c.l.b16 %v17
  %v292 = vunpack.c.h.b16 %v17
  %v293 = vunpack.c.l.b16 %v18
  %v294 = vunpack.c.h.b16 %v18
  %v295 = vunpack.c.l.b16 %v19
  %v296 = vunpack.c.h.b16 %v19
  %v297 = vunpack.c.l.b16 %v20
  %v298 = vunpack.c.h.b16 %v20
  %v299 = vunpack.c.l.b16 %v21
  %v300 = vunpack.c.h.b16 %v21
  %v301 = vunpack.c.l.b16 %v22
  %v302 = vunpack.c.h.b16 %v22
  %v303 = vunpack.c.l.b16 %v23
  %v304 = vunpack.c.h.b16 %v23
  %v305 = vunpack.c.l.b16 %v24
  %v306 = vunpack.c.h.b16 %v24
  %v307 = vunpack.c.l.b16 %v25
  %v308 = vunpack.c.h.b16 %v25
  %v309 = vunpack.c.l.b16 %v26
  %v310 = vunpack.c.h.b16 %v26
  %v311 = vunpack.c.l.b16 %v27
  %v312 = vunpack.c.h.b16 %v27
  %v313 = vunpack.c.l.b16 %v28
  %v314 = vunpack.c.h.b16 %v28
  %v315 = vunpack.c.l.b16 %v29
  %v316 = vunpack.c.h.b16 %v29
  %v317 = vunpack.c.l.b16 %v30
  %v318 = vunpack.c.h.b16 %v30
  %v319 = vunpack.c.l.b16 %v31
  %v320 = vunpack.c.h.b16 %v31
  %v321 = vunpack.c.l.b16 %v32
  %v322 = vunpack.c.h.b16 %v32
  %v323 = vunpack.c.l.b16 %v33
  %v324 = vunpack.c.h.b16 %v33
  %v325 = vunpack.c.l.b16 %v34
  %v326 = vunpack.c.h.b16 %v34
  %v327 = vunpack.c.l.b16 %v35
  %v328 = vunpack.c.h.b16 %v35
  %v329 = vunpack.c.l.b16 %v36
  %v330 = vunpack.c.h.b16 %v36
  %v331 = vunpack.c.l.b16 %v37
  %v332 = vunpack.c.h.b16 %v37
  %v333 = vunpack.c.l.b16 %v38
  %v334 = vunpack.c.h.b16 %v38
  %v335 = vunpack.c.l.b16 %v39
  %v336 = vunpack.c.h.b16 %v39
  %v337 = vunpack.c.l.b16 %v40
  %v338 = vunpack.c.h.b16 %v40
  %v339 = vunpack.c.l.b16 %v41
  %v340 = vunpack.c.h.b16 %v41
  %v341 = vunpack.c.l.b16 %v42
  %v342 = vunpack.c.h.b16 %v42
  %v343 = vunpack.c.l.b16 %v43
  %v344 = vunpack.c.h.b16 %v43
  %v345 = vunpack.c.l.b16 %v44
  %v346 = vunpack.c.h.b16 %v44
  %v347 = vunpack.c.l.b16 %v45
  %v348 = vunpack.c.h.b16 %v45
  %v349 = vunpack.c.l.b16 %v46
  %v350 = vunpack.c.h.b16 %v46
  %v351 = vunpack.c.l.b16 %v47
  %v352 = vunpack.c.h.b16 %v47
  %v353 = vunpack.c.l.b16 %v48
  %v354 = vunpack.c.h.b16 %v48
  %v355 = vunpack.c.l.b16 %v49
  %v356 = vunpack.c.h.b16 %v49
  %v357 = vunpack.c.l.b16 %v50
  %v358 = vunpack.c.h.b16 %v50
  %v359 = vunpack.c.l.b16 %v51
  %v360 = vunpack.c.h.b16 %v51
  %v361 = vunpack.c.l.b16 %v52
  %v362 = vunpack.c.h.b16 %v52
  %v363 = vunpack.c.l.b16 %v53
  %v364 = vunpack.c.h.b16 %v53
  %v365 = vunpack.c.l.b16 %v54
  %v366 = vunpack.c.h.b16 %v54
  %v367 = vunpack.c.l.b16 %v55
  %v368 = vunpack.c.h.b16 %v55
  %v369 = vunpack.c.l.b16 %v56
  %v370 = vunpack.c.h.b16 %v56
  %v371 = vunpack.c.l.b16 %v57
  %v372 = vunpack.c.h.b16 %v57
  %v373 = vunpack.c.l.b16 %v58
  %v374 = vunpack.c.h.b16 %v58
  %v375 = vunpack.c.l.b16 %v59
  %v376 = vunpack.c.h.b16 %v59
  %v377 = vunpack.c.l.b16 %v60
  %v378 = vunpack.c.h.b16 %v60
  %v379 = vunpack.c.l.b16 %v61
  %v380 = vunpack.c.h.b16 %v61
  %v381 = vunpack.c.l.b16 %v62
  %v382 = vunpack.c.h.b16 %v62
  %v383 = vunpack.c.l.b16 %v63
  %v384 = vunpack.c.h.b16 %v63
  %v385 = vunpack.c.l.b16 %v64
  %v386 = vunpack.c.h.b16 %v64
  %v387 = vunpack.c.l.b16 %v65
  %v388 = vunpack.c.h.b16 %v65
  %v389 = vunpack.c.l.b16 %v66
  %v390 = vunpack.c.h.b16 %v66
  %v391 = vunpack.c.l.b16 %v67
  %v392 = vunpack.c.h.b16 %v67
  %v393 = vunpack.c.l.b16 %v68
  %v394 = vunpack.c.h.b16 %v68
  %v395 = vunpack.c.l.b16 %v69
  %v396 = vunpack.c.h.b16 %v69
  %v397 = vunpack.c.l.b16 %v70
  %v398 = vunpack.c.h.b16 %v70
  %v399 = vunpack.c.l.b16 %v71
  %v400 = vunpack.c.h.b16 %v71
  %v401 = vunpack.c.l.b16 %v72
  %v402 = vunpack.c.h.b16 %v72
  %v403 = vunpack.c.l.b16 %v73
  %v404 = vunpack.c.h.b16 %v73
  %v405 = vunpack.c.l.b16 %v74
  %v406 = vunpack.c.h.b16 %v74
  %v407 = vunpack.c.l.b16 %v75
  %v408 = vunpack.c.h.b16 %v75
  %v409 = vunpack.c.l.b16 %v76
  %v410 = vunpack.c.h.b16 %v76
  %v411 = vunpack.c.l.b16 %v77
  %v412 = vunpack.c.h.b16 %v77
  %v413 = vunpack.c.l.b16 %v78
  %v414 = vunpack.c.h.b16 %v78
  %v415 = vunpack.c.l.b16 %v79
  %v416 = vunpack.c.h.b16 %v79
  %v417 = vunpack.c.l.b16 %v80
  %v418 = vunpack.c.h.b16 %v80
  %v419 = vunpack.c.l.b16 %v81
  %v420 = vunpack.c.h.b16 %v81
  %v421 = vunpack.c.l.b16 %v82
  %v422 = vunpack.c.h.b16 %v82
  %v423 = vunpack.c.l.b16 %v83
  %v424 = vunpack.c.h.b16 %v83
  %v425 = vunpack.c.l.b16 %v84
  %v426 = vunpack.c.h.b16 %v84
  %v427 = vunpack.c.l.b16 %v85
  %v428 = vunpack.c.h.b16 %v85
  %v429 = vunpack.c.l.b16 %v86
  %v430 = vunpack.c.h.b16 %v86
  %v431 = vunpack.c.l.b16 %v87
  %v432 = vunpack.c.h.b16 %v87
  %v433 = vunpack.c.l.b16 %v88
  %v434 = vunpack.c.h.b16 %v88
  %v435 = vunpack.c.l.b16 %v89
  %v436 = vunpack.c.h.b16 %v89
  %v437 = vunpack.c.l.b16 %v90
  %v438 = vunpack.c.h.b16 %v90
  %v439 = vunpack.c.l.b16 %v91
  %v440 = vunpack.c.h.b16 %v91
  %v441 = vunpack.c.l.b16 %v92
  %v442 = vunpack.c.h.b16 %v92
  %v443 = vunpack.c.l.b16 %v93
  %v444 = vunpack.c.h.b16 %v93
  %v445 = vunpack.c.l.b16 %v94
  %v446 = vunpack.c.h.b16 %v94
  %v447 = vunpack.c.l.b16 %v95
  %v448 = vunpack.c.h.b16 %v95
  %v449 = vunpack.c.l.b16 %v96
  %v450 = vunpack.c.h.b16 %v96
  %v451 = vunpack.c.l.b16 %v97
  %v452 = vunpack.c.h.b16 %v97
  %v453 = vunpack.c.l.b16 %v98
  %v454 = vunpack.c.h.b16 %v98
  %v455 = vunpack.c.l.b16 %v99
  %v456 = vunpack.c.h.b16 %v99
  %v457 = vunpack.c.l.b16 %v100
  %v458 = vunpack.c.h.b16 %v100
  %v459 = vunpack.c.l.b16 %v101
  %v460 = vunpack.c.h.b16 %v101
  %v461 = vunpack.c.l.b16 %v102
  %v462 = vunpack.c.h.b16 %v102
  %v463 = vunpack.c.l.b16 %v103
  %v464 = vunpack.c.h.b16 %v103
  %v465 = vunpack.c.l.b16 %v104
  %v466 = vunpack.c.h.b16 %v104
  %v467 = vunpack.c.l.b16 %v105
  %v468 = vunpack.c.h.b16 %v105
  %v469 = vunpack.c.l.b16 %v106
  %v470 = vunpack.c.h.b16 %v106
  %v471 = vunpack.c.l.b16 %v107
  %v472 = vunpack.c.h.b16 %v107
  %v473 = vunpack.c.l.b16 %v108
  %v474 = vunpack.c.h.b16 %v108
  %v475 = vunpack.c.l.b16 %v109
  %v476 = vunpack.c.h.b16 %v109
  %v477 = vunpack.c.l.b16 %v110
  %v478 = vunpack.c.h.b16 %v110
  %v479 = vunpack.c.l.b16 %v111
  %v480 = vunpack.c.h.b16 %v111
  %v481 = vunpack.c.l.b16 %v112
  %v482 = vunpack.c.h.b16 %v112
  %v483 = vunpack.c.l.b16 %v113
  %v484 = vunpack.c.h.b16 %v113
  %v485 = vunpack.c.l.b16 %v114
  %v486 = vunpack.c.h.b16 %v114
  %v487 = vunpack.c.l.b16 %v115
  %v488 = vunpack.c.h.b16 %v115
  %v489 = vunpack.c.l.b16 %v116
  %v490 = vunpack.c.h.b16 %v116
  %v491 = vunpack.c.l.b16 %v117
  %v492 = vunpack.c.h.b16 %v117
  %v493 = vunpack.c.l.b16 %v118
  %v494 = vunpack.c.h.b16 %v118
  %v495 = vunpack.c.l.b16 %v119
  %v496 = vunpack.c.h.b16 %v119
  %v497 = vunpack.c.l.b16 %v120
  %v498 = vunpack.c.h.b16 %v120
  %v499 = vunpack.c.l.b16 %v121
  %v500 = vunpack.c.h.b16 %v121
  %v501 = vunpack.c.l.b16 %v122
  %v502 = vunpack.c.h.b16 %v122
  %v503 = vunpack.c.l.b16 %v123
  %v504 = vunpack.c.h.b16 %v123
  %v505 = vunpack.c.l.b16 %v124
  %v506 = vunpack.c.h.b16 %v124
  %v507 = vunpack.c.l.b16 %v125
  %v508 = vunpack.c.h.b16 %v125
  %v509 = vunpack.c.l.b16 %v126
  %v510 = vunpack.c.h.b16 %v126
  %v511 = vunpack.c.l.b16 %v127
  %v512 = vunpack.c.h.b16 %v127
  %v513 = vunpack.c.l.b16 %v128
  %v514 = vunpack.c.h.b16 %v128
  %v515 = vunpack.c.l.b16 %v129
  %v516 = vunpack.c.h.b16 %v129
  %v517 = vunpack.c.l.b16 %v130
  %v518 = vunpack.c.h.b16 %v130
  %v519 = vunpack.c.l.b16 %v131
  %v520 = vunpack.c.h.b16 %v131
  %v521 = vunpack.c.l.b16 %v132
  %v522 = vunpack.c.h.b16 %v132
  %v523 = vunpack.c.l.b16 %v133
  %v524 = vunpack.c.h.b16 %v133
  %v525 = vunpack.c.l.b16 %v134
  %v526 = vunpack.c.h.b16 %v134
  %v527 = vunpack.c.l.b16 %v135
  %v528 = vunpack.c.h.b16 %v135
  %v529 = vpack.c.b16 %v289, %v287
  %v530 = vpack.c.b16 %v290, %v288
  %v531 = vpack.c.b16 %v293, %v291
  %v532 = vpack.c.b16 %v294, %v292
  %v533 = vpack.c.b16 %v297, %v295
  %v534 = vpack.c.b16 %v298, %v296
  %v535 = vpack.c.b16 %v301, %v299
  %v536 = vpack.c.b16 %v302, %v300
  %v537 = vpack.c.b16 %v305, %v303
  %v538 = vpack.c.b16 %v306, %v304
  %v539 = vpack.c.b16 %v309, %v307
  %v540 = vpack.c.b16 %v310, %v308
  %v541 = vpack.c.b16 %v313, %v311
  %v542 = vpack.c.b16 %v314, %v312
  %v543 = vpack.c.b16 %v317, %v315
  %v544 = vpack.c.b16 %v318, %v316
  %v545 = vpack.c.b16 %v321, %v319
  %v546 = vpack.c.b16 %v322, %v320
  %v547 = vpack.c.b16 %v325, %v323
  %v548 = vpack.c.b16 %v326, %v324
  %v549 = vpack.c.b16 %v329, %v327
  %v550 = vpack.c.b16 %v330, %v328
  %v551 = vpack.c.b16 %v333, %v331
  %v552 = vpack.c.b16 %v334, %v332
  %v553 = vpack.c.b16 %v337, %v335
  %v554 = vpack.c.b16 %v338, %v336
  %v555 = vpack.c.b16 %v341, %v339
  %v556 = vpack.c.b16 %v342, %v340
  %v557 = vpack.c.b16 %v345, %v343
  %v558 = vpack.c.b16 %v346, %v344
  %v559 = vpack.c.b16 %v349, %v347
  %v560 = vpack.c.b16 %v350, %v348
  %v561 = vpack.c.b16 %v353, %v351
  %v562 = vpack.c.b16 %v354, %v352
  %v563 = vpack.c.b16 %v357, %v355
  %v564 = vpack.c.b16 %v358, %v356
  %v565 = vpack.c.b16 %v361, %v359
  %v566 = vpack.c.b16 %v362, %v360
  %v567 = vpack.c.b16 %v365, %v363
  %v568 = vpack.c.b16 %v366, %v364
  %v569 = vpack.c.b16 %v369, %v367
  %v570 = vpack.c.b16 %v370, %v368
  %v571 = vpack.c.b16 %v373, %v371
  %v572 = vpack.c.b16 %v374, %v372
  %v573 = vpack.c.b16 %v377, %v375
  %v574 = vpack.c.b16 %v378, %v376
  %v575 = vpack.c.b16 %v381, %v379
  %v576 = vpack.c.b16 %v382, %v380
  %v577 = vpack.c.b16 %v385, %v383
  %v578 = vpack.c.b16 %v386, %v384
  %v579 = vpack.c.b16 %v389, %v387
  %v580 = vpack.c.b16 %v390, %v388
  %v581 = vpack.c.b16 %v393, %v391
  %v582 = vpack.c.b16 %v394, %v392
  %v583 = vpack.c.b16 %v397, %v395
  %v584 = vpack.c.b16 %v398, %v396
  %v585 = vpack.c.b16 %v401, %v399
  %v586 = vpack.c.b16 %v402, %v400
  %v587 = vpack.c.b16 %v405, %v403
  %v588 = vpack.c.b16 %v406, %v404
  %v589 = vpack.c.b16 %v409, %v407
  %v590 = vpack.c.b16 %v410, %v408
  %v591 = vpack.c.b16 %v413, %v411
  %v592 = vpack.c.b16 %v414, %v412
  %v593 = vpack.c.b16 %v417, %v415
  %v594 = vpack.c.b16 %v418, %v416
  %v595 = vpack.c.b16 %v421, %v419
  %v596 = vpack.c.b16 %v422, %v420
  %v597 = vpack.c.b16 %v425, %v423
  %v598 = vpack.c.b16 %v426, %v424
  %v599 = vpack.c.b16 %v429, %v427
  %v600 = vpack.c.b16 %v430, %v428
  %v601 = vpack.c.b16 %v433, %v431
  %v602 = vpack.c.b16 %v434, %v432
  %v603 = vpack.c.b16 %v437, %v435
  %v604 = vpack.c.b16 %v438, %v436
  %v605 = vpack.c.b16 %v441, %v439
  %v606 = vpack.c.b16 %v442, %v440
  %v607 = vpack.c.b16 %v445, %v443
  %v608 = vpack.c.b16 %v446, %v444
  %v609 = vpack.c.b16 %v449, %v447
  %v610 = vpack.c.b16 %v450, %v448
  %v611 = vpack.c.b16 %v453, %v451
  %v612 = vpack.c.b16 %v454, %v452
  %v613 = vpack.c.b16 %v457, %v455
  %v614 = vpack.c.b16 %v458, %v456
  %v615 = vpack.c.b16 %v461, %v459
  %v616 = vpack.c.b16 %v462, %v460
  %v617 = vpack.c.b16 %v465, %v463
  %v618 = vpack.c.b16 %v466, %v464
  %v619 = vpack.c.b16 %v469, %v467
  %v620 = vpack.c.b16 %v470, %v468
  %v621 = vpack.c.b16 %v473, %v471
  %v622 = vpack.c.b16 %v474, %v472
  %v623 = vpack.c.b16 %v477, %v475
  %v624 = vpack.c.b16 %v478, %v476
  %v625 = vpack.c.b16 %v481, %v479
  %v626 = vpack.c.b16 %v482, %v480
  %v627 = vpack.c.b16 %v485, %v483
  %v628 = vpack.c.b16 %v486, %v484
  %v629 = vpack.c.b16 %v489, %v487
  %v630 = vpack.c.b16 %v490, %v488
  %v631 = vpack.c.b16 %v493, %v491
  %v632 = vpack.c.b16 %v494, %v492
  %v633 = vpack.c.b16 %v497, %v495
  %v634 = vpack.c.b16 %v498, %v496
  %v635 = vpack.c.b16 %v501, %v499
  %v636 = vpack.c.b16 %v502, %v500
  %v637 = vpack.c.b16 %v505, %v503
  %v638 = vpack.c.b16 %v506, %v504
  %v639 = vpack.c.b16 %v509, %v507
  %v640 = vpack.c.b16 %v510, %v508
  %v641 = vpack.c.b16 %v513, %v511
  %v642 = vpack.c.b16 %v514, %v512
  %v643 = vpack.c.b16 %v517, %v515
  %v644 = vpack.c.b16 %v518, %v516
  %v645 = vpack.c.b16 %v521, %v519
  %v646 = vpack.c.b16 %v522, %v520
  %v647 = vpack.c.b16 %v525, %v523
  %v648 = vpack.c.b16 %v526, %v524
  %v649 = vpack.c.b16 %v527, %v527
  %v650 = vpack.c.b16 %v528, %v528
  %v735 = vunpack.c.l.b16 %v136
  %v736 = vunpack.c.l.b16 %v137
  %v737 = vunpack.c.l.b16 %v138
  %v738 = vunpack.c.l.b16 %v139
  %v739 = vunpack.c.l.b16 %v140
  %v740 = vunpack.c.l.b16 %v141
  %v741 = vunpack.c.l.b16 %v142
  %v742 = vunpack.c.l.b16 %v143
  %v743 = vunpack.c.l.b16 %v144
  %v744 = vunpack.c.l.b16 %v145
  %v745 = vunpack.c.l.b16 %v146
  %v746 = vunpack.c.l.b16 %v147
  %v747 = vunpack.c.l.b16 %v148
  %v748 = vunpack.c.l.b16 %v149
  %v749 = vunpack.c.l.b16 %v150
  %v750 = vunpack.c.l.b16 %v151
  %v751 = vunpack.c.l.b16 %v152
  %v752 = vunpack.c.l.b16 %v153
  %v753 = vunpack.c.l.b16 %v154
  %v754 = vunpack.c.l.b16 %v155
  %v755 = vunpack.c.l.b16 %v156
  %v756 = vunpack.c.l.b16 %v157
  %v757 = vunpack.c.l.b16 %v158
  %v758 = vpack.c.b16 %v736, %v735
  %v759 = vpack.c.b16 %v738, %v737
  %v760 = vpack.c.b16 %v740, %v739
  %v761 = vpack.c.b16 %v742, %v741
  %v762 = vpack.c.b16 %v744, %v743
  %v763 = vpack.c.b16 %v746, %v745
  %v764 = vpack.c.b16 %v748, %v747
  %v765 = vpack.c.b16 %v750, %v749
  %v766 = vpack.c.b16 %v752, %v751
  %v767 = vpack.c.b16 %v754, %v753
  %v768 = vpack.c.b16 %v756, %v755
  %v769 = vpack.c.b16 %v757, %v757
  %vm781 = vcmask 424960
  %v783 = vsel %vm781, %v530, 0
  %v786 = vsel %vm781, %v532, 0
  %v789 = vsel %vm781, %v534, 0
  %v792 = vsel %vm781, %v536, 0
  %v795 = vsel %vm781, %v538, 0
  %v798 = vsel %vm781, %v540, 0
  %v801 = vsel %vm781, %v542, 0
  %v804 = vsel %vm781, %v544, 0
  %v807 = vsel %vm781, %v546, 0
  %v810 = vsel %vm781, %v548, 0
  %v813 = vsel %vm781, %v550, 0
  %v816 = vsel %vm781, %v552, 0
  %v819 = vsel %vm781, %v554, 0
  %v822 = vsel %vm781, %v556, 0
  %v825 = vsel %vm781, %v558, 0
  %v828 = vsel %vm781, %v560, 0
  %v831 = vsel %vm781, %v562, 0
  %v834 = vsel %vm781, %v564, 0
  %v837 = vsel %vm781, %v566, 0
  %v840 = vsel %vm781, %v568, 0
  %v843 = vsel %vm781, %v570, 0
  %v846 = vsel %vm781, %v572, 0
  %v849 = vsel %vm781, %v574, 0
  %v852 = vsel %vm781, %v576, 0
  %v855 = vsel %vm781, %v578, 0
  %v858 = vsel %vm781, %v580, 0
  %v861 = vsel %vm781, %v582, 0
  %v864 = vsel %vm781, %v584, 0
  %v867 = vsel %vm781, %v586, 0
  %v870 = vsel %vm781, %v588, 0
  %v873 = vsel %vm781, %v590, 0
  %v876 = vsel %vm781, %v592, 0
  %v879 = vsel %vm781, %v594, 0
  %v882 = vsel %vm781, %v596, 0
  %v885 = vsel %vm781, %v598, 0
  %v888 = vsel %vm781, %v600, 0
  %v891 = vsel %vm781, %v602, 0
  %v894 = vsel %vm781, %v604, 0
  %v897 = vsel %vm781, %v606, 0
  %v900 = vsel %vm781, %v608, 0
  %v903 = vsel %vm781, %v610, 0
  %v906 = vsel %vm781, %v612, 0
  %v909 = vsel %vm781, %v614, 0
  %v912 = vsel %vm781, %v616, 0
  %v915 = vsel %vm781, %v618, 0
  %v918 = vsel %vm781, %v620, 0
  %v921 = vsel %vm781, %v622, 0
  %v924 = vsel %vm781, %v624, 0
  %v927 = vsel %vm781, %v626, 0
  %v930 = vsel %vm781, %v628, 0
  %v933 = vsel %vm781, %v630, 0
  %v936 = vsel %vm781, %v632, 0
  %v939 = vsel %vm781, %v634, 0
  %v942 = vsel %vm781, %v636, 0
  %v945 = vsel %vm781, %v638, 0
  %v948 = vsel %vm781, %v640, 0
  %v951 = vsel %vm781, %v642, 0
  %v954 = vsel %vm781, %v644, 0
  %v957 = vsel %vm781, %v646, 0
  %v960 = vsel %vm781, %v648, 0
  %v963 = vsel %vm781, %v650, 0
  %vm965 = vcmask 1041408
  %v967 = vsel %vm965, %v769, 0
  %969 = vmatprep.subr.bf16.mxu0 0
  %970 = vmatpush1.bf16.msra.mxu0 %v765
  %971 = vmatprep.subr.bf16.mxu0 0
  %972 = vmatpush1.bf16.msra.mxu0 %v764
  %973 = vmatprep.subr.bf16.mxu0 0
  %974 = vmatpush1.bf16.msra.mxu0 %v763
  %975 = vmatprep.subr.bf16.mxu0 0
  %976 = vmatpush1.bf16.msra.mxu0 %v762
  %977 = vmatprep.subr.bf16.mxu0 0
  %978 = vmatpush1.bf16.msra.mxu0 %v761
  %979 = vmatprep.subr.bf16.mxu0 0
  %980 = vmatpush1.bf16.msra.mxu0 %v760
  %981 = vmatprep.subr.bf16.mxu0 0
  %982 = vmatpush1.bf16.msra.mxu0 %v759
  %983 = vmatprep.subr.bf16.mxu0 0
  %984 = vmatpush1.bf16.msra.mxu0 %v758
  %985 = vmatprep.subr.bf16.mxu0 0
  %986 = vmatpush2.bf16.msra.mxu0 0
  %987 = vmatprep.subr.bf16.mxu0 0
  %988 = vmatpush2.bf16.msra.mxu0 0
  %989 = vmatprep.subr.bf16.mxu0 0
  %990 = vmatpush2.bf16.msra.mxu0 0
  %991 = vmatprep.subr.bf16.mxu0 0
  %992 = vmatpush2.bf16.msra.mxu0 0
  %993 = vmatprep.subr.bf16.mxu0 0
  %994 = vmatpush2.bf16.msra.mxu0 %v967
  %995 = vmatprep.subr.bf16.mxu0 0
  %996 = vmatpush2.bf16.msra.mxu0 %v768
  %997 = vmatprep.subr.bf16.mxu0 0
  %998 = vmatpush2.bf16.msra.mxu0 %v767
  %999 = vmatprep.subr.bf16.mxu0 0
  %1000 = vmatpush2.bf16.msra.mxu0 %v766
  %1001 = vmatprep.mubr.bf16.mxu0 %v783
  %1002 = vmatmul.mubr.bf16.gmra.mxu0 %v529
  %v1003 = vpop.f32.mrf.mxu0
  %v1004 = vadd.f32 %v164, %v1003
  %v1005 = vpop.f32.mrf.mxu0
  %v1006 = vpop.f32.mrf.mxu0
  %v1007 = vadd.f32 %v164, %v1006
  %v1008 = vpop.f32.mrf.mxu0
  %1009 = vmatprep.mubr.bf16.mxu0 %v786
  %1010 = vmatmul.mubr.bf16.gmra.mxu0 %v531
  %v1011 = vpop.f32.mrf.mxu0
  %v1012 = vadd.f32 %v164, %v1011
  %v1013 = vpop.f32.mrf.mxu0
  %v1014 = vpop.f32.mrf.mxu0
  %v1015 = vadd.f32 %v164, %v1014
  %v1016 = vpop.f32.mrf.mxu0
  %1017 = vmatprep.mubr.bf16.mxu0 %v789
  %1018 = vmatmul.mubr.bf16.gmra.mxu0 %v533
  %v1019 = vpop.f32.mrf.mxu0
  %v1020 = vadd.f32 %v164, %v1019
  %v1021 = vpop.f32.mrf.mxu0
  %v1022 = vpop.f32.mrf.mxu0
  %v1023 = vadd.f32 %v164, %v1022
  %v1024 = vpop.f32.mrf.mxu0
  %1025 = vmatprep.mubr.bf16.mxu0 %v792
  %1026 = vmatmul.mubr.bf16.gmra.mxu0 %v535
  %v1027 = vpop.f32.mrf.mxu0
  %v1028 = vadd.f32 %v164, %v1027
  %v1029 = vpop.f32.mrf.mxu0
  %v1030 = vpop.f32.mrf.mxu0
  %v1031 = vadd.f32 %v164, %v1030
  %v1032 = vpop.f32.mrf.mxu0
  %1033 = vmatprep.mubr.bf16.mxu0 %v795
  %1034 = vmatmul.mubr.bf16.gmra.mxu0 %v537
  %v1035 = vpop.f32.mrf.mxu0
  %v1036 = vadd.f32 %v164, %v1035
  %v1037 = vpop.f32.mrf.mxu0
  %v1038 = vpop.f32.mrf.mxu0
  %v1039 = vadd.f32 %v164, %v1038
  %v1040 = vpop.f32.mrf.mxu0
  %1041 = vmatprep.mubr.bf16.mxu0 %v798
  %1042 = vmatmul.mubr.bf16.gmra.mxu0 %v539
  %v1043 = vpop.f32.mrf.mxu0
  %v1044 = vadd.f32 %v164, %v1043
  %v1045 = vpop.f32.mrf.mxu0
  %v1046 = vpop.f32.mrf.mxu0
  %v1047 = vadd.f32 %v164, %v1046
  %v1048 = vpop.f32.mrf.mxu0
  %1049 = vmatprep.mubr.bf16.mxu0 %v801
  %1050 = vmatmul.mubr.bf16.gmra.mxu0 %v541
  %v1051 = vpop.f32.mrf.mxu0
  %v1052 = vadd.f32 %v164, %v1051
  %v1053 = vpop.f32.mrf.mxu0
  %v1054 = vpop.f32.mrf.mxu0
  %v1055 = vadd.f32 %v164, %v1054
  %v1056 = vpop.f32.mrf.mxu0
  %1057 = vmatprep.mubr.bf16.mxu0 %v804
  %1058 = vmatmul.mubr.bf16.gmra.mxu0 %v543
  %v1059 = vpop.f32.mrf.mxu0
  %v1060 = vadd.f32 %v164, %v1059
  %v1061 = vpop.f32.mrf.mxu0
  %v1062 = vpop.f32.mrf.mxu0
  %v1063 = vadd.f32 %v164, %v1062
  %v1064 = vpop.f32.mrf.mxu0
  %1065 = vmatprep.mubr.bf16.mxu0 %v807
  %1066 = vmatmul.mubr.bf16.gmra.mxu0 %v545
  %v1067 = vpop.f32.mrf.mxu0
  %v1068 = vadd.f32 %v164, %v1067
  %v1069 = vpop.f32.mrf.mxu0
  %v1070 = vpop.f32.mrf.mxu0
  %v1071 = vadd.f32 %v164, %v1070
  %v1072 = vpop.f32.mrf.mxu0
  %1073 = vmatprep.mubr.bf16.mxu0 %v810
  %1074 = vmatmul.mubr.bf16.gmra.mxu0 %v547
  %v1075 = vpop.f32.mrf.mxu0
  %v1076 = vadd.f32 %v164, %v1075
  %v1077 = vpop.f32.mrf.mxu0
  %v1078 = vpop.f32.mrf.mxu0
  %v1079 = vadd.f32 %v164, %v1078
  %v1080 = vpop.f32.mrf.mxu0
  %1081 = vmatprep.mubr.bf16.mxu0 %v813
  %1082 = vmatmul.mubr.bf16.gmra.mxu0 %v549
  %v1083 = vpop.f32.mrf.mxu0
  %v1084 = vadd.f32 %v164, %v1083
  %v1085 = vpop.f32.mrf.mxu0
  %v1086 = vpop.f32.mrf.mxu0
  %v1087 = vadd.f32 %v164, %v1086
  %v1088 = vpop.f32.mrf.mxu0
  %1089 = vmatprep.mubr.bf16.mxu0 %v816
  %1090 = vmatmul.mubr.bf16.gmra.mxu0 %v551
  %v1091 = vpop.f32.mrf.mxu0
  %v1092 = vadd.f32 %v164, %v1091
  %v1093 = vpop.f32.mrf.mxu0
  %v1094 = vpop.f32.mrf.mxu0
  %v1095 = vadd.f32 %v164, %v1094
  %v1096 = vpop.f32.mrf.mxu0
  %1097 = vmatprep.mubr.bf16.mxu0 %v819
  %1098 = vmatmul.mubr.bf16.gmra.mxu0 %v553
  %v1099 = vpop.f32.mrf.mxu0
  %v1100 = vadd.f32 %v164, %v1099
  %v1101 = vpop.f32.mrf.mxu0
  %v1102 = vpop.f32.mrf.mxu0
  %v1103 = vadd.f32 %v164, %v1102
  %v1104 = vpop.f32.mrf.mxu0
  %1105 = vmatprep.mubr.bf16.mxu0 %v822
  %1106 = vmatmul.mubr.bf16.gmra.mxu0 %v555
  %v1107 = vpop.f32.mrf.mxu0
  %v1108 = vadd.f32 %v164, %v1107
  %v1109 = vpop.f32.mrf.mxu0
  %v1110 = vpop.f32.mrf.mxu0
  %v1111 = vadd.f32 %v164, %v1110
  %v1112 = vpop.f32.mrf.mxu0
  %1113 = vmatprep.mubr.bf16.mxu0 %v825
  %1114 = vmatmul.mubr.bf16.gmra.mxu0 %v557
  %v1115 = vpop.f32.mrf.mxu0
  %v1116 = vadd.f32 %v164, %v1115
  %v1117 = vpop.f32.mrf.mxu0
  %v1118 = vpop.f32.mrf.mxu0
  %v1119 = vadd.f32 %v164, %v1118
  %v1120 = vpop.f32.mrf.mxu0
  %1121 = vmatprep.mubr.bf16.mxu0 %v828
  %1122 = vmatmul.mubr.bf16.gmra.mxu0 %v559
  %v1123 = vpop.f32.mrf.mxu0
  %v1124 = vadd.f32 %v164, %v1123
  %v1125 = vpop.f32.mrf.mxu0
  %v1126 = vpop.f32.mrf.mxu0
  %v1127 = vadd.f32 %v164, %v1126
  %v1128 = vpop.f32.mrf.mxu0
  %1129 = vmatprep.mubr.bf16.mxu0 %v831
  %1130 = vmatmul.mubr.bf16.gmra.mxu0 %v561
  %v1131 = vpop.f32.mrf.mxu0
  %v1132 = vadd.f32 %v164, %v1131
  %v1133 = vpop.f32.mrf.mxu0
  %v1134 = vpop.f32.mrf.mxu0
  %v1135 = vadd.f32 %v164, %v1134
  %v1136 = vpop.f32.mrf.mxu0
  %1137 = vmatprep.mubr.bf16.mxu0 %v834
  %1138 = vmatmul.mubr.bf16.gmra.mxu0 %v563
  %v1139 = vpop.f32.mrf.mxu0
  %v1140 = vadd.f32 %v164, %v1139
  %v1141 = vpop.f32.mrf.mxu0
  %v1142 = vpop.f32.mrf.mxu0
  %v1143 = vadd.f32 %v164, %v1142
  %v1144 = vpop.f32.mrf.mxu0
  %1145 = vmatprep.mubr.bf16.mxu0 %v837
  %1146 = vmatmul.mubr.bf16.gmra.mxu0 %v565
  %v1147 = vpop.f32.mrf.mxu0
  %v1148 = vadd.f32 %v164, %v1147
  %v1149 = vpop.f32.mrf.mxu0
  %v1150 = vpop.f32.mrf.mxu0
  %v1151 = vadd.f32 %v164, %v1150
  %v1152 = vpop.f32.mrf.mxu0
  %1153 = vmatprep.mubr.bf16.mxu0 %v840
  %1154 = vmatmul.mubr.bf16.gmra.mxu0 %v567
  %v1155 = vpop.f32.mrf.mxu0
  %v1156 = vadd.f32 %v164, %v1155
  %v1157 = vpop.f32.mrf.mxu0
  %v1158 = vpop.f32.mrf.mxu0
  %v1159 = vadd.f32 %v164, %v1158
  %v1160 = vpop.f32.mrf.mxu0
  %1161 = vmatprep.mubr.bf16.mxu0 %v843
  %1162 = vmatmul.mubr.bf16.gmra.mxu0 %v569
  %v1163 = vpop.f32.mrf.mxu0
  %v1164 = vadd.f32 %v164, %v1163
  %v1165 = vpop.f32.mrf.mxu0
  %v1166 = vpop.f32.mrf.mxu0
  %v1167 = vadd.f32 %v164, %v1166
  %v1168 = vpop.f32.mrf.mxu0
  %1169 = vmatprep.mubr.bf16.mxu0 %v846
  %1170 = vmatmul.mubr.bf16.gmra.mxu0 %v571
  %v1171 = vpop.f32.mrf.mxu0
  %v1172 = vadd.f32 %v164, %v1171
  %v1173 = vpop.f32.mrf.mxu0
  %v1174 = vpop.f32.mrf.mxu0
  %v1175 = vadd.f32 %v164, %v1174
  %v1176 = vpop.f32.mrf.mxu0
  %1177 = vmatprep.mubr.bf16.mxu0 %v849
  %1178 = vmatmul.mubr.bf16.gmra.mxu0 %v573
  %v1179 = vpop.f32.mrf.mxu0
  %v1180 = vadd.f32 %v164, %v1179
  %v1181 = vpop.f32.mrf.mxu0
  %v1182 = vpop.f32.mrf.mxu0
  %v1183 = vadd.f32 %v164, %v1182
  %v1184 = vpop.f32.mrf.mxu0
  %1185 = vmatprep.mubr.bf16.mxu0 %v852
  %1186 = vmatmul.mubr.bf16.gmra.mxu0 %v575
  %v1187 = vpop.f32.mrf.mxu0
  %v1188 = vadd.f32 %v164, %v1187
  %v1189 = vpop.f32.mrf.mxu0
  %v1190 = vpop.f32.mrf.mxu0
  %v1191 = vadd.f32 %v164, %v1190
  %v1192 = vpop.f32.mrf.mxu0
  %1193 = vmatprep.mubr.bf16.mxu0 %v855
  %1194 = vmatmul.mubr.bf16.gmra.mxu0 %v577
  %v1195 = vpop.f32.mrf.mxu0
  %v1196 = vadd.f32 %v164, %v1195
  %v1197 = vpop.f32.mrf.mxu0
  %v1198 = vpop.f32.mrf.mxu0
  %v1199 = vadd.f32 %v164, %v1198
  %v1200 = vpop.f32.mrf.mxu0
  %1201 = vmatprep.mubr.bf16.mxu0 %v858
  %1202 = vmatmul.mubr.bf16.gmra.mxu0 %v579
  %v1203 = vpop.f32.mrf.mxu0
  %v1204 = vadd.f32 %v164, %v1203
  %v1205 = vpop.f32.mrf.mxu0
  %v1206 = vpop.f32.mrf.mxu0
  %v1207 = vadd.f32 %v164, %v1206
  %v1208 = vpop.f32.mrf.mxu0
  %1209 = vmatprep.mubr.bf16.mxu0 %v861
  %1210 = vmatmul.mubr.bf16.gmra.mxu0 %v581
  %v1211 = vpop.f32.mrf.mxu0
  %v1212 = vadd.f32 %v164, %v1211
  %v1213 = vpop.f32.mrf.mxu0
  %v1214 = vpop.f32.mrf.mxu0
  %v1215 = vadd.f32 %v164, %v1214
  %v1216 = vpop.f32.mrf.mxu0
  %1217 = vmatprep.mubr.bf16.mxu0 %v864
  %1218 = vmatmul.mubr.bf16.gmra.mxu0 %v583
  %v1219 = vpop.f32.mrf.mxu0
  %v1220 = vadd.f32 %v164, %v1219
  %v1221 = vpop.f32.mrf.mxu0
  %v1222 = vpop.f32.mrf.mxu0
  %v1223 = vadd.f32 %v164, %v1222
  %v1224 = vpop.f32.mrf.mxu0
  %1225 = vmatprep.mubr.bf16.mxu0 %v867
  %1226 = vmatmul.mubr.bf16.gmra.mxu0 %v585
  %v1227 = vpop.f32.mrf.mxu0
  %v1228 = vadd.f32 %v164, %v1227
  %v1229 = vpop.f32.mrf.mxu0
  %v1230 = vpop.f32.mrf.mxu0
  %v1231 = vadd.f32 %v164, %v1230
  %v1232 = vpop.f32.mrf.mxu0
  %1233 = vmatprep.mubr.bf16.mxu0 %v870
  %1234 = vmatmul.mubr.bf16.gmra.mxu0 %v587
  %v1235 = vpop.f32.mrf.mxu0
  %v1236 = vadd.f32 %v164, %v1235
  %v1237 = vpop.f32.mrf.mxu0
  %v1238 = vpop.f32.mrf.mxu0
  %v1239 = vadd.f32 %v164, %v1238
  %v1240 = vpop.f32.mrf.mxu0
  %1241 = vmatprep.mubr.bf16.mxu0 %v873
  %1242 = vmatmul.mubr.bf16.gmra.mxu0 %v589
  %v1243 = vpop.f32.mrf.mxu0
  %v1244 = vadd.f32 %v164, %v1243
  %v1245 = vpop.f32.mrf.mxu0
  %v1246 = vpop.f32.mrf.mxu0
  %v1247 = vadd.f32 %v164, %v1246
  %v1248 = vpop.f32.mrf.mxu0
  %1249 = vmatprep.mubr.bf16.mxu0 %v876
  %1250 = vmatmul.mubr.bf16.gmra.mxu0 %v591
  %v1251 = vpop.f32.mrf.mxu0
  %v1252 = vadd.f32 %v164, %v1251
  %v1253 = vpop.f32.mrf.mxu0
  %v1254 = vpop.f32.mrf.mxu0
  %v1255 = vadd.f32 %v164, %v1254
  %v1256 = vpop.f32.mrf.mxu0
  %1257 = vmatprep.mubr.bf16.mxu0 %v879
  %1258 = vmatmul.mubr.bf16.gmra.mxu0 %v593
  %v1259 = vpop.f32.mrf.mxu0
  %v1260 = vadd.f32 %v164, %v1259
  %v1261 = vpop.f32.mrf.mxu0
  %v1262 = vpop.f32.mrf.mxu0
  %v1263 = vadd.f32 %v164, %v1262
  %v1264 = vpop.f32.mrf.mxu0
  %1265 = vmatprep.mubr.bf16.mxu0 %v882
  %1266 = vmatmul.mubr.bf16.gmra.mxu0 %v595
  %v1267 = vpop.f32.mrf.mxu0
  %v1268 = vadd.f32 %v164, %v1267
  %v1269 = vpop.f32.mrf.mxu0
  %v1270 = vpop.f32.mrf.mxu0
  %v1271 = vadd.f32 %v164, %v1270
  %v1272 = vpop.f32.mrf.mxu0
  %1273 = vmatprep.mubr.bf16.mxu0 %v885
  %1274 = vmatmul.mubr.bf16.gmra.mxu0 %v597
  %v1275 = vpop.f32.mrf.mxu0
  %v1276 = vadd.f32 %v164, %v1275
  %v1277 = vpop.f32.mrf.mxu0
  %v1278 = vpop.f32.mrf.mxu0
  %v1279 = vadd.f32 %v164, %v1278
  %v1280 = vpop.f32.mrf.mxu0
  %1281 = vmatprep.mubr.bf16.mxu0 %v888
  %1282 = vmatmul.mubr.bf16.gmra.mxu0 %v599
  %v1283 = vpop.f32.mrf.mxu0
  %v1284 = vadd.f32 %v164, %v1283
  %v1285 = vpop.f32.mrf.mxu0
  %v1286 = vpop.f32.mrf.mxu0
  %v1287 = vadd.f32 %v164, %v1286
  %v1288 = vpop.f32.mrf.mxu0
  %1289 = vmatprep.mubr.bf16.mxu0 %v891
  %1290 = vmatmul.mubr.bf16.gmra.mxu0 %v601
  %v1291 = vpop.f32.mrf.mxu0
  %v1292 = vadd.f32 %v164, %v1291
  %v1293 = vpop.f32.mrf.mxu0
  %v1294 = vpop.f32.mrf.mxu0
  %v1295 = vadd.f32 %v164, %v1294
  %v1296 = vpop.f32.mrf.mxu0
  %1297 = vmatprep.mubr.bf16.mxu0 %v894
  %1298 = vmatmul.mubr.bf16.gmra.mxu0 %v603
  %v1299 = vpop.f32.mrf.mxu0
  %v1300 = vadd.f32 %v164, %v1299
  %v1301 = vpop.f32.mrf.mxu0
  %v1302 = vpop.f32.mrf.mxu0
  %v1303 = vadd.f32 %v164, %v1302
  %v1304 = vpop.f32.mrf.mxu0
  %1305 = vmatprep.mubr.bf16.mxu0 %v897
  %1306 = vmatmul.mubr.bf16.gmra.mxu0 %v605
  %v1307 = vpop.f32.mrf.mxu0
  %v1308 = vadd.f32 %v164, %v1307
  %v1309 = vpop.f32.mrf.mxu0
  %v1310 = vpop.f32.mrf.mxu0
  %v1311 = vadd.f32 %v164, %v1310
  %v1312 = vpop.f32.mrf.mxu0
  %1313 = vmatprep.mubr.bf16.mxu0 %v900
  %1314 = vmatmul.mubr.bf16.gmra.mxu0 %v607
  %v1315 = vpop.f32.mrf.mxu0
  %v1316 = vadd.f32 %v164, %v1315
  %v1317 = vpop.f32.mrf.mxu0
  %v1318 = vpop.f32.mrf.mxu0
  %v1319 = vadd.f32 %v164, %v1318
  %v1320 = vpop.f32.mrf.mxu0
  %1321 = vmatprep.mubr.bf16.mxu0 %v903
  %1322 = vmatmul.mubr.bf16.gmra.mxu0 %v609
  %v1323 = vpop.f32.mrf.mxu0
  %v1324 = vadd.f32 %v164, %v1323
  %v1325 = vpop.f32.mrf.mxu0
  %v1326 = vpop.f32.mrf.mxu0
  %v1327 = vadd.f32 %v164, %v1326
  %v1328 = vpop.f32.mrf.mxu0
  %1329 = vmatprep.mubr.bf16.mxu0 %v906
  %1330 = vmatmul.mubr.bf16.gmra.mxu0 %v611
  %v1331 = vpop.f32.mrf.mxu0
  %v1332 = vadd.f32 %v164, %v1331
  %v1333 = vpop.f32.mrf.mxu0
  %v1334 = vpop.f32.mrf.mxu0
  %v1335 = vadd.f32 %v164, %v1334
  %v1336 = vpop.f32.mrf.mxu0
  %1337 = vmatprep.mubr.bf16.mxu0 %v909
  %1338 = vmatmul.mubr.bf16.gmra.mxu0 %v613
  %v1339 = vpop.f32.mrf.mxu0
  %v1340 = vadd.f32 %v164, %v1339
  %v1341 = vpop.f32.mrf.mxu0
  %v1342 = vpop.f32.mrf.mxu0
  %v1343 = vadd.f32 %v164, %v1342
  %v1344 = vpop.f32.mrf.mxu0
  %1345 = vmatprep.mubr.bf16.mxu0 %v912
  %1346 = vmatmul.mubr.bf16.gmra.mxu0 %v615
  %v1347 = vpop.f32.mrf.mxu0
  %v1348 = vadd.f32 %v164, %v1347
  %v1349 = vpop.f32.mrf.mxu0
  %v1350 = vpop.f32.mrf.mxu0
  %v1351 = vadd.f32 %v164, %v1350
  %v1352 = vpop.f32.mrf.mxu0
  %1353 = vmatprep.mubr.bf16.mxu0 %v915
  %1354 = vmatmul.mubr.bf16.gmra.mxu0 %v617
  %v1355 = vpop.f32.mrf.mxu0
  %v1356 = vadd.f32 %v164, %v1355
  %v1357 = vpop.f32.mrf.mxu0
  %v1358 = vpop.f32.mrf.mxu0
  %v1359 = vadd.f32 %v164, %v1358
  %v1360 = vpop.f32.mrf.mxu0
  %1361 = vmatprep.mubr.bf16.mxu0 %v918
  %1362 = vmatmul.mubr.bf16.gmra.mxu0 %v619
  %v1363 = vpop.f32.mrf.mxu0
  %v1364 = vadd.f32 %v164, %v1363
  %v1365 = vpop.f32.mrf.mxu0
  %v1366 = vpop.f32.mrf.mxu0
  %v1367 = vadd.f32 %v164, %v1366
  %v1368 = vpop.f32.mrf.mxu0
  %1369 = vmatprep.mubr.bf16.mxu0 %v921
  %1370 = vmatmul.mubr.bf16.gmra.mxu0 %v621
  %v1371 = vpop.f32.mrf.mxu0
  %v1372 = vadd.f32 %v164, %v1371
  %v1373 = vpop.f32.mrf.mxu0
  %v1374 = vpop.f32.mrf.mxu0
  %v1375 = vadd.f32 %v164, %v1374
  %v1376 = vpop.f32.mrf.mxu0
  %1377 = vmatprep.mubr.bf16.mxu0 %v924
  %1378 = vmatmul.mubr.bf16.gmra.mxu0 %v623
  %v1379 = vpop.f32.mrf.mxu0
  %v1380 = vadd.f32 %v164, %v1379
  %v1381 = vpop.f32.mrf.mxu0
  %v1382 = vpop.f32.mrf.mxu0
  %v1383 = vadd.f32 %v164, %v1382
  %v1384 = vpop.f32.mrf.mxu0
  %1385 = vmatprep.mubr.bf16.mxu0 %v927
  %1386 = vmatmul.mubr.bf16.gmra.mxu0 %v625
  %v1387 = vpop.f32.mrf.mxu0
  %v1388 = vadd.f32 %v164, %v1387
  %v1389 = vpop.f32.mrf.mxu0
  %v1390 = vpop.f32.mrf.mxu0
  %v1391 = vadd.f32 %v164, %v1390
  %v1392 = vpop.f32.mrf.mxu0
  %1393 = vmatprep.mubr.bf16.mxu0 %v930
  %1394 = vmatmul.mubr.bf16.gmra.mxu0 %v627
  %v1395 = vpop.f32.mrf.mxu0
  %v1396 = vadd.f32 %v164, %v1395
  %v1397 = vpop.f32.mrf.mxu0
  %v1398 = vpop.f32.mrf.mxu0
  %v1399 = vadd.f32 %v164, %v1398
  %v1400 = vpop.f32.mrf.mxu0
  %1401 = vmatprep.mubr.bf16.mxu0 %v933
  %1402 = vmatmul.mubr.bf16.gmra.mxu0 %v629
  %v1403 = vpop.f32.mrf.mxu0
  %v1404 = vadd.f32 %v164, %v1403
  %v1405 = vpop.f32.mrf.mxu0
  %v1406 = vpop.f32.mrf.mxu0
  %v1407 = vadd.f32 %v164, %v1406
  %v1408 = vpop.f32.mrf.mxu0
  %1409 = vmatprep.mubr.bf16.mxu0 %v936
  %1410 = vmatmul.mubr.bf16.gmra.mxu0 %v631
  %v1411 = vpop.f32.mrf.mxu0
  %v1412 = vadd.f32 %v164, %v1411
  %v1413 = vpop.f32.mrf.mxu0
  %v1414 = vpop.f32.mrf.mxu0
  %v1415 = vadd.f32 %v164, %v1414
  %v1416 = vpop.f32.mrf.mxu0
  %1417 = vmatprep.mubr.bf16.mxu0 %v939
  %1418 = vmatmul.mubr.bf16.gmra.mxu0 %v633
  %v1419 = vpop.f32.mrf.mxu0
  %v1420 = vadd.f32 %v164, %v1419
  %v1421 = vpop.f32.mrf.mxu0
  %v1422 = vpop.f32.mrf.mxu0
  %v1423 = vadd.f32 %v164, %v1422
  %v1424 = vpop.f32.mrf.mxu0
  %1425 = vmatprep.mubr.bf16.mxu0 %v942
  %1426 = vmatmul.mubr.bf16.gmra.mxu0 %v635
  %v1427 = vpop.f32.mrf.mxu0
  %v1428 = vadd.f32 %v164, %v1427
  %v1429 = vpop.f32.mrf.mxu0
  %v1430 = vpop.f32.mrf.mxu0
  %v1431 = vadd.f32 %v164, %v1430
  %v1432 = vpop.f32.mrf.mxu0
  %1433 = vmatprep.mubr.bf16.mxu0 %v945
  %1434 = vmatmul.mubr.bf16.gmra.mxu0 %v637
  %v1435 = vpop.f32.mrf.mxu0
  %v1436 = vadd.f32 %v164, %v1435
  %v1437 = vpop.f32.mrf.mxu0
  %v1438 = vpop.f32.mrf.mxu0
  %v1439 = vadd.f32 %v164, %v1438
  %v1440 = vpop.f32.mrf.mxu0
  %1441 = vmatprep.mubr.bf16.mxu0 %v948
  %1442 = vmatmul.mubr.bf16.gmra.mxu0 %v639
  %v1443 = vpop.f32.mrf.mxu0
  %v1444 = vadd.f32 %v164, %v1443
  %v1445 = vpop.f32.mrf.mxu0
  %v1446 = vpop.f32.mrf.mxu0
  %v1447 = vadd.f32 %v164, %v1446
  %v1448 = vpop.f32.mrf.mxu0
  %1449 = vmatprep.mubr.bf16.mxu0 %v951
  %1450 = vmatmul.mubr.bf16.gmra.mxu0 %v641
  %v1451 = vpop.f32.mrf.mxu0
  %v1452 = vadd.f32 %v164, %v1451
  %v1453 = vpop.f32.mrf.mxu0
  %v1454 = vpop.f32.mrf.mxu0
  %v1455 = vadd.f32 %v164, %v1454
  %v1456 = vpop.f32.mrf.mxu0
  %1457 = vmatprep.mubr.bf16.mxu0 %v954
  %1458 = vmatmul.mubr.bf16.gmra.mxu0 %v643
  %v1459 = vpop.f32.mrf.mxu0
  %v1460 = vadd.f32 %v164, %v1459
  %v1461 = vpop.f32.mrf.mxu0
  %v1462 = vpop.f32.mrf.mxu0
  %v1463 = vadd.f32 %v164, %v1462
  %v1464 = vpop.f32.mrf.mxu0
  %1465 = vmatprep.mubr.bf16.mxu0 %v957
  %1466 = vmatmul.mubr.bf16.gmra.mxu0 %v645
  %v1467 = vpop.f32.mrf.mxu0
  %v1468 = vadd.f32 %v164, %v1467
  %v1469 = vpop.f32.mrf.mxu0
  %v1470 = vpop.f32.mrf.mxu0
  %v1471 = vadd.f32 %v164, %v1470
  %v1472 = vpop.f32.mrf.mxu0
  %1473 = vmatprep.mubr.bf16.mxu0 %v960
  %1474 = vmatmul.mubr.bf16.gmra.mxu0 %v647
  %v1475 = vpop.f32.mrf.mxu0
  %v1476 = vadd.f32 %v164, %v1475
  %v1477 = vpop.f32.mrf.mxu0
  %v1478 = vpop.f32.mrf.mxu0
  %v1479 = vadd.f32 %v164, %v1478
  %v1480 = vpop.f32.mrf.mxu0
  %1481 = vmatprep.mubr.bf16.mxu0 %v963
  %1482 = vmatmul.mubr.bf16.gmra.mxu0 %v649
  %v1483 = vpop.f32.mrf.mxu0
  %v1484 = vadd.f32 %v164, %v1483
  %v1485 = vpop.f32.mrf.mxu0
  %v1486 = vpop.f32.mrf.mxu0
  %v1487 = vpop.f32.mrf.mxu0
  %1488 = vdwg.mxu0
  %v1489 = vmax.f32 %v1004, 0.0
  %v1490 = vmax.f32 %v1007, 0.0
  %v1491 = vmax.f32 %v1012, 0.0
  %v1492 = vmax.f32 %v1015, 0.0
  %v1493 = vmax.f32 %v1020, 0.0
  %v1494 = vmax.f32 %v1023, 0.0
  %v1495 = vmax.f32 %v1028, 0.0
  %v1496 = vmax.f32 %v1031, 0.0
  %v1497 = vmax.f32 %v1036, 0.0
  %v1498 = vmax.f32 %v1039, 0.0
  %v1499 = vmax.f32 %v1044, 0.0
  %v1500 = vmax.f32 %v1047, 0.0
  %v1501 = vmax.f32 %v1052, 0.0
  %v1502 = vmax.f32 %v1055, 0.0
  %v1503 = vmax.f32 %v1060, 0.0
  %v1504 = vmax.f32 %v1063, 0.0
  %v1505 = vmax.f32 %v1068, 0.0
  %v1506 = vmax.f32 %v1071, 0.0
  %v1507 = vmax.f32 %v1076, 0.0
  %v1508 = vmax.f32 %v1079, 0.0
  %v1509 = vmax.f32 %v1084, 0.0
  %v1510 = vmax.f32 %v1087, 0.0
  %v1511 = vmax.f32 %v1092, 0.0
  %v1512 = vmax.f32 %v1095, 0.0
  %v1513 = vmax.f32 %v1100, 0.0
  %v1514 = vmax.f32 %v1103, 0.0
  %v1515 = vmax.f32 %v1108, 0.0
  %v1516 = vmax.f32 %v1111, 0.0
  %v1517 = vmax.f32 %v1116, 0.0
  %v1518 = vmax.f32 %v1119, 0.0
  %v1519 = vmax.f32 %v1124, 0.0
  %v1520 = vmax.f32 %v1127, 0.0
  %v1521 = vmax.f32 %v1132, 0.0
  %v1522 = vmax.f32 %v1135, 0.0
  %v1523 = vmax.f32 %v1140, 0.0
  %v1524 = vmax.f32 %v1143, 0.0
  %v1525 = vmax.f32 %v1148, 0.0
  %v1526 = vmax.f32 %v1151, 0.0
  %v1527 = vmax.f32 %v1156, 0.0
  %v1528 = vmax.f32 %v1159, 0.0
  %v1529 = vmax.f32 %v1164, 0.0
  %v1530 = vmax.f32 %v1167, 0.0
  %v1531 = vmax.f32 %v1172, 0.0
  %v1532 = vmax.f32 %v1175, 0.0
  %v1533 = vmax.f32 %v1180, 0.0
  %v1534 = vmax.f32 %v1183, 0.0
  %v1535 = vmax.f32 %v1188, 0.0
  %v1536 = vmax.f32 %v1191, 0.0
  %v1537 = vmax.f32 %v1196, 0.0
  %v1538 = vmax.f32 %v1199, 0.0
  %v1539 = vmax.f32 %v1204, 0.0
  %v1540 = vmax.f32 %v1207, 0.0
  %v1541 = vmax.f32 %v1212, 0.0
  %v1542 = vmax.f32 %v1215, 0.0
  %v1543 = vmax.f32 %v1220, 0.0
  %v1544 = vmax.f32 %v1223, 0.0
  %v1545 = vmax.f32 %v1228, 0.0
  %v1546 = vmax.f32 %v1231, 0.0
  %v1547 = vmax.f32 %v1236, 0.0
  %v1548 = vmax.f32 %v1239, 0.0
  %v1549 = vmax.f32 %v1244, 0.0
  %v1550 = vmax.f32 %v1247, 0.0
  %v1551 = vmax.f32 %v1252, 0.0
  %v1552 = vmax.f32 %v1255, 0.0
  %v1553 = vmax.f32 %v1260, 0.0
  %v1554 = vmax.f32 %v1263, 0.0
  %v1555 = vmax.f32 %v1268, 0.0
  %v1556 = vmax.f32 %v1271, 0.0
  %v1557 = vmax.f32 %v1276, 0.0
  %v1558 = vmax.f32 %v1279, 0.0
  %v1559 = vmax.f32 %v1284, 0.0
  %v1560 = vmax.f32 %v1287, 0.0
  %v1561 = vmax.f32 %v1292, 0.0
  %v1562 = vmax.f32 %v1295, 0.0
  %v1563 = vmax.f32 %v1300, 0.0
  %v1564 = vmax.f32 %v1303, 0.0
  %v1565 = vmax.f32 %v1308, 0.0
  %v1566 = vmax.f32 %v1311, 0.0
  %v1567 = vmax.f32 %v1316, 0.0
  %v1568 = vmax.f32 %v1319, 0.0
  %v1569 = vmax.f32 %v1324, 0.0
  %v1570 = vmax.f32 %v1327, 0.0
  %v1571 = vmax.f32 %v1332, 0.0
  %v1572 = vmax.f32 %v1335, 0.0
  %v1573 = vmax.f32 %v1340, 0.0
  %v1574 = vmax.f32 %v1343, 0.0
  %v1575 = vmax.f32 %v1348, 0.0
  %v1576 = vmax.f32 %v1351, 0.0
  %v1577 = vmax.f32 %v1356, 0.0
  %v1578 = vmax.f32 %v1359, 0.0
  %v1579 = vmax.f32 %v1364, 0.0
  %v1580 = vmax.f32 %v1367, 0.0
  %v1581 = vmax.f32 %v1372, 0.0
  %v1582 = vmax.f32 %v1375, 0.0
  %v1583 = vmax.f32 %v1380, 0.0
  %v1584 = vmax.f32 %v1383, 0.0
  %v1585 = vmax.f32 %v1388, 0.0
  %v1586 = vmax.f32 %v1391, 0.0
  %v1587 = vmax.f32 %v1396, 0.0
  %v1588 = vmax.f32 %v1399, 0.0
  %v1589 = vmax.f32 %v1404, 0.0
  %v1590 = vmax.f32 %v1407, 0.0
  %v1591 = vmax.f32 %v1412, 0.0
  %v1592 = vmax.f32 %v1415, 0.0
  %v1593 = vmax.f32 %v1420, 0.0
  %v1594 = vmax.f32 %v1423, 0.0
  %v1595 = vmax.f32 %v1428, 0.0
  %v1596 = vmax.f32 %v1431, 0.0
  %v1597 = vmax.f32 %v1436, 0.0
  %v1598 = vmax.f32 %v1439, 0.0
  %v1599 = vmax.f32 %v1444, 0.0
  %v1600 = vmax.f32 %v1447, 0.0
  %v1601 = vmax.f32 %v1452, 0.0
  %v1602 = vmax.f32 %v1455, 0.0
  %v1603 = vmax.f32 %v1460, 0.0
  %v1604 = vmax.f32 %v1463, 0.0
  %v1605 = vmax.f32 %v1468, 0.0
  %v1606 = vmax.f32 %v1471, 0.0
  %v1607 = vmax.f32 %v1476, 0.0
  %v1608 = vmax.f32 %v1479, 0.0
  %v1609 = vmax.f32 %v1484, 0.0
  %v1610 = vpack.c.bf16 %v1490, %v1489
  %v1611 = vpack.c.bf16 %v1492, %v1491
  %v1612 = vpack.c.bf16 %v1494, %v1493
  %v1613 = vpack.c.bf16 %v1496, %v1495
  %v1614 = vpack.c.bf16 %v1498, %v1497
  %v1615 = vpack.c.bf16 %v1500, %v1499
  %v1616 = vpack.c.bf16 %v1502, %v1501
  %v1617 = vpack.c.bf16 %v1504, %v1503
  %v1618 = vpack.c.bf16 %v1506, %v1505
  %v1619 = vpack.c.bf16 %v1508, %v1507
  %v1620 = vpack.c.bf16 %v1510, %v1509
  %v1621 = vpack.c.bf16 %v1512, %v1511
  %v1622 = vpack.c.bf16 %v1514, %v1513
  %v1623 = vpack.c.bf16 %v1516, %v1515
  %v1624 = vpack.c.bf16 %v1518, %v1517
  %v1625 = vpack.c.bf16 %v1520, %v1519
  %v1626 = vpack.c.bf16 %v1522, %v1521
  %v1627 = vpack.c.bf16 %v1524, %v1523
  %v1628 = vpack.c.bf16 %v1526, %v1525
  %v1629 = vpack.c.bf16 %v1528, %v1527
  %v1630 = vpack.c.bf16 %v1530, %v1529
  %v1631 = vpack.c.bf16 %v1532, %v1531
  %v1632 = vpack.c.bf16 %v1534, %v1533
  %v1633 = vpack.c.bf16 %v1536, %v1535
  %v1634 = vpack.c.bf16 %v1538, %v1537
  %v1635 = vpack.c.bf16 %v1540, %v1539
  %v1636 = vpack.c.bf16 %v1542, %v1541
  %v1637 = vpack.c.bf16 %v1544, %v1543
  %v1638 = vpack.c.bf16 %v1546, %v1545
  %v1639 = vpack.c.bf16 %v1548, %v1547
  %v1640 = vpack.c.bf16 %v1550, %v1549
  %v1641 = vpack.c.bf16 %v1552, %v1551
  %v1642 = vpack.c.bf16 %v1554, %v1553
  %v1643 = vpack.c.bf16 %v1556, %v1555
  %v1644 = vpack.c.bf16 %v1558, %v1557
  %v1645 = vpack.c.bf16 %v1560, %v1559
  %v1646 = vpack.c.bf16 %v1562, %v1561
  %v1647 = vpack.c.bf16 %v1564, %v1563
  %v1648 = vpack.c.bf16 %v1566, %v1565
  %v1649 = vpack.c.bf16 %v1568, %v1567
  %v1650 = vpack.c.bf16 %v1570, %v1569
  %v1651 = vpack.c.bf16 %v1572, %v1571
  %v1652 = vpack.c.bf16 %v1574, %v1573
  %v1653 = vpack.c.bf16 %v1576, %v1575
  %v1654 = vpack.c.bf16 %v1578, %v1577
  %v1655 = vpack.c.bf16 %v1580, %v1579
  %v1656 = vpack.c.bf16 %v1582, %v1581
  %v1657 = vpack.c.bf16 %v1584, %v1583
  %v1658 = vpack.c.bf16 %v1586, %v1585
  %v1659 = vpack.c.bf16 %v1588, %v1587
  %v1660 = vpack.c.bf16 %v1590, %v1589
  %v1661 = vpack.c.bf16 %v1592, %v1591
  %v1662 = vpack.c.bf16 %v1594, %v1593
  %v1663 = vpack.c.bf16 %v1596, %v1595
  %v1664 = vpack.c.bf16 %v1598, %v1597
  %v1665 = vpack.c.bf16 %v1600, %v1599
  %v1666 = vpack.c.bf16 %v1602, %v1601
  %v1667 = vpack.c.bf16 %v1604, %v1603
  %v1668 = vpack.c.bf16 %v1606, %v1605
  %v1669 = vpack.c.bf16 %v1608, %v1607
  %v1670 = vpack.c.bf16 %v1609, %v1609
  %v1732 = vunpack.c.l.b16 %v1610
  %v1733 = vunpack.c.h.b16 %v1610
  %v1734 = vunpack.c.l.b16 %v1611
  %v1735 = vunpack.c.h.b16 %v1611
  %v1736 = vunpack.c.l.b16 %v1612
  %v1737 = vunpack.c.h.b16 %v1612
  %v1738 = vunpack.c.l.b16 %v1613
  %v1739 = vunpack.c.h.b16 %v1613
  %v1740 = vunpack.c.l.b16 %v1614
  %v1741 = vunpack.c.h.b16 %v1614
  %v1742 = vunpack.c.l.b16 %v1615
  %v1743 = vunpack.c.h.b16 %v1615
  %v1744 = vunpack.c.l.b16 %v1616
  %v1745 = vunpack.c.h.b16 %v1616
  %v1746 = vunpack.c.l.b16 %v1617
  %v1747 = vunpack.c.h.b16 %v1617
  %v1748 = vunpack.c.l.b16 %v1618
  %v1749 = vunpack.c.h.b16 %v1618
  %v1750 = vunpack.c.l.b16 %v1619
  %v1751 = vunpack.c.h.b16 %v1619
  %v1752 = vunpack.c.l.b16 %v1620
  %v1753 = vunpack.c.h.b16 %v1620
  %v1754 = vunpack.c.l.b16 %v1621
  %v1755 = vunpack.c.h.b16 %v1621
  %v1756 = vunpack.c.l.b16 %v1622
  %v1757 = vunpack.c.h.b16 %v1622
  %v1758 = vunpack.c.l.b16 %v1623
  %v1759 = vunpack.c.h.b16 %v1623
  %v1760 = vunpack.c.l.b16 %v1624
  %v1761 = vunpack.c.h.b16 %v1624
  %v1762 = vunpack.c.l.b16 %v1625
  %v1763 = vunpack.c.h.b16 %v1625
  %v1764 = vunpack.c.l.b16 %v1626
  %v1765 = vunpack.c.h.b16 %v1626
  %v1766 = vunpack.c.l.b16 %v1627
  %v1767 = vunpack.c.h.b16 %v1627
  %v1768 = vunpack.c.l.b16 %v1628
  %v1769 = vunpack.c.h.b16 %v1628
  %v1770 = vunpack.c.l.b16 %v1629
  %v1771 = vunpack.c.h.b16 %v1629
  %v1772 = vunpack.c.l.b16 %v1630
  %v1773 = vunpack.c.h.b16 %v1630
  %v1774 = vunpack.c.l.b16 %v1631
  %v1775 = vunpack.c.h.b16 %v1631
  %v1776 = vunpack.c.l.b16 %v1632
  %v1777 = vunpack.c.h.b16 %v1632
  %v1778 = vunpack.c.l.b16 %v1633
  %v1779 = vunpack.c.h.b16 %v1633
  %v1780 = vunpack.c.l.b16 %v1634
  %v1781 = vunpack.c.h.b16 %v1634
  %v1782 = vunpack.c.l.b16 %v1635
  %v1783 = vunpack.c.h.b16 %v1635
  %v1784 = vunpack.c.l.b16 %v1636
  %v1785 = vunpack.c.h.b16 %v1636
  %v1786 = vunpack.c.l.b16 %v1637
  %v1787 = vunpack.c.h.b16 %v1637
  %v1788 = vunpack.c.l.b16 %v1638
  %v1789 = vunpack.c.h.b16 %v1638
  %v1790 = vunpack.c.l.b16 %v1639
  %v1791 = vunpack.c.h.b16 %v1639
  %v1792 = vunpack.c.l.b16 %v1640
  %v1793 = vunpack.c.h.b16 %v1640
  %v1794 = vunpack.c.l.b16 %v1641
  %v1795 = vunpack.c.h.b16 %v1641
  %v1796 = vunpack.c.l.b16 %v1642
  %v1797 = vunpack.c.h.b16 %v1642
  %v1798 = vunpack.c.l.b16 %v1643
  %v1799 = vunpack.c.h.b16 %v1643
  %v1800 = vunpack.c.l.b16 %v1644
  %v1801 = vunpack.c.h.b16 %v1644
  %v1802 = vunpack.c.l.b16 %v1645
  %v1803 = vunpack.c.h.b16 %v1645
  %v1804 = vunpack.c.l.b16 %v1646
  %v1805 = vunpack.c.h.b16 %v1646
  %v1806 = vunpack.c.l.b16 %v1647
  %v1807 = vunpack.c.h.b16 %v1647
  %v1808 = vunpack.c.l.b16 %v1648
  %v1809 = vunpack.c.h.b16 %v1648
  %v1810 = vunpack.c.l.b16 %v1649
  %v1811 = vunpack.c.h.b16 %v1649
  %v1812 = vunpack.c.l.b16 %v1650
  %v1813 = vunpack.c.h.b16 %v1650
  %v1814 = vunpack.c.l.b16 %v1651
  %v1815 = vunpack.c.h.b16 %v1651
  %v1816 = vunpack.c.l.b16 %v1652
  %v1817 = vunpack.c.h.b16 %v1652
  %v1818 = vunpack.c.l.b16 %v1653
  %v1819 = vunpack.c.h.b16 %v1653
  %v1820 = vunpack.c.l.b16 %v1654
  %v1821 = vunpack.c.h.b16 %v1654
  %v1822 = vunpack.c.l.b16 %v1655
  %v1823 = vunpack.c.h.b16 %v1655
  %v1824 = vunpack.c.l.b16 %v1656
  %v1825 = vunpack.c.h.b16 %v1656
  %v1826 = vunpack.c.l.b16 %v1657
  %v1827 = vunpack.c.h.b16 %v1657
  %v1828 = vunpack.c.l.b16 %v1658
  %v1829 = vunpack.c.h.b16 %v1658
  %v1830 = vunpack.c.l.b16 %v1659
  %v1831 = vunpack.c.h.b16 %v1659
  %v1832 = vunpack.c.l.b16 %v1660
  %v1833 = vunpack.c.h.b16 %v1660
  %v1834 = vunpack.c.l.b16 %v1661
  %v1835 = vunpack.c.h.b16 %v1661
  %v1836 = vunpack.c.l.b16 %v1662
  %v1837 = vunpack.c.h.b16 %v1662
  %v1838 = vunpack.c.l.b16 %v1663
  %v1839 = vunpack.c.h.b16 %v1663
  %v1840 = vunpack.c.l.b16 %v1664
  %v1841 = vunpack.c.h.b16 %v1664
  %v1842 = vunpack.c.l.b16 %v1665
  %v1843 = vunpack.c.h.b16 %v1665
  %v1844 = vunpack.c.l.b16 %v1666
  %v1845 = vunpack.c.h.b16 %v1666
  %v1846 = vunpack.c.l.b16 %v1667
  %v1847 = vunpack.c.h.b16 %v1667
  %v1848 = vunpack.c.l.b16 %v1668
  %v1849 = vunpack.c.h.b16 %v1668
  %v1850 = vunpack.c.l.b16 %v1669
  %v1851 = vunpack.c.h.b16 %v1669
  %v1852 = vunpack.c.l.b16 %v1670
  %v1853 = vpack.c.b16 %v1732, %v1732
  %v1854 = vpack.c.b16 %v1733, %v1733
  %v1855 = vpack.c.b16 %v1734, %v1734
  %v1856 = vpack.c.b16 %v1735, %v1735
  %v1857 = vpack.c.b16 %v1736, %v1736
  %v1858 = vpack.c.b16 %v1737, %v1737
  %v1859 = vpack.c.b16 %v1738, %v1738
  %v1860 = vpack.c.b16 %v1739, %v1739
  %v1861 = vpack.c.b16 %v1740, %v1740
  %v1862 = vpack.c.b16 %v1741, %v1741
  %v1863 = vpack.c.b16 %v1742, %v1742
  %v1864 = vpack.c.b16 %v1743, %v1743
  %v1865 = vpack.c.b16 %v1744, %v1744
  %v1866 = vpack.c.b16 %v1745, %v1745
  %v1867 = vpack.c.b16 %v1746, %v1746
  %v1868 = vpack.c.b16 %v1747, %v1747
  %v1869 = vpack.c.b16 %v1748, %v1748
  %v1870 = vpack.c.b16 %v1749, %v1749
  %v1871 = vpack.c.b16 %v1750, %v1750
  %v1872 = vpack.c.b16 %v1751, %v1751
  %v1873 = vpack.c.b16 %v1752, %v1752
  %v1874 = vpack.c.b16 %v1753, %v1753
  %v1875 = vpack.c.b16 %v1754, %v1754
  %v1876 = vpack.c.b16 %v1755, %v1755
  %v1877 = vpack.c.b16 %v1756, %v1756
  %v1878 = vpack.c.b16 %v1757, %v1757
  %v1879 = vpack.c.b16 %v1758, %v1758
  %v1880 = vpack.c.b16 %v1759, %v1759
  %v1881 = vpack.c.b16 %v1760, %v1760
  %v1882 = vpack.c.b16 %v1761, %v1761
  %v1883 = vpack.c.b16 %v1762, %v1762
  %v1884 = vpack.c.b16 %v1763, %v1763
  %v1885 = vpack.c.b16 %v1764, %v1764
  %v1886 = vpack.c.b16 %v1765, %v1765
  %v1887 = vpack.c.b16 %v1766, %v1766
  %v1888 = vpack.c.b16 %v1767, %v1767
  %v1889 = vpack.c.b16 %v1768, %v1768
  %v1890 = vpack.c.b16 %v1769, %v1769
  %v1891 = vpack.c.b16 %v1770, %v1770
  %v1892 = vpack.c.b16 %v1771, %v1771
  %v1893 = vpack.c.b16 %v1772, %v1772
  %v1894 = vpack.c.b16 %v1773, %v1773
  %v1895 = vpack.c.b16 %v1774, %v1774
  %v1896 = vpack.c.b16 %v1775, %v1775
  %v1897 = vpack.c.b16 %v1776, %v1776
  %v1898 = vpack.c.b16 %v1777, %v1777
  %v1899 = vpack.c.b16 %v1778, %v1778
  %v1900 = vpack.c.b16 %v1779, %v1779
  %v1901 = vpack.c.b16 %v1780, %v1780
  %v1902 = vpack.c.b16 %v1781, %v1781
  %v1903 = vpack.c.b16 %v1782, %v1782
  %v1904 = vpack.c.b16 %v1783, %v1783
  %v1905 = vpack.c.b16 %v1784, %v1784
  %v1906 = vpack.c.b16 %v1785, %v1785
  %v1907 = vpack.c.b16 %v1786, %v1786
  %v1908 = vpack.c.b16 %v1787, %v1787
  %v1909 = vpack.c.b16 %v1788, %v1788
  %v1910 = vpack.c.b16 %v1789, %v1789
  %v1911 = vpack.c.b16 %v1790, %v1790
  %v1912 = vpack.c.b16 %v1791, %v1791
  %v1913 = vpack.c.b16 %v1792, %v1792
  %v1914 = vpack.c.b16 %v1793, %v1793
  %v1915 = vpack.c.b16 %v1794, %v1794
  %v1916 = vpack.c.b16 %v1795, %v1795
  %v1917 = vpack.c.b16 %v1796, %v1796
  %v1918 = vpack.c.b16 %v1797, %v1797
  %v1919 = vpack.c.b16 %v1798, %v1798
  %v1920 = vpack.c.b16 %v1799, %v1799
  %v1921 = vpack.c.b16 %v1800, %v1800
  %v1922 = vpack.c.b16 %v1801, %v1801
  %v1923 = vpack.c.b16 %v1802, %v1802
  %v1924 = vpack.c.b16 %v1803, %v1803
  %v1925 = vpack.c.b16 %v1804, %v1804
  %v1926 = vpack.c.b16 %v1805, %v1805
  %v1927 = vpack.c.b16 %v1806, %v1806
  %v1928 = vpack.c.b16 %v1807, %v1807
  %v1929 = vpack.c.b16 %v1808, %v1808
  %v1930 = vpack.c.b16 %v1809, %v1809
  %v1931 = vpack.c.b16 %v1810, %v1810
  %v1932 = vpack.c.b16 %v1811, %v1811
  %v1933 = vpack.c.b16 %v1812, %v1812
  %v1934 = vpack.c.b16 %v1813, %v1813
  %v1935 = vpack.c.b16 %v1814, %v1814
  %v1936 = vpack.c.b16 %v1815, %v1815
  %v1937 = vpack.c.b16 %v1816, %v1816
  %v1938 = vpack.c.b16 %v1817, %v1817
  %v1939 = vpack.c.b16 %v1818, %v1818
  %v1940 = vpack.c.b16 %v1819, %v1819
  %v1941 = vpack.c.b16 %v1820, %v1820
  %v1942 = vpack.c.b16 %v1821, %v1821
  %v1943 = vpack.c.b16 %v1822, %v1822
  %v1944 = vpack.c.b16 %v1823, %v1823
  %v1945 = vpack.c.b16 %v1824, %v1824
  %v1946 = vpack.c.b16 %v1825, %v1825
  %v1947 = vpack.c.b16 %v1826, %v1826
  %v1948 = vpack.c.b16 %v1827, %v1827
  %v1949 = vpack.c.b16 %v1828, %v1828
  %v1950 = vpack.c.b16 %v1829, %v1829
  %v1951 = vpack.c.b16 %v1830, %v1830
  %v1952 = vpack.c.b16 %v1831, %v1831
  %v1953 = vpack.c.b16 %v1832, %v1832
  %v1954 = vpack.c.b16 %v1833, %v1833
  %v1955 = vpack.c.b16 %v1834, %v1834
  %v1956 = vpack.c.b16 %v1835, %v1835
  %v1957 = vpack.c.b16 %v1836, %v1836
  %v1958 = vpack.c.b16 %v1837, %v1837
  %v1959 = vpack.c.b16 %v1838, %v1838
  %v1960 = vpack.c.b16 %v1839, %v1839
  %v1961 = vpack.c.b16 %v1840, %v1840
  %v1962 = vpack.c.b16 %v1841, %v1841
  %v1963 = vpack.c.b16 %v1842, %v1842
  %v1964 = vpack.c.b16 %v1843, %v1843
  %v1965 = vpack.c.b16 %v1844, %v1844
  %v1966 = vpack.c.b16 %v1845, %v1845
  %v1967 = vpack.c.b16 %v1846, %v1846
  %v1968 = vpack.c.b16 %v1847, %v1847
  %v1969 = vpack.c.b16 %v1848, %v1848
  %v1970 = vpack.c.b16 %v1849, %v1849
  %v1971 = vpack.c.b16 %v1850, %v1850
  %v1972 = vpack.c.b16 %v1851, %v1851
  %v1973 = vpack.c.b16 %v1852, %v1852
  %vm2095 = vcmask 322560
  %2096 = vst.msk [vmem:[%s3] sm:$0xf] %vm2095, %v1853
  %2097 = vst.msk [vmem:[%s3 + $0x4] sm:$0xf] %vm2095, %v1854
  %2098 = vst.msk [vmem:[%s3 + $0x8] sm:$0xf] %vm2095, %v1855
  %2099 = vst.msk [vmem:[%s3 + $0xc] sm:$0xf] %vm2095, %v1856
  %2100 = vst.msk [vmem:[%s3 + $0x10] sm:$0xf] %vm2095, %v1857
  %2101 = vst.msk [vmem:[%s3 + $0x14] sm:$0xf] %vm2095, %v1858
  %2102 = vst.msk [vmem:[%s3 + $0x18] sm:$0xf] %vm2095, %v1859
  %2103 = vst.msk [vmem:[%s3 + $0x1c] sm:$0xf] %vm2095, %v1860
  %2104 = vst.msk [vmem:[%s3 + $0x20] sm:$0xf] %vm2095, %v1861
  %2105 = vst.msk [vmem:[%s3 + $0x24] sm:$0xf] %vm2095, %v1862
  %2106 = vst.msk [vmem:[%s3 + $0x28] sm:$0xf] %vm2095, %v1863
  %2107 = vst.msk [vmem:[%s3 + $0x2c] sm:$0xf] %vm2095, %v1864
  %2108 = vst.msk [vmem:[%s3 + $0x30] sm:$0xf] %vm2095, %v1865
  %2109 = vst.msk [vmem:[%s3 + $0x34] sm:$0xf] %vm2095, %v1866
  %2110 = vst.msk [vmem:[%s3 + $0x38] sm:$0xf] %vm2095, %v1867
  %2111 = vst.msk [vmem:[%s3 + $0x3c] sm:$0xf] %vm2095, %v1868
  %2112 = vst.msk [vmem:[%s3 + $0x40] sm:$0xf] %vm2095, %v1869
  %2113 = vst.msk [vmem:[%s3 + $0x44] sm:$0xf] %vm2095, %v1870
  %2114 = vst.msk [vmem:[%s3 + $0x48] sm:$0xf] %vm2095, %v1871
  %2115 = vst.msk [vmem:[%s3 + $0x4c] sm:$0xf] %vm2095, %v1872
  %2116 = vst.msk [vmem:[%s3 + $0x50] sm:$0xf] %vm2095, %v1873
  %2117 = vst.msk [vmem:[%s3 + $0x54] sm:$0xf] %vm2095, %v1874
  %2118 = vst.msk [vmem:[%s3 + $0x58] sm:$0xf] %vm2095, %v1875
  %2119 = vst.msk [vmem:[%s3 + $0x5c] sm:$0xf] %vm2095, %v1876
  %2120 = vst.msk [vmem:[%s3 + $0x60] sm:$0xf] %vm2095, %v1877
  %2121 = vst.msk [vmem:[%s3 + $0x64] sm:$0xf] %vm2095, %v1878
  %2122 = vst.msk [vmem:[%s3 + $0x68] sm:$0xf] %vm2095, %v1879
  %2123 = vst.msk [vmem:[%s3 + $0x6c] sm:$0xf] %vm2095, %v1880
  %2124 = vst.msk [vmem:[%s3 + $0x70] sm:$0xf] %vm2095, %v1881
  %2125 = vst.msk [vmem:[%s3 + $0x74] sm:$0xf] %vm2095, %v1882
  %2126 = vst.msk [vmem:[%s3 + $0x78] sm:$0xf] %vm2095, %v1883
  %2127 = vst.msk [vmem:[%s3 + $0x7c] sm:$0xf] %vm2095, %v1884
  %2128 = vst.msk [vmem:[%s3 + $0x80] sm:$0xf] %vm2095, %v1885
  %2129 = vst.msk [vmem:[%s3 + $0x84] sm:$0xf] %vm2095, %v1886
  %2130 = vst.msk [vmem:[%s3 + $0x88] sm:$0xf] %vm2095, %v1887
  %2131 = vst.msk [vmem:[%s3 + $0x8c] sm:$0xf] %vm2095, %v1888
  %2132 = vst.msk [vmem:[%s3 + $0x90] sm:$0xf] %vm2095, %v1889
  %2133 = vst.msk [vmem:[%s3 + $0x94] sm:$0xf] %vm2095, %v1890
  %2134 = vst.msk [vmem:[%s3 + $0x98] sm:$0xf] %vm2095, %v1891
  %2135 = vst.msk [vmem:[%s3 + $0x9c] sm:$0xf] %vm2095, %v1892
  %2136 = vst.msk [vmem:[%s3 + $0xa0] sm:$0xf] %vm2095, %v1893
  %2137 = vst.msk [vmem:[%s3 + $0xa4] sm:$0xf] %vm2095, %v1894
  %2138 = vst.msk [vmem:[%s3 + $0xa8] sm:$0xf] %vm2095, %v1895
  %2139 = vst.msk [vmem:[%s3 + $0xac] sm:$0xf] %vm2095, %v1896
  %2140 = vst.msk [vmem:[%s3 + $0xb0] sm:$0xf] %vm2095, %v1897
  %2141 = vst.msk [vmem:[%s3 + $0xb4] sm:$0xf] %vm2095, %v1898
  %2142 = vst.msk [vmem:[%s3 + $0xb8] sm:$0xf] %vm2095, %v1899
  %2143 = vst.msk [vmem:[%s3 + $0xbc] sm:$0xf] %vm2095, %v1900
  %2144 = vst.msk [vmem:[%s3 + $0xc0] sm:$0xf] %vm2095, %v1901
  %2145 = vst.msk [vmem:[%s3 + $0xc4] sm:$0xf] %vm2095, %v1902
  %2146 = vst.msk [vmem:[%s3 + $0xc8] sm:$0xf] %vm2095, %v1903
  %2147 = vst.msk [vmem:[%s3 + $0xcc] sm:$0xf] %vm2095, %v1904
  %2148 = vst.msk [vmem:[%s3 + $0xd0] sm:$0xf] %vm2095, %v1905
  %2149 = vst.msk [vmem:[%s3 + $0xd4] sm:$0xf] %vm2095, %v1906
  %2150 = vst.msk [vmem:[%s3 + $0xd8] sm:$0xf] %vm2095, %v1907
  %2151 = vst.msk [vmem:[%s3 + $0xdc] sm:$0xf] %vm2095, %v1908
  %2152 = vst.msk [vmem:[%s3 + $0xe0] sm:$0xf] %vm2095, %v1909
  %2153 = vst.msk [vmem:[%s3 + $0xe4] sm:$0xf] %vm2095, %v1910
  %2154 = vst.msk [vmem:[%s3 + $0xe8] sm:$0xf] %vm2095, %v1911
  %2155 = vst.msk [vmem:[%s3 + $0xec] sm:$0xf] %vm2095, %v1912
  %2156 = vst.msk [vmem:[%s3 + $0xf0] sm:$0xf] %vm2095, %v1913
  %2157 = vst.msk [vmem:[%s3 + $0xf4] sm:$0xf] %vm2095, %v1914
  %2158 = vst.msk [vmem:[%s3 + $0xf8] sm:$0xf] %vm2095, %v1915
  %2159 = vst.msk [vmem:[%s3 + $0xfc] sm:$0xf] %vm2095, %v1916
  %2160 = vst.msk [vmem:[%s3 + $0x100] sm:$0xf] %vm2095, %v1917
  %2161 = vst.msk [vmem:[%s3 + $0x104] sm:$0xf] %vm2095, %v1918
  %2162 = vst.msk [vmem:[%s3 + $0x108] sm:$0xf] %vm2095, %v1919
  %2163 = vst.msk [vmem:[%s3 + $0x10c] sm:$0xf] %vm2095, %v1920
  %2164 = vst.msk [vmem:[%s3 + $0x110] sm:$0xf] %vm2095, %v1921
  %2165 = vst.msk [vmem:[%s3 + $0x114] sm:$0xf] %vm2095, %v1922
  %2166 = vst.msk [vmem:[%s3 + $0x118] sm:$0xf] %vm2095, %v1923
  %2167 = vst.msk [vmem:[%s3 + $0x11c] sm:$0xf] %vm2095, %v1924
  %2168 = vst.msk [vmem:[%s3 + $0x120] sm:$0xf] %vm2095, %v1925
  %2169 = vst.msk [vmem:[%s3 + $0x124] sm:$0xf] %vm2095, %v1926
  %2170 = vst.msk [vmem:[%s3 + $0x128] sm:$0xf] %vm2095, %v1927
  %2171 = vst.msk [vmem:[%s3 + $0x12c] sm:$0xf] %vm2095, %v1928
  %2172 = vst.msk [vmem:[%s3 + $0x130] sm:$0xf] %vm2095, %v1929
  %2173 = vst.msk [vmem:[%s3 + $0x134] sm:$0xf] %vm2095, %v1930
  %2174 = vst.msk [vmem:[%s3 + $0x138] sm:$0xf] %vm2095, %v1931
  %2175 = vst.msk [vmem:[%s3 + $0x13c] sm:$0xf] %vm2095, %v1932
  %2176 = vst.msk [vmem:[%s3 + $0x140] sm:$0xf] %vm2095, %v1933
  %2177 = vst.msk [vmem:[%s3 + $0x144] sm:$0xf] %vm2095, %v1934
  %2178 = vst.msk [vmem:[%s3 + $0x148] sm:$0xf] %vm2095, %v1935
  %2179 = vst.msk [vmem:[%s3 + $0x14c] sm:$0xf] %vm2095, %v1936
  %2180 = vst.msk [vmem:[%s3 + $0x150] sm:$0xf] %vm2095, %v1937
  %2181 = vst.msk [vmem:[%s3 + $0x154] sm:$0xf] %vm2095, %v1938
  %2182 = vst.msk [vmem:[%s3 + $0x158] sm:$0xf] %vm2095, %v1939
  %2183 = vst.msk [vmem:[%s3 + $0x15c] sm:$0xf] %vm2095, %v1940
  %2184 = vst.msk [vmem:[%s3 + $0x160] sm:$0xf] %vm2095, %v1941
  %2185 = vst.msk [vmem:[%s3 + $0x164] sm:$0xf] %vm2095, %v1942
  %2186 = vst.msk [vmem:[%s3 + $0x168] sm:$0xf] %vm2095, %v1943
  %2187 = vst.msk [vmem:[%s3 + $0x16c] sm:$0xf] %vm2095, %v1944
  %2188 = vst.msk [vmem:[%s3 + $0x170] sm:$0xf] %vm2095, %v1945
  %2189 = vst.msk [vmem:[%s3 + $0x174] sm:$0xf] %vm2095, %v1946
  %2190 = vst.msk [vmem:[%s3 + $0x178] sm:$0xf] %vm2095, %v1947
  %2191 = vst.msk [vmem:[%s3 + $0x17c] sm:$0xf] %vm2095, %v1948
  %2192 = vst.msk [vmem:[%s3 + $0x180] sm:$0xf] %vm2095, %v1949
  %2193 = vst.msk [vmem:[%s3 + $0x184] sm:$0xf] %vm2095, %v1950
  %2194 = vst.msk [vmem:[%s3 + $0x188] sm:$0xf] %vm2095, %v1951
  %2195 = vst.msk [vmem:[%s3 + $0x18c] sm:$0xf] %vm2095, %v1952
  %2196 = vst.msk [vmem:[%s3 + $0x190] sm:$0xf] %vm2095, %v1953
  %2197 = vst.msk [vmem:[%s3 + $0x194] sm:$0xf] %vm2095, %v1954
  %2198 = vst.msk [vmem:[%s3 + $0x198] sm:$0xf] %vm2095, %v1955
  %2199 = vst.msk [vmem:[%s3 + $0x19c] sm:$0xf] %vm2095, %v1956
  %2200 = vst.msk [vmem:[%s3 + $0x1a0] sm:$0xf] %vm2095, %v1957
  %2201 = vst.msk [vmem:[%s3 + $0x1a4] sm:$0xf] %vm2095, %v1958
  %2202 = vst.msk [vmem:[%s3 + $0x1a8] sm:$0xf] %vm2095, %v1959
  %2203 = vst.msk [vmem:[%s3 + $0x1ac] sm:$0xf] %vm2095, %v1960
  %2204 = vst.msk [vmem:[%s3 + $0x1b0] sm:$0xf] %vm2095, %v1961
  %2205 = vst.msk [vmem:[%s3 + $0x1b4] sm:$0xf] %vm2095, %v1962
  %2206 = vst.msk [vmem:[%s3 + $0x1b8] sm:$0xf] %vm2095, %v1963
  %2207 = vst.msk [vmem:[%s3 + $0x1bc] sm:$0xf] %vm2095, %v1964
  %2208 = vst.msk [vmem:[%s3 + $0x1c0] sm:$0xf] %vm2095, %v1965
  %2209 = vst.msk [vmem:[%s3 + $0x1c4] sm:$0xf] %vm2095, %v1966
  %2210 = vst.msk [vmem:[%s3 + $0x1c8] sm:$0xf] %vm2095, %v1967
  %2211 = vst.msk [vmem:[%s3 + $0x1cc] sm:$0xf] %vm2095, %v1968
  %2212 = vst.msk [vmem:[%s3 + $0x1d0] sm:$0xf] %vm2095, %v1969
  %2213 = vst.msk [vmem:[%s3 + $0x1d4] sm:$0xf] %vm2095, %v1970
  %2214 = vst.msk [vmem:[%s3 + $0x1d8] sm:$0xf] %vm2095, %v1971
  %2215 = vst.msk [vmem:[%s3 + $0x1dc] sm:$0xf] %vm2095, %v1972
  %2216 = vst.msk [vmem:[%s3 + $0x1e0] sm:$0xf] %vm2095, %v1973
  // Predicated region
  $region14: #{critic_forward.8} parent=0 // pred_check
    _
  $region15: #{critic_forward.8} parent=0 // pred_check_branch
    %2218 = sbr.rel (0) target = $region17
  $region16: #{critic_forward.8} parent=0 // pred_region
    _
  $region17: #{critic_forward.8} parent=0 // pred_fallthru
    _
  // Predicated region
  $region18: #{critic_forward.8} parent=0 // pred_check
    _
  $region19: #{critic_forward.8} parent=0 // pred_check_branch
    %2220 = sbr.rel (0) target = $region21
  $region20: #{critic_forward.8} parent=0 // pred_region
    _
  $region21: #{critic_forward.8} parent=0 // pred_fallthru
    _

// kernel: critic_forward.9
$region0: #{critic_forward.9}
  #allocation0 [shape = 'u32[]', space=smem, size = 0x4, offset = 0x4, fixed_abs, tag = 'smem constant byte address 0x4 - core index']
  #allocation1 [shape = 'u32[144,128]{1,0:T(1,128)}', space=vmem, size = 0x12000, scoped, tag = 'internal scratch']
  %s0 = inlined_call_operand.vmem [shape: bf16[242,40], index: 0, kind: input, shape index: {}]
  %s1 = inlined_call_operand.vmem [shape: bf16[242,40], index: 1, kind: input, shape index: {}]
  %s2 = inlined_call_operand.vmem [shape: bf16[242,40], index: 2, kind: input, shape index: {}]
  %s3 = inlined_call_operand.vmem [shape: bf16[242,40], index: 3, kind: input, shape index: {}]
  %s4 = inlined_call_operand.vmem [shape: bf16[40,20], index: 4, kind: input, shape index: {}]
  %s5 = inlined_call_operand.vmem [shape: f32[1,20], index: 5, kind: input, shape index: {}]
  %s6 = inlined_call_operand.vmem [shape: bf16[242,20], index: 6, kind: output, shape index: {}]
  %s7 = sld [smem:[#allocation0]]
  $region34: #{critic_forward.9} parent=0
    _
  %s9 = ssub.s32 1, %s7
  %s10 = scalar_select 0, %s9, %s7
  // Predicated region
  $region2: #{critic_forward.9} parent=0 // pred_check
    _
  $region3: #{critic_forward.9} parent=0 // pred_check_branch
    %12 = sbr.rel (0) target = $region5
  $region4: #{critic_forward.9} parent=0 // pred_region
    _
  $region5: #{critic_forward.9} parent=0 // pred_fallthru
    _
  // Predicated region
  $region6: #{critic_forward.9} parent=0 // pred_check
    _
  $region7: #{critic_forward.9} parent=0 // pred_check_branch
    %14 = sbr.rel (0) target = $region9
  $region8: #{critic_forward.9} parent=0 // pred_region
    _
  $region9: #{critic_forward.9} parent=0 // pred_fallthru
    _
  // Predicated region
  $region10: #{critic_forward.9} parent=0 // pred_check
    _
  $region11: #{critic_forward.9} parent=0 // pred_check_branch
    %16 = sbr.rel (0) target = $region13
  $region12: #{critic_forward.9} parent=0 // pred_region
    _
  $region13: #{critic_forward.9} parent=0 // pred_fallthru
    _
  // Predicated region
  $region14: #{critic_forward.9} parent=0 // pred_check
    _
  $region15: #{critic_forward.9} parent=0 // pred_check_branch
    %18 = sbr.rel (0) target = $region17
  $region16: #{critic_forward.9} parent=0 // pred_region
    _
  $region17: #{critic_forward.9} parent=0 // pred_fallthru
    _
  // Predicated region
  $region18: #{critic_forward.9} parent=0 // pred_check
    _
  $region19: #{critic_forward.9} parent=0 // pred_check_branch
    %20 = sbr.rel (0) target = $region21
  $region20: #{critic_forward.9} parent=0 // pred_region
    _
  $region21: #{critic_forward.9} parent=0 // pred_fallthru
    _
  // Predicated region
  $region22: #{critic_forward.9} parent=0 // pred_check
    _
  $region23: #{critic_forward.9} parent=0 // pred_check_branch
    %22 = sbr.rel (0) target = $region25
  $region24: #{critic_forward.9} parent=0 // pred_region
    _
  $region25: #{critic_forward.9} parent=0 // pred_fallthru
    _
  %v24 = vld [vmem:[%s0] sm:$0xf]
  %v25 = vld [vmem:[%s0 + $0x4] sm:$0xf]
  %v26 = vld [vmem:[%s0 + $0x8] sm:$0xf]
  %v27 = vld [vmem:[%s0 + $0xc] sm:$0xf]
  %v28 = vld [vmem:[%s0 + $0x10] sm:$0xf]
  %v29 = vld [vmem:[%s0 + $0x14] sm:$0xf]
  %v30 = vld [vmem:[%s0 + $0x18] sm:$0xf]
  %v31 = vld [vmem:[%s0 + $0x1c] sm:$0xf]
  %v32 = vld [vmem:[%s0 + $0x20] sm:$0xf]
  %v33 = vld [vmem:[%s0 + $0x24] sm:$0xf]
  %v34 = vld [vmem:[%s0 + $0x28] sm:$0xf]
  %v35 = vld [vmem:[%s0 + $0x2c] sm:$0xf]
  %v36 = vld [vmem:[%s0 + $0x30] sm:$0xf]
  %v37 = vld [vmem:[%s0 + $0x34] sm:$0xf]
  %v38 = vld [vmem:[%s0 + $0x38] sm:$0xf]
  %v39 = vld [vmem:[%s0 + $0x3c] sm:$0xf]
  %v40 = vld [vmem:[%s0 + $0x40] sm:$0xf]
  %v41 = vld [vmem:[%s0 + $0x44] sm:$0xf]
  %v42 = vld [vmem:[%s0 + $0x48] sm:$0xf]
  %v43 = vld [vmem:[%s0 + $0x4c] sm:$0xf]
  %v44 = vld [vmem:[%s0 + $0x50] sm:$0xf]
  %v45 = vld [vmem:[%s0 + $0x54] sm:$0xf]
  %v46 = vld [vmem:[%s0 + $0x58] sm:$0xf]
  %v47 = vld [vmem:[%s0 + $0x5c] sm:$0xf]
  %v48 = vld [vmem:[%s0 + $0x60] sm:$0xf]
  %v49 = vld [vmem:[%s0 + $0x64] sm:$0xf]
  %v50 = vld [vmem:[%s0 + $0x68] sm:$0xf]
  %v51 = vld [vmem:[%s0 + $0x6c] sm:$0xf]
  %v52 = vld [vmem:[%s0 + $0x70] sm:$0xf]
  %v53 = vld [vmem:[%s0 + $0x74] sm:$0xf]
  %v54 = vld [vmem:[%s0 + $0x78] sm:$0x1]
  %v55 = vunpack.c.l.bf16 %v24
  %v56 = vunpack.c.l.bf16 %v25
  %v57 = vunpack.c.l.bf16 %v26
  %v58 = vunpack.c.l.bf16 %v27
  %v59 = vunpack.c.l.bf16 %v28
  %v60 = vunpack.c.l.bf16 %v29
  %v61 = vunpack.c.l.bf16 %v30
  %v62 = vunpack.c.l.bf16 %v31
  %v63 = vunpack.c.l.bf16 %v32
  %v64 = vunpack.c.l.bf16 %v33
  %v65 = vunpack.c.l.bf16 %v34
  %v66 = vunpack.c.l.bf16 %v35
  %v67 = vunpack.c.l.bf16 %v36
  %v68 = vunpack.c.l.bf16 %v37
  %v69 = vunpack.c.l.bf16 %v38
  %v70 = vunpack.c.l.bf16 %v39
  %v71 = vunpack.c.l.bf16 %v40
  %v72 = vunpack.c.l.bf16 %v41
  %v73 = vunpack.c.l.bf16 %v42
  %v74 = vunpack.c.l.bf16 %v43
  %v75 = vunpack.c.l.bf16 %v44
  %v76 = vunpack.c.l.bf16 %v45
  %v77 = vunpack.c.l.bf16 %v46
  %v78 = vunpack.c.l.bf16 %v47
  %v79 = vunpack.c.l.bf16 %v48
  %v80 = vunpack.c.l.bf16 %v49
  %v81 = vunpack.c.l.bf16 %v50
  %v82 = vunpack.c.l.bf16 %v51
  %v83 = vunpack.c.l.bf16 %v52
  %v84 = vunpack.c.l.bf16 %v53
  %v85 = vunpack.c.l.bf16 %v54
  %v86 = vld [vmem:[%s1] sm:$0xf]
  %v87 = vld [vmem:[%s1 + $0x4] sm:$0xf]
  %v88 = vld [vmem:[%s1 + $0x8] sm:$0xf]
  %v89 = vld [vmem:[%s1 + $0xc] sm:$0xf]
  %v90 = vld [vmem:[%s1 + $0x10] sm:$0xf]
  %v91 = vld [vmem:[%s1 + $0x14] sm:$0xf]
  %v92 = vld [vmem:[%s1 + $0x18] sm:$0xf]
  %v93 = vld [vmem:[%s1 + $0x1c] sm:$0xf]
  %v94 = vld [vmem:[%s1 + $0x20] sm:$0xf]
  %v95 = vld [vmem:[%s1 + $0x24] sm:$0xf]
  %v96 = vld [vmem:[%s1 + $0x28] sm:$0xf]
  %v97 = vld [vmem:[%s1 + $0x2c] sm:$0xf]
  %v98 = vld [vmem:[%s1 + $0x30] sm:$0xf]
  %v99 = vld [vmem:[%s1 + $0x34] sm:$0xf]
  %v100 = vld [vmem:[%s1 + $0x38] sm:$0xf]
  %v101 = vld [vmem:[%s1 + $0x3c] sm:$0xf]
  %v102 = vld [vmem:[%s1 + $0x40] sm:$0xf]
  %v103 = vld [vmem:[%s1 + $0x44] sm:$0xf]
  %v104 = vld [vmem:[%s1 + $0x48] sm:$0xf]
  %v105 = vld [vmem:[%s1 + $0x4c] sm:$0xf]
  %v106 = vld [vmem:[%s1 + $0x50] sm:$0xf]
  %v107 = vld [vmem:[%s1 + $0x54] sm:$0xf]
  %v108 = vld [vmem:[%s1 + $0x58] sm:$0xf]
  %v109 = vld [vmem:[%s1 + $0x5c] sm:$0xf]
  %v110 = vld [vmem:[%s1 + $0x60] sm:$0xf]
  %v111 = vld [vmem:[%s1 + $0x64] sm:$0xf]
  %v112 = vld [vmem:[%s1 + $0x68] sm:$0xf]
  %v113 = vld [vmem:[%s1 + $0x6c] sm:$0xf]
  %v114 = vld [vmem:[%s1 + $0x70] sm:$0xf]
  %v115 = vld [vmem:[%s1 + $0x74] sm:$0xf]
  %v116 = vld [vmem:[%s1 + $0x78] sm:$0x1]
  %v117 = vunpack.c.l.bf16 %v86
  %v118 = vunpack.c.l.bf16 %v87
  %v119 = vunpack.c.l.bf16 %v88
  %v120 = vunpack.c.l.bf16 %v89
  %v121 = vunpack.c.l.bf16 %v90
  %v122 = vunpack.c.l.bf16 %v91
  %v123 = vunpack.c.l.bf16 %v92
  %v124 = vunpack.c.l.bf16 %v93
  %v125 = vunpack.c.l.bf16 %v94
  %v126 = vunpack.c.l.bf16 %v95
  %v127 = vunpack.c.l.bf16 %v96
  %v128 = vunpack.c.l.bf16 %v97
  %v129 = vunpack.c.l.bf16 %v98
  %v130 = vunpack.c.l.bf16 %v99
  %v131 = vunpack.c.l.bf16 %v100
  %v132 = vunpack.c.l.bf16 %v101
  %v133 = vunpack.c.l.bf16 %v102
  %v134 = vunpack.c.l.bf16 %v103
  %v135 = vunpack.c.l.bf16 %v104
  %v136 = vunpack.c.l.bf16 %v105
  %v137 = vunpack.c.l.bf16 %v106
  %v138 = vunpack.c.l.bf16 %v107
  %v139 = vunpack.c.l.bf16 %v108
  %v140 = vunpack.c.l.bf16 %v109
  %v141 = vunpack.c.l.bf16 %v110
  %v142 = vunpack.c.l.bf16 %v111
  %v143 = vunpack.c.l.bf16 %v112
  %v144 = vunpack.c.l.bf16 %v113
  %v145 = vunpack.c.l.bf16 %v114
  %v146 = vunpack.c.l.bf16 %v115
  %v147 = vunpack.c.l.bf16 %v116
  %v148 = vld [vmem:[%s2] sm:$0xf]
  %v149 = vld [vmem:[%s2 + $0x4] sm:$0xf]
  %v150 = vld [vmem:[%s2 + $0x8] sm:$0xf]
  %v151 = vld [vmem:[%s2 + $0xc] sm:$0xf]
  %v152 = vld [vmem:[%s2 + $0x10] sm:$0xf]
  %v153 = vld [vmem:[%s2 + $0x14] sm:$0xf]
  %v154 = vld [vmem:[%s2 + $0x18] sm:$0xf]
  %v155 = vld [vmem:[%s2 + $0x1c] sm:$0xf]
  %v156 = vld [vmem:[%s2 + $0x20] sm:$0xf]
  %v157 = vld [vmem:[%s2 + $0x24] sm:$0xf]
  %v158 = vld [vmem:[%s2 + $0x28] sm:$0xf]
  %v159 = vld [vmem:[%s2 + $0x2c] sm:$0xf]
  %v160 = vld [vmem:[%s2 + $0x30] sm:$0xf]
  %v161 = vld [vmem:[%s2 + $0x34] sm:$0xf]
  %v162 = vld [vmem:[%s2 + $0x38] sm:$0xf]
  %v163 = vld [vmem:[%s2 + $0x3c] sm:$0xf]
  %v164 = vld [vmem:[%s2 + $0x40] sm:$0xf]
  %v165 = vld [vmem:[%s2 + $0x44] sm:$0xf]
  %v166 = vld [vmem:[%s2 + $0x48] sm:$0xf]
  %v167 = vld [vmem:[%s2 + $0x4c] sm:$0xf]
  %v168 = vld [vmem:[%s2 + $0x50] sm:$0xf]
  %v169 = vld [vmem:[%s2 + $0x54] sm:$0xf]
  %v170 = vld [vmem:[%s2 + $0x58] sm:$0xf]
  %v171 = vld [vmem:[%s2 + $0x5c] sm:$0xf]
  %v172 = vld [vmem:[%s2 + $0x60] sm:$0xf]
  %v173 = vld [vmem:[%s2 + $0x64] sm:$0xf]
  %v174 = vld [vmem:[%s2 + $0x68] sm:$0xf]
  %v175 = vld [vmem:[%s2 + $0x6c] sm:$0xf]
  %v176 = vld [vmem:[%s2 + $0x70] sm:$0xf]
  %v177 = vld [vmem:[%s2 + $0x74] sm:$0xf]
  %v178 = vld [vmem:[%s2 + $0x78] sm:$0x1]
  %v179 = vunpack.c.l.bf16 %v148
  %v180 = vunpack.c.l.bf16 %v149
  %v181 = vunpack.c.l.bf16 %v150
  %v182 = vunpack.c.l.bf16 %v151
  %v183 = vunpack.c.l.bf16 %v152
  %v184 = vunpack.c.l.bf16 %v153
  %v185 = vunpack.c.l.bf16 %v154
  %v186 = vunpack.c.l.bf16 %v155
  %v187 = vunpack.c.l.bf16 %v156
  %v188 = vunpack.c.l.bf16 %v157
  %v189 = vunpack.c.l.bf16 %v158
  %v190 = vunpack.c.l.bf16 %v159
  %v191 = vunpack.c.l.bf16 %v160
  %v192 = vunpack.c.l.bf16 %v161
  %v193 = vunpack.c.l.bf16 %v162
  %v194 = vunpack.c.l.bf16 %v163
  %v195 = vunpack.c.l.bf16 %v164
  %v196 = vunpack.c.l.bf16 %v165
  %v197 = vunpack.c.l.bf16 %v166
  %v198 = vunpack.c.l.bf16 %v167
  %v199 = vunpack.c.l.bf16 %v168
  %v200 = vunpack.c.l.bf16 %v169
  %v201 = vunpack.c.l.bf16 %v170
  %v202 = vunpack.c.l.bf16 %v171
  %v203 = vunpack.c.l.bf16 %v172
  %v204 = vunpack.c.l.bf16 %v173
  %v205 = vunpack.c.l.bf16 %v174
  %v206 = vunpack.c.l.bf16 %v175
  %v207 = vunpack.c.l.bf16 %v176
  %v208 = vunpack.c.l.bf16 %v177
  %v209 = vunpack.c.l.bf16 %v178
  %v210 = vld [vmem:[%s3] sm:$0xf]
  %v211 = vld [vmem:[%s3 + $0x4] sm:$0xf]
  %v212 = vld [vmem:[%s3 + $0x8] sm:$0xf]
  %v213 = vld [vmem:[%s3 + $0xc] sm:$0xf]
  %v214 = vld [vmem:[%s3 + $0x10] sm:$0xf]
  %v215 = vld [vmem:[%s3 + $0x14] sm:$0xf]
  %v216 = vld [vmem:[%s3 + $0x18] sm:$0xf]
  %v217 = vld [vmem:[%s3 + $0x1c] sm:$0xf]
  %v218 = vld [vmem:[%s3 + $0x20] sm:$0xf]
  %v219 = vld [vmem:[%s3 + $0x24] sm:$0xf]
  %v220 = vld [vmem:[%s3 + $0x28] sm:$0xf]
  %v221 = vld [vmem:[%s3 + $0x2c] sm:$0xf]
  %v222 = vld [vmem:[%s3 + $0x30] sm:$0xf]
  %v223 = vld [vmem:[%s3 + $0x34] sm:$0xf]
  %v224 = vld [vmem:[%s3 + $0x38] sm:$0xf]
  %v225 = vld [vmem:[%s3 + $0x3c] sm:$0xf]
  %v226 = vld [vmem:[%s3 + $0x40] sm:$0xf]
  %v227 = vld [vmem:[%s3 + $0x44] sm:$0xf]
  %v228 = vld [vmem:[%s3 + $0x48] sm:$0xf]
  %v229 = vld [vmem:[%s3 + $0x4c] sm:$0xf]
  %v230 = vld [vmem:[%s3 + $0x50] sm:$0xf]
  %v231 = vld [vmem:[%s3 + $0x54] sm:$0xf]
  %v232 = vld [vmem:[%s3 + $0x58] sm:$0xf]
  %v233 = vld [vmem:[%s3 + $0x5c] sm:$0xf]
  %v234 = vld [vmem:[%s3 + $0x60] sm:$0xf]
  %v235 = vld [vmem:[%s3 + $0x64] sm:$0xf]
  %v236 = vld [vmem:[%s3 + $0x68] sm:$0xf]
  %v237 = vld [vmem:[%s3 + $0x6c] sm:$0xf]
  %v238 = vld [vmem:[%s3 + $0x70] sm:$0xf]
  %v239 = vld [vmem:[%s3 + $0x74] sm:$0xf]
  %v240 = vld [vmem:[%s3 + $0x78] sm:$0x1]
  %v241 = vunpack.c.l.bf16 %v210
  %v242 = vunpack.c.l.bf16 %v211
  %v243 = vunpack.c.l.bf16 %v212
  %v244 = vunpack.c.l.bf16 %v213
  %v245 = vunpack.c.l.bf16 %v214
  %v246 = vunpack.c.l.bf16 %v215
  %v247 = vunpack.c.l.bf16 %v216
  %v248 = vunpack.c.l.bf16 %v217
  %v249 = vunpack.c.l.bf16 %v218
  %v250 = vunpack.c.l.bf16 %v219
  %v251 = vunpack.c.l.bf16 %v220
  %v252 = vunpack.c.l.bf16 %v221
  %v253 = vunpack.c.l.bf16 %v222
  %v254 = vunpack.c.l.bf16 %v223
  %v255 = vunpack.c.l.bf16 %v224
  %v256 = vunpack.c.l.bf16 %v225
  %v257 = vunpack.c.l.bf16 %v226
  %v258 = vunpack.c.l.bf16 %v227
  %v259 = vunpack.c.l.bf16 %v228
  %v260 = vunpack.c.l.bf16 %v229
  %v261 = vunpack.c.l.bf16 %v230
  %v262 = vunpack.c.l.bf16 %v231
  %v263 = vunpack.c.l.bf16 %v232
  %v264 = vunpack.c.l.bf16 %v233
  %v265 = vunpack.c.l.bf16 %v234
  %v266 = vunpack.c.l.bf16 %v235
  %v267 = vunpack.c.l.bf16 %v236
  %v268 = vunpack.c.l.bf16 %v237
  %v269 = vunpack.c.l.bf16 %v238
  %v270 = vunpack.c.l.bf16 %v239
  %v271 = vunpack.c.l.bf16 %v240
  %v272 = vmax.f32 %v55, %v117
  %v273 = vmax.f32 %v56, %v118
  %v274 = vmax.f32 %v57, %v119
  %v275 = vmax.f32 %v58, %v120
  %v276 = vmax.f32 %v59, %v121
  %v277 = vmax.f32 %v60, %v122
  %v278 = vmax.f32 %v61, %v123
  %v279 = vmax.f32 %v62, %v124
  %v280 = vmax.f32 %v63, %v125
  %v281 = vmax.f32 %v64, %v126
  %v282 = vmax.f32 %v65, %v127
  %v283 = vmax.f32 %v66, %v128
  %v284 = vmax.f32 %v67, %v129
  %v285 = vmax.f32 %v68, %v130
  %v286 = vmax.f32 %v69, %v131
  %v287 = vmax.f32 %v70, %v132
  %v288 = vmax.f32 %v71, %v133
  %v289 = vmax.f32 %v72, %v134
  %v290 = vmax.f32 %v73, %v135
  %v291 = vmax.f32 %v74, %v136
  %v292 = vmax.f32 %v75, %v137
  %v293 = vmax.f32 %v76, %v138
  %v294 = vmax.f32 %v77, %v139
  %v295 = vmax.f32 %v78, %v140
  %v296 = vmax.f32 %v79, %v141
  %v297 = vmax.f32 %v80, %v142
  %v298 = vmax.f32 %v81, %v143
  %v299 = vmax.f32 %v82, %v144
  %v300 = vmax.f32 %v83, %v145
  %v301 = vmax.f32 %v84, %v146
  %v302 = vmax.f32 %v85, %v147
  %v303 = vmax.f32 %v179, %v241
  %v304 = vmax.f32 %v180, %v242
  %v305 = vmax.f32 %v181, %v243
  %v306 = vmax.f32 %v182, %v244
  %v307 = vmax.f32 %v183, %v245
  %v308 = vmax.f32 %v184, %v246
  %v309 = vmax.f32 %v185, %v247
  %v310 = vmax.f32 %v186, %v248
  %v311 = vmax.f32 %v187, %v249
  %v312 = vmax.f32 %v188, %v250
  %v313 = vmax.f32 %v189, %v251
  %v314 = vmax.f32 %v190, %v252
  %v315 = vmax.f32 %v191, %v253
  %v316 = vmax.f32 %v192, %v254
  %v317 = vmax.f32 %v193, %v255
  %v318 = vmax.f32 %v194, %v256
  %v319 = vmax.f32 %v195, %v257
  %v320 = vmax.f32 %v196, %v258
  %v321 = vmax.f32 %v197, %v259
  %v322 = vmax.f32 %v198, %v260
  %v323 = vmax.f32 %v199, %v261
  %v324 = vmax.f32 %v200, %v262
  %v325 = vmax.f32 %v201, %v263
  %v326 = vmax.f32 %v202, %v264
  %v327 = vmax.f32 %v203, %v265
  %v328 = vmax.f32 %v204, %v266
  %v329 = vmax.f32 %v205, %v267
  %v330 = vmax.f32 %v206, %v268
  %v331 = vmax.f32 %v207, %v269
  %v332 = vmax.f32 %v208, %v270
  %v333 = vmax.f32 %v209, %v271
  %v334 = vmax.f32 %v272, %v303
  %v335 = vmax.f32 %v273, %v304
  %v336 = vmax.f32 %v274, %v305
  %v337 = vmax.f32 %v275, %v306
  %v338 = vmax.f32 %v276, %v307
  %v339 = vmax.f32 %v277, %v308
  %v340 = vmax.f32 %v278, %v309
  %v341 = vmax.f32 %v279, %v310
  %v342 = vmax.f32 %v280, %v311
  %v343 = vmax.f32 %v281, %v312
  %v344 = vmax.f32 %v282, %v313
  %v345 = vmax.f32 %v283, %v314
  %v346 = vmax.f32 %v284, %v315
  %v347 = vmax.f32 %v285, %v316
  %v348 = vmax.f32 %v286, %v317
  %v349 = vmax.f32 %v287, %v318
  %v350 = vmax.f32 %v288, %v319
  %v351 = vmax.f32 %v289, %v320
  %v352 = vmax.f32 %v290, %v321
  %v353 = vmax.f32 %v291, %v322
  %v354 = vmax.f32 %v292, %v323
  %v355 = vmax.f32 %v293, %v324
  %v356 = vmax.f32 %v294, %v325
  %v357 = vmax.f32 %v295, %v326
  %v358 = vmax.f32 %v296, %v327
  %v359 = vmax.f32 %v297, %v328
  %v360 = vmax.f32 %v298, %v329
  %v361 = vmax.f32 %v299, %v330
  %v362 = vmax.f32 %v300, %v331
  %v363 = vmax.f32 %v301, %v332
  %v364 = vmax.f32 %v302, %v333
  %v365 = vpack.c.bf16 %v335, %v334
  %v366 = vpack.c.bf16 %v337, %v336
  %v367 = vpack.c.bf16 %v339, %v338
  %v368 = vpack.c.bf16 %v341, %v340
  %v369 = vpack.c.bf16 %v343, %v342
  %v370 = vpack.c.bf16 %v345, %v344
  %v371 = vpack.c.bf16 %v347, %v346
  %v372 = vpack.c.bf16 %v349, %v348
  %v373 = vpack.c.bf16 %v351, %v350
  %v374 = vpack.c.bf16 %v353, %v352
  %v375 = vpack.c.bf16 %v355, %v354
  %v376 = vpack.c.bf16 %v357, %v356
  %v377 = vpack.c.bf16 %v359, %v358
  %v378 = vpack.c.bf16 %v361, %v360
  %v379 = vpack.c.bf16 %v363, %v362
  %v380 = vpack.c.bf16 %v364, %v364
  %v381 = vld [vmem:[%s4] sm:$0xf]
  %v382 = vld [vmem:[%s4 + $0x4] sm:$0xf]
  %v383 = vld [vmem:[%s4 + $0x8] sm:$0xf]
  %v384 = vld [vmem:[%s4 + $0xc] sm:$0xf]
  %v385 = vld [vmem:[%s4 + $0x10] sm:$0xf]
  %v386 = vld [vmem:[%s5] sm:$0x1]
  %v388 = vlaneseq
  %v389 = vshrl.u32 %v388, 7
  %v390 = vsub.s32 0, %v389
  %v391 = vrot.slane %v386, %v390
  %v398 = vunpack.c.l.b16 %v381
  %v399 = vunpack.c.l.b16 %v382
  %v400 = vunpack.c.l.b16 %v383
  %v401 = vunpack.c.l.b16 %v384
  %v402 = vunpack.c.l.b16 %v385
  %v403 = vpack.c.b16 %v399, %v398
  %v404 = vpack.c.b16 %v401, %v400
  %v405 = vpack.c.b16 %v402, %v402
  %vm408 = vcmask 326656
  %v410 = vsel %vm408, %v365, 0
  %v413 = vsel %vm408, %v366, 0
  %v416 = vsel %vm408, %v367, 0
  %v419 = vsel %vm408, %v368, 0
  %v422 = vsel %vm408, %v369, 0
  %v425 = vsel %vm408, %v370, 0
  %v428 = vsel %vm408, %v371, 0
  %v431 = vsel %vm408, %v372, 0
  %v434 = vsel %vm408, %v373, 0
  %v437 = vsel %vm408, %v374, 0
  %v440 = vsel %vm408, %v375, 0
  %v443 = vsel %vm408, %v376, 0
  %v446 = vsel %vm408, %v377, 0
  %v449 = vsel %vm408, %v378, 0
  %v452 = vsel %vm408, %v379, 0
  %v455 = vsel %vm408, %v380, 0
  %vm457 = vcmask 1043456
  %v459 = vsel %vm457, %v405, 0
  %461 = vmatprep.subr.bf16.mxu0 0
  %462 = vmatpush1.bf16.msra.mxu0 0
  %463 = vmatprep.subr.bf16.mxu0 0
  %464 = vmatpush1.bf16.msra.mxu0 0
  %465 = vmatprep.subr.bf16.mxu0 0
  %466 = vmatpush1.bf16.msra.mxu0 0
  %467 = vmatprep.subr.bf16.mxu0 0
  %468 = vmatpush1.bf16.msra.mxu0 0
  %469 = vmatprep.subr.bf16.mxu0 0
  %470 = vmatpush1.bf16.msra.mxu0 0
  %471 = vmatprep.subr.bf16.mxu0 0
  %472 = vmatpush1.bf16.msra.mxu0 %v459
  %473 = vmatprep.subr.bf16.mxu0 0
  %474 = vmatpush1.bf16.msra.mxu0 %v404
  %475 = vmatprep.subr.bf16.mxu0 0
  %476 = vmatpush1.bf16.msra.mxu0 %v403
  %477 = vmatprep.subr.bf16.mxu0 0
  %478 = vmatpush2.bf16.msra.mxu0 0
  %479 = vmatprep.subr.bf16.mxu0 0
  %480 = vmatpush2.bf16.msra.mxu0 0
  %481 = vmatprep.subr.bf16.mxu0 0
  %482 = vmatpush2.bf16.msra.mxu0 0
  %483 = vmatprep.subr.bf16.mxu0 0
  %484 = vmatpush2.bf16.msra.mxu0 0
  %485 = vmatprep.subr.bf16.mxu0 0
  %486 = vmatpush2.bf16.msra.mxu0 0
  %487 = vmatprep.subr.bf16.mxu0 0
  %488 = vmatpush2.bf16.msra.mxu0 0
  %489 = vmatprep.subr.bf16.mxu0 0
  %490 = vmatpush2.bf16.msra.mxu0 0
  %491 = vmatprep.subr.bf16.mxu0 0
  %492 = vmatpush2.bf16.msra.mxu0 0
  %493 = vmatprep.mubr.bf16.mxu0 0
  %494 = vmatmul.mubr.bf16.gmra.mxu0 %v410
  %v495 = vpop.f32.mrf.mxu0
  %v496 = vadd.f32 %v391, %v495
  %v497 = vpop.f32.mrf.mxu0
  %v498 = vpop.f32.mrf.mxu0
  %v499 = vadd.f32 %v391, %v498
  %v500 = vpop.f32.mrf.mxu0
  %501 = vmatprep.mubr.bf16.mxu0 0
  %502 = vmatmul.mubr.bf16.gmra.mxu0 %v413
  %v503 = vpop.f32.mrf.mxu0
  %v504 = vadd.f32 %v391, %v503
  %v505 = vpop.f32.mrf.mxu0
  %v506 = vpop.f32.mrf.mxu0
  %v507 = vadd.f32 %v391, %v506
  %v508 = vpop.f32.mrf.mxu0
  %509 = vmatprep.mubr.bf16.mxu0 0
  %510 = vmatmul.mubr.bf16.gmra.mxu0 %v416
  %v511 = vpop.f32.mrf.mxu0
  %v512 = vadd.f32 %v391, %v511
  %v513 = vpop.f32.mrf.mxu0
  %v514 = vpop.f32.mrf.mxu0
  %v515 = vadd.f32 %v391, %v514
  %v516 = vpop.f32.mrf.mxu0
  %517 = vmatprep.mubr.bf16.mxu0 0
  %518 = vmatmul.mubr.bf16.gmra.mxu0 %v419
  %v519 = vpop.f32.mrf.mxu0
  %v520 = vadd.f32 %v391, %v519
  %v521 = vpop.f32.mrf.mxu0
  %v522 = vpop.f32.mrf.mxu0
  %v523 = vadd.f32 %v391, %v522
  %v524 = vpop.f32.mrf.mxu0
  %525 = vmatprep.mubr.bf16.mxu0 0
  %526 = vmatmul.mubr.bf16.gmra.mxu0 %v422
  %v527 = vpop.f32.mrf.mxu0
  %v528 = vadd.f32 %v391, %v527
  %v529 = vpop.f32.mrf.mxu0
  %v530 = vpop.f32.mrf.mxu0
  %v531 = vadd.f32 %v391, %v530
  %v532 = vpop.f32.mrf.mxu0
  %533 = vmatprep.mubr.bf16.mxu0 0
  %534 = vmatmul.mubr.bf16.gmra.mxu0 %v425
  %v535 = vpop.f32.mrf.mxu0
  %v536 = vadd.f32 %v391, %v535
  %v537 = vpop.f32.mrf.mxu0
  %v538 = vpop.f32.mrf.mxu0
  %v539 = vadd.f32 %v391, %v538
  %v540 = vpop.f32.mrf.mxu0
  %541 = vmatprep.mubr.bf16.mxu0 0
  %542 = vmatmul.mubr.bf16.gmra.mxu0 %v428
  %v543 = vpop.f32.mrf.mxu0
  %v544 = vadd.f32 %v391, %v543
  %v545 = vpop.f32.mrf.mxu0
  %v546 = vpop.f32.mrf.mxu0
  %v547 = vadd.f32 %v391, %v546
  %v548 = vpop.f32.mrf.mxu0
  %549 = vmatprep.mubr.bf16.mxu0 0
  %550 = vmatmul.mubr.bf16.gmra.mxu0 %v431
  %v551 = vpop.f32.mrf.mxu0
  %v552 = vadd.f32 %v391, %v551
  %v553 = vpop.f32.mrf.mxu0
  %v554 = vpop.f32.mrf.mxu0
  %v555 = vadd.f32 %v391, %v554
  %v556 = vpop.f32.mrf.mxu0
  %557 = vmatprep.mubr.bf16.mxu0 0
  %558 = vmatmul.mubr.bf16.gmra.mxu0 %v434
  %v559 = vpop.f32.mrf.mxu0
  %v560 = vadd.f32 %v391, %v559
  %v561 = vpop.f32.mrf.mxu0
  %v562 = vpop.f32.mrf.mxu0
  %v563 = vadd.f32 %v391, %v562
  %v564 = vpop.f32.mrf.mxu0
  %565 = vmatprep.mubr.bf16.mxu0 0
  %566 = vmatmul.mubr.bf16.gmra.mxu0 %v437
  %v567 = vpop.f32.mrf.mxu0
  %v568 = vadd.f32 %v391, %v567
  %v569 = vpop.f32.mrf.mxu0
  %v570 = vpop.f32.mrf.mxu0
  %v571 = vadd.f32 %v391, %v570
  %v572 = vpop.f32.mrf.mxu0
  %573 = vmatprep.mubr.bf16.mxu0 0
  %574 = vmatmul.mubr.bf16.gmra.mxu0 %v440
  %v575 = vpop.f32.mrf.mxu0
  %v576 = vadd.f32 %v391, %v575
  %v577 = vpop.f32.mrf.mxu0
  %v578 = vpop.f32.mrf.mxu0
  %v579 = vadd.f32 %v391, %v578
  %v580 = vpop.f32.mrf.mxu0
  %581 = vmatprep.mubr.bf16.mxu0 0
  %582 = vmatmul.mubr.bf16.gmra.mxu0 %v443
  %v583 = vpop.f32.mrf.mxu0
  %v584 = vadd.f32 %v391, %v583
  %v585 = vpop.f32.mrf.mxu0
  %v586 = vpop.f32.mrf.mxu0
  %v587 = vadd.f32 %v391, %v586
  %v588 = vpop.f32.mrf.mxu0
  %589 = vmatprep.mubr.bf16.mxu0 0
  %590 = vmatmul.mubr.bf16.gmra.mxu0 %v446
  %v591 = vpop.f32.mrf.mxu0
  %v592 = vadd.f32 %v391, %v591
  %v593 = vpop.f32.mrf.mxu0
  %v594 = vpop.f32.mrf.mxu0
  %v595 = vadd.f32 %v391, %v594
  %v596 = vpop.f32.mrf.mxu0
  %597 = vmatprep.mubr.bf16.mxu0 0
  %598 = vmatmul.mubr.bf16.gmra.mxu0 %v449
  %v599 = vpop.f32.mrf.mxu0
  %v600 = vadd.f32 %v391, %v599
  %v601 = vpop.f32.mrf.mxu0
  %v602 = vpop.f32.mrf.mxu0
  %v603 = vadd.f32 %v391, %v602
  %v604 = vpop.f32.mrf.mxu0
  %605 = vmatprep.mubr.bf16.mxu0 0
  %606 = vmatmul.mubr.bf16.gmra.mxu0 %v452
  %v607 = vpop.f32.mrf.mxu0
  %v608 = vadd.f32 %v391, %v607
  %v609 = vpop.f32.mrf.mxu0
  %v610 = vpop.f32.mrf.mxu0
  %v611 = vadd.f32 %v391, %v610
  %v612 = vpop.f32.mrf.mxu0
  %613 = vmatprep.mubr.bf16.mxu0 0
  %614 = vmatmul.mubr.bf16.gmra.mxu0 %v455
  %v615 = vpop.f32.mrf.mxu0
  %v616 = vadd.f32 %v391, %v615
  %v617 = vpop.f32.mrf.mxu0
  %v618 = vpop.f32.mrf.mxu0
  %v619 = vpop.f32.mrf.mxu0
  %620 = vdwg.mxu0
  %v621 = vmax.f32 %v496, 0.0
  %v622 = vmax.f32 %v499, 0.0
  %v623 = vmax.f32 %v504, 0.0
  %v624 = vmax.f32 %v507, 0.0
  %v625 = vmax.f32 %v512, 0.0
  %v626 = vmax.f32 %v515, 0.0
  %v627 = vmax.f32 %v520, 0.0
  %v628 = vmax.f32 %v523, 0.0
  %v629 = vmax.f32 %v528, 0.0
  %v630 = vmax.f32 %v531, 0.0
  %v631 = vmax.f32 %v536, 0.0
  %v632 = vmax.f32 %v539, 0.0
  %v633 = vmax.f32 %v544, 0.0
  %v634 = vmax.f32 %v547, 0.0
  %v635 = vmax.f32 %v552, 0.0
  %v636 = vmax.f32 %v555, 0.0
  %v637 = vmax.f32 %v560, 0.0
  %v638 = vmax.f32 %v563, 0.0
  %v639 = vmax.f32 %v568, 0.0
  %v640 = vmax.f32 %v571, 0.0
  %v641 = vmax.f32 %v576, 0.0
  %v642 = vmax.f32 %v579, 0.0
  %v643 = vmax.f32 %v584, 0.0
  %v644 = vmax.f32 %v587, 0.0
  %v645 = vmax.f32 %v592, 0.0
  %v646 = vmax.f32 %v595, 0.0
  %v647 = vmax.f32 %v600, 0.0
  %v648 = vmax.f32 %v603, 0.0
  %v649 = vmax.f32 %v608, 0.0
  %v650 = vmax.f32 %v611, 0.0
  %v651 = vmax.f32 %v616, 0.0
  %v652 = vpack.c.bf16 %v622, %v621
  %v653 = vpack.c.bf16 %v624, %v623
  %v654 = vpack.c.bf16 %v626, %v625
  %v655 = vpack.c.bf16 %v628, %v627
  %v656 = vpack.c.bf16 %v630, %v629
  %v657 = vpack.c.bf16 %v632, %v631
  %v658 = vpack.c.bf16 %v634, %v633
  %v659 = vpack.c.bf16 %v636, %v635
  %v660 = vpack.c.bf16 %v638, %v637
  %v661 = vpack.c.bf16 %v640, %v639
  %v662 = vpack.c.bf16 %v642, %v641
  %v663 = vpack.c.bf16 %v644, %v643
  %v664 = vpack.c.bf16 %v646, %v645
  %v665 = vpack.c.bf16 %v648, %v647
  %v666 = vpack.c.bf16 %v650, %v649
  %v667 = vpack.c.bf16 %v651, %v651
  %v684 = vunpack.c.l.b16 %v652
  %v685 = vunpack.c.h.b16 %v652
  %v686 = vunpack.c.l.b16 %v653
  %v687 = vunpack.c.h.b16 %v653
  %v688 = vunpack.c.l.b16 %v654
  %v689 = vunpack.c.h.b16 %v654
  %v690 = vunpack.c.l.b16 %v655
  %v691 = vunpack.c.h.b16 %v655
  %v692 = vunpack.c.l.b16 %v656
  %v693 = vunpack.c.h.b16 %v656
  %v694 = vunpack.c.l.b16 %v657
  %v695 = vunpack.c.h.b16 %v657
  %v696 = vunpack.c.l.b16 %v658
  %v697 = vunpack.c.h.b16 %v658
  %v698 = vunpack.c.l.b16 %v659
  %v699 = vunpack.c.h.b16 %v659
  %v700 = vunpack.c.l.b16 %v660
  %v701 = vunpack.c.h.b16 %v660
  %v702 = vunpack.c.l.b16 %v661
  %v703 = vunpack.c.h.b16 %v661
  %v704 = vunpack.c.l.b16 %v662
  %v705 = vunpack.c.h.b16 %v662
  %v706 = vunpack.c.l.b16 %v663
  %v707 = vunpack.c.h.b16 %v663
  %v708 = vunpack.c.l.b16 %v664
  %v709 = vunpack.c.h.b16 %v664
  %v710 = vunpack.c.l.b16 %v665
  %v711 = vunpack.c.h.b16 %v665
  %v712 = vunpack.c.l.b16 %v666
  %v713 = vunpack.c.h.b16 %v666
  %v714 = vunpack.c.l.b16 %v667
  %v715 = vpack.c.b16 %v684, %v684
  %v716 = vpack.c.b16 %v685, %v685
  %v717 = vpack.c.b16 %v686, %v686
  %v718 = vpack.c.b16 %v687, %v687
  %v719 = vpack.c.b16 %v688, %v688
  %v720 = vpack.c.b16 %v689, %v689
  %v721 = vpack.c.b16 %v690, %v690
  %v722 = vpack.c.b16 %v691, %v691
  %v723 = vpack.c.b16 %v692, %v692
  %v724 = vpack.c.b16 %v693, %v693
  %v725 = vpack.c.b16 %v694, %v694
  %v726 = vpack.c.b16 %v695, %v695
  %v727 = vpack.c.b16 %v696, %v696
  %v728 = vpack.c.b16 %v697, %v697
  %v729 = vpack.c.b16 %v698, %v698
  %v730 = vpack.c.b16 %v699, %v699
  %v731 = vpack.c.b16 %v700, %v700
  %v732 = vpack.c.b16 %v701, %v701
  %v733 = vpack.c.b16 %v702, %v702
  %v734 = vpack.c.b16 %v703, %v703
  %v735 = vpack.c.b16 %v704, %v704
  %v736 = vpack.c.b16 %v705, %v705
  %v737 = vpack.c.b16 %v706, %v706
  %v738 = vpack.c.b16 %v707, %v707
  %v739 = vpack.c.b16 %v708, %v708
  %v740 = vpack.c.b16 %v709, %v709
  %v741 = vpack.c.b16 %v710, %v710
  %v742 = vpack.c.b16 %v711, %v711
  %v743 = vpack.c.b16 %v712, %v712
  %v744 = vpack.c.b16 %v713, %v713
  %v745 = vpack.c.b16 %v714, %v714
  %vm777 = vcmask 158720
  %778 = vst.msk [vmem:[%s6] sm:$0xf] %vm777, %v715
  %779 = vst.msk [vmem:[%s6 + $0x4] sm:$0xf] %vm777, %v716
  %780 = vst.msk [vmem:[%s6 + $0x8] sm:$0xf] %vm777, %v717
  %781 = vst.msk [vmem:[%s6 + $0xc] sm:$0xf] %vm777, %v718
  %782 = vst.msk [vmem:[%s6 + $0x10] sm:$0xf] %vm777, %v719
  %783 = vst.msk [vmem:[%s6 + $0x14] sm:$0xf] %vm777, %v720
  %784 = vst.msk [vmem:[%s6 + $0x18] sm:$0xf] %vm777, %v721
  %785 = vst.msk [vmem:[%s6 + $0x1c] sm:$0xf] %vm777, %v722
  %786 = vst.msk [vmem:[%s6 + $0x20] sm:$0xf] %vm777, %v723
  %787 = vst.msk [vmem:[%s6 + $0x24] sm:$0xf] %vm777, %v724
  %788 = vst.msk [vmem:[%s6 + $0x28] sm:$0xf] %vm777, %v725
  %789 = vst.msk [vmem:[%s6 + $0x2c] sm:$0xf] %vm777, %v726
  %790 = vst.msk [vmem:[%s6 + $0x30] sm:$0xf] %vm777, %v727
  %791 = vst.msk [vmem:[%s6 + $0x34] sm:$0xf] %vm777, %v728
  %792 = vst.msk [vmem:[%s6 + $0x38] sm:$0xf] %vm777, %v729
  %793 = vst.msk [vmem:[%s6 + $0x3c] sm:$0xf] %vm777, %v730
  %794 = vst.msk [vmem:[%s6 + $0x40] sm:$0xf] %vm777, %v731
  %795 = vst.msk [vmem:[%s6 + $0x44] sm:$0xf] %vm777, %v732
  %796 = vst.msk [vmem:[%s6 + $0x48] sm:$0xf] %vm777, %v733
  %797 = vst.msk [vmem:[%s6 + $0x4c] sm:$0xf] %vm777, %v734
  %798 = vst.msk [vmem:[%s6 + $0x50] sm:$0xf] %vm777, %v735
  %799 = vst.msk [vmem:[%s6 + $0x54] sm:$0xf] %vm777, %v736
  %800 = vst.msk [vmem:[%s6 + $0x58] sm:$0xf] %vm777, %v737
  %801 = vst.msk [vmem:[%s6 + $0x5c] sm:$0xf] %vm777, %v738
  %802 = vst.msk [vmem:[%s6 + $0x60] sm:$0xf] %vm777, %v739
  %803 = vst.msk [vmem:[%s6 + $0x64] sm:$0xf] %vm777, %v740
  %804 = vst.msk [vmem:[%s6 + $0x68] sm:$0xf] %vm777, %v741
  %805 = vst.msk [vmem:[%s6 + $0x6c] sm:$0xf] %vm777, %v742
  %806 = vst.msk [vmem:[%s6 + $0x70] sm:$0xf] %vm777, %v743
  %807 = vst.msk [vmem:[%s6 + $0x74] sm:$0xf] %vm777, %v744
  %vm808 = vcmask 155648
  %809 = vst.msk [vmem:[%s6 + $0x78] sm:$0x1] %vm808, %v745
  // Predicated region
  $region26: #{critic_forward.9} parent=0 // pred_check
    _
  $region27: #{critic_forward.9} parent=0 // pred_check_branch
    %811 = sbr.rel (0) target = $region29
  $region28: #{critic_forward.9} parent=0 // pred_region
    _
  $region29: #{critic_forward.9} parent=0 // pred_fallthru
    _
  // Predicated region
  $region30: #{critic_forward.9} parent=0 // pred_check
    _
  $region31: #{critic_forward.9} parent=0 // pred_check_branch
    %813 = sbr.rel (0) target = $region33
  $region32: #{critic_forward.9} parent=0 // pred_region
    _
  $region33: #{critic_forward.9} parent=0 // pred_fallthru
    _

// kernel: critic_forward.10
$region0: #{critic_forward.10}
  #allocation0 [shape = 'u32[]', space=smem, size = 0x4, offset = 0x4, fixed_abs, tag = 'smem constant byte address 0x4 - core index']
  #allocation1 [shape = 'u32[144,128]{1,0:T(1,128)}', space=vmem, size = 0x12000, scoped, tag = 'internal scratch']
  %s0 = inlined_call_operand.vmem [shape: bf16[162,180], index: 0, kind: input, shape index: {}]
  %s1 = inlined_call_operand.vmem [shape: bf16[180,20], index: 1, kind: input, shape index: {}]
  %s2 = inlined_call_operand.vmem [shape: f32[1,20], index: 2, kind: input, shape index: {}]
  %s3 = inlined_call_operand.vmem [shape: bf16[162,20], index: 3, kind: output, shape index: {}]
  %s4 = sld [smem:[#allocation0]]
  $region22: #{critic_forward.10} parent=0
    _
  %s6 = ssub.s32 1, %s4
  %s7 = scalar_select 0, %s6, %s4
  // Predicated region
  $region2: #{critic_forward.10} parent=0 // pred_check
    _
  $region3: #{critic_forward.10} parent=0 // pred_check_branch
    %9 = sbr.rel (0) target = $region5
  $region4: #{critic_forward.10} parent=0 // pred_region
    _
  $region5: #{critic_forward.10} parent=0 // pred_fallthru
    _
  // Predicated region
  $region6: #{critic_forward.10} parent=0 // pred_check
    _
  $region7: #{critic_forward.10} parent=0 // pred_check_branch
    %11 = sbr.rel (0) target = $region9
  $region8: #{critic_forward.10} parent=0 // pred_region
    _
  $region9: #{critic_forward.10} parent=0 // pred_fallthru
    _
  // Predicated region
  $region10: #{critic_forward.10} parent=0 // pred_check
    _
  $region11: #{critic_forward.10} parent=0 // pred_check_branch
    %13 = sbr.rel (0) target = $region13
  $region12: #{critic_forward.10} parent=0 // pred_region
    _
  $region13: #{critic_forward.10} parent=0 // pred_fallthru
    _
  %v15 = vld [vmem:[%s0] sm:$0xff]
  %v16 = vld [vmem:[%s0 + $0x8] sm:$0xff]
  %v17 = vld [vmem:[%s0 + $0x10] sm:$0xff]
  %v18 = vld [vmem:[%s0 + $0x18] sm:$0xff]
  %v19 = vld [vmem:[%s0 + $0x20] sm:$0xff]
  %v20 = vld [vmem:[%s0 + $0x28] sm:$0xff]
  %v21 = vld [vmem:[%s0 + $0x30] sm:$0xff]
  %v22 = vld [vmem:[%s0 + $0x38] sm:$0xff]
  %v23 = vld [vmem:[%s0 + $0x40] sm:$0xff]
  %v24 = vld [vmem:[%s0 + $0x48] sm:$0xff]
  %v25 = vld [vmem:[%s0 + $0x50] sm:$0xff]
  %v26 = vld [vmem:[%s0 + $0x58] sm:$0xff]
  %v27 = vld [vmem:[%s0 + $0x60] sm:$0xff]
  %v28 = vld [vmem:[%s0 + $0x68] sm:$0xff]
  %v29 = vld [vmem:[%s0 + $0x70] sm:$0xff]
  %v30 = vld [vmem:[%s0 + $0x78] sm:$0xff]
  %v31 = vld [vmem:[%s0 + $0x80] sm:$0xff]
  %v32 = vld [vmem:[%s0 + $0x88] sm:$0xff]
  %v33 = vld [vmem:[%s0 + $0x90] sm:$0xff]
  %v34 = vld [vmem:[%s0 + $0x98] sm:$0xff]
  %v35 = vld [vmem:[%s0 + $0xa0] sm:$0x11]
  %v36 = vld [vmem:[%s1] sm:$0xf]
  %v37 = vld [vmem:[%s1 + $0x4] sm:$0xf]
  %v38 = vld [vmem:[%s1 + $0x8] sm:$0xf]
  %v39 = vld [vmem:[%s1 + $0xc] sm:$0xf]
  %v40 = vld [vmem:[%s1 + $0x10] sm:$0xf]
  %v41 = vld [vmem:[%s1 + $0x14] sm:$0xf]
  %v42 = vld [vmem:[%s1 + $0x18] sm:$0xf]
  %v43 = vld [vmem:[%s1 + $0x1c] sm:$0xf]
  %v44 = vld [vmem:[%s1 + $0x20] sm:$0xf]
  %v45 = vld [vmem:[%s1 + $0x24] sm:$0xf]
  %v46 = vld [vmem:[%s1 + $0x28] sm:$0xf]
  %v47 = vld [vmem:[%s1 + $0x2c] sm:$0xf]
  %v48 = vld [vmem:[%s1 + $0x30] sm:$0xf]
  %v49 = vld [vmem:[%s1 + $0x34] sm:$0xf]
  %v50 = vld [vmem:[%s1 + $0x38] sm:$0xf]
  %v51 = vld [vmem:[%s1 + $0x3c] sm:$0xf]
  %v52 = vld [vmem:[%s1 + $0x40] sm:$0xf]
  %v53 = vld [vmem:[%s1 + $0x44] sm:$0xf]
  %v54 = vld [vmem:[%s1 + $0x48] sm:$0xf]
  %v55 = vld [vmem:[%s1 + $0x4c] sm:$0xf]
  %v56 = vld [vmem:[%s1 + $0x50] sm:$0xf]
  %v57 = vld [vmem:[%s1 + $0x54] sm:$0xf]
  %v58 = vld [vmem:[%s1 + $0x58] sm:$0x3]
  %v59 = vld [vmem:[%s2] sm:$0x1]
  %v61 = vlaneseq
  %v62 = vshrl.u32 %v61, 7
  %v63 = vsub.s32 0, %v62
  %v64 = vrot.slane %v59, %v63
  %v87 = vunpack.c.l.b16 %v15
  %v88 = vunpack.c.h.b16 %v15
  %v89 = vunpack.c.l.b16 %v16
  %v90 = vunpack.c.h.b16 %v16
  %v91 = vunpack.c.l.b16 %v17
  %v92 = vunpack.c.h.b16 %v17
  %v93 = vunpack.c.l.b16 %v18
  %v94 = vunpack.c.h.b16 %v18
  %v95 = vunpack.c.l.b16 %v19
  %v96 = vunpack.c.h.b16 %v19
  %v97 = vunpack.c.l.b16 %v20
  %v98 = vunpack.c.h.b16 %v20
  %v99 = vunpack.c.l.b16 %v21
  %v100 = vunpack.c.h.b16 %v21
  %v101 = vunpack.c.l.b16 %v22
  %v102 = vunpack.c.h.b16 %v22
  %v103 = vunpack.c.l.b16 %v23
  %v104 = vunpack.c.h.b16 %v23
  %v105 = vunpack.c.l.b16 %v24
  %v106 = vunpack.c.h.b16 %v24
  %v107 = vunpack.c.l.b16 %v25
  %v108 = vunpack.c.h.b16 %v25
  %v109 = vunpack.c.l.b16 %v26
  %v110 = vunpack.c.h.b16 %v26
  %v111 = vunpack.c.l.b16 %v27
  %v112 = vunpack.c.h.b16 %v27
  %v113 = vunpack.c.l.b16 %v28
  %v114 = vunpack.c.h.b16 %v28
  %v115 = vunpack.c.l.b16 %v29
  %v116 = vunpack.c.h.b16 %v29
  %v117 = vunpack.c.l.b16 %v30
  %v118 = vunpack.c.h.b16 %v30
  %v119 = vunpack.c.l.b16 %v31
  %v120 = vunpack.c.h.b16 %v31
  %v121 = vunpack.c.l.b16 %v32
  %v122 = vunpack.c.h.b16 %v32
  %v123 = vunpack.c.l.b16 %v33
  %v124 = vunpack.c.h.b16 %v33
  %v125 = vunpack.c.l.b16 %v34
  %v126 = vunpack.c.h.b16 %v34
  %v127 = vunpack.c.l.b16 %v35
  %v128 = vunpack.c.h.b16 %v35
  %v129 = vpack.c.b16 %v89, %v87
  %v130 = vpack.c.b16 %v90, %v88
  %v131 = vpack.c.b16 %v93, %v91
  %v132 = vpack.c.b16 %v94, %v92
  %v133 = vpack.c.b16 %v97, %v95
  %v134 = vpack.c.b16 %v98, %v96
  %v135 = vpack.c.b16 %v101, %v99
  %v136 = vpack.c.b16 %v102, %v100
  %v137 = vpack.c.b16 %v105, %v103
  %v138 = vpack.c.b16 %v106, %v104
  %v139 = vpack.c.b16 %v109, %v107
  %v140 = vpack.c.b16 %v110, %v108
  %v141 = vpack.c.b16 %v113, %v111
  %v142 = vpack.c.b16 %v114, %v112
  %v143 = vpack.c.b16 %v117, %v115
  %v144 = vpack.c.b16 %v118, %v116
  %v145 = vpack.c.b16 %v121, %v119
  %v146 = vpack.c.b16 %v122, %v120
  %v147 = vpack.c.b16 %v125, %v123
  %v148 = vpack.c.b16 %v126, %v124
  %v149 = vpack.c.b16 %v127, %v127
  %v150 = vpack.c.b16 %v128, %v128
  %v185 = vunpack.c.l.b16 %v36
  %v186 = vunpack.c.l.b16 %v37
  %v187 = vunpack.c.l.b16 %v38
  %v188 = vunpack.c.l.b16 %v39
  %v189 = vunpack.c.l.b16 %v40
  %v190 = vunpack.c.l.b16 %v41
  %v191 = vunpack.c.l.b16 %v42
  %v192 = vunpack.c.l.b16 %v43
  %v193 = vunpack.c.l.b16 %v44
  %v194 = vunpack.c.l.b16 %v45
  %v195 = vunpack.c.l.b16 %v46
  %v196 = vunpack.c.l.b16 %v47
  %v197 = vunpack.c.l.b16 %v48
  %v198 = vunpack.c.l.b16 %v49
  %v199 = vunpack.c.l.b16 %v50
  %v200 = vunpack.c.l.b16 %v51
  %v201 = vunpack.c.l.b16 %v52
  %v202 = vunpack.c.l.b16 %v53
  %v203 = vunpack.c.l.b16 %v54
  %v204 = vunpack.c.l.b16 %v55
  %v205 = vunpack.c.l.b16 %v56
  %v206 = vunpack.c.l.b16 %v57
  %v207 = vunpack.c.l.b16 %v58
  %v208 = vpack.c.b16 %v186, %v185
  %v209 = vpack.c.b16 %v188, %v187
  %v210 = vpack.c.b16 %v190, %v189
  %v211 = vpack.c.b16 %v192, %v191
  %v212 = vpack.c.b16 %v194, %v193
  %v213 = vpack.c.b16 %v196, %v195
  %v214 = vpack.c.b16 %v198, %v197
  %v215 = vpack.c.b16 %v200, %v199
  %v216 = vpack.c.b16 %v202, %v201
  %v217 = vpack.c.b16 %v204, %v203
  %v218 = vpack.c.b16 %v206, %v205
  %v219 = vpack.c.b16 %v207, %v207
  %vm231 = vcmask 424960
  %v233 = vsel %vm231, %v130, 0
  %v236 = vsel %vm231, %v132, 0
  %v239 = vsel %vm231, %v134, 0
  %v242 = vsel %vm231, %v136, 0
  %v245 = vsel %vm231, %v138, 0
  %v248 = vsel %vm231, %v140, 0
  %v251 = vsel %vm231, %v142, 0
  %v254 = vsel %vm231, %v144, 0
  %v257 = vsel %vm231, %v146, 0
  %v260 = vsel %vm231, %v148, 0
  %v263 = vsel %vm231, %v150, 0
  %vm265 = vcmask 1041408
  %v267 = vsel %vm265, %v219, 0
  %269 = vmatprep.subr.bf16.mxu0 0
  %270 = vmatpush1.bf16.msra.mxu0 %v215
  %271 = vmatprep.subr.bf16.mxu0 0
  %272 = vmatpush1.bf16.msra.mxu0 %v214
  %273 = vmatprep.subr.bf16.mxu0 0
  %274 = vmatpush1.bf16.msra.mxu0 %v213
  %275 = vmatprep.subr.bf16.mxu0 0
  %276 = vmatpush1.bf16.msra.mxu0 %v212
  %277 = vmatprep.subr.bf16.mxu0 0
  %278 = vmatpush1.bf16.msra.mxu0 %v211
  %279 = vmatprep.subr.bf16.mxu0 0
  %280 = vmatpush1.bf16.msra.mxu0 %v210
  %281 = vmatprep.subr.bf16.mxu0 0
  %282 = vmatpush1.bf16.msra.mxu0 %v209
  %283 = vmatprep.subr.bf16.mxu0 0
  %284 = vmatpush1.bf16.msra.mxu0 %v208
  %285 = vmatprep.subr.bf16.mxu0 0
  %286 = vmatpush2.bf16.msra.mxu0 0
  %287 = vmatprep.subr.bf16.mxu0 0
  %288 = vmatpush2.bf16.msra.mxu0 0
  %289 = vmatprep.subr.bf16.mxu0 0
  %290 = vmatpush2.bf16.msra.mxu0 0
  %291 = vmatprep.subr.bf16.mxu0 0
  %292 = vmatpush2.bf16.msra.mxu0 0
  %293 = vmatprep.subr.bf16.mxu0 0
  %294 = vmatpush2.bf16.msra.mxu0 %v267
  %295 = vmatprep.subr.bf16.mxu0 0
  %296 = vmatpush2.bf16.msra.mxu0 %v218
  %297 = vmatprep.subr.bf16.mxu0 0
  %298 = vmatpush2.bf16.msra.mxu0 %v217
  %299 = vmatprep.subr.bf16.mxu0 0
  %300 = vmatpush2.bf16.msra.mxu0 %v216
  %301 = vmatprep.mubr.bf16.mxu0 %v233
  %302 = vmatmul.mubr.bf16.gmra.mxu0 %v129
  %v303 = vpop.f32.mrf.mxu0
  %v304 = vadd.f32 %v64, %v303
  %v305 = vpop.f32.mrf.mxu0
  %v306 = vpop.f32.mrf.mxu0
  %v307 = vadd.f32 %v64, %v306
  %v308 = vpop.f32.mrf.mxu0
  %309 = vmatprep.mubr.bf16.mxu0 %v236
  %310 = vmatmul.mubr.bf16.gmra.mxu0 %v131
  %v311 = vpop.f32.mrf.mxu0
  %v312 = vadd.f32 %v64, %v311
  %v313 = vpop.f32.mrf.mxu0
  %v314 = vpop.f32.mrf.mxu0
  %v315 = vadd.f32 %v64, %v314
  %v316 = vpop.f32.mrf.mxu0
  %317 = vmatprep.mubr.bf16.mxu0 %v239
  %318 = vmatmul.mubr.bf16.gmra.mxu0 %v133
  %v319 = vpop.f32.mrf.mxu0
  %v320 = vadd.f32 %v64, %v319
  %v321 = vpop.f32.mrf.mxu0
  %v322 = vpop.f32.mrf.mxu0
  %v323 = vadd.f32 %v64, %v322
  %v324 = vpop.f32.mrf.mxu0
  %325 = vmatprep.mubr.bf16.mxu0 %v242
  %326 = vmatmul.mubr.bf16.gmra.mxu0 %v135
  %v327 = vpop.f32.mrf.mxu0
  %v328 = vadd.f32 %v64, %v327
  %v329 = vpop.f32.mrf.mxu0
  %v330 = vpop.f32.mrf.mxu0
  %v331 = vadd.f32 %v64, %v330
  %v332 = vpop.f32.mrf.mxu0
  %333 = vmatprep.mubr.bf16.mxu0 %v245
  %334 = vmatmul.mubr.bf16.gmra.mxu0 %v137
  %v335 = vpop.f32.mrf.mxu0
  %v336 = vadd.f32 %v64, %v335
  %v337 = vpop.f32.mrf.mxu0
  %v338 = vpop.f32.mrf.mxu0
  %v339 = vadd.f32 %v64, %v338
  %v340 = vpop.f32.mrf.mxu0
  %341 = vmatprep.mubr.bf16.mxu0 %v248
  %342 = vmatmul.mubr.bf16.gmra.mxu0 %v139
  %v343 = vpop.f32.mrf.mxu0
  %v344 = vadd.f32 %v64, %v343
  %v345 = vpop.f32.mrf.mxu0
  %v346 = vpop.f32.mrf.mxu0
  %v347 = vadd.f32 %v64, %v346
  %v348 = vpop.f32.mrf.mxu0
  %349 = vmatprep.mubr.bf16.mxu0 %v251
  %350 = vmatmul.mubr.bf16.gmra.mxu0 %v141
  %v351 = vpop.f32.mrf.mxu0
  %v352 = vadd.f32 %v64, %v351
  %v353 = vpop.f32.mrf.mxu0
  %v354 = vpop.f32.mrf.mxu0
  %v355 = vadd.f32 %v64, %v354
  %v356 = vpop.f32.mrf.mxu0
  %357 = vmatprep.mubr.bf16.mxu0 %v254
  %358 = vmatmul.mubr.bf16.gmra.mxu0 %v143
  %v359 = vpop.f32.mrf.mxu0
  %v360 = vadd.f32 %v64, %v359
  %v361 = vpop.f32.mrf.mxu0
  %v362 = vpop.f32.mrf.mxu0
  %v363 = vadd.f32 %v64, %v362
  %v364 = vpop.f32.mrf.mxu0
  %365 = vmatprep.mubr.bf16.mxu0 %v257
  %366 = vmatmul.mubr.bf16.gmra.mxu0 %v145
  %v367 = vpop.f32.mrf.mxu0
  %v368 = vadd.f32 %v64, %v367
  %v369 = vpop.f32.mrf.mxu0
  %v370 = vpop.f32.mrf.mxu0
  %v371 = vadd.f32 %v64, %v370
  %v372 = vpop.f32.mrf.mxu0
  %373 = vmatprep.mubr.bf16.mxu0 %v260
  %374 = vmatmul.mubr.bf16.gmra.mxu0 %v147
  %v375 = vpop.f32.mrf.mxu0
  %v376 = vadd.f32 %v64, %v375
  %v377 = vpop.f32.mrf.mxu0
  %v378 = vpop.f32.mrf.mxu0
  %v379 = vadd.f32 %v64, %v378
  %v380 = vpop.f32.mrf.mxu0
  %381 = vmatprep.mubr.bf16.mxu0 %v263
  %382 = vmatmul.mubr.bf16.gmra.mxu0 %v149
  %v383 = vpop.f32.mrf.mxu0
  %v384 = vadd.f32 %v64, %v383
  %v385 = vpop.f32.mrf.mxu0
  %v386 = vpop.f32.mrf.mxu0
  %v387 = vpop.f32.mrf.mxu0
  %388 = vdwg.mxu0
  %v389 = vmax.f32 %v304, 0.0
  %v390 = vmax.f32 %v307, 0.0
  %v391 = vmax.f32 %v312, 0.0
  %v392 = vmax.f32 %v315, 0.0
  %v393 = vmax.f32 %v320, 0.0
  %v394 = vmax.f32 %v323, 0.0
  %v395 = vmax.f32 %v328, 0.0
  %v396 = vmax.f32 %v331, 0.0
  %v397 = vmax.f32 %v336, 0.0
  %v398 = vmax.f32 %v339, 0.0
  %v399 = vmax.f32 %v344, 0.0
  %v400 = vmax.f32 %v347, 0.0
  %v401 = vmax.f32 %v352, 0.0
  %v402 = vmax.f32 %v355, 0.0
  %v403 = vmax.f32 %v360, 0.0
  %v404 = vmax.f32 %v363, 0.0
  %v405 = vmax.f32 %v368, 0.0
  %v406 = vmax.f32 %v371, 0.0
  %v407 = vmax.f32 %v376, 0.0
  %v408 = vmax.f32 %v379, 0.0
  %v409 = vmax.f32 %v384, 0.0
  %v410 = vpack.c.bf16 %v390, %v389
  %v411 = vpack.c.bf16 %v392, %v391
  %v412 = vpack.c.bf16 %v394, %v393
  %v413 = vpack.c.bf16 %v396, %v395
  %v414 = vpack.c.bf16 %v398, %v397
  %v415 = vpack.c.bf16 %v400, %v399
  %v416 = vpack.c.bf16 %v402, %v401
  %v417 = vpack.c.bf16 %v404, %v403
  %v418 = vpack.c.bf16 %v406, %v405
  %v419 = vpack.c.bf16 %v408, %v407
  %v420 = vpack.c.bf16 %v409, %v409
  %v432 = vunpack.c.l.b16 %v410
  %v433 = vunpack.c.h.b16 %v410
  %v434 = vunpack.c.l.b16 %v411
  %v435 = vunpack.c.h.b16 %v411
  %v436 = vunpack.c.l.b16 %v412
  %v437 = vunpack.c.h.b16 %v412
  %v438 = vunpack.c.l.b16 %v413
  %v439 = vunpack.c.h.b16 %v413
  %v440 = vunpack.c.l.b16 %v414
  %v441 = vunpack.c.h.b16 %v414
  %v442 = vunpack.c.l.b16 %v415
  %v443 = vunpack.c.h.b16 %v415
  %v444 = vunpack.c.l.b16 %v416
  %v445 = vunpack.c.h.b16 %v416
  %v446 = vunpack.c.l.b16 %v417
  %v447 = vunpack.c.h.b16 %v417
  %v448 = vunpack.c.l.b16 %v418
  %v449 = vunpack.c.h.b16 %v418
  %v450 = vunpack.c.l.b16 %v419
  %v451 = vunpack.c.h.b16 %v419
  %v452 = vunpack.c.l.b16 %v420
  %v453 = vpack.c.b16 %v432, %v432
  %v454 = vpack.c.b16 %v433, %v433
  %v455 = vpack.c.b16 %v434, %v434
  %v456 = vpack.c.b16 %v435, %v435
  %v457 = vpack.c.b16 %v436, %v436
  %v458 = vpack.c.b16 %v437, %v437
  %v459 = vpack.c.b16 %v438, %v438
  %v460 = vpack.c.b16 %v439, %v439
  %v461 = vpack.c.b16 %v440, %v440
  %v462 = vpack.c.b16 %v441, %v441
  %v463 = vpack.c.b16 %v442, %v442
  %v464 = vpack.c.b16 %v443, %v443
  %v465 = vpack.c.b16 %v444, %v444
  %v466 = vpack.c.b16 %v445, %v445
  %v467 = vpack.c.b16 %v446, %v446
  %v468 = vpack.c.b16 %v447, %v447
  %v469 = vpack.c.b16 %v448, %v448
  %v470 = vpack.c.b16 %v449, %v449
  %v471 = vpack.c.b16 %v450, %v450
  %v472 = vpack.c.b16 %v451, %v451
  %v473 = vpack.c.b16 %v452, %v452
  %vm495 = vcmask 158720
  %496 = vst.msk [vmem:[%s3] sm:$0xf] %vm495, %v453
  %497 = vst.msk [vmem:[%s3 + $0x4] sm:$0xf] %vm495, %v454
  %498 = vst.msk [vmem:[%s3 + $0x8] sm:$0xf] %vm495, %v455
  %499 = vst.msk [vmem:[%s3 + $0xc] sm:$0xf] %vm495, %v456
  %500 = vst.msk [vmem:[%s3 + $0x10] sm:$0xf] %vm495, %v457
  %501 = vst.msk [vmem:[%s3 + $0x14] sm:$0xf] %vm495, %v458
  %502 = vst.msk [vmem:[%s3 + $0x18] sm:$0xf] %vm495, %v459
  %503 = vst.msk [vmem:[%s3 + $0x1c] sm:$0xf] %vm495, %v460
  %504 = vst.msk [vmem:[%s3 + $0x20] sm:$0xf] %vm495, %v461
  %505 = vst.msk [vmem:[%s3 + $0x24] sm:$0xf] %vm495, %v462
  %506 = vst.msk [vmem:[%s3 + $0x28] sm:$0xf] %vm495, %v463
  %507 = vst.msk [vmem:[%s3 + $0x2c] sm:$0xf] %vm495, %v464
  %508 = vst.msk [vmem:[%s3 + $0x30] sm:$0xf] %vm495, %v465
  %509 = vst.msk [vmem:[%s3 + $0x34] sm:$0xf] %vm495, %v466
  %510 = vst.msk [vmem:[%s3 + $0x38] sm:$0xf] %vm495, %v467
  %511 = vst.msk [vmem:[%s3 + $0x3c] sm:$0xf] %vm495, %v468
  %512 = vst.msk [vmem:[%s3 + $0x40] sm:$0xf] %vm495, %v469
  %513 = vst.msk [vmem:[%s3 + $0x44] sm:$0xf] %vm495, %v470
  %514 = vst.msk [vmem:[%s3 + $0x48] sm:$0xf] %vm495, %v471
  %515 = vst.msk [vmem:[%s3 + $0x4c] sm:$0xf] %vm495, %v472
  %vm516 = vcmask 155648
  %517 = vst.msk [vmem:[%s3 + $0x50] sm:$0x1] %vm516, %v473
  // Predicated region
  $region14: #{critic_forward.10} parent=0 // pred_check
    _
  $region15: #{critic_forward.10} parent=0 // pred_check_branch
    %519 = sbr.rel (0) target = $region17
  $region16: #{critic_forward.10} parent=0 // pred_region
    _
  $region17: #{critic_forward.10} parent=0 // pred_fallthru
    _
  // Predicated region
  $region18: #{critic_forward.10} parent=0 // pred_check
    _
  $region19: #{critic_forward.10} parent=0 // pred_check_branch
    %521 = sbr.rel (0) target = $region21
  $region20: #{critic_forward.10} parent=0 // pred_region
    _
  $region21: #{critic_forward.10} parent=0 // pred_fallthru
    _

// kernel: neg.1
$region0: #{neg.1}
  #allocation0 [shape = 's32[1]{0}', space=sflag, size = 0x4, scoped, tag = 'scoped memory for neg.1']
  %s0 = inlined_call_operand.vmem [shape: f32[2,1], index: 0, kind: input, shape index: {}]
  %s1 = inlined_call_operand.vmem [shape: f32[2,1], index: 1, kind: output, shape index: {}]
  %v2 = vld [vmem:[%s0] sm:$0x3]
  %3 = xla_tuple %v2
  %4 = xla_tuple %3
  %v5 = vxor.u32 %v2, 2147483648
  %6 = xla_tuple %v5
  %7 = vst [vmem:[%s1] sm:$0x3] %v5

// kernel: critic_forward.11
$region0: #{critic_forward.11}
  #allocation0 [shape = 'u32[]', space=smem, size = 0x4, offset = 0x4, fixed_abs, tag = 'smem constant byte address 0x4 - core index']
  #allocation1 [shape = 'u32[144,128]{1,0:T(1,128)}', space=vmem, size = 0x12000, scoped, tag = 'internal scratch']
  %s0 = inlined_call_operand.vmem [shape: bf16[392,180], index: 0, kind: input, shape index: {}]
  %s1 = inlined_call_operand.vmem [shape: f32[8,3], index: 1, kind: input, shape index: {}]
  %s2 = inlined_call_operand.vmem [shape: bf16[180,40], index: 2, kind: input, shape index: {}]
  %s3 = inlined_call_operand.vmem [shape: f32[1,40], index: 3, kind: input, shape index: {}]
  %s4 = inlined_call_operand.vmem [shape: bf16[40,20], index: 4, kind: input, shape index: {}]
  %s5 = inlined_call_operand.vmem [shape: f32[1,20], index: 5, kind: input, shape index: {}]
  %s6 = inlined_call_operand.vmem [shape: bf16[8,392], index: 6, kind: input, shape index: {}]
  %s7 = inlined_call_operand.vmem [shape: f32[20,100], index: 7, kind: input, shape index: {}]
  %s8 = inlined_call_operand.vmem [shape: f32[3,100], index: 8, kind: input, shape index: {}]
  %s9 = inlined_call_operand.vmem [shape: f32[1,100], index: 9, kind: input, shape index: {}]
  %s10 = inlined_call_operand.vmem [shape: f32[100,20], index: 10, kind: input, shape index: {}]
  %s11 = inlined_call_operand.vmem [shape: f32[1,20], index: 11, kind: input, shape index: {}]
  %s12 = inlined_call_operand.vmem [shape: f32[20,2], index: 12, kind: input, shape index: {}]
  %s13 = inlined_call_operand.vmem [shape: f32[1,2], index: 13, kind: input, shape index: {}]
  %s14 = inlined_call_operand.vmem [shape: f32[8,2], index: 14, kind: output, shape index: {}]
  %s15 = sld [smem:[#allocation0]]
  $region66: #{critic_forward.11} parent=0
    _
  %s17 = ssub.s32 1, %s15
  %s18 = scalar_select 0, %s17, %s15
  // Predicated region
  $region2: #{critic_forward.11} parent=0 // pred_check
    _
  $region3: #{critic_forward.11} parent=0 // pred_check_branch
    %20 = sbr.rel (0) target = $region5
  $region4: #{critic_forward.11} parent=0 // pred_region
    _
  $region5: #{critic_forward.11} parent=0 // pred_fallthru
    _
  // Predicated region
  $region6: #{critic_forward.11} parent=0 // pred_check
    _
  $region7: #{critic_forward.11} parent=0 // pred_check_branch
    %22 = sbr.rel (0) target = $region9
  $region8: #{critic_forward.11} parent=0 // pred_region
    _
  $region9: #{critic_forward.11} parent=0 // pred_fallthru
    _
  // Predicated region
  $region10: #{critic_forward.11} parent=0 // pred_check
    _
  $region11: #{critic_forward.11} parent=0 // pred_check_branch
    %24 = sbr.rel (0) target = $region13
  $region12: #{critic_forward.11} parent=0 // pred_region
    _
  $region13: #{critic_forward.11} parent=0 // pred_fallthru
    _
  // Predicated region
  $region14: #{critic_forward.11} parent=0 // pred_check
    _
  $region15: #{critic_forward.11} parent=0 // pred_check_branch
    %26 = sbr.rel (0) target = $region17
  $region16: #{critic_forward.11} parent=0 // pred_region
    _
  $region17: #{critic_forward.11} parent=0 // pred_fallthru
    _
  // Predicated region
  $region18: #{critic_forward.11} parent=0 // pred_check
    _
  $region19: #{critic_forward.11} parent=0 // pred_check_branch
    %28 = sbr.rel (0) target = $region21
  $region20: #{critic_forward.11} parent=0 // pred_region
    _
  $region21: #{critic_forward.11} parent=0 // pred_fallthru
    _
  // Predicated region
  $region22: #{critic_forward.11} parent=0 // pred_check
    _
  $region23: #{critic_forward.11} parent=0 // pred_check_branch
    %30 = sbr.rel (0) target = $region25
  $region24: #{critic_forward.11} parent=0 // pred_region
    _
  $region25: #{critic_forward.11} parent=0 // pred_fallthru
    _
  // Predicated region
  $region26: #{critic_forward.11} parent=0 // pred_check
    _
  $region27: #{critic_forward.11} parent=0 // pred_check_branch
    %32 = sbr.rel (0) target = $region29
  $region28: #{critic_forward.11} parent=0 // pred_region
    _
  $region29: #{critic_forward.11} parent=0 // pred_fallthru
    _
  // Predicated region
  $region30: #{critic_forward.11} parent=0 // pred_check
    _
  $region31: #{critic_forward.11} parent=0 // pred_check_branch
    %34 = sbr.rel (0) target = $region33
  $region32: #{critic_forward.11} parent=0 // pred_region
    _
  $region33: #{critic_forward.11} parent=0 // pred_fallthru
    _
  // Predicated region
  $region34: #{critic_forward.11} parent=0 // pred_check
    _
  $region35: #{critic_forward.11} parent=0 // pred_check_branch
    %36 = sbr.rel (0) target = $region37
  $region36: #{critic_forward.11} parent=0 // pred_region
    _
  $region37: #{critic_forward.11} parent=0 // pred_fallthru
    _
  // Predicated region
  $region38: #{critic_forward.11} parent=0 // pred_check
    _
  $region39: #{critic_forward.11} parent=0 // pred_check_branch
    %38 = sbr.rel (0) target = $region41
  $region40: #{critic_forward.11} parent=0 // pred_region
    _
  $region41: #{critic_forward.11} parent=0 // pred_fallthru
    _
  // Predicated region
  $region42: #{critic_forward.11} parent=0 // pred_check
    _
  $region43: #{critic_forward.11} parent=0 // pred_check_branch
    %40 = sbr.rel (0) target = $region45
  $region44: #{critic_forward.11} parent=0 // pred_region
    _
  $region45: #{critic_forward.11} parent=0 // pred_fallthru
    _
  // Predicated region
  $region46: #{critic_forward.11} parent=0 // pred_check
    _
  $region47: #{critic_forward.11} parent=0 // pred_check_branch
    %42 = sbr.rel (0) target = $region49
  $region48: #{critic_forward.11} parent=0 // pred_region
    _
  $region49: #{critic_forward.11} parent=0 // pred_fallthru
    _
  // Predicated region
  $region50: #{critic_forward.11} parent=0 // pred_check
    _
  $region51: #{critic_forward.11} parent=0 // pred_check_branch
    %44 = sbr.rel (0) target = $region53
  $region52: #{critic_forward.11} parent=0 // pred_region
    _
  $region53: #{critic_forward.11} parent=0 // pred_fallthru
    _
  // Predicated region
  $region54: #{critic_forward.11} parent=0 // pred_check
    _
  $region55: #{critic_forward.11} parent=0 // pred_check_branch
    %46 = sbr.rel (0) target = $region57
  $region56: #{critic_forward.11} parent=0 // pred_region
    _
  $region57: #{critic_forward.11} parent=0 // pred_fallthru
    _
  %v48 = vld [vmem:[%s0] sm:$0xff]
  %v49 = vld [vmem:[%s0 + $0x8] sm:$0xff]
  %v50 = vld [vmem:[%s0 + $0x10] sm:$0xff]
  %v51 = vld [vmem:[%s0 + $0x18] sm:$0xff]
  %v52 = vld [vmem:[%s0 + $0x20] sm:$0xff]
  %v53 = vld [vmem:[%s0 + $0x28] sm:$0xff]
  %v54 = vld [vmem:[%s0 + $0x30] sm:$0xff]
  %v55 = vld [vmem:[%s0 + $0x38] sm:$0xff]
  %v56 = vld [vmem:[%s0 + $0x40] sm:$0xff]
  %v57 = vld [vmem:[%s0 + $0x48] sm:$0xff]
  %v58 = vld [vmem:[%s0 + $0x50] sm:$0xff]
  %v59 = vld [vmem:[%s0 + $0x58] sm:$0xff]
  %v60 = vld [vmem:[%s0 + $0x60] sm:$0xff]
  %v61 = vld [vmem:[%s0 + $0x68] sm:$0xff]
  %v62 = vld [vmem:[%s0 + $0x70] sm:$0xff]
  %v63 = vld [vmem:[%s0 + $0x78] sm:$0xff]
  %v64 = vld [vmem:[%s0 + $0x80] sm:$0xff]
  %v65 = vld [vmem:[%s0 + $0x88] sm:$0xff]
  %v66 = vld [vmem:[%s0 + $0x90] sm:$0xff]
  %v67 = vld [vmem:[%s0 + $0x98] sm:$0xff]
  %v68 = vld [vmem:[%s0 + $0xa0] sm:$0xff]
  %v69 = vld [vmem:[%s0 + $0xa8] sm:$0xff]
  %v70 = vld [vmem:[%s0 + $0xb0] sm:$0xff]
  %v71 = vld [vmem:[%s0 + $0xb8] sm:$0xff]
  %v72 = vld [vmem:[%s0 + $0xc0] sm:$0xff]
  %v73 = vld [vmem:[%s0 + $0xc8] sm:$0xff]
  %v74 = vld [vmem:[%s0 + $0xd0] sm:$0xff]
  %v75 = vld [vmem:[%s0 + $0xd8] sm:$0xff]
  %v76 = vld [vmem:[%s0 + $0xe0] sm:$0xff]
  %v77 = vld [vmem:[%s0 + $0xe8] sm:$0xff]
  %v78 = vld [vmem:[%s0 + $0xf0] sm:$0xff]
  %v79 = vld [vmem:[%s0 + $0xf8] sm:$0xff]
  %v80 = vld [vmem:[%s0 + $0x100] sm:$0xff]
  %v81 = vld [vmem:[%s0 + $0x108] sm:$0xff]
  %v82 = vld [vmem:[%s0 + $0x110] sm:$0xff]
  %v83 = vld [vmem:[%s0 + $0x118] sm:$0xff]
  %v84 = vld [vmem:[%s0 + $0x120] sm:$0xff]
  %v85 = vld [vmem:[%s0 + $0x128] sm:$0xff]
  %v86 = vld [vmem:[%s0 + $0x130] sm:$0xff]
  %v87 = vld [vmem:[%s0 + $0x138] sm:$0xff]
  %v88 = vld [vmem:[%s0 + $0x140] sm:$0xff]
  %v89 = vld [vmem:[%s0 + $0x148] sm:$0xff]
  %v90 = vld [vmem:[%s0 + $0x150] sm:$0xff]
  %v91 = vld [vmem:[%s0 + $0x158] sm:$0xff]
  %v92 = vld [vmem:[%s0 + $0x160] sm:$0xff]
  %v93 = vld [vmem:[%s0 + $0x168] sm:$0xff]
  %v94 = vld [vmem:[%s0 + $0x170] sm:$0xff]
  %v95 = vld [vmem:[%s0 + $0x178] sm:$0xff]
  %v96 = vld [vmem:[%s0 + $0x180] sm:$0xff]
  %v97 = vld [vmem:[%s2] sm:$0xf]
  %v98 = vld [vmem:[%s2 + $0x4] sm:$0xf]
  %v99 = vld [vmem:[%s2 + $0x8] sm:$0xf]
  %v100 = vld [vmem:[%s2 + $0xc] sm:$0xf]
  %v101 = vld [vmem:[%s2 + $0x10] sm:$0xf]
  %v102 = vld [vmem:[%s2 + $0x14] sm:$0xf]
  %v103 = vld [vmem:[%s2 + $0x18] sm:$0xf]
  %v104 = vld [vmem:[%s2 + $0x1c] sm:$0xf]
  %v105 = vld [vmem:[%s2 + $0x20] sm:$0xf]
  %v106 = vld [vmem:[%s2 + $0x24] sm:$0xf]
  %v107 = vld [vmem:[%s2 + $0x28] sm:$0xf]
  %v108 = vld [vmem:[%s2 + $0x2c] sm:$0xf]
  %v109 = vld [vmem:[%s2 + $0x30] sm:$0xf]
  %v110 = vld [vmem:[%s2 + $0x34] sm:$0xf]
  %v111 = vld [vmem:[%s2 + $0x38] sm:$0xf]
  %v112 = vld [vmem:[%s2 + $0x3c] sm:$0xf]
  %v113 = vld [vmem:[%s2 + $0x40] sm:$0xf]
  %v114 = vld [vmem:[%s2 + $0x44] sm:$0xf]
  %v115 = vld [vmem:[%s2 + $0x48] sm:$0xf]
  %v116 = vld [vmem:[%s2 + $0x4c] sm:$0xf]
  %v117 = vld [vmem:[%s2 + $0x50] sm:$0xf]
  %v118 = vld [vmem:[%s2 + $0x54] sm:$0xf]
  %v119 = vld [vmem:[%s2 + $0x58] sm:$0x3]
  %v120 = vld [vmem:[%s3] sm:$0x1]
  %v122 = vlaneseq
  %v123 = vshrl.u32 %v122, 7
  %v124 = vsub.s32 0, %v123
  %v125 = vrot.slane %v120, %v124
  %v176 = vunpack.c.l.b16 %v48
  %v177 = vunpack.c.h.b16 %v48
  %v178 = vunpack.c.l.b16 %v49
  %v179 = vunpack.c.h.b16 %v49
  %v180 = vunpack.c.l.b16 %v50
  %v181 = vunpack.c.h.b16 %v50
  %v182 = vunpack.c.l.b16 %v51
  %v183 = vunpack.c.h.b16 %v51
  %v184 = vunpack.c.l.b16 %v52
  %v185 = vunpack.c.h.b16 %v52
  %v186 = vunpack.c.l.b16 %v53
  %v187 = vunpack.c.h.b16 %v53
  %v188 = vunpack.c.l.b16 %v54
  %v189 = vunpack.c.h.b16 %v54
  %v190 = vunpack.c.l.b16 %v55
  %v191 = vunpack.c.h.b16 %v55
  %v192 = vunpack.c.l.b16 %v56
  %v193 = vunpack.c.h.b16 %v56
  %v194 = vunpack.c.l.b16 %v57
  %v195 = vunpack.c.h.b16 %v57
  %v196 = vunpack.c.l.b16 %v58
  %v197 = vunpack.c.h.b16 %v58
  %v198 = vunpack.c.l.b16 %v59
  %v199 = vunpack.c.h.b16 %v59
  %v200 = vunpack.c.l.b16 %v60
  %v201 = vunpack.c.h.b16 %v60
  %v202 = vunpack.c.l.b16 %v61
  %v203 = vunpack.c.h.b16 %v61
  %v204 = vunpack.c.l.b16 %v62
  %v205 = vunpack.c.h.b16 %v62
  %v206 = vunpack.c.l.b16 %v63
  %v207 = vunpack.c.h.b16 %v63
  %v208 = vunpack.c.l.b16 %v64
  %v209 = vunpack.c.h.b16 %v64
  %v210 = vunpack.c.l.b16 %v65
  %v211 = vunpack.c.h.b16 %v65
  %v212 = vunpack.c.l.b16 %v66
  %v213 = vunpack.c.h.b16 %v66
  %v214 = vunpack.c.l.b16 %v67
  %v215 = vunpack.c.h.b16 %v67
  %v216 = vunpack.c.l.b16 %v68
  %v217 = vunpack.c.h.b16 %v68
  %v218 = vunpack.c.l.b16 %v69
  %v219 = vunpack.c.h.b16 %v69
  %v220 = vunpack.c.l.b16 %v70
  %v221 = vunpack.c.h.b16 %v70
  %v222 = vunpack.c.l.b16 %v71
  %v223 = vunpack.c.h.b16 %v71
  %v224 = vunpack.c.l.b16 %v72
  %v225 = vunpack.c.h.b16 %v72
  %v226 = vunpack.c.l.b16 %v73
  %v227 = vunpack.c.h.b16 %v73
  %v228 = vunpack.c.l.b16 %v74
  %v229 = vunpack.c.h.b16 %v74
  %v230 = vunpack.c.l.b16 %v75
  %v231 = vunpack.c.h.b16 %v75
  %v232 = vunpack.c.l.b16 %v76
  %v233 = vunpack.c.h.b16 %v76
  %v234 = vunpack.c.l.b16 %v77
  %v235 = vunpack.c.h.b16 %v77
  %v236 = vunpack.c.l.b16 %v78
  %v237 = vunpack.c.h.b16 %v78
  %v238 = vunpack.c.l.b16 %v79
  %v239 = vunpack.c.h.b16 %v79
  %v240 = vunpack.c.l.b16 %v80
  %v241 = vunpack.c.h.b16 %v80
  %v242 = vunpack.c.l.b16 %v81
  %v243 = vunpack.c.h.b16 %v81
  %v244 = vunpack.c.l.b16 %v82
  %v245 = vunpack.c.h.b16 %v82
  %v246 = vunpack.c.l.b16 %v83
  %v247 = vunpack.c.h.b16 %v83
  %v248 = vunpack.c.l.b16 %v84
  %v249 = vunpack.c.h.b16 %v84
  %v250 = vunpack.c.l.b16 %v85
  %v251 = vunpack.c.h.b16 %v85
  %v252 = vunpack.c.l.b16 %v86
  %v253 = vunpack.c.h.b16 %v86
  %v254 = vunpack.c.l.b16 %v87
  %v255 = vunpack.c.h.b16 %v87
  %v256 = vunpack.c.l.b16 %v88
  %v257 = vunpack.c.h.b16 %v88
  %v258 = vunpack.c.l.b16 %v89
  %v259 = vunpack.c.h.b16 %v89
  %v260 = vunpack.c.l.b16 %v90
  %v261 = vunpack.c.h.b16 %v90
  %v262 = vunpack.c.l.b16 %v91
  %v263 = vunpack.c.h.b16 %v91
  %v264 = vunpack.c.l.b16 %v92
  %v265 = vunpack.c.h.b16 %v92
  %v266 = vunpack.c.l.b16 %v93
  %v267 = vunpack.c.h.b16 %v93
  %v268 = vunpack.c.l.b16 %v94
  %v269 = vunpack.c.h.b16 %v94
  %v270 = vunpack.c.l.b16 %v95
  %v271 = vunpack.c.h.b16 %v95
  %v272 = vunpack.c.l.b16 %v96
  %v273 = vunpack.c.h.b16 %v96
  %v274 = vpack.c.b16 %v178, %v176
  %v275 = vpack.c.b16 %v179, %v177
  %v276 = vpack.c.b16 %v182, %v180
  %v277 = vpack.c.b16 %v183, %v181
  %v278 = vpack.c.b16 %v186, %v184
  %v279 = vpack.c.b16 %v187, %v185
  %v280 = vpack.c.b16 %v190, %v188
  %v281 = vpack.c.b16 %v191, %v189
  %v282 = vpack.c.b16 %v194, %v192
  %v283 = vpack.c.b16 %v195, %v193
  %v284 = vpack.c.b16 %v198, %v196
  %v285 = vpack.c.b16 %v199, %v197
  %v286 = vpack.c.b16 %v202, %v200
  %v287 = vpack.c.b16 %v203, %v201
  %v288 = vpack.c.b16 %v206, %v204
  %v289 = vpack.c.b16 %v207, %v205
  %v290 = vpack.c.b16 %v210, %v208
  %v291 = vpack.c.b16 %v211, %v209
  %v292 = vpack.c.b16 %v214, %v212
  %v293 = vpack.c.b16 %v215, %v213
  %v294 = vpack.c.b16 %v218, %v216
  %v295 = vpack.c.b16 %v219, %v217
  %v296 = vpack.c.b16 %v222, %v220
  %v297 = vpack.c.b16 %v223, %v221
  %v298 = vpack.c.b16 %v226, %v224
  %v299 = vpack.c.b16 %v227, %v225
  %v300 = vpack.c.b16 %v230, %v228
  %v301 = vpack.c.b16 %v231, %v229
  %v302 = vpack.c.b16 %v234, %v232
  %v303 = vpack.c.b16 %v235, %v233
  %v304 = vpack.c.b16 %v238, %v236
  %v305 = vpack.c.b16 %v239, %v237
  %v306 = vpack.c.b16 %v242, %v240
  %v307 = vpack.c.b16 %v243, %v241
  %v308 = vpack.c.b16 %v246, %v244
  %v309 = vpack.c.b16 %v247, %v245
  %v310 = vpack.c.b16 %v250, %v248
  %v311 = vpack.c.b16 %v251, %v249
  %v312 = vpack.c.b16 %v254, %v252
  %v313 = vpack.c.b16 %v255, %v253
  %v314 = vpack.c.b16 %v258, %v256
  %v315 = vpack.c.b16 %v259, %v257
  %v316 = vpack.c.b16 %v262, %v260
  %v317 = vpack.c.b16 %v263, %v261
  %v318 = vpack.c.b16 %v266, %v264
  %v319 = vpack.c.b16 %v267, %v265
  %v320 = vpack.c.b16 %v270, %v268
  %v321 = vpack.c.b16 %v271, %v269
  %v322 = vpack.c.b16 %v272, %v272
  %v323 = vpack.c.b16 %v273, %v273
  %v372 = vunpack.c.l.b16 %v97
  %v373 = vunpack.c.l.b16 %v98
  %v374 = vunpack.c.l.b16 %v99
  %v375 = vunpack.c.l.b16 %v100
  %v376 = vunpack.c.l.b16 %v101
  %v377 = vunpack.c.l.b16 %v102
  %v378 = vunpack.c.l.b16 %v103
  %v379 = vunpack.c.l.b16 %v104
  %v380 = vunpack.c.l.b16 %v105
  %v381 = vunpack.c.l.b16 %v106
  %v382 = vunpack.c.l.b16 %v107
  %v383 = vunpack.c.l.b16 %v108
  %v384 = vunpack.c.l.b16 %v109
  %v385 = vunpack.c.l.b16 %v110
  %v386 = vunpack.c.l.b16 %v111
  %v387 = vunpack.c.l.b16 %v112
  %v388 = vunpack.c.l.b16 %v113
  %v389 = vunpack.c.l.b16 %v114
  %v390 = vunpack.c.l.b16 %v115
  %v391 = vunpack.c.l.b16 %v116
  %v392 = vunpack.c.l.b16 %v117
  %v393 = vunpack.c.l.b16 %v118
  %v394 = vunpack.c.l.b16 %v119
  %v395 = vpack.c.b16 %v373, %v372
  %v396 = vpack.c.b16 %v375, %v374
  %v397 = vpack.c.b16 %v377, %v376
  %v398 = vpack.c.b16 %v379, %v378
  %v399 = vpack.c.b16 %v381, %v380
  %v400 = vpack.c.b16 %v383, %v382
  %v401 = vpack.c.b16 %v385, %v384
  %v402 = vpack.c.b16 %v387, %v386
  %v403 = vpack.c.b16 %v389, %v388
  %v404 = vpack.c.b16 %v391, %v390
  %v405 = vpack.c.b16 %v393, %v392
  %v406 = vpack.c.b16 %v394, %v394
  %vm418 = vcmask 424960
  %v420 = vsel %vm418, %v275, 0
  %v423 = vsel %vm418, %v277, 0
  %v426 = vsel %vm418, %v279, 0
  %v429 = vsel %vm418, %v281, 0
  %v432 = vsel %vm418, %v283, 0
  %v435 = vsel %vm418, %v285, 0
  %v438 = vsel %vm418, %v287, 0
  %v441 = vsel %vm418, %v289, 0
  %v444 = vsel %vm418, %v291, 0
  %v447 = vsel %vm418, %v293, 0
  %v450 = vsel %vm418, %v295, 0
  %v453 = vsel %vm418, %v297, 0
  %v456 = vsel %vm418, %v299, 0
  %v459 = vsel %vm418, %v301, 0
  %v462 = vsel %vm418, %v303, 0
  %v465 = vsel %vm418, %v305, 0
  %v468 = vsel %vm418, %v307, 0
  %v471 = vsel %vm418, %v309, 0
  %v474 = vsel %vm418, %v311, 0
  %v477 = vsel %vm418, %v313, 0
  %v480 = vsel %vm418, %v315, 0
  %v483 = vsel %vm418, %v317, 0
  %v486 = vsel %vm418, %v319, 0
  %v489 = vsel %vm418, %v321, 0
  %v492 = vsel %vm418, %v323, 0
  %vm494 = vcmask 1041408
  %v496 = vsel %vm494, %v406, 0
  %498 = vmatprep.subr.bf16.mxu0 0
  %499 = vmatpush1.bf16.msra.mxu0 %v402
  %500 = vmatprep.subr.bf16.mxu0 0
  %501 = vmatpush1.bf16.msra.mxu0 %v401
  %502 = vmatprep.subr.bf16.mxu0 0
  %503 = vmatpush1.bf16.msra.mxu0 %v400
  %504 = vmatprep.subr.bf16.mxu0 0
  %505 = vmatpush1.bf16.msra.mxu0 %v399
  %506 = vmatprep.subr.bf16.mxu0 0
  %507 = vmatpush1.bf16.msra.mxu0 %v398
  %508 = vmatprep.subr.bf16.mxu0 0
  %509 = vmatpush1.bf16.msra.mxu0 %v397
  %510 = vmatprep.subr.bf16.mxu0 0
  %511 = vmatpush1.bf16.msra.mxu0 %v396
  %512 = vmatprep.subr.bf16.mxu0 0
  %513 = vmatpush1.bf16.msra.mxu0 %v395
  %514 = vmatprep.subr.bf16.mxu0 0
  %515 = vmatpush2.bf16.msra.mxu0 0
  %516 = vmatprep.subr.bf16.mxu0 0
  %517 = vmatpush2.bf16.msra.mxu0 0
  %518 = vmatprep.subr.bf16.mxu0 0
  %519 = vmatpush2.bf16.msra.mxu0 0
  %520 = vmatprep.subr.bf16.mxu0 0
  %521 = vmatpush2.bf16.msra.mxu0 0
  %522 = vmatprep.subr.bf16.mxu0 0
  %523 = vmatpush2.bf16.msra.mxu0 %v496
  %524 = vmatprep.subr.bf16.mxu0 0
  %525 = vmatpush2.bf16.msra.mxu0 %v405
  %526 = vmatprep.subr.bf16.mxu0 0
  %527 = vmatpush2.bf16.msra.mxu0 %v404
  %528 = vmatprep.subr.bf16.mxu0 0
  %529 = vmatpush2.bf16.msra.mxu0 %v403
  %530 = vmatprep.mubr.bf16.mxu0 %v420
  %531 = vmatmul.mubr.bf16.gmra.mxu0 %v274
  %v532 = vpop.f32.mrf.mxu0
  %v533 = vadd.f32 %v125, %v532
  %v534 = vpop.f32.mrf.mxu0
  %v535 = vpop.f32.mrf.mxu0
  %v536 = vadd.f32 %v125, %v535
  %v537 = vpop.f32.mrf.mxu0
  %538 = vmatprep.mubr.bf16.mxu0 %v423
  %539 = vmatmul.mubr.bf16.gmra.mxu0 %v276
  %v540 = vpop.f32.mrf.mxu0
  %v541 = vadd.f32 %v125, %v540
  %v542 = vpop.f32.mrf.mxu0
  %v543 = vpop.f32.mrf.mxu0
  %v544 = vadd.f32 %v125, %v543
  %v545 = vpop.f32.mrf.mxu0
  %546 = vmatprep.mubr.bf16.mxu0 %v426
  %547 = vmatmul.mubr.bf16.gmra.mxu0 %v278
  %v548 = vpop.f32.mrf.mxu0
  %v549 = vadd.f32 %v125, %v548
  %v550 = vpop.f32.mrf.mxu0
  %v551 = vpop.f32.mrf.mxu0
  %v552 = vadd.f32 %v125, %v551
  %v553 = vpop.f32.mrf.mxu0
  %554 = vmatprep.mubr.bf16.mxu0 %v429
  %555 = vmatmul.mubr.bf16.gmra.mxu0 %v280
  %v556 = vpop.f32.mrf.mxu0
  %v557 = vadd.f32 %v125, %v556
  %v558 = vpop.f32.mrf.mxu0
  %v559 = vpop.f32.mrf.mxu0
  %v560 = vadd.f32 %v125, %v559
  %v561 = vpop.f32.mrf.mxu0
  %562 = vmatprep.mubr.bf16.mxu0 %v432
  %563 = vmatmul.mubr.bf16.gmra.mxu0 %v282
  %v564 = vpop.f32.mrf.mxu0
  %v565 = vadd.f32 %v125, %v564
  %v566 = vpop.f32.mrf.mxu0
  %v567 = vpop.f32.mrf.mxu0
  %v568 = vadd.f32 %v125, %v567
  %v569 = vpop.f32.mrf.mxu0
  %570 = vmatprep.mubr.bf16.mxu0 %v435
  %571 = vmatmul.mubr.bf16.gmra.mxu0 %v284
  %v572 = vpop.f32.mrf.mxu0
  %v573 = vadd.f32 %v125, %v572
  %v574 = vpop.f32.mrf.mxu0
  %v575 = vpop.f32.mrf.mxu0
  %v576 = vadd.f32 %v125, %v575
  %v577 = vpop.f32.mrf.mxu0
  %578 = vmatprep.mubr.bf16.mxu0 %v438
  %579 = vmatmul.mubr.bf16.gmra.mxu0 %v286
  %v580 = vpop.f32.mrf.mxu0
  %v581 = vadd.f32 %v125, %v580
  %v582 = vpop.f32.mrf.mxu0
  %v583 = vpop.f32.mrf.mxu0
  %v584 = vadd.f32 %v125, %v583
  %v585 = vpop.f32.mrf.mxu0
  %586 = vmatprep.mubr.bf16.mxu0 %v441
  %587 = vmatmul.mubr.bf16.gmra.mxu0 %v288
  %v588 = vpop.f32.mrf.mxu0
  %v589 = vadd.f32 %v125, %v588
  %v590 = vpop.f32.mrf.mxu0
  %v591 = vpop.f32.mrf.mxu0
  %v592 = vadd.f32 %v125, %v591
  %v593 = vpop.f32.mrf.mxu0
  %594 = vmatprep.mubr.bf16.mxu0 %v444
  %595 = vmatmul.mubr.bf16.gmra.mxu0 %v290
  %v596 = vpop.f32.mrf.mxu0
  %v597 = vadd.f32 %v125, %v596
  %v598 = vpop.f32.mrf.mxu0
  %v599 = vpop.f32.mrf.mxu0
  %v600 = vadd.f32 %v125, %v599
  %v601 = vpop.f32.mrf.mxu0
  %602 = vmatprep.mubr.bf16.mxu0 %v447
  %603 = vmatmul.mubr.bf16.gmra.mxu0 %v292
  %v604 = vpop.f32.mrf.mxu0
  %v605 = vadd.f32 %v125, %v604
  %v606 = vpop.f32.mrf.mxu0
  %v607 = vpop.f32.mrf.mxu0
  %v608 = vadd.f32 %v125, %v607
  %v609 = vpop.f32.mrf.mxu0
  %610 = vmatprep.mubr.bf16.mxu0 %v450
  %611 = vmatmul.mubr.bf16.gmra.mxu0 %v294
  %v612 = vpop.f32.mrf.mxu0
  %v613 = vadd.f32 %v125, %v612
  %v614 = vpop.f32.mrf.mxu0
  %v615 = vpop.f32.mrf.mxu0
  %v616 = vadd.f32 %v125, %v615
  %v617 = vpop.f32.mrf.mxu0
  %618 = vmatprep.mubr.bf16.mxu0 %v453
  %619 = vmatmul.mubr.bf16.gmra.mxu0 %v296
  %v620 = vpop.f32.mrf.mxu0
  %v621 = vadd.f32 %v125, %v620
  %v622 = vpop.f32.mrf.mxu0
  %v623 = vpop.f32.mrf.mxu0
  %v624 = vadd.f32 %v125, %v623
  %v625 = vpop.f32.mrf.mxu0
  %626 = vmatprep.mubr.bf16.mxu0 %v456
  %627 = vmatmul.mubr.bf16.gmra.mxu0 %v298
  %v628 = vpop.f32.mrf.mxu0
  %v629 = vadd.f32 %v125, %v628
  %v630 = vpop.f32.mrf.mxu0
  %v631 = vpop.f32.mrf.mxu0
  %v632 = vadd.f32 %v125, %v631
  %v633 = vpop.f32.mrf.mxu0
  %634 = vmatprep.mubr.bf16.mxu0 %v459
  %635 = vmatmul.mubr.bf16.gmra.mxu0 %v300
  %v636 = vpop.f32.mrf.mxu0
  %v637 = vadd.f32 %v125, %v636
  %v638 = vpop.f32.mrf.mxu0
  %v639 = vpop.f32.mrf.mxu0
  %v640 = vadd.f32 %v125, %v639
  %v641 = vpop.f32.mrf.mxu0
  %642 = vmatprep.mubr.bf16.mxu0 %v462
  %643 = vmatmul.mubr.bf16.gmra.mxu0 %v302
  %v644 = vpop.f32.mrf.mxu0
  %v645 = vadd.f32 %v125, %v644
  %v646 = vpop.f32.mrf.mxu0
  %v647 = vpop.f32.mrf.mxu0
  %v648 = vadd.f32 %v125, %v647
  %v649 = vpop.f32.mrf.mxu0
  %650 = vmatprep.mubr.bf16.mxu0 %v465
  %651 = vmatmul.mubr.bf16.gmra.mxu0 %v304
  %v652 = vpop.f32.mrf.mxu0
  %v653 = vadd.f32 %v125, %v652
  %v654 = vpop.f32.mrf.mxu0
  %v655 = vpop.f32.mrf.mxu0
  %v656 = vadd.f32 %v125, %v655
  %v657 = vpop.f32.mrf.mxu0
  %658 = vmatprep.mubr.bf16.mxu0 %v468
  %659 = vmatmul.mubr.bf16.gmra.mxu0 %v306
  %v660 = vpop.f32.mrf.mxu0
  %v661 = vadd.f32 %v125, %v660
  %v662 = vpop.f32.mrf.mxu0
  %v663 = vpop.f32.mrf.mxu0
  %v664 = vadd.f32 %v125, %v663
  %v665 = vpop.f32.mrf.mxu0
  %666 = vmatprep.mubr.bf16.mxu0 %v471
  %667 = vmatmul.mubr.bf16.gmra.mxu0 %v308
  %v668 = vpop.f32.mrf.mxu0
  %v669 = vadd.f32 %v125, %v668
  %v670 = vpop.f32.mrf.mxu0
  %v671 = vpop.f32.mrf.mxu0
  %v672 = vadd.f32 %v125, %v671
  %v673 = vpop.f32.mrf.mxu0
  %674 = vmatprep.mubr.bf16.mxu0 %v474
  %675 = vmatmul.mubr.bf16.gmra.mxu0 %v310
  %v676 = vpop.f32.mrf.mxu0
  %v677 = vadd.f32 %v125, %v676
  %v678 = vpop.f32.mrf.mxu0
  %v679 = vpop.f32.mrf.mxu0
  %v680 = vadd.f32 %v125, %v679
  %v681 = vpop.f32.mrf.mxu0
  %682 = vmatprep.mubr.bf16.mxu0 %v477
  %683 = vmatmul.mubr.bf16.gmra.mxu0 %v312
  %v684 = vpop.f32.mrf.mxu0
  %v685 = vadd.f32 %v125, %v684
  %v686 = vpop.f32.mrf.mxu0
  %v687 = vpop.f32.mrf.mxu0
  %v688 = vadd.f32 %v125, %v687
  %v689 = vpop.f32.mrf.mxu0
  %690 = vmatprep.mubr.bf16.mxu0 %v480
  %691 = vmatmul.mubr.bf16.gmra.mxu0 %v314
  %v692 = vpop.f32.mrf.mxu0
  %v693 = vadd.f32 %v125, %v692
  %v694 = vpop.f32.mrf.mxu0
  %v695 = vpop.f32.mrf.mxu0
  %v696 = vadd.f32 %v125, %v695
  %v697 = vpop.f32.mrf.mxu0
  %698 = vmatprep.mubr.bf16.mxu0 %v483
  %699 = vmatmul.mubr.bf16.gmra.mxu0 %v316
  %v700 = vpop.f32.mrf.mxu0
  %v701 = vadd.f32 %v125, %v700
  %v702 = vpop.f32.mrf.mxu0
  %v703 = vpop.f32.mrf.mxu0
  %v704 = vadd.f32 %v125, %v703
  %v705 = vpop.f32.mrf.mxu0
  %706 = vmatprep.mubr.bf16.mxu0 %v486
  %707 = vmatmul.mubr.bf16.gmra.mxu0 %v318
  %v708 = vpop.f32.mrf.mxu0
  %v709 = vadd.f32 %v125, %v708
  %v710 = vpop.f32.mrf.mxu0
  %v711 = vpop.f32.mrf.mxu0
  %v712 = vadd.f32 %v125, %v711
  %v713 = vpop.f32.mrf.mxu0
  %714 = vmatprep.mubr.bf16.mxu0 %v489
  %715 = vmatmul.mubr.bf16.gmra.mxu0 %v320
  %v716 = vpop.f32.mrf.mxu0
  %v717 = vadd.f32 %v125, %v716
  %v718 = vpop.f32.mrf.mxu0
  %v719 = vpop.f32.mrf.mxu0
  %v720 = vadd.f32 %v125, %v719
  %v721 = vpop.f32.mrf.mxu0
  %722 = vmatprep.mubr.bf16.mxu0 %v492
  %723 = vmatmul.mubr.bf16.gmra.mxu0 %v322
  %v724 = vpop.f32.mrf.mxu0
  %v725 = vadd.f32 %v125, %v724
  %v726 = vpop.f32.mrf.mxu0
  %v727 = vpop.f32.mrf.mxu0
  %v728 = vpop.f32.mrf.mxu0
  %729 = vdwg.mxu0
  %v730 = vmax.f32 %v533, 0.0
  %v731 = vmax.f32 %v536, 0.0
  %v732 = vmax.f32 %v541, 0.0
  %v733 = vmax.f32 %v544, 0.0
  %v734 = vmax.f32 %v549, 0.0
  %v735 = vmax.f32 %v552, 0.0
  %v736 = vmax.f32 %v557, 0.0
  %v737 = vmax.f32 %v560, 0.0
  %v738 = vmax.f32 %v565, 0.0
  %v739 = vmax.f32 %v568, 0.0
  %v740 = vmax.f32 %v573, 0.0
  %v741 = vmax.f32 %v576, 0.0
  %v742 = vmax.f32 %v581, 0.0
  %v743 = vmax.f32 %v584, 0.0
  %v744 = vmax.f32 %v589, 0.0
  %v745 = vmax.f32 %v592, 0.0
  %v746 = vmax.f32 %v597, 0.0
  %v747 = vmax.f32 %v600, 0.0
  %v748 = vmax.f32 %v605, 0.0
  %v749 = vmax.f32 %v608, 0.0
  %v750 = vmax.f32 %v613, 0.0
  %v751 = vmax.f32 %v616, 0.0
  %v752 = vmax.f32 %v621, 0.0
  %v753 = vmax.f32 %v624, 0.0
  %v754 = vmax.f32 %v629, 0.0
  %v755 = vmax.f32 %v632, 0.0
  %v756 = vmax.f32 %v637, 0.0
  %v757 = vmax.f32 %v640, 0.0
  %v758 = vmax.f32 %v645, 0.0
  %v759 = vmax.f32 %v648, 0.0
  %v760 = vmax.f32 %v653, 0.0
  %v761 = vmax.f32 %v656, 0.0
  %v762 = vmax.f32 %v661, 0.0
  %v763 = vmax.f32 %v664, 0.0
  %v764 = vmax.f32 %v669, 0.0
  %v765 = vmax.f32 %v672, 0.0
  %v766 = vmax.f32 %v677, 0.0
  %v767 = vmax.f32 %v680, 0.0
  %v768 = vmax.f32 %v685, 0.0
  %v769 = vmax.f32 %v688, 0.0
  %v770 = vmax.f32 %v693, 0.0
  %v771 = vmax.f32 %v696, 0.0
  %v772 = vmax.f32 %v701, 0.0
  %v773 = vmax.f32 %v704, 0.0
  %v774 = vmax.f32 %v709, 0.0
  %v775 = vmax.f32 %v712, 0.0
  %v776 = vmax.f32 %v717, 0.0
  %v777 = vmax.f32 %v720, 0.0
  %v778 = vmax.f32 %v725, 0.0
  %v779 = vpack.c.bf16 %v731, %v730
  %v780 = vpack.c.bf16 %v733, %v732
  %v781 = vpack.c.bf16 %v735, %v734
  %v782 = vpack.c.bf16 %v737, %v736
  %v783 = vpack.c.bf16 %v739, %v738
  %v784 = vpack.c.bf16 %v741, %v740
  %v785 = vpack.c.bf16 %v743, %v742
  %v786 = vpack.c.bf16 %v745, %v744
  %v787 = vpack.c.bf16 %v747, %v746
  %v788 = vpack.c.bf16 %v749, %v748
  %v789 = vpack.c.bf16 %v751, %v750
  %v790 = vpack.c.bf16 %v753, %v752
  %v791 = vpack.c.bf16 %v755, %v754
  %v792 = vpack.c.bf16 %v757, %v756
  %v793 = vpack.c.bf16 %v759, %v758
  %v794 = vpack.c.bf16 %v761, %v760
  %v795 = vpack.c.bf16 %v763, %v762
  %v796 = vpack.c.bf16 %v765, %v764
  %v797 = vpack.c.bf16 %v767, %v766
  %v798 = vpack.c.bf16 %v769, %v768
  %v799 = vpack.c.bf16 %v771, %v770
  %v800 = vpack.c.bf16 %v773, %v772
  %v801 = vpack.c.bf16 %v775, %v774
  %v802 = vpack.c.bf16 %v777, %v776
  %v803 = vpack.c.bf16 %v778, %v778
  %v804 = vld [vmem:[%s4] sm:$0xf]
  %v805 = vld [vmem:[%s4 + $0x4] sm:$0xf]
  %v806 = vld [vmem:[%s4 + $0x8] sm:$0xf]
  %v807 = vld [vmem:[%s4 + $0xc] sm:$0xf]
  %v808 = vld [vmem:[%s4 + $0x10] sm:$0xf]
  %v809 = vld [vmem:[%s5] sm:$0x1]
  %v811 = vlaneseq
  %v812 = vshrl.u32 %v811, 7
  %v813 = vsub.s32 0, %v812
  %v814 = vrot.slane %v809, %v813
  %v821 = vunpack.c.l.b16 %v804
  %v822 = vunpack.c.l.b16 %v805
  %v823 = vunpack.c.l.b16 %v806
  %v824 = vunpack.c.l.b16 %v807
  %v825 = vunpack.c.l.b16 %v808
  %v826 = vpack.c.b16 %v822, %v821
  %v827 = vpack.c.b16 %v824, %v823
  %v828 = vpack.c.b16 %v825, %v825
  %vm831 = vcmask 326656
  %v833 = vsel %vm831, %v779, 0
  %v836 = vsel %vm831, %v780, 0
  %v839 = vsel %vm831, %v781, 0
  %v842 = vsel %vm831, %v782, 0
  %v845 = vsel %vm831, %v783, 0
  %v848 = vsel %vm831, %v784, 0
  %v851 = vsel %vm831, %v785, 0
  %v854 = vsel %vm831, %v786, 0
  %v857 = vsel %vm831, %v787, 0
  %v860 = vsel %vm831, %v788, 0
  %v863 = vsel %vm831, %v789, 0
  %v866 = vsel %vm831, %v790, 0
  %v869 = vsel %vm831, %v791, 0
  %v872 = vsel %vm831, %v792, 0
  %v875 = vsel %vm831, %v793, 0
  %v878 = vsel %vm831, %v794, 0
  %v881 = vsel %vm831, %v795, 0
  %v884 = vsel %vm831, %v796, 0
  %v887 = vsel %vm831, %v797, 0
  %v890 = vsel %vm831, %v798, 0
  %v893 = vsel %vm831, %v799, 0
  %v896 = vsel %vm831, %v800, 0
  %v899 = vsel %vm831, %v801, 0
  %v902 = vsel %vm831, %v802, 0
  %v905 = vsel %vm831, %v803, 0
  %vm907 = vcmask 1043456
  %v909 = vsel %vm907, %v828, 0
  %911 = vmatprep.subr.bf16.mxu0 0
  %912 = vmatpush1.bf16.msra.mxu0 0
  %913 = vmatprep.subr.bf16.mxu0 0
  %914 = vmatpush1.bf16.msra.mxu0 0
  %915 = vmatprep.subr.bf16.mxu0 0
  %916 = vmatpush1.bf16.msra.mxu0 0
  %917 = vmatprep.subr.bf16.mxu0 0
  %918 = vmatpush1.bf16.msra.mxu0 0
  %919 = vmatprep.subr.bf16.mxu0 0
  %920 = vmatpush1.bf16.msra.mxu0 0
  %921 = vmatprep.subr.bf16.mxu0 0
  %922 = vmatpush1.bf16.msra.mxu0 %v909
  %923 = vmatprep.subr.bf16.mxu0 0
  %924 = vmatpush1.bf16.msra.mxu0 %v827
  %925 = vmatprep.subr.bf16.mxu0 0
  %926 = vmatpush1.bf16.msra.mxu0 %v826
  %927 = vmatprep.subr.bf16.mxu0 0
  %928 = vmatpush2.bf16.msra.mxu0 0
  %929 = vmatprep.subr.bf16.mxu0 0
  %930 = vmatpush2.bf16.msra.mxu0 0
  %931 = vmatprep.subr.bf16.mxu0 0
  %932 = vmatpush2.bf16.msra.mxu0 0
  %933 = vmatprep.subr.bf16.mxu0 0
  %934 = vmatpush2.bf16.msra.mxu0 0
  %935 = vmatprep.subr.bf16.mxu0 0
  %936 = vmatpush2.bf16.msra.mxu0 0
  %937 = vmatprep.subr.bf16.mxu0 0
  %938 = vmatpush2.bf16.msra.mxu0 0
  %939 = vmatprep.subr.bf16.mxu0 0
  %940 = vmatpush2.bf16.msra.mxu0 0
  %941 = vmatprep.subr.bf16.mxu0 0
  %942 = vmatpush2.bf16.msra.mxu0 0
  %943 = vmatprep.mubr.bf16.mxu0 0
  %944 = vmatmul.mubr.bf16.gmra.mxu0 %v833
  %v945 = vpop.f32.mrf.mxu0
  %v946 = vadd.f32 %v814, %v945
  %v947 = vpop.f32.mrf.mxu0
  %v948 = vpop.f32.mrf.mxu0
  %v949 = vadd.f32 %v814, %v948
  %v950 = vpop.f32.mrf.mxu0
  %951 = vmatprep.mubr.bf16.mxu0 0
  %952 = vmatmul.mubr.bf16.gmra.mxu0 %v836
  %v953 = vpop.f32.mrf.mxu0
  %v954 = vadd.f32 %v814, %v953
  %v955 = vpop.f32.mrf.mxu0
  %v956 = vpop.f32.mrf.mxu0
  %v957 = vadd.f32 %v814, %v956
  %v958 = vpop.f32.mrf.mxu0
  %959 = vmatprep.mubr.bf16.mxu0 0
  %960 = vmatmul.mubr.bf16.gmra.mxu0 %v839
  %v961 = vpop.f32.mrf.mxu0
  %v962 = vadd.f32 %v814, %v961
  %v963 = vpop.f32.mrf.mxu0
  %v964 = vpop.f32.mrf.mxu0
  %v965 = vadd.f32 %v814, %v964
  %v966 = vpop.f32.mrf.mxu0
  %967 = vmatprep.mubr.bf16.mxu0 0
  %968 = vmatmul.mubr.bf16.gmra.mxu0 %v842
  %v969 = vpop.f32.mrf.mxu0
  %v970 = vadd.f32 %v814, %v969
  %v971 = vpop.f32.mrf.mxu0
  %v972 = vpop.f32.mrf.mxu0
  %v973 = vadd.f32 %v814, %v972
  %v974 = vpop.f32.mrf.mxu0
  %975 = vmatprep.mubr.bf16.mxu0 0
  %976 = vmatmul.mubr.bf16.gmra.mxu0 %v845
  %v977 = vpop.f32.mrf.mxu0
  %v978 = vadd.f32 %v814, %v977
  %v979 = vpop.f32.mrf.mxu0
  %v980 = vpop.f32.mrf.mxu0
  %v981 = vadd.f32 %v814, %v980
  %v982 = vpop.f32.mrf.mxu0
  %983 = vmatprep.mubr.bf16.mxu0 0
  %984 = vmatmul.mubr.bf16.gmra.mxu0 %v848
  %v985 = vpop.f32.mrf.mxu0
  %v986 = vadd.f32 %v814, %v985
  %v987 = vpop.f32.mrf.mxu0
  %v988 = vpop.f32.mrf.mxu0
  %v989 = vadd.f32 %v814, %v988
  %v990 = vpop.f32.mrf.mxu0
  %991 = vmatprep.mubr.bf16.mxu0 0
  %992 = vmatmul.mubr.bf16.gmra.mxu0 %v851
  %v993 = vpop.f32.mrf.mxu0
  %v994 = vadd.f32 %v814, %v993
  %v995 = vpop.f32.mrf.mxu0
  %v996 = vpop.f32.mrf.mxu0
  %v997 = vadd.f32 %v814, %v996
  %v998 = vpop.f32.mrf.mxu0
  %999 = vmatprep.mubr.bf16.mxu0 0
  %1000 = vmatmul.mubr.bf16.gmra.mxu0 %v854
  %v1001 = vpop.f32.mrf.mxu0
  %v1002 = vadd.f32 %v814, %v1001
  %v1003 = vpop.f32.mrf.mxu0
  %v1004 = vpop.f32.mrf.mxu0
  %v1005 = vadd.f32 %v814, %v1004
  %v1006 = vpop.f32.mrf.mxu0
  %1007 = vmatprep.mubr.bf16.mxu0 0
  %1008 = vmatmul.mubr.bf16.gmra.mxu0 %v857
  %v1009 = vpop.f32.mrf.mxu0
  %v1010 = vadd.f32 %v814, %v1009
  %v1011 = vpop.f32.mrf.mxu0
  %v1012 = vpop.f32.mrf.mxu0
  %v1013 = vadd.f32 %v814, %v1012
  %v1014 = vpop.f32.mrf.mxu0
  %1015 = vmatprep.mubr.bf16.mxu0 0
  %1016 = vmatmul.mubr.bf16.gmra.mxu0 %v860
  %v1017 = vpop.f32.mrf.mxu0
  %v1018 = vadd.f32 %v814, %v1017
  %v1019 = vpop.f32.mrf.mxu0
  %v1020 = vpop.f32.mrf.mxu0
  %v1021 = vadd.f32 %v814, %v1020
  %v1022 = vpop.f32.mrf.mxu0
  %1023 = vmatprep.mubr.bf16.mxu0 0
  %1024 = vmatmul.mubr.bf16.gmra.mxu0 %v863
  %v1025 = vpop.f32.mrf.mxu0
  %v1026 = vadd.f32 %v814, %v1025
  %v1027 = vpop.f32.mrf.mxu0
  %v1028 = vpop.f32.mrf.mxu0
  %v1029 = vadd.f32 %v814, %v1028
  %v1030 = vpop.f32.mrf.mxu0
  %1031 = vmatprep.mubr.bf16.mxu0 0
  %1032 = vmatmul.mubr.bf16.gmra.mxu0 %v866
  %v1033 = vpop.f32.mrf.mxu0
  %v1034 = vadd.f32 %v814, %v1033
  %v1035 = vpop.f32.mrf.mxu0
  %v1036 = vpop.f32.mrf.mxu0
  %v1037 = vadd.f32 %v814, %v1036
  %v1038 = vpop.f32.mrf.mxu0
  %1039 = vmatprep.mubr.bf16.mxu0 0
  %1040 = vmatmul.mubr.bf16.gmra.mxu0 %v869
  %v1041 = vpop.f32.mrf.mxu0
  %v1042 = vadd.f32 %v814, %v1041
  %v1043 = vpop.f32.mrf.mxu0
  %v1044 = vpop.f32.mrf.mxu0
  %v1045 = vadd.f32 %v814, %v1044
  %v1046 = vpop.f32.mrf.mxu0
  %1047 = vmatprep.mubr.bf16.mxu0 0
  %1048 = vmatmul.mubr.bf16.gmra.mxu0 %v872
  %v1049 = vpop.f32.mrf.mxu0
  %v1050 = vadd.f32 %v814, %v1049
  %v1051 = vpop.f32.mrf.mxu0
  %v1052 = vpop.f32.mrf.mxu0
  %v1053 = vadd.f32 %v814, %v1052
  %v1054 = vpop.f32.mrf.mxu0
  %1055 = vmatprep.mubr.bf16.mxu0 0
  %1056 = vmatmul.mubr.bf16.gmra.mxu0 %v875
  %v1057 = vpop.f32.mrf.mxu0
  %v1058 = vadd.f32 %v814, %v1057
  %v1059 = vpop.f32.mrf.mxu0
  %v1060 = vpop.f32.mrf.mxu0
  %v1061 = vadd.f32 %v814, %v1060
  %v1062 = vpop.f32.mrf.mxu0
  %1063 = vmatprep.mubr.bf16.mxu0 0
  %1064 = vmatmul.mubr.bf16.gmra.mxu0 %v878
  %v1065 = vpop.f32.mrf.mxu0
  %v1066 = vadd.f32 %v814, %v1065
  %v1067 = vpop.f32.mrf.mxu0
  %v1068 = vpop.f32.mrf.mxu0
  %v1069 = vadd.f32 %v814, %v1068
  %v1070 = vpop.f32.mrf.mxu0
  %1071 = vmatprep.mubr.bf16.mxu0 0
  %1072 = vmatmul.mubr.bf16.gmra.mxu0 %v881
  %v1073 = vpop.f32.mrf.mxu0
  %v1074 = vadd.f32 %v814, %v1073
  %v1075 = vpop.f32.mrf.mxu0
  %v1076 = vpop.f32.mrf.mxu0
  %v1077 = vadd.f32 %v814, %v1076
  %v1078 = vpop.f32.mrf.mxu0
  %1079 = vmatprep.mubr.bf16.mxu0 0
  %1080 = vmatmul.mubr.bf16.gmra.mxu0 %v884
  %v1081 = vpop.f32.mrf.mxu0
  %v1082 = vadd.f32 %v814, %v1081
  %v1083 = vpop.f32.mrf.mxu0
  %v1084 = vpop.f32.mrf.mxu0
  %v1085 = vadd.f32 %v814, %v1084
  %v1086 = vpop.f32.mrf.mxu0
  %1087 = vmatprep.mubr.bf16.mxu0 0
  %1088 = vmatmul.mubr.bf16.gmra.mxu0 %v887
  %v1089 = vpop.f32.mrf.mxu0
  %v1090 = vadd.f32 %v814, %v1089
  %v1091 = vpop.f32.mrf.mxu0
  %v1092 = vpop.f32.mrf.mxu0
  %v1093 = vadd.f32 %v814, %v1092
  %v1094 = vpop.f32.mrf.mxu0
  %1095 = vmatprep.mubr.bf16.mxu0 0
  %1096 = vmatmul.mubr.bf16.gmra.mxu0 %v890
  %v1097 = vpop.f32.mrf.mxu0
  %v1098 = vadd.f32 %v814, %v1097
  %v1099 = vpop.f32.mrf.mxu0
  %v1100 = vpop.f32.mrf.mxu0
  %v1101 = vadd.f32 %v814, %v1100
  %v1102 = vpop.f32.mrf.mxu0
  %1103 = vmatprep.mubr.bf16.mxu0 0
  %1104 = vmatmul.mubr.bf16.gmra.mxu0 %v893
  %v1105 = vpop.f32.mrf.mxu0
  %v1106 = vadd.f32 %v814, %v1105
  %v1107 = vpop.f32.mrf.mxu0
  %v1108 = vpop.f32.mrf.mxu0
  %v1109 = vadd.f32 %v814, %v1108
  %v1110 = vpop.f32.mrf.mxu0
  %1111 = vmatprep.mubr.bf16.mxu0 0
  %1112 = vmatmul.mubr.bf16.gmra.mxu0 %v896
  %v1113 = vpop.f32.mrf.mxu0
  %v1114 = vadd.f32 %v814, %v1113
  %v1115 = vpop.f32.mrf.mxu0
  %v1116 = vpop.f32.mrf.mxu0
  %v1117 = vadd.f32 %v814, %v1116
  %v1118 = vpop.f32.mrf.mxu0
  %1119 = vmatprep.mubr.bf16.mxu0 0
  %1120 = vmatmul.mubr.bf16.gmra.mxu0 %v899
  %v1121 = vpop.f32.mrf.mxu0
  %v1122 = vadd.f32 %v814, %v1121
  %v1123 = vpop.f32.mrf.mxu0
  %v1124 = vpop.f32.mrf.mxu0
  %v1125 = vadd.f32 %v814, %v1124
  %v1126 = vpop.f32.mrf.mxu0
  %1127 = vmatprep.mubr.bf16.mxu0 0
  %1128 = vmatmul.mubr.bf16.gmra.mxu0 %v902
  %v1129 = vpop.f32.mrf.mxu0
  %v1130 = vadd.f32 %v814, %v1129
  %v1131 = vpop.f32.mrf.mxu0
  %v1132 = vpop.f32.mrf.mxu0
  %v1133 = vadd.f32 %v814, %v1132
  %v1134 = vpop.f32.mrf.mxu0
  %1135 = vmatprep.mubr.bf16.mxu0 0
  %1136 = vmatmul.mubr.bf16.gmra.mxu0 %v905
  %v1137 = vpop.f32.mrf.mxu0
  %v1138 = vadd.f32 %v814, %v1137
  %v1139 = vpop.f32.mrf.mxu0
  %v1140 = vpop.f32.mrf.mxu0
  %v1141 = vpop.f32.mrf.mxu0
  %1142 = vdwg.mxu0
  %v1143 = vmax.f32 %v946, 0.0
  %v1144 = vmax.f32 %v949, 0.0
  %v1145 = vmax.f32 %v954, 0.0
  %v1146 = vmax.f32 %v957, 0.0
  %v1147 = vmax.f32 %v962, 0.0
  %v1148 = vmax.f32 %v965, 0.0
  %v1149 = vmax.f32 %v970, 0.0
  %v1150 = vmax.f32 %v973, 0.0
  %v1151 = vmax.f32 %v978, 0.0
  %v1152 = vmax.f32 %v981, 0.0
  %v1153 = vmax.f32 %v986, 0.0
  %v1154 = vmax.f32 %v989, 0.0
  %v1155 = vmax.f32 %v994, 0.0
  %v1156 = vmax.f32 %v997, 0.0
  %v1157 = vmax.f32 %v1002, 0.0
  %v1158 = vmax.f32 %v1005, 0.0
  %v1159 = vmax.f32 %v1010, 0.0
  %v1160 = vmax.f32 %v1013, 0.0
  %v1161 = vmax.f32 %v1018, 0.0
  %v1162 = vmax.f32 %v1021, 0.0
  %v1163 = vmax.f32 %v1026, 0.0
  %v1164 = vmax.f32 %v1029, 0.0
  %v1165 = vmax.f32 %v1034, 0.0
  %v1166 = vmax.f32 %v1037, 0.0
  %v1167 = vmax.f32 %v1042, 0.0
  %v1168 = vmax.f32 %v1045, 0.0
  %v1169 = vmax.f32 %v1050, 0.0
  %v1170 = vmax.f32 %v1053, 0.0
  %v1171 = vmax.f32 %v1058, 0.0
  %v1172 = vmax.f32 %v1061, 0.0
  %v1173 = vmax.f32 %v1066, 0.0
  %v1174 = vmax.f32 %v1069, 0.0
  %v1175 = vmax.f32 %v1074, 0.0
  %v1176 = vmax.f32 %v1077, 0.0
  %v1177 = vmax.f32 %v1082, 0.0
  %v1178 = vmax.f32 %v1085, 0.0
  %v1179 = vmax.f32 %v1090, 0.0
  %v1180 = vmax.f32 %v1093, 0.0
  %v1181 = vmax.f32 %v1098, 0.0
  %v1182 = vmax.f32 %v1101, 0.0
  %v1183 = vmax.f32 %v1106, 0.0
  %v1184 = vmax.f32 %v1109, 0.0
  %v1185 = vmax.f32 %v1114, 0.0
  %v1186 = vmax.f32 %v1117, 0.0
  %v1187 = vmax.f32 %v1122, 0.0
  %v1188 = vmax.f32 %v1125, 0.0
  %v1189 = vmax.f32 %v1130, 0.0
  %v1190 = vmax.f32 %v1133, 0.0
  %v1191 = vmax.f32 %v1138, 0.0
  %v1192 = vld [vmem:[%s6] sm:$0xff]
  %v1193 = vld [vmem:[%s6 + $0x8] sm:$0xff]
  %v1194 = vpack.c.bf16 %v1144, %v1143
  %v1195 = vpack.c.bf16 %v1146, %v1145
  %v1196 = vpack.c.bf16 %v1148, %v1147
  %v1197 = vpack.c.bf16 %v1150, %v1149
  %v1198 = vpack.c.bf16 %v1152, %v1151
  %v1199 = vpack.c.bf16 %v1154, %v1153
  %v1200 = vpack.c.bf16 %v1156, %v1155
  %v1201 = vpack.c.bf16 %v1158, %v1157
  %v1202 = vpack.c.bf16 %v1160, %v1159
  %v1203 = vpack.c.bf16 %v1162, %v1161
  %v1204 = vpack.c.bf16 %v1164, %v1163
  %v1205 = vpack.c.bf16 %v1166, %v1165
  %v1206 = vpack.c.bf16 %v1168, %v1167
  %v1207 = vpack.c.bf16 %v1170, %v1169
  %v1208 = vpack.c.bf16 %v1172, %v1171
  %v1209 = vpack.c.bf16 %v1174, %v1173
  %v1210 = vpack.c.bf16 %v1176, %v1175
  %v1211 = vpack.c.bf16 %v1178, %v1177
  %v1212 = vpack.c.bf16 %v1180, %v1179
  %v1213 = vpack.c.bf16 %v1182, %v1181
  %v1214 = vpack.c.bf16 %v1184, %v1183
  %v1215 = vpack.c.bf16 %v1186, %v1185
  %v1216 = vpack.c.bf16 %v1188, %v1187
  %v1217 = vpack.c.bf16 %v1190, %v1189
  %v1218 = vpack.c.bf16 %v1191, %v1191
  %v1221 = vunpack.c.l.b16 %v1192
  %v1222 = vunpack.c.h.b16 %v1192
  %v1223 = vunpack.c.l.b16 %v1193
  %v1224 = vunpack.c.h.b16 %v1193
  %v1225 = vpack.c.b16 %v1221, %v1221
  %v1226 = vpack.c.b16 %v1222, %v1222
  %v1227 = vpack.c.b16 %v1223, %v1223
  %v1228 = vpack.c.b16 %v1224, %v1224
  %vm1232 = vcmask 64512
  %v1234 = vsel %vm1232, %v1228, 0
  %v1237 = vsel %vm907, %v1218, 0
  %1239 = vmatprep.subr.bf16.mxu0 0
  %1240 = vmatpush1.bf16.msra.mxu0 %v1201
  %1241 = vmatprep.subr.bf16.mxu0 0
  %1242 = vmatpush1.bf16.msra.mxu0 %v1200
  %1243 = vmatprep.subr.bf16.mxu0 0
  %1244 = vmatpush1.bf16.msra.mxu0 %v1199
  %1245 = vmatprep.subr.bf16.mxu0 0
  %1246 = vmatpush1.bf16.msra.mxu0 %v1198
  %1247 = vmatprep.subr.bf16.mxu0 0
  %1248 = vmatpush1.bf16.msra.mxu0 %v1197
  %1249 = vmatprep.subr.bf16.mxu0 0
  %1250 = vmatpush1.bf16.msra.mxu0 %v1196
  %1251 = vmatprep.subr.bf16.mxu0 0
  %1252 = vmatpush1.bf16.msra.mxu0 %v1195
  %1253 = vmatprep.subr.bf16.mxu0 0
  %1254 = vmatpush1.bf16.msra.mxu0 %v1194
  %1255 = vmatprep.subr.bf16.mxu0 0
  %1256 = vmatpush2.bf16.msra.mxu0 %v1209
  %1257 = vmatprep.subr.bf16.mxu0 0
  %1258 = vmatpush2.bf16.msra.mxu0 %v1208
  %1259 = vmatprep.subr.bf16.mxu0 0
  %1260 = vmatpush2.bf16.msra.mxu0 %v1207
  %1261 = vmatprep.subr.bf16.mxu0 0
  %1262 = vmatpush2.bf16.msra.mxu0 %v1206
  %1263 = vmatprep.subr.bf16.mxu0 0
  %1264 = vmatpush2.bf16.msra.mxu0 %v1205
  %1265 = vmatprep.subr.bf16.mxu0 0
  %1266 = vmatpush2.bf16.msra.mxu0 %v1204
  %1267 = vmatprep.subr.bf16.mxu0 0
  %1268 = vmatpush2.bf16.msra.mxu0 %v1203
  %1269 = vmatprep.subr.bf16.mxu0 0
  %1270 = vmatpush2.bf16.msra.mxu0 %v1202
  %1271 = vmatprep.mubr.bf16.mxu0 %v1226
  %1272 = vmatmul.mubr.bf16.gmra.mxu0 %v1225
  %v1273 = vpop.f32.mrf.mxu0
  %v1274 = vadd.f32 0.0, %v1273
  %v1275 = vpop.f32.mrf.mxu0
  %v1276 = vpop.f32.mrf.mxu0
  %v1277 = vpop.f32.mrf.mxu0
  %1278 = vdwg.mxu0
  %1279 = vmatprep.subr.bf16.mxu0 0
  %1280 = vmatpush1.bf16.msra.mxu0 %v1217
  %1281 = vmatprep.subr.bf16.mxu0 0
  %1282 = vmatpush1.bf16.msra.mxu0 %v1216
  %1283 = vmatprep.subr.bf16.mxu0 0
  %1284 = vmatpush1.bf16.msra.mxu0 %v1215
  %1285 = vmatprep.subr.bf16.mxu0 0
  %1286 = vmatpush1.bf16.msra.mxu0 %v1214
  %1287 = vmatprep.subr.bf16.mxu0 0
  %1288 = vmatpush1.bf16.msra.mxu0 %v1213
  %1289 = vmatprep.subr.bf16.mxu0 0
  %1290 = vmatpush1.bf16.msra.mxu0 %v1212
  %1291 = vmatprep.subr.bf16.mxu0 0
  %1292 = vmatpush1.bf16.msra.mxu0 %v1211
  %1293 = vmatprep.subr.bf16.mxu0 0
  %1294 = vmatpush1.bf16.msra.mxu0 %v1210
  %1295 = vmatprep.subr.bf16.mxu0 0
  %1296 = vmatpush2.bf16.msra.mxu0 0
  %1297 = vmatprep.subr.bf16.mxu0 0
  %1298 = vmatpush2.bf16.msra.mxu0 0
  %1299 = vmatprep.subr.bf16.mxu0 0
  %1300 = vmatpush2.bf16.msra.mxu0 0
  %1301 = vmatprep.subr.bf16.mxu0 0
  %1302 = vmatpush2.bf16.msra.mxu0 0
  %1303 = vmatprep.subr.bf16.mxu0 0
  %1304 = vmatpush2.bf16.msra.mxu0 0
  %1305 = vmatprep.subr.bf16.mxu0 0
  %1306 = vmatpush2.bf16.msra.mxu0 0
  %1307 = vmatprep.subr.bf16.mxu0 0
  %1308 = vmatpush2.bf16.msra.mxu0 0
  %1309 = vmatprep.subr.bf16.mxu0 0
  %1310 = vmatpush2.bf16.msra.mxu0 %v1237
  %1311 = vmatprep.mubr.bf16.mxu0 %v1234
  %1312 = vmatmul.mubr.bf16.gmra.mxu0 %v1227
  %v1313 = vpop.f32.mrf.mxu0
  %v1314 = vadd.f32 %v1274, %v1313
  %v1315 = vpop.f32.mrf.mxu0
  %v1316 = vpop.f32.mrf.mxu0
  %v1317 = vpop.f32.mrf.mxu0
  %1318 = vdwg.mxu0
  %v1319 = vmul.f32 %v1314, 0.020408163
  %v1320 = vld [vmem:[%s7] sm:$0xff]
  %v1321 = vld [vmem:[%s7 + $0x8] sm:$0xff]
  %v1322 = vld [vmem:[%s7 + $0x10] sm:$0xf]
  %v1323 = vld [vmem:[%s1] sm:$0xff]
  %v1324 = vld [vmem:[%s8] sm:$0x7]
  %vm1325 = vcmask 23552
  %v1327 = vsel %vm1325, %v1323, 0
  %vm1329 = vcmask 1042432
  %v1331 = vsel %vm1329, %v1324, 0
  %1333 = vmatprep.subr.mxu0 0.0
  %1334 = vmatpush1.msra.mxu0 0.0
  %1335 = vmatprep.subr.mxu0 0.0
  %1336 = vmatpush1.msra.mxu0 0.0
  %1337 = vmatprep.subr.mxu0 0.0
  %1338 = vmatpush1.msra.mxu0 0.0
  %1339 = vmatprep.subr.mxu0 0.0
  %1340 = vmatpush1.msra.mxu0 0.0
  %1341 = vmatprep.subr.mxu0 0.0
  %1342 = vmatpush1.msra.mxu0 0.0
  %1343 = vmatprep.subr.mxu0 0.0
  %1344 = vmatpush1.msra.mxu0 0.0
  %1345 = vmatprep.subr.mxu0 0.0
  %1346 = vmatpush1.msra.mxu0 0.0
  %1347 = vmatprep.subr.mxu0 0.0
  %1348 = vmatpush1.msra.mxu0 0.0
  %1349 = vmatprep.subr.mxu0 0.0
  %1350 = vmatpush1.msra.mxu0 0.0
  %1351 = vmatprep.subr.mxu0 0.0
  %1352 = vmatpush1.msra.mxu0 0.0
  %1353 = vmatprep.subr.mxu0 0.0
  %1354 = vmatpush1.msra.mxu0 0.0
  %1355 = vmatprep.subr.mxu0 0.0
  %1356 = vmatpush1.msra.mxu0 0.0
  %1357 = vmatprep.subr.mxu0 0.0
  %1358 = vmatpush1.msra.mxu0 0.0
  %1359 = vmatprep.subr.mxu0 0.0
  %1360 = vmatpush1.msra.mxu0 0.0
  %1361 = vmatprep.subr.mxu0 0.0
  %1362 = vmatpush1.msra.mxu0 0.0
  %1363 = vmatprep.subr.mxu0 0.0
  %1364 = vmatpush1.msra.mxu0 %v1331
  %1365 = vmatprep.subr.mxu0 0.0
  %1366 = vmatpush2.msra.mxu0 0.0
  %1367 = vmatprep.subr.mxu0 0.0
  %1368 = vmatpush2.msra.mxu0 0.0
  %1369 = vmatprep.subr.mxu0 0.0
  %1370 = vmatpush2.msra.mxu0 0.0
  %1371 = vmatprep.subr.mxu0 0.0
  %1372 = vmatpush2.msra.mxu0 0.0
  %1373 = vmatprep.subr.mxu0 0.0
  %1374 = vmatpush2.msra.mxu0 0.0
  %1375 = vmatprep.subr.mxu0 0.0
  %1376 = vmatpush2.msra.mxu0 0.0
  %1377 = vmatprep.subr.mxu0 0.0
  %1378 = vmatpush2.msra.mxu0 0.0
  %1379 = vmatprep.subr.mxu0 0.0
  %1380 = vmatpush2.msra.mxu0 0.0
  %1381 = vmatprep.subr.mxu0 0.0
  %1382 = vmatpush2.msra.mxu0 0.0
  %1383 = vmatprep.subr.mxu0 0.0
  %1384 = vmatpush2.msra.mxu0 0.0
  %1385 = vmatprep.subr.mxu0 0.0
  %1386 = vmatpush2.msra.mxu0 0.0
  %1387 = vmatprep.subr.mxu0 0.0
  %1388 = vmatpush2.msra.mxu0 0.0
  %1389 = vmatprep.subr.mxu0 0.0
  %1390 = vmatpush2.msra.mxu0 0.0
  %1391 = vmatprep.subr.mxu0 0.0
  %1392 = vmatpush2.msra.mxu0 0.0
  %1393 = vmatprep.subr.mxu0 0.0
  %1394 = vmatpush2.msra.mxu0 0.0
  %1395 = vmatprep.subr.mxu0 0.0
  %1396 = vmatpush2.msra.mxu0 0.0
  %1397 = vmatprep.mubr.f32.mxu0 0.0
  %1398 = vmatmul.mubr.f32.gmra.mxu0 %v1327
  %v1399 = vpop.f32.mrf.mxu0
  %v1400 = vadd.f32 0.0, %v1399
  %v1401 = vpop.f32.mrf.mxu0
  %1402 = vdwg.mxu0
  %vm1403 = vcmask 162816
  %v1405 = vsel %vm1403, %v1319, 0
  %v1408 = vsel %vm907, %v1322, 0
  %1410 = vmatprep.subr.mxu0 0.0
  %1411 = vmatpush1.msra.mxu0 0.0
  %1412 = vmatprep.subr.mxu0 0.0
  %1413 = vmatpush1.msra.mxu0 0.0
  %1414 = vmatprep.subr.mxu0 0.0
  %1415 = vmatpush1.msra.mxu0 0.0
  %1416 = vmatprep.subr.mxu0 0.0
  %1417 = vmatpush1.msra.mxu0 0.0
  %1418 = vmatprep.subr.mxu0 0.0
  %1419 = vmatpush1.msra.mxu0 0.0
  %1420 = vmatprep.subr.mxu0 0.0
  %1421 = vmatpush1.msra.mxu0 0.0
  %1422 = vmatprep.subr.mxu0 0.0
  %1423 = vmatpush1.msra.mxu0 0.0
  %1424 = vmatprep.subr.mxu0 0.0
  %1425 = vmatpush1.msra.mxu0 0.0
  %1426 = vmatprep.subr.mxu0 0.0
  %1427 = vmatpush1.msra.mxu0 0.0
  %1428 = vmatprep.subr.mxu0 0.0
  %1429 = vmatpush1.msra.mxu0 0.0
  %1430 = vmatprep.subr.mxu0 0.0
  %1431 = vmatpush1.msra.mxu0 0.0
  %1432 = vmatprep.subr.mxu0 0.0
  %1433 = vmatpush1.msra.mxu0 0.0
  %1434 = vmatprep.subr.mxu0 0.0
  %1435 = vmatpush1.msra.mxu0 0.0
  %1436 = vmatprep.subr.mxu0 0.0
  %1437 = vmatpush1.msra.mxu0 %v1408
  %1438 = vmatprep.subr.mxu0 0.0
  %1439 = vmatpush1.msra.mxu0 %v1321
  %1440 = vmatprep.subr.mxu0 0.0
  %1441 = vmatpush1.msra.mxu0 %v1320
  %1442 = vmatprep.subr.mxu0 0.0
  %1443 = vmatpush2.msra.mxu0 0.0
  %1444 = vmatprep.subr.mxu0 0.0
  %1445 = vmatpush2.msra.mxu0 0.0
  %1446 = vmatprep.subr.mxu0 0.0
  %1447 = vmatpush2.msra.mxu0 0.0
  %1448 = vmatprep.subr.mxu0 0.0
  %1449 = vmatpush2.msra.mxu0 0.0
  %1450 = vmatprep.subr.mxu0 0.0
  %1451 = vmatpush2.msra.mxu0 0.0
  %1452 = vmatprep.subr.mxu0 0.0
  %1453 = vmatpush2.msra.mxu0 0.0
  %1454 = vmatprep.subr.mxu0 0.0
  %1455 = vmatpush2.msra.mxu0 0.0
  %1456 = vmatprep.subr.mxu0 0.0
  %1457 = vmatpush2.msra.mxu0 0.0
  %1458 = vmatprep.subr.mxu0 0.0
  %1459 = vmatpush2.msra.mxu0 0.0
  %1460 = vmatprep.subr.mxu0 0.0
  %1461 = vmatpush2.msra.mxu0 0.0
  %1462 = vmatprep.subr.mxu0 0.0
  %1463 = vmatpush2.msra.mxu0 0.0
  %1464 = vmatprep.subr.mxu0 0.0
  %1465 = vmatpush2.msra.mxu0 0.0
  %1466 = vmatprep.subr.mxu0 0.0
  %1467 = vmatpush2.msra.mxu0 0.0
  %1468 = vmatprep.subr.mxu0 0.0
  %1469 = vmatpush2.msra.mxu0 0.0
  %1470 = vmatprep.subr.mxu0 0.0
  %1471 = vmatpush2.msra.mxu0 0.0
  %1472 = vmatprep.subr.mxu0 0.0
  %1473 = vmatpush2.msra.mxu0 0.0
  %1474 = vmatprep.mubr.f32.mxu0 0.0
  %1475 = vmatmul.mubr.f32.gmra.mxu0 %v1405
  %v1476 = vpop.f32.mrf.mxu0
  %v1477 = vadd.f32 %v1400, %v1476
  %v1478 = vpop.f32.mrf.mxu0
  %1479 = vdwg.mxu0
  %v1480 = vld [vmem:[%s9] sm:$0x1]
  %v1482 = vlaneseq
  %v1483 = vshrl.u32 %v1482, 7
  %v1484 = vsub.s32 0, %v1483
  %v1485 = vrot.slane %v1480, %v1484
  %v1487 = vadd.f32 %v1477, %v1485
  %v1488 = vmax.f32 %v1487, 0.0
  %v1489 = vld [vmem:[%s10] sm:$0xff]
  %v1490 = vld [vmem:[%s10 + $0x8] sm:$0xff]
  %v1491 = vld [vmem:[%s10 + $0x10] sm:$0xff]
  %v1492 = vld [vmem:[%s10 + $0x18] sm:$0xff]
  %v1493 = vld [vmem:[%s10 + $0x20] sm:$0xff]
  %v1494 = vld [vmem:[%s10 + $0x28] sm:$0xff]
  %v1495 = vld [vmem:[%s10 + $0x30] sm:$0xff]
  %v1496 = vld [vmem:[%s10 + $0x38] sm:$0xff]
  %v1497 = vld [vmem:[%s10 + $0x40] sm:$0xff]
  %v1498 = vld [vmem:[%s10 + $0x48] sm:$0xff]
  %v1499 = vld [vmem:[%s10 + $0x50] sm:$0xff]
  %v1500 = vld [vmem:[%s10 + $0x58] sm:$0xff]
  %v1501 = vld [vmem:[%s10 + $0x60] sm:$0xf]
  %v1502 = vld [vmem:[%s11] sm:$0x1]
  %v1504 = vlaneseq
  %v1505 = vshrl.u32 %v1504, 7
  %v1506 = vsub.s32 0, %v1505
  %v1507 = vrot.slane %v1502, %v1506
  %vm1509 = vcmask 818176
  %v1511 = vsel %vm1509, %v1488, 0
  %v1514 = vsel %vm907, %v1501, 0
  %1516 = vmatprep.subr.mxu0 0.0
  %1517 = vmatpush1.msra.mxu0 0.0
  %1518 = vmatprep.subr.mxu0 0.0
  %1519 = vmatpush1.msra.mxu0 0.0
  %1520 = vmatprep.subr.mxu0 0.0
  %1521 = vmatpush1.msra.mxu0 0.0
  %1522 = vmatprep.subr.mxu0 0.0
  %1523 = vmatpush1.msra.mxu0 %v1514
  %1524 = vmatprep.subr.mxu0 0.0
  %1525 = vmatpush1.msra.mxu0 %v1500
  %1526 = vmatprep.subr.mxu0 0.0
  %1527 = vmatpush1.msra.mxu0 %v1499
  %1528 = vmatprep.subr.mxu0 0.0
  %1529 = vmatpush1.msra.mxu0 %v1498
  %1530 = vmatprep.subr.mxu0 0.0
  %1531 = vmatpush1.msra.mxu0 %v1497
  %1532 = vmatprep.subr.mxu0 0.0
  %1533 = vmatpush1.msra.mxu0 %v1496
  %1534 = vmatprep.subr.mxu0 0.0
  %1535 = vmatpush1.msra.mxu0 %v1495
  %1536 = vmatprep.subr.mxu0 0.0
  %1537 = vmatpush1.msra.mxu0 %v1494
  %1538 = vmatprep.subr.mxu0 0.0
  %1539 = vmatpush1.msra.mxu0 %v1493
  %1540 = vmatprep.subr.mxu0 0.0
  %1541 = vmatpush1.msra.mxu0 %v1492
  %1542 = vmatprep.subr.mxu0 0.0
  %1543 = vmatpush1.msra.mxu0 %v1491
  %1544 = vmatprep.subr.mxu0 0.0
  %1545 = vmatpush1.msra.mxu0 %v1490
  %1546 = vmatprep.subr.mxu0 0.0
  %1547 = vmatpush1.msra.mxu0 %v1489
  %1548 = vmatprep.subr.mxu0 0.0
  %1549 = vmatpush2.msra.mxu0 0.0
  %1550 = vmatprep.subr.mxu0 0.0
  %1551 = vmatpush2.msra.mxu0 0.0
  %1552 = vmatprep.subr.mxu0 0.0
  %1553 = vmatpush2.msra.mxu0 0.0
  %1554 = vmatprep.subr.mxu0 0.0
  %1555 = vmatpush2.msra.mxu0 0.0
  %1556 = vmatprep.subr.mxu0 0.0
  %1557 = vmatpush2.msra.mxu0 0.0
  %1558 = vmatprep.subr.mxu0 0.0
  %1559 = vmatpush2.msra.mxu0 0.0
  %1560 = vmatprep.subr.mxu0 0.0
  %1561 = vmatpush2.msra.mxu0 0.0
  %1562 = vmatprep.subr.mxu0 0.0
  %1563 = vmatpush2.msra.mxu0 0.0
  %1564 = vmatprep.subr.mxu0 0.0
  %1565 = vmatpush2.msra.mxu0 0.0
  %1566 = vmatprep.subr.mxu0 0.0
  %1567 = vmatpush2.msra.mxu0 0.0
  %1568 = vmatprep.subr.mxu0 0.0
  %1569 = vmatpush2.msra.mxu0 0.0
  %1570 = vmatprep.subr.mxu0 0.0
  %1571 = vmatpush2.msra.mxu0 0.0
  %1572 = vmatprep.subr.mxu0 0.0
  %1573 = vmatpush2.msra.mxu0 0.0
  %1574 = vmatprep.subr.mxu0 0.0
  %1575 = vmatpush2.msra.mxu0 0.0
  %1576 = vmatprep.subr.mxu0 0.0
  %1577 = vmatpush2.msra.mxu0 0.0
  %1578 = vmatprep.subr.mxu0 0.0
  %1579 = vmatpush2.msra.mxu0 0.0
  %1580 = vmatprep.mubr.f32.mxu0 0.0
  %1581 = vmatmul.mubr.f32.gmra.mxu0 %v1511
  %v1582 = vpop.f32.mrf.mxu0
  %v1583 = vadd.f32 %v1507, %v1582
  %v1584 = vpop.f32.mrf.mxu0
  %1585 = vdwg.mxu0
  %v1586 = vmax.f32 %v1583, 0.0
  %v1587 = vld [vmem:[%s12] sm:$0xff]
  %v1588 = vld [vmem:[%s12 + $0x8] sm:$0xff]
  %v1589 = vld [vmem:[%s12 + $0x10] sm:$0xf]
  %v1590 = vld [vmem:[%s13] sm:$0x1]
  %v1592 = vlaneseq
  %v1593 = vshrl.u32 %v1592, 7
  %v1594 = vsub.s32 0, %v1593
  %v1595 = vrot.slane %v1590, %v1594
  %v1598 = vsel %vm1403, %v1586, 0
  %v1601 = vsel %vm907, %v1589, 0
  %1603 = vmatprep.subr.mxu0 0.0
  %1604 = vmatpush1.msra.mxu0 0.0
  %1605 = vmatprep.subr.mxu0 0.0
  %1606 = vmatpush1.msra.mxu0 0.0
  %1607 = vmatprep.subr.mxu0 0.0
  %1608 = vmatpush1.msra.mxu0 0.0
  %1609 = vmatprep.subr.mxu0 0.0
  %1610 = vmatpush1.msra.mxu0 0.0
  %1611 = vmatprep.subr.mxu0 0.0
  %1612 = vmatpush1.msra.mxu0 0.0
  %1613 = vmatprep.subr.mxu0 0.0
  %1614 = vmatpush1.msra.mxu0 0.0
  %1615 = vmatprep.subr.mxu0 0.0
  %1616 = vmatpush1.msra.mxu0 0.0
  %1617 = vmatprep.subr.mxu0 0.0
  %1618 = vmatpush1.msra.mxu0 0.0
  %1619 = vmatprep.subr.mxu0 0.0
  %1620 = vmatpush1.msra.mxu0 0.0
  %1621 = vmatprep.subr.mxu0 0.0
  %1622 = vmatpush1.msra.mxu0 0.0
  %1623 = vmatprep.subr.mxu0 0.0
  %1624 = vmatpush1.msra.mxu0 0.0
  %1625 = vmatprep.subr.mxu0 0.0
  %1626 = vmatpush1.msra.mxu0 0.0
  %1627 = vmatprep.subr.mxu0 0.0
  %1628 = vmatpush1.msra.mxu0 0.0
  %1629 = vmatprep.subr.mxu0 0.0
  %1630 = vmatpush1.msra.mxu0 %v1601
  %1631 = vmatprep.subr.mxu0 0.0
  %1632 = vmatpush1.msra.mxu0 %v1588
  %1633 = vmatprep.subr.mxu0 0.0
  %1634 = vmatpush1.msra.mxu0 %v1587
  %1635 = vmatprep.subr.mxu0 0.0
  %1636 = vmatpush2.msra.mxu0 0.0
  %1637 = vmatprep.subr.mxu0 0.0
  %1638 = vmatpush2.msra.mxu0 0.0
  %1639 = vmatprep.subr.mxu0 0.0
  %1640 = vmatpush2.msra.mxu0 0.0
  %1641 = vmatprep.subr.mxu0 0.0
  %1642 = vmatpush2.msra.mxu0 0.0
  %1643 = vmatprep.subr.mxu0 0.0
  %1644 = vmatpush2.msra.mxu0 0.0
  %1645 = vmatprep.subr.mxu0 0.0
  %1646 = vmatpush2.msra.mxu0 0.0
  %1647 = vmatprep.subr.mxu0 0.0
  %1648 = vmatpush2.msra.mxu0 0.0
  %1649 = vmatprep.subr.mxu0 0.0
  %1650 = vmatpush2.msra.mxu0 0.0
  %1651 = vmatprep.subr.mxu0 0.0
  %1652 = vmatpush2.msra.mxu0 0.0
  %1653 = vmatprep.subr.mxu0 0.0
  %1654 = vmatpush2.msra.mxu0 0.0
  %1655 = vmatprep.subr.mxu0 0.0
  %1656 = vmatpush2.msra.mxu0 0.0
  %1657 = vmatprep.subr.mxu0 0.0
  %1658 = vmatpush2.msra.mxu0 0.0
  %1659 = vmatprep.subr.mxu0 0.0
  %1660 = vmatpush2.msra.mxu0 0.0
  %1661 = vmatprep.subr.mxu0 0.0
  %1662 = vmatpush2.msra.mxu0 0.0
  %1663 = vmatprep.subr.mxu0 0.0
  %1664 = vmatpush2.msra.mxu0 0.0
  %1665 = vmatprep.subr.mxu0 0.0
  %1666 = vmatpush2.msra.mxu0 0.0
  %1667 = vmatprep.mubr.f32.mxu0 0.0
  %1668 = vmatmul.mubr.f32.gmra.mxu0 %v1598
  %v1669 = vpop.f32.mrf.mxu0
  %v1670 = vadd.f32 %v1595, %v1669
  %v1671 = vpop.f32.mrf.mxu0
  %1672 = vdwg.mxu0
  %vm1673 = vcmask 15360
  %1674 = vst.msk [vmem:[%s14] sm:$0xff] %vm1673, %v1670
  // Predicated region
  $region58: #{critic_forward.11} parent=0 // pred_check
    _
  $region59: #{critic_forward.11} parent=0 // pred_check_branch
    %1676 = sbr.rel (0) target = $region61
  $region60: #{critic_forward.11} parent=0 // pred_region
    _
  $region61: #{critic_forward.11} parent=0 // pred_fallthru
    _
  // Predicated region
  $region62: #{critic_forward.11} parent=0 // pred_check
    _
  $region63: #{critic_forward.11} parent=0 // pred_check_branch
    %1678 = sbr.rel (0) target = $region65
  $region64: #{critic_forward.11} parent=0 // pred_region
    _
  $region65: #{critic_forward.11} parent=0 // pred_fallthru
    _

</llo_original>
